<compile_context>
chip_gen: v6e
topology: v6e:2x2x1
jax: 0.10.0
libtpu: 0.0.40
codegen_flags: <defaults>
</compile_context>

<pallas_src>
import functools
import math

import jax
import jax.numpy as jnp
from jax import lax
from jax.experimental import pallas as pl
from jax.experimental.pallas import tpu as pltpu


# ----------------------------------------------------------------------------
# Fused whole-forward kernel
# ----------------------------------------------------------------------------

def _fused_forward_kernel(
    x_ref, pos_ref, w_in_ref, b_in_ref,
    wqkv_ref, bqkv_ref, wo_ref, bo_ref, g1_ref, be1_ref,
    w1_ref, b1_ref, w2_ref, b2_ref, g2_ref, be2_ref,
    w_out_ref, b_out_ref,
    o_ref,
    attn_sc,
    *, num_layers, num_heads, eps):
    Bblk, S, Din = x_ref.shape
    Dm = pos_ref.shape[-1]
    R = Bblk * S
    H = num_heads
    Dh = Dm // H
    scale = 1.0 / math.sqrt(Dh)

    # ---------------- input projection + positional embedding ----------------
    xf = x_ref[...].reshape(R, Din)                      # (R, Din) f32
    if Din <= 16:
        # K = input_dim is tiny: Din VPU multiply-adds, no degenerate MXU pass.
        w_in = w_in_ref[...]
        h = jnp.zeros((R, Dm), jnp.float32)
        for d in range(Din):
            h = h + xf[:, d:d + 1] * w_in[d:d + 1, :]
    else:
        h = jnp.dot(xf, w_in_ref[...], preferred_element_type=jnp.float32)
    h = h + b_in_ref[...]
    pos = pos_ref[...]                                   # (S, Dm)
    if Bblk == 1:
        h = h + pos
    else:
        h = (h.reshape(Bblk, S, Dm) + pos[None, :, :]).reshape(R, Dm)

    # Block-diagonal additive mask: rows from different batch elements must
    # not attend to each other when several batches share one grid step.
    if Bblk > 1:
        rb = lax.broadcasted_iota(jnp.int32, (R, R), 0) // S
        cb = lax.broadcasted_iota(jnp.int32, (R, R), 1) // S
        neg = jnp.where(rb == cb, 0.0, -1e30).astype(jnp.float32)

    # --------------------------- encoder layers ------------------------------
    for l in range(num_layers):                          # static unroll
        # Fused QKV projection: bf16 weights, f32 accumulation on the MXU.
        qkv = jnp.dot(h.astype(jnp.bfloat16), wqkv_ref[l],
                      preferred_element_type=jnp.float32) + bqkv_ref[l]
        q = qkv[:, :Dm] * scale                          # fold 1/sqrt(Dh) in q
        k = qkv[:, Dm:2 * Dm]
        v = qkv[:, 2 * Dm:]

        # Per-head attention; each head's normalized PV is written directly
        # into the (R, Dm) VMEM scratch at its lane offset (no concatenate).
        for hh in range(H):
            lo = hh * Dh
            qh = q[:, lo:lo + Dh].astype(jnp.bfloat16)
            kh = k[:, lo:lo + Dh].astype(jnp.bfloat16)
            vh = v[:, lo:lo + Dh].astype(jnp.bfloat16)
            s = lax.dot_general(qh, kh, (((1,), (1,)), ((), ())),
                                preferred_element_type=jnp.float32)  # (R, R)
            if Bblk > 1:
                s = s + neg
            m = jnp.max(s, axis=-1, keepdims=True)
            p = jnp.exp(s - m)                           # f32 softmax
            inv = pl.reciprocal(jnp.sum(p, axis=-1, keepdims=True), approx=True)
            pv = jnp.dot(p.astype(jnp.bfloat16), vh,
                         preferred_element_type=jnp.float32)
            attn_sc[:, lo:lo + Dh] = pv * inv            # normalize after P@V

        # Attention out-proj + residual + LayerNorm1 (post-norm).
        sa = jnp.dot(attn_sc[...].astype(jnp.bfloat16), wo_ref[l],
                     preferred_element_type=jnp.float32) + bo_ref[l]
        # TODO(synk): dropout layers are identity in eval mode; train-mode
        # stochastic dropout is intentionally not implemented.
        hr = h + sa
        mu = jnp.mean(hr, axis=-1, keepdims=True)
        var = jnp.mean(jnp.square(hr - mu), axis=-1, keepdims=True)
        h = (hr - mu) * lax.rsqrt(var + eps) * g1_ref[l] + be1_ref[l]

        # FFN (linear1 + ReLU + linear2) + residual + LayerNorm2.
        t = jnp.dot(h.astype(jnp.bfloat16), w1_ref[l],
                    preferred_element_type=jnp.float32) + b1_ref[l]
        t = jnp.maximum(t, 0.0)                          # ReLU in f32
        y = jnp.dot(t.astype(jnp.bfloat16), w2_ref[l],
                    preferred_element_type=jnp.float32) + b2_ref[l]
        hr = h + y
        mu = jnp.mean(hr, axis=-1, keepdims=True)
        var = jnp.mean(jnp.square(hr - mu), axis=-1, keepdims=True)
        h = (hr - mu) * lax.rsqrt(var + eps) * g2_ref[l] + be2_ref[l]

    # --------------- output projection (lane-padded, unmasked store) ---------
    out = jnp.dot(h.astype(jnp.bfloat16), w_out_ref[...],
                  preferred_element_type=jnp.float32) + b_out_ref[...]
    o_ref[...] = out.reshape(o_ref.shape).astype(o_ref.dtype)


# ----------------------------------------------------------------------------
# Wrapper: batch-block selection + single pallas_call
# ----------------------------------------------------------------------------

def _choose_batch_block(B, S, target_rows=256):
    """Largest divisor of B with Bblk*S <= target_rows (fill MXU rows), while
    keeping >= 2 grid steps when B >= 2 (v7x megacore: 2 TensorCores)."""
    cap = max(1, target_rows // max(S, 1))
    best = 1
    for d in range(1, B + 1):
        if B % d == 0 and d <= cap:
            best = d
    if B >= 2 and B // best < 2:
        divs = [d for d in range(1, B) if B % d == 0 and B // d >= 2]
        best = max(divs) if divs else 1
    return best


def trajectory_transformer_forward(params, x, *, num_heads, n_entities,
                                   eps=1e-5):
    B, T, E, Din = x.shape
    S = T * E
    Dm = params["w_in"].shape[1]
    L = params["wqkv"].shape[0]
    F = params["w1"].shape[-1]
    Do = params["w_out"].shape[1]

    # pos_embedding.repeat(1, n_entities, 1)[:, :S, :]   (tiny; XLA precompute)
    pos = jnp.tile(params["pos_embedding"], (1, n_entities, 1))[0, :S, :]

    # Pad the output projection to a lane-dense width (unmasked vst); the real
    # Do columns are sliced back out after the kernel.  Pad columns are exact
    # zeros (zero weights + zero bias).
    Dopad = max(128, ((Do + 127) // 128) * 128)
    w_out_p = jnp.zeros((Dm, Dopad), jnp.bfloat16)
    w_out_p = w_out_p.at[:, :Do].set(params["w_out"].astype(jnp.bfloat16))
    b_out_p = jnp.zeros((1, Dopad), jnp.float32)
    b_out_p = b_out_p.at[:, :Do].set(params["b_out"].reshape(1, Do))

    Bblk = _choose_batch_block(B, S)
    grid = (B // Bblk,)

    const3 = lambda i: (0, 0, 0)
    const2 = lambda i: (0, 0)

    out_pad = pl.pallas_call(
        functools.partial(_fused_forward_kernel, num_layers=L,
                          num_heads=num_heads, eps=eps),
        out_shape=jax.ShapeDtypeStruct((B, S, Dopad), jnp.float32),
        grid=grid,
        in_specs=[
            pl.BlockSpec((Bblk, S, Din), lambda i: (i, 0, 0)),   # x
            pl.BlockSpec((S, Dm), const2),                       # pos
            pl.BlockSpec((Din, Dm), const2),                     # input_proj W
            pl.BlockSpec((1, Dm), const2),                       # input_proj b
            pl.BlockSpec((L, Dm, 3 * Dm), const3),               # wqkv (bf16)
            pl.BlockSpec((L, 1, 3 * Dm), const3),                # bqkv
            pl.BlockSpec((L, Dm, Dm), const3),                   # wo (bf16)
            pl.BlockSpec((L, 1, Dm), const3),                    # bo
            pl.BlockSpec((L, 1, Dm), const3),                    # ln1 gamma
            pl.BlockSpec((L, 1, Dm), const3),                    # ln1 beta
            pl.BlockSpec((L, Dm, F), const3),                    # w1 (bf16)
            pl.BlockSpec((L, 1, F), const3),                     # b1
            pl.BlockSpec((L, F, Dm), const3),                    # w2 (bf16)
            pl.BlockSpec((L, 1, Dm), const3),                    # b2
            pl.BlockSpec((L, 1, Dm), const3),                    # ln2 gamma
            pl.BlockSpec((L, 1, Dm), const3),                    # ln2 beta
            pl.BlockSpec((Dm, Dopad), const2),                   # out W (padded)
            pl.BlockSpec((1, Dopad), const2),                    # out b (padded)
        ],
        out_specs=pl.BlockSpec((Bblk, S, Dopad), lambda i: (i, 0, 0)),
        scratch_shapes=[pltpu.VMEM((Bblk * S, Dm), jnp.float32)],
        compiler_params=pltpu.CompilerParams(
            dimension_semantics=("parallel",)),
    )(x.reshape(B, S, Din), pos, params["w_in"], params["b_in"],
      params["wqkv"], params["bqkv"], params["wo"], params["bo"],
      params["ln1_g"], params["ln1_b"],
      params["w1"], params["b1"], params["w2"], params["b2"],
      params["ln2_g"], params["ln2_b"],
      w_out_p, b_out_p)

    return out_pad[:, :, :Do].reshape(B, T, E, Do)


# ----------------------------------------------------------------------------
# Parameter initialization (deterministic, shapes implied by the module)
# ----------------------------------------------------------------------------

def init_params(key, *, input_dim, model_dim, num_heads, num_layers,
                output_dim, dim_ff):
    """Deterministic init.  Weights stored (in, out); porting a real PyTorch
    checkpoint requires transposing nn.Linear / in_proj weights and keeping
    the packed Q/K/V column ordering of nn.MultiheadAttention."""
    del num_heads
    keys = jax.random.split(key, 3 + num_layers)

    def dense(k, fin, fout, scale=0.05):
        kw, kb = jax.random.split(k)
        return (jax.random.normal(kw, (fin, fout), jnp.float32) * scale,
                jax.random.normal(kb, (fout,), jnp.float32) * scale)

    w_in, b_in = dense(keys[0], input_dim, model_dim)
    pos = jax.random.normal(keys[1], (1, 10, model_dim), jnp.float32)
    w_out, b_out = dense(keys[2], model_dim, output_dim)

    wqkv, bqkv, wo, bo, w1, b1, w2, b2 = ([] for _ in range(8))
    for l in range(num_layers):
        lk = jax.random.split(keys[3 + l], 4)
        wq_, bq_ = dense(lk[0], model_dim, 3 * model_dim)    # fused Q/K/V
        wo_, bo_ = dense(lk[1], model_dim, model_dim)
        w1_, b1_ = dense(lk[2], model_dim, dim_ff)
        w2_, b2_ = dense(lk[3], dim_ff, model_dim)
        wqkv.append(wq_); bqkv.append(bq_.reshape(1, -1))
        wo.append(wo_);   bo.append(bo_.reshape(1, -1))
        w1.append(w1_);   b1.append(b1_.reshape(1, -1))
        w2.append(w2_);   b2.append(b2_.reshape(1, -1))

    L = num_layers
    ones = jnp.ones((L, 1, model_dim), jnp.float32)
    zeros = jnp.zeros((L, 1, model_dim), jnp.float32)
    return {
        "w_in": w_in, "b_in": b_in.reshape(1, -1),
        "pos_embedding": pos,
        # Matmul weights stored in bf16 (halves weight DMA; MXU consumes bf16
        # anyway).  Biases / LayerNorm parameters stay f32.
        "wqkv": jnp.stack(wqkv).astype(jnp.bfloat16), "bqkv": jnp.stack(bqkv),
        "wo": jnp.stack(wo).astype(jnp.bfloat16),     "bo": jnp.stack(bo),
        "ln1_g": ones, "ln1_b": zeros,
        "w1": jnp.stack(w1).astype(jnp.bfloat16),     "b1": jnp.stack(b1),
        "w2": jnp.stack(w2).astype(jnp.bfloat16),     "b2": jnp.stack(b2),
        "ln2_g": ones, "ln2_b": zeros,
        "w_out": w_out, "b_out": b_out,
    }


# ----------------------------------------------------------------------------
# Demo
# ----------------------------------------------------------------------------

if __name__ == "__main__":
    # Small shapes consistent with the module: model_dim keeps its default 128
    # (lane-aligned), dim_ff keeps the nn.TransformerEncoderLayer default 2048.
    n_entities = 4
    input_dim = 2
    model_dim = 128
    num_heads = 4
    num_layers = 2
    output_dim = 2
    dim_ff = 2048
    B, T, E = 2, 2, n_entities       # S = T*E = 8 <= 10 * n_entities

    key = jax.random.PRNGKey(0)
    pkey, xkey = jax.random.split(key)

    params = init_params(
        pkey, input_dim=input_dim, model_dim=model_dim, num_heads=num_heads,
        num_layers=num_layers, output_dim=output_dim, dim_ff=dim_ff)

    x = jax.random.normal(xkey, (B, T, E, input_dim), jnp.float32)

    fwd = jax.jit(functools.partial(
        trajectory_transformer_forward, num_heads=num_heads,
        n_entities=n_entities))
    out = fwd(params, x)
    jax.block_until_ready(out)

    assert out.shape == (B, T, E, output_dim), out.shape
    assert bool(jnp.all(jnp.isfinite(out)))
    print("KERNEL_OK")
</pallas_src>

<mosaic_0001>
module attributes {stable_mosaic.version = 11 : i64} {
  func.func @_fused_forward_kernel(%arg0: i32, %arg1: memref<1x8x2xf32, #tpu.memory_space<vmem>>, %arg2: memref<8x128xf32, #tpu.memory_space<vmem>>, %arg3: memref<2x128xf32, #tpu.memory_space<vmem>>, %arg4: memref<1x128xf32, #tpu.memory_space<vmem>>, %arg5: memref<2x128x384xbf16, #tpu.memory_space<vmem>>, %arg6: memref<2x1x384xf32, #tpu.memory_space<vmem>>, %arg7: memref<2x128x128xbf16, #tpu.memory_space<vmem>>, %arg8: memref<2x1x128xf32, #tpu.memory_space<vmem>>, %arg9: memref<2x1x128xf32, #tpu.memory_space<vmem>>, %arg10: memref<2x1x128xf32, #tpu.memory_space<vmem>>, %arg11: memref<2x128x2048xbf16, #tpu.memory_space<vmem>>, %arg12: memref<2x1x2048xf32, #tpu.memory_space<vmem>>, %arg13: memref<2x2048x128xbf16, #tpu.memory_space<vmem>>, %arg14: memref<2x1x128xf32, #tpu.memory_space<vmem>>, %arg15: memref<2x1x128xf32, #tpu.memory_space<vmem>>, %arg16: memref<2x1x128xf32, #tpu.memory_space<vmem>>, %arg17: memref<128x128xbf16, #tpu.memory_space<vmem>>, %arg18: memref<1x128xf32, #tpu.memory_space<vmem>>, %arg19: memref<1x8x128xf32, #tpu.memory_space<vmem>>, %arg20: memref<8x128xf32, #tpu.memory_space<vmem>>) attributes {dimension_semantics = [#tpu.dimension_semantics<parallel>], iteration_bounds = array<i64: 2>, scalar_prefetch = 0 : i64, scratch_operands = 1 : i64, tpu.core_type = #tpu.core_type<tc>, window_params = [{transform_indices = @transform_0, window_bounds = array<i64: 1, 8, 2>}, {pipeline_mode = #tpu.pipeline_mode<synchronous>, transform_indices = @transform_1, window_bounds = array<i64: 8, 128>}, {pipeline_mode = #tpu.pipeline_mode<synchronous>, transform_indices = @transform_2, window_bounds = array<i64: 2, 128>}, {pipeline_mode = #tpu.pipeline_mode<synchronous>, transform_indices = @transform_3, window_bounds = array<i64: 1, 128>}, {pipeline_mode = #tpu.pipeline_mode<synchronous>, transform_indices = @transform_4, window_bounds = array<i64: 2, 128, 384>}, {pipeline_mode = #tpu.pipeline_mode<synchronous>, transform_indices = @transform_5, window_bounds = array<i64: 2, 1, 384>}, {pipeline_mode = #tpu.pipeline_mode<synchronous>, transform_indices = @transform_6, window_bounds = array<i64: 2, 128, 128>}, {pipeline_mode = #tpu.pipeline_mode<synchronous>, transform_indices = @transform_7, window_bounds = array<i64: 2, 1, 128>}, {pipeline_mode = #tpu.pipeline_mode<synchronous>, transform_indices = @transform_8, window_bounds = array<i64: 2, 1, 128>}, {pipeline_mode = #tpu.pipeline_mode<synchronous>, transform_indices = @transform_9, window_bounds = array<i64: 2, 1, 128>}, {pipeline_mode = #tpu.pipeline_mode<synchronous>, transform_indices = @transform_10, window_bounds = array<i64: 2, 128, 2048>}, {pipeline_mode = #tpu.pipeline_mode<synchronous>, transform_indices = @transform_11, window_bounds = array<i64: 2, 1, 2048>}, {pipeline_mode = #tpu.pipeline_mode<synchronous>, transform_indices = @transform_12, window_bounds = array<i64: 2, 2048, 128>}, {pipeline_mode = #tpu.pipeline_mode<synchronous>, transform_indices = @transform_13, window_bounds = array<i64: 2, 1, 128>}, {pipeline_mode = #tpu.pipeline_mode<synchronous>, transform_indices = @transform_14, window_bounds = array<i64: 2, 1, 128>}, {pipeline_mode = #tpu.pipeline_mode<synchronous>, transform_indices = @transform_15, window_bounds = array<i64: 2, 1, 128>}, {pipeline_mode = #tpu.pipeline_mode<synchronous>, transform_indices = @transform_16, window_bounds = array<i64: 128, 128>}, {pipeline_mode = #tpu.pipeline_mode<synchronous>, transform_indices = @transform_17, window_bounds = array<i64: 1, 128>}, {transform_indices = @transform_18, window_bounds = array<i64: 1, 8, 128>}]} {
    %c0 = arith.constant 0 : index
    %c0_0 = arith.constant 0 : index
    %c0_1 = arith.constant 0 : index
    %0 = vector.load %arg1[%c0, %c0_0, %c0_1] : memref<1x8x2xf32, #tpu.memory_space<vmem>>, vector<1x8x2xf32>
    %1 = vector.shape_cast %0 : vector<1x8x2xf32> to vector<8x2xf32>
    %c0_2 = arith.constant 0 : index
    %c0_3 = arith.constant 0 : index
    %2 = vector.load %arg3[%c0_2, %c0_3] : memref<2x128xf32, #tpu.memory_space<vmem>>, vector<2x128xf32>
    %cst = arith.constant 0.000000e+00 : f32
    %3 = vector.broadcast %cst : f32 to vector<8x128xf32>
    %4 = vector.extract_strided_slice %1 {offsets = [0, 0], sizes = [8, 1], strides = [1, 1]} : vector<8x2xf32> to vector<8x1xf32>
    %5 = vector.extract_strided_slice %2 {offsets = [0, 0], sizes = [1, 128], strides = [1, 1]} : vector<2x128xf32> to vector<1x128xf32>
    %6 = vector.broadcast %4 : vector<8x1xf32> to vector<8x128xf32>
    %7 = vector.broadcast %5 : vector<1x128xf32> to vector<8x128xf32>
    %8 = arith.mulf %6, %7 : vector<8x128xf32>
    %9 = arith.addf %3, %8 : vector<8x128xf32>
    %10 = vector.extract_strided_slice %1 {offsets = [0, 1], sizes = [8, 1], strides = [1, 1]} : vector<8x2xf32> to vector<8x1xf32>
    %11 = vector.extract_strided_slice %2 {offsets = [1, 0], sizes = [1, 128], strides = [1, 1]} : vector<2x128xf32> to vector<1x128xf32>
    %12 = vector.broadcast %10 : vector<8x1xf32> to vector<8x128xf32>
    %13 = vector.broadcast %11 : vector<1x128xf32> to vector<8x128xf32>
    %14 = arith.mulf %12, %13 : vector<8x128xf32>
    %15 = arith.addf %9, %14 : vector<8x128xf32>
    %c0_4 = arith.constant 0 : index
    %c0_5 = arith.constant 0 : index
    %16 = vector.load %arg4[%c0_4, %c0_5] : memref<1x128xf32, #tpu.memory_space<vmem>>, vector<1x128xf32>
    %17 = vector.broadcast %16 : vector<1x128xf32> to vector<8x128xf32>
    %18 = arith.addf %15, %17 : vector<8x128xf32>
    %c0_6 = arith.constant 0 : index
    %c0_7 = arith.constant 0 : index
    %19 = vector.load %arg2[%c0_6, %c0_7] : memref<8x128xf32, #tpu.memory_space<vmem>>, vector<8x128xf32>
    %20 = arith.addf %18, %19 : vector<8x128xf32>
    %21 = arith.truncf %20 : vector<8x128xf32> to vector<8x128xbf16>
    %c0_8 = arith.constant 0 : index
    %c0_9 = arith.constant 0 : index
    %c0_10 = arith.constant 0 : index
    %22 = vector.load %arg5[%c0_8, %c0_9, %c0_10] : memref<2x128x384xbf16, #tpu.memory_space<vmem>>, vector<1x128x384xbf16>
    %23 = vector.shape_cast %22 : vector<1x128x384xbf16> to vector<128x384xbf16>
    %cst_11 = arith.constant dense<0.000000e+00> : vector<8x384xf32>
    %24 = tpu.matmul %21, %23, %cst_11 {dimension_numbers = #tpu.dot_dimension_numbers<[1], [0], [0], [1], [0, 0, 1, 1], [], []>} : vector<8x128xbf16>, vector<128x384xbf16>, vector<8x384xf32> -> vector<8x384xf32>
    %c0_12 = arith.constant 0 : index
    %c0_13 = arith.constant 0 : index
    %c0_14 = arith.constant 0 : index
    %25 = vector.load %arg6[%c0_12, %c0_13, %c0_14] : memref<2x1x384xf32, #tpu.memory_space<vmem>>, vector<1x1x384xf32>
    %26 = vector.shape_cast %25 : vector<1x1x384xf32> to vector<1x384xf32>
    %27 = vector.broadcast %26 : vector<1x384xf32> to vector<8x384xf32>
    %28 = arith.addf %24, %27 : vector<8x384xf32>
    %29 = vector.extract_strided_slice %28 {offsets = [0, 0], sizes = [8, 128], strides = [1, 1]} : vector<8x384xf32> to vector<8x128xf32>
    %cst_15 = arith.constant 0.176776692 : f32
    %30 = vector.broadcast %cst_15 : f32 to vector<8x128xf32>
    %31 = arith.mulf %29, %30 : vector<8x128xf32>
    %32 = vector.extract_strided_slice %28 {offsets = [0, 128], sizes = [8, 128], strides = [1, 1]} : vector<8x384xf32> to vector<8x128xf32>
    %33 = vector.extract_strided_slice %28 {offsets = [0, 256], sizes = [8, 128], strides = [1, 1]} : vector<8x384xf32> to vector<8x128xf32>
    %34 = vector.extract_strided_slice %31 {offsets = [0, 0], sizes = [8, 32], strides = [1, 1]} : vector<8x128xf32> to vector<8x32xf32>
    %35 = arith.truncf %34 : vector<8x32xf32> to vector<8x32xbf16>
    %36 = vector.extract_strided_slice %32 {offsets = [0, 0], sizes = [8, 32], strides = [1, 1]} : vector<8x128xf32> to vector<8x32xf32>
    %37 = arith.truncf %36 : vector<8x32xf32> to vector<8x32xbf16>
    %38 = vector.extract_strided_slice %33 {offsets = [0, 0], sizes = [8, 32], strides = [1, 1]} : vector<8x128xf32> to vector<8x32xf32>
    %39 = arith.truncf %38 : vector<8x32xf32> to vector<8x32xbf16>
    %cst_16 = arith.constant dense<0.000000e+00> : vector<8x8xf32>
    %40 = tpu.matmul %35, %37, %cst_16 {dimension_numbers = #tpu.dot_dimension_numbers<[1], [1], [0], [0], [0, 0, 1, 0], [], []>} : vector<8x32xbf16>, vector<8x32xbf16>, vector<8x8xf32> -> vector<8x8xf32>
    %cst_17 = arith.constant dense<0xFF800000> : vector<8xf32>
    %41 = vector.multi_reduction <maximumf>, %40, %cst_17 [1] : vector<8x8xf32> to vector<8xf32>
    %42 = vector.shape_cast %41 : vector<8xf32> to vector<8x1xf32>
    %43 = vector.broadcast %42 : vector<8x1xf32> to vector<8x8xf32>
    %44 = arith.subf %40, %43 : vector<8x8xf32>
    %45 = math.exp %44 : vector<8x8xf32>
    %cst_18 = arith.constant dense<0.000000e+00> : vector<8xf32>
    %46 = vector.multi_reduction <add>, %45, %cst_18 [1] : vector<8x8xf32> to vector<8xf32>
    %47 = vector.shape_cast %46 : vector<8xf32> to vector<8x1xf32>
    %48 = tpu.reciprocal %47 {approx = true} : vector<8x1xf32> -> vector<8x1xf32>
    %49 = arith.truncf %45 : vector<8x8xf32> to vector<8x8xbf16>
    %cst_19 = arith.constant dense<0.000000e+00> : vector<8x32xf32>
    %50 = tpu.matmul %49, %39, %cst_19 {dimension_numbers = #tpu.dot_dimension_numbers<[1], [0], [0], [1], [0, 0, 1, 1], [], []>} : vector<8x8xbf16>, vector<8x32xbf16>, vector<8x32xf32> -> vector<8x32xf32>
    %51 = vector.broadcast %48 : vector<8x1xf32> to vector<8x32xf32>
    %52 = arith.mulf %50, %51 : vector<8x32xf32>
    %c0_20 = arith.constant 0 : index
    %c0_21 = arith.constant 0 : index
    %53 = vector.load %arg20[%c0_20, %c0_21] : memref<8x128xf32, #tpu.memory_space<vmem>>, vector<8x32xf32>
    tpu.vector_store %arg20[%c0_20, %c0_21], %52 {strides = array<i32>} : memref<8x128xf32, #tpu.memory_space<vmem>>, vector<8x32xf32>,
    %54 = vector.extract_strided_slice %31 {offsets = [0, 32], sizes = [8, 32], strides = [1, 1]} : vector<8x128xf32> to vector<8x32xf32>
    %55 = arith.truncf %54 : vector<8x32xf32> to vector<8x32xbf16>
    %56 = vector.extract_strided_slice %32 {offsets = [0, 32], sizes = [8, 32], strides = [1, 1]} : vector<8x128xf32> to vector<8x32xf32>
    %57 = arith.truncf %56 : vector<8x32xf32> to vector<8x32xbf16>
    %58 = vector.extract_strided_slice %33 {offsets = [0, 32], sizes = [8, 32], strides = [1, 1]} : vector<8x128xf32> to vector<8x32xf32>
    %59 = arith.truncf %58 : vector<8x32xf32> to vector<8x32xbf16>
    %cst_22 = arith.constant dense<0.000000e+00> : vector<8x8xf32>
    %60 = tpu.matmul %55, %57, %cst_22 {dimension_numbers = #tpu.dot_dimension_numbers<[1], [1], [0], [0], [0, 0, 1, 0], [], []>} : vector<8x32xbf16>, vector<8x32xbf16>, vector<8x8xf32> -> vector<8x8xf32>
    %cst_23 = arith.constant dense<0xFF800000> : vector<8xf32>
    %61 = vector.multi_reduction <maximumf>, %60, %cst_23 [1] : vector<8x8xf32> to vector<8xf32>
    %62 = vector.shape_cast %61 : vector<8xf32> to vector<8x1xf32>
    %63 = vector.broadcast %62 : vector<8x1xf32> to vector<8x8xf32>
    %64 = arith.subf %60, %63 : vector<8x8xf32>
    %65 = math.exp %64 : vector<8x8xf32>
    %cst_24 = arith.constant dense<0.000000e+00> : vector<8xf32>
    %66 = vector.multi_reduction <add>, %65, %cst_24 [1] : vector<8x8xf32> to vector<8xf32>
    %67 = vector.shape_cast %66 : vector<8xf32> to vector<8x1xf32>
    %68 = tpu.reciprocal %67 {approx = true} : vector<8x1xf32> -> vector<8x1xf32>
    %69 = arith.truncf %65 : vector<8x8xf32> to vector<8x8xbf16>
    %cst_25 = arith.constant dense<0.000000e+00> : vector<8x32xf32>
    %70 = tpu.matmul %69, %59, %cst_25 {dimension_numbers = #tpu.dot_dimension_numbers<[1], [0], [0], [1], [0, 0, 1, 1], [], []>} : vector<8x8xbf16>, vector<8x32xbf16>, vector<8x32xf32> -> vector<8x32xf32>
    %71 = vector.broadcast %68 : vector<8x1xf32> to vector<8x32xf32>
    %72 = arith.mulf %70, %71 : vector<8x32xf32>
    %c0_26 = arith.constant 0 : index
    %c32 = arith.constant 32 : index
    %73 = vector.load %arg20[%c0_26, %c32] : memref<8x128xf32, #tpu.memory_space<vmem>>, vector<8x32xf32>
    tpu.vector_store %arg20[%c0_26, %c32], %72 {strides = array<i32>} : memref<8x128xf32, #tpu.memory_space<vmem>>, vector<8x32xf32>,
    %74 = vector.extract_strided_slice %31 {offsets = [0, 64], sizes = [8, 32], strides = [1, 1]} : vector<8x128xf32> to vector<8x32xf32>
    %75 = arith.truncf %74 : vector<8x32xf32> to vector<8x32xbf16>
    %76 = vector.extract_strided_slice %32 {offsets = [0, 64], sizes = [8, 32], strides = [1, 1]} : vector<8x128xf32> to vector<8x32xf32>
    %77 = arith.truncf %76 : vector<8x32xf32> to vector<8x32xbf16>
    %78 = vector.extract_strided_slice %33 {offsets = [0, 64], sizes = [8, 32], strides = [1, 1]} : vector<8x128xf32> to vector<8x32xf32>
    %79 = arith.truncf %78 : vector<8x32xf32> to vector<8x32xbf16>
    %cst_27 = arith.constant dense<0.000000e+00> : vector<8x8xf32>
    %80 = tpu.matmul %75, %77, %cst_27 {dimension_numbers = #tpu.dot_dimension_numbers<[1], [1], [0], [0], [0, 0, 1, 0], [], []>} : vector<8x32xbf16>, vector<8x32xbf16>, vector<8x8xf32> -> vector<8x8xf32>
    %cst_28 = arith.constant dense<0xFF800000> : vector<8xf32>
    %81 = vector.multi_reduction <maximumf>, %80, %cst_28 [1] : vector<8x8xf32> to vector<8xf32>
    %82 = vector.shape_cast %81 : vector<8xf32> to vector<8x1xf32>
    %83 = vector.broadcast %82 : vector<8x1xf32> to vector<8x8xf32>
    %84 = arith.subf %80, %83 : vector<8x8xf32>
    %85 = math.exp %84 : vector<8x8xf32>
    %cst_29 = arith.constant dense<0.000000e+00> : vector<8xf32>
    %86 = vector.multi_reduction <add>, %85, %cst_29 [1] : vector<8x8xf32> to vector<8xf32>
    %87 = vector.shape_cast %86 : vector<8xf32> to vector<8x1xf32>
    %88 = tpu.reciprocal %87 {approx = true} : vector<8x1xf32> -> vector<8x1xf32>
    %89 = arith.truncf %85 : vector<8x8xf32> to vector<8x8xbf16>
    %cst_30 = arith.constant dense<0.000000e+00> : vector<8x32xf32>
    %90 = tpu.matmul %89, %79, %cst_30 {dimension_numbers = #tpu.dot_dimension_numbers<[1], [0], [0], [1], [0, 0, 1, 1], [], []>} : vector<8x8xbf16>, vector<8x32xbf16>, vector<8x32xf32> -> vector<8x32xf32>
    %91 = vector.broadcast %88 : vector<8x1xf32> to vector<8x32xf32>
    %92 = arith.mulf %90, %91 : vector<8x32xf32>
    %c0_31 = arith.constant 0 : index
    %c64 = arith.constant 64 : index
    %93 = vector.load %arg20[%c0_31, %c64] : memref<8x128xf32, #tpu.memory_space<vmem>>, vector<8x32xf32>
    tpu.vector_store %arg20[%c0_31, %c64], %92 {strides = array<i32>} : memref<8x128xf32, #tpu.memory_space<vmem>>, vector<8x32xf32>,
    %94 = vector.extract_strided_slice %31 {offsets = [0, 96], sizes = [8, 32], strides = [1, 1]} : vector<8x128xf32> to vector<8x32xf32>
    %95 = arith.truncf %94 : vector<8x32xf32> to vector<8x32xbf16>
    %96 = vector.extract_strided_slice %32 {offsets = [0, 96], sizes = [8, 32], strides = [1, 1]} : vector<8x128xf32> to vector<8x32xf32>
    %97 = arith.truncf %96 : vector<8x32xf32> to vector<8x32xbf16>
    %98 = vector.extract_strided_slice %33 {offsets = [0, 96], sizes = [8, 32], strides = [1, 1]} : vector<8x128xf32> to vector<8x32xf32>
    %99 = arith.truncf %98 : vector<8x32xf32> to vector<8x32xbf16>
    %cst_32 = arith.constant dense<0.000000e+00> : vector<8x8xf32>
    %100 = tpu.matmul %95, %97, %cst_32 {dimension_numbers = #tpu.dot_dimension_numbers<[1], [1], [0], [0], [0, 0, 1, 0], [], []>} : vector<8x32xbf16>, vector<8x32xbf16>, vector<8x8xf32> -> vector<8x8xf32>
    %cst_33 = arith.constant dense<0xFF800000> : vector<8xf32>
    %101 = vector.multi_reduction <maximumf>, %100, %cst_33 [1] : vector<8x8xf32> to vector<8xf32>
    %102 = vector.shape_cast %101 : vector<8xf32> to vector<8x1xf32>
    %103 = vector.broadcast %102 : vector<8x1xf32> to vector<8x8xf32>
    %104 = arith.subf %100, %103 : vector<8x8xf32>
    %105 = math.exp %104 : vector<8x8xf32>
    %cst_34 = arith.constant dense<0.000000e+00> : vector<8xf32>
    %106 = vector.multi_reduction <add>, %105, %cst_34 [1] : vector<8x8xf32> to vector<8xf32>
    %107 = vector.shape_cast %106 : vector<8xf32> to vector<8x1xf32>
    %108 = tpu.reciprocal %107 {approx = true} : vector<8x1xf32> -> vector<8x1xf32>
    %109 = arith.truncf %105 : vector<8x8xf32> to vector<8x8xbf16>
    %cst_35 = arith.constant dense<0.000000e+00> : vector<8x32xf32>
    %110 = tpu.matmul %109, %99, %cst_35 {dimension_numbers = #tpu.dot_dimension_numbers<[1], [0], [0], [1], [0, 0, 1, 1], [], []>} : vector<8x8xbf16>, vector<8x32xbf16>, vector<8x32xf32> -> vector<8x32xf32>
    %111 = vector.broadcast %108 : vector<8x1xf32> to vector<8x32xf32>
    %112 = arith.mulf %110, %111 : vector<8x32xf32>
    %c0_36 = arith.constant 0 : index
    %c96 = arith.constant 96 : index
    %113 = vector.load %arg20[%c0_36, %c96] : memref<8x128xf32, #tpu.memory_space<vmem>>, vector<8x32xf32>
    tpu.vector_store %arg20[%c0_36, %c96], %112 {strides = array<i32>} : memref<8x128xf32, #tpu.memory_space<vmem>>, vector<8x32xf32>,
    %c0_37 = arith.constant 0 : index
    %c0_38 = arith.constant 0 : index
    %114 = vector.load %arg20[%c0_37, %c0_38] : memref<8x128xf32, #tpu.memory_space<vmem>>, vector<8x128xf32>
    %115 = arith.truncf %114 : vector<8x128xf32> to vector<8x128xbf16>
    %c0_39 = arith.constant 0 : index
    %c0_40 = arith.constant 0 : index
    %c0_41 = arith.constant 0 : index
    %116 = vector.load %arg7[%c0_39, %c0_40, %c0_41] : memref<2x128x128xbf16, #tpu.memory_space<vmem>>, vector<1x128x128xbf16>
    %117 = vector.shape_cast %116 : vector<1x128x128xbf16> to vector<128x128xbf16>
    %cst_42 = arith.constant dense<0.000000e+00> : vector<8x128xf32>
    %118 = tpu.matmul %115, %117, %cst_42 {dimension_numbers = #tpu.dot_dimension_numbers<[1], [0], [0], [1], [0, 0, 1, 1], [], []>} : vector<8x128xbf16>, vector<128x128xbf16>, vector<8x128xf32> -> vector<8x128xf32>
    %c0_43 = arith.constant 0 : index
    %c0_44 = arith.constant 0 : index
    %c0_45 = arith.constant 0 : index
    %119 = vector.load %arg8[%c0_43, %c0_44, %c0_45] : memref<2x1x128xf32, #tpu.memory_space<vmem>>, vector<1x1x128xf32>
    %120 = vector.shape_cast %119 : vector<1x1x128xf32> to vector<1x128xf32>
    %121 = vector.broadcast %120 : vector<1x128xf32> to vector<8x128xf32>
    %122 = arith.addf %118, %121 : vector<8x128xf32>
    %123 = arith.addf %20, %122 : vector<8x128xf32>
    %cst_46 = arith.constant dense<0.000000e+00> : vector<8xf32>
    %124 = vector.multi_reduction <add>, %123, %cst_46 [1] : vector<8x128xf32> to vector<8xf32>
    %125 = vector.shape_cast %124 : vector<8xf32> to vector<8x1xf32>
    %cst_47 = arith.constant 1.280000e+02 : f32
    %126 = vector.broadcast %cst_47 : f32 to vector<8x1xf32>
    %127 = arith.divf %125, %126 : vector<8x1xf32>
    %128 = vector.broadcast %127 : vector<8x1xf32> to vector<8x128xf32>
    %129 = arith.subf %123, %128 : vector<8x128xf32>
    %130 = arith.mulf %129, %129 : vector<8x128xf32>
    %cst_48 = arith.constant dense<0.000000e+00> : vector<8xf32>
    %131 = vector.multi_reduction <add>, %130, %cst_48 [1] : vector<8x128xf32> to vector<8xf32>
    %132 = vector.shape_cast %131 : vector<8xf32> to vector<8x1xf32>
    %cst_49 = arith.constant 1.280000e+02 : f32
    %133 = vector.broadcast %cst_49 : f32 to vector<8x1xf32>
    %134 = arith.divf %132, %133 : vector<8x1xf32>
    %135 = vector.broadcast %127 : vector<8x1xf32> to vector<8x128xf32>
    %136 = arith.subf %123, %135 : vector<8x128xf32>
    %cst_50 = arith.constant 9.99999974E-6 : f32
    %137 = vector.broadcast %cst_50 : f32 to vector<8x1xf32>
    %138 = arith.addf %134, %137 : vector<8x1xf32>
    %139 = math.rsqrt %138 : vector<8x1xf32>
    %140 = vector.broadcast %139 : vector<8x1xf32> to vector<8x128xf32>
    %141 = arith.mulf %136, %140 : vector<8x128xf32>
    %c0_51 = arith.constant 0 : index
    %c0_52 = arith.constant 0 : index
    %c0_53 = arith.constant 0 : index
    %142 = vector.load %arg9[%c0_51, %c0_52, %c0_53] : memref<2x1x128xf32, #tpu.memory_space<vmem>>, vector<1x1x128xf32>
    %143 = vector.shape_cast %142 : vector<1x1x128xf32> to vector<1x128xf32>
    %144 = vector.broadcast %143 : vector<1x128xf32> to vector<8x128xf32>
    %145 = arith.mulf %141, %144 : vector<8x128xf32>
    %c0_54 = arith.constant 0 : index
    %c0_55 = arith.constant 0 : index
    %c0_56 = arith.constant 0 : index
    %146 = vector.load %arg10[%c0_54, %c0_55, %c0_56] : memref<2x1x128xf32, #tpu.memory_space<vmem>>, vector<1x1x128xf32>
    %147 = vector.shape_cast %146 : vector<1x1x128xf32> to vector<1x128xf32>
    %148 = vector.broadcast %147 : vector<1x128xf32> to vector<8x128xf32>
    %149 = arith.addf %145, %148 : vector<8x128xf32>
    %150 = arith.truncf %149 : vector<8x128xf32> to vector<8x128xbf16>
    %c0_57 = arith.constant 0 : index
    %c0_58 = arith.constant 0 : index
    %c0_59 = arith.constant 0 : index
    %151 = vector.load %arg11[%c0_57, %c0_58, %c0_59] : memref<2x128x2048xbf16, #tpu.memory_space<vmem>>, vector<1x128x2048xbf16>
    %152 = vector.shape_cast %151 : vector<1x128x2048xbf16> to vector<128x2048xbf16>
    %cst_60 = arith.constant dense<0.000000e+00> : vector<8x2048xf32>
    %153 = tpu.matmul %150, %152, %cst_60 {dimension_numbers = #tpu.dot_dimension_numbers<[1], [0], [0], [1], [0, 0, 1, 1], [], []>} : vector<8x128xbf16>, vector<128x2048xbf16>, vector<8x2048xf32> -> vector<8x2048xf32>
    %c0_61 = arith.constant 0 : index
    %c0_62 = arith.constant 0 : index
    %c0_63 = arith.constant 0 : index
    %154 = vector.load %arg12[%c0_61, %c0_62, %c0_63] : memref<2x1x2048xf32, #tpu.memory_space<vmem>>, vector<1x1x2048xf32>
    %155 = vector.shape_cast %154 : vector<1x1x2048xf32> to vector<1x2048xf32>
    %156 = vector.broadcast %155 : vector<1x2048xf32> to vector<8x2048xf32>
    %157 = arith.addf %153, %156 : vector<8x2048xf32>
    %cst_64 = arith.constant 0.000000e+00 : f32
    %158 = vector.broadcast %cst_64 : f32 to vector<8x2048xf32>
    %159 = arith.maximumf %157, %158 : vector<8x2048xf32>
    %160 = arith.truncf %159 : vector<8x2048xf32> to vector<8x2048xbf16>
    %c0_65 = arith.constant 0 : index
    %c0_66 = arith.constant 0 : index
    %c0_67 = arith.constant 0 : index
    %161 = vector.load %arg13[%c0_65, %c0_66, %c0_67] : memref<2x2048x128xbf16, #tpu.memory_space<vmem>>, vector<1x2048x128xbf16>
    %162 = vector.shape_cast %161 : vector<1x2048x128xbf16> to vector<2048x128xbf16>
    %cst_68 = arith.constant dense<0.000000e+00> : vector<8x128xf32>
    %163 = tpu.matmul %160, %162, %cst_68 {dimension_numbers = #tpu.dot_dimension_numbers<[1], [0], [0], [1], [0, 0, 1, 1], [], []>} : vector<8x2048xbf16>, vector<2048x128xbf16>, vector<8x128xf32> -> vector<8x128xf32>
    %c0_69 = arith.constant 0 : index
    %c0_70 = arith.constant 0 : index
    %c0_71 = arith.constant 0 : index
    %164 = vector.load %arg14[%c0_69, %c0_70, %c0_71] : memref<2x1x128xf32, #tpu.memory_space<vmem>>, vector<1x1x128xf32>
    %165 = vector.shape_cast %164 : vector<1x1x128xf32> to vector<1x128xf32>
    %166 = vector.broadcast %165 : vector<1x128xf32> to vector<8x128xf32>
    %167 = arith.addf %163, %166 : vector<8x128xf32>
    %168 = arith.addf %149, %167 : vector<8x128xf32>
    %cst_72 = arith.constant dense<0.000000e+00> : vector<8xf32>
    %169 = vector.multi_reduction <add>, %168, %cst_72 [1] : vector<8x128xf32> to vector<8xf32>
    %170 = vector.shape_cast %169 : vector<8xf32> to vector<8x1xf32>
    %cst_73 = arith.constant 1.280000e+02 : f32
    %171 = vector.broadcast %cst_73 : f32 to vector<8x1xf32>
    %172 = arith.divf %170, %171 : vector<8x1xf32>
    %173 = vector.broadcast %172 : vector<8x1xf32> to vector<8x128xf32>
    %174 = arith.subf %168, %173 : vector<8x128xf32>
    %175 = arith.mulf %174, %174 : vector<8x128xf32>
    %cst_74 = arith.constant dense<0.000000e+00> : vector<8xf32>
    %176 = vector.multi_reduction <add>, %175, %cst_74 [1] : vector<8x128xf32> to vector<8xf32>
    %177 = vector.shape_cast %176 : vector<8xf32> to vector<8x1xf32>
    %cst_75 = arith.constant 1.280000e+02 : f32
    %178 = vector.broadcast %cst_75 : f32 to vector<8x1xf32>
    %179 = arith.divf %177, %178 : vector<8x1xf32>
    %180 = vector.broadcast %172 : vector<8x1xf32> to vector<8x128xf32>
    %181 = arith.subf %168, %180 : vector<8x128xf32>
    %cst_76 = arith.constant 9.99999974E-6 : f32
    %182 = vector.broadcast %cst_76 : f32 to vector<8x1xf32>
    %183 = arith.addf %179, %182 : vector<8x1xf32>
    %184 = math.rsqrt %183 : vector<8x1xf32>
    %185 = vector.broadcast %184 : vector<8x1xf32> to vector<8x128xf32>
    %186 = arith.mulf %181, %185 : vector<8x128xf32>
    %c0_77 = arith.constant 0 : index
    %c0_78 = arith.constant 0 : index
    %c0_79 = arith.constant 0 : index
    %187 = vector.load %arg15[%c0_77, %c0_78, %c0_79] : memref<2x1x128xf32, #tpu.memory_space<vmem>>, vector<1x1x128xf32>
    %188 = vector.shape_cast %187 : vector<1x1x128xf32> to vector<1x128xf32>
    %189 = vector.broadcast %188 : vector<1x128xf32> to vector<8x128xf32>
    %190 = arith.mulf %186, %189 : vector<8x128xf32>
    %c0_80 = arith.constant 0 : index
    %c0_81 = arith.constant 0 : index
    %c0_82 = arith.constant 0 : index
    %191 = vector.load %arg16[%c0_80, %c0_81, %c0_82] : memref<2x1x128xf32, #tpu.memory_space<vmem>>, vector<1x1x128xf32>
    %192 = vector.shape_cast %191 : vector<1x1x128xf32> to vector<1x128xf32>
    %193 = vector.broadcast %192 : vector<1x128xf32> to vector<8x128xf32>
    %194 = arith.addf %190, %193 : vector<8x128xf32>
    %195 = arith.truncf %194 : vector<8x128xf32> to vector<8x128xbf16>
    %c1 = arith.constant 1 : index
    %c0_83 = arith.constant 0 : index
    %c0_84 = arith.constant 0 : index
    %196 = vector.load %arg5[%c1, %c0_83, %c0_84] : memref<2x128x384xbf16, #tpu.memory_space<vmem>>, vector<1x128x384xbf16>
    %197 = vector.shape_cast %196 : vector<1x128x384xbf16> to vector<128x384xbf16>
    %cst_85 = arith.constant dense<0.000000e+00> : vector<8x384xf32>
    %198 = tpu.matmul %195, %197, %cst_85 {dimension_numbers = #tpu.dot_dimension_numbers<[1], [0], [0], [1], [0, 0, 1, 1], [], []>} : vector<8x128xbf16>, vector<128x384xbf16>, vector<8x384xf32> -> vector<8x384xf32>
    %c1_86 = arith.constant 1 : index
    %c0_87 = arith.constant 0 : index
    %c0_88 = arith.constant 0 : index
    %199 = vector.load %arg6[%c1_86, %c0_87, %c0_88] : memref<2x1x384xf32, #tpu.memory_space<vmem>>, vector<1x1x384xf32>
    %200 = vector.shape_cast %199 : vector<1x1x384xf32> to vector<1x384xf32>
    %201 = vector.broadcast %200 : vector<1x384xf32> to vector<8x384xf32>
    %202 = arith.addf %198, %201 : vector<8x384xf32>
    %203 = vector.extract_strided_slice %202 {offsets = [0, 0], sizes = [8, 128], strides = [1, 1]} : vector<8x384xf32> to vector<8x128xf32>
    %cst_89 = arith.constant 0.176776692 : f32
    %204 = vector.broadcast %cst_89 : f32 to vector<8x128xf32>
    %205 = arith.mulf %203, %204 : vector<8x128xf32>
    %206 = vector.extract_strided_slice %202 {offsets = [0, 128], sizes = [8, 128], strides = [1, 1]} : vector<8x384xf32> to vector<8x128xf32>
    %207 = vector.extract_strided_slice %202 {offsets = [0, 256], sizes = [8, 128], strides = [1, 1]} : vector<8x384xf32> to vector<8x128xf32>
    %208 = vector.extract_strided_slice %205 {offsets = [0, 0], sizes = [8, 32], strides = [1, 1]} : vector<8x128xf32> to vector<8x32xf32>
    %209 = arith.truncf %208 : vector<8x32xf32> to vector<8x32xbf16>
    %210 = vector.extract_strided_slice %206 {offsets = [0, 0], sizes = [8, 32], strides = [1, 1]} : vector<8x128xf32> to vector<8x32xf32>
    %211 = arith.truncf %210 : vector<8x32xf32> to vector<8x32xbf16>
    %212 = vector.extract_strided_slice %207 {offsets = [0, 0], sizes = [8, 32], strides = [1, 1]} : vector<8x128xf32> to vector<8x32xf32>
    %213 = arith.truncf %212 : vector<8x32xf32> to vector<8x32xbf16>
    %cst_90 = arith.constant dense<0.000000e+00> : vector<8x8xf32>
    %214 = tpu.matmul %209, %211, %cst_90 {dimension_numbers = #tpu.dot_dimension_numbers<[1], [1], [0], [0], [0, 0, 1, 0], [], []>} : vector<8x32xbf16>, vector<8x32xbf16>, vector<8x8xf32> -> vector<8x8xf32>
    %cst_91 = arith.constant dense<0xFF800000> : vector<8xf32>
    %215 = vector.multi_reduction <maximumf>, %214, %cst_91 [1] : vector<8x8xf32> to vector<8xf32>
    %216 = vector.shape_cast %215 : vector<8xf32> to vector<8x1xf32>
    %217 = vector.broadcast %216 : vector<8x1xf32> to vector<8x8xf32>
    %218 = arith.subf %214, %217 : vector<8x8xf32>
    %219 = math.exp %218 : vector<8x8xf32>
    %cst_92 = arith.constant dense<0.000000e+00> : vector<8xf32>
    %220 = vector.multi_reduction <add>, %219, %cst_92 [1] : vector<8x8xf32> to vector<8xf32>
    %221 = vector.shape_cast %220 : vector<8xf32> to vector<8x1xf32>
    %222 = tpu.reciprocal %221 {approx = true} : vector<8x1xf32> -> vector<8x1xf32>
    %223 = arith.truncf %219 : vector<8x8xf32> to vector<8x8xbf16>
    %cst_93 = arith.constant dense<0.000000e+00> : vector<8x32xf32>
    %224 = tpu.matmul %223, %213, %cst_93 {dimension_numbers = #tpu.dot_dimension_numbers<[1], [0], [0], [1], [0, 0, 1, 1], [], []>} : vector<8x8xbf16>, vector<8x32xbf16>, vector<8x32xf32> -> vector<8x32xf32>
    %225 = vector.broadcast %222 : vector<8x1xf32> to vector<8x32xf32>
    %226 = arith.mulf %224, %225 : vector<8x32xf32>
    %c0_94 = arith.constant 0 : index
    %c0_95 = arith.constant 0 : index
    %227 = vector.load %arg20[%c0_94, %c0_95] : memref<8x128xf32, #tpu.memory_space<vmem>>, vector<8x32xf32>
    tpu.vector_store %arg20[%c0_94, %c0_95], %226 {strides = array<i32>} : memref<8x128xf32, #tpu.memory_space<vmem>>, vector<8x32xf32>,
    %228 = vector.extract_strided_slice %205 {offsets = [0, 32], sizes = [8, 32], strides = [1, 1]} : vector<8x128xf32> to vector<8x32xf32>
    %229 = arith.truncf %228 : vector<8x32xf32> to vector<8x32xbf16>
    %230 = vector.extract_strided_slice %206 {offsets = [0, 32], sizes = [8, 32], strides = [1, 1]} : vector<8x128xf32> to vector<8x32xf32>
    %231 = arith.truncf %230 : vector<8x32xf32> to vector<8x32xbf16>
    %232 = vector.extract_strided_slice %207 {offsets = [0, 32], sizes = [8, 32], strides = [1, 1]} : vector<8x128xf32> to vector<8x32xf32>
    %233 = arith.truncf %232 : vector<8x32xf32> to vector<8x32xbf16>
    %cst_96 = arith.constant dense<0.000000e+00> : vector<8x8xf32>
    %234 = tpu.matmul %229, %231, %cst_96 {dimension_numbers = #tpu.dot_dimension_numbers<[1], [1], [0], [0], [0, 0, 1, 0], [], []>} : vector<8x32xbf16>, vector<8x32xbf16>, vector<8x8xf32> -> vector<8x8xf32>
    %cst_97 = arith.constant dense<0xFF800000> : vector<8xf32>
    %235 = vector.multi_reduction <maximumf>, %234, %cst_97 [1] : vector<8x8xf32> to vector<8xf32>
    %236 = vector.shape_cast %235 : vector<8xf32> to vector<8x1xf32>
    %237 = vector.broadcast %236 : vector<8x1xf32> to vector<8x8xf32>
    %238 = arith.subf %234, %237 : vector<8x8xf32>
    %239 = math.exp %238 : vector<8x8xf32>
    %cst_98 = arith.constant dense<0.000000e+00> : vector<8xf32>
    %240 = vector.multi_reduction <add>, %239, %cst_98 [1] : vector<8x8xf32> to vector<8xf32>
    %241 = vector.shape_cast %240 : vector<8xf32> to vector<8x1xf32>
    %242 = tpu.reciprocal %241 {approx = true} : vector<8x1xf32> -> vector<8x1xf32>
    %243 = arith.truncf %239 : vector<8x8xf32> to vector<8x8xbf16>
    %cst_99 = arith.constant dense<0.000000e+00> : vector<8x32xf32>
    %244 = tpu.matmul %243, %233, %cst_99 {dimension_numbers = #tpu.dot_dimension_numbers<[1], [0], [0], [1], [0, 0, 1, 1], [], []>} : vector<8x8xbf16>, vector<8x32xbf16>, vector<8x32xf32> -> vector<8x32xf32>
    %245 = vector.broadcast %242 : vector<8x1xf32> to vector<8x32xf32>
    %246 = arith.mulf %244, %245 : vector<8x32xf32>
    %c0_100 = arith.constant 0 : index
    %c32_101 = arith.constant 32 : index
    %247 = vector.load %arg20[%c0_100, %c32_101] : memref<8x128xf32, #tpu.memory_space<vmem>>, vector<8x32xf32>
    tpu.vector_store %arg20[%c0_100, %c32_101], %246 {strides = array<i32>} : memref<8x128xf32, #tpu.memory_space<vmem>>, vector<8x32xf32>,
    %248 = vector.extract_strided_slice %205 {offsets = [0, 64], sizes = [8, 32], strides = [1, 1]} : vector<8x128xf32> to vector<8x32xf32>
    %249 = arith.truncf %248 : vector<8x32xf32> to vector<8x32xbf16>
    %250 = vector.extract_strided_slice %206 {offsets = [0, 64], sizes = [8, 32], strides = [1, 1]} : vector<8x128xf32> to vector<8x32xf32>
    %251 = arith.truncf %250 : vector<8x32xf32> to vector<8x32xbf16>
    %252 = vector.extract_strided_slice %207 {offsets = [0, 64], sizes = [8, 32], strides = [1, 1]} : vector<8x128xf32> to vector<8x32xf32>
    %253 = arith.truncf %252 : vector<8x32xf32> to vector<8x32xbf16>
    %cst_102 = arith.constant dense<0.000000e+00> : vector<8x8xf32>
    %254 = tpu.matmul %249, %251, %cst_102 {dimension_numbers = #tpu.dot_dimension_numbers<[1], [1], [0], [0], [0, 0, 1, 0], [], []>} : vector<8x32xbf16>, vector<8x32xbf16>, vector<8x8xf32> -> vector<8x8xf32>
    %cst_103 = arith.constant dense<0xFF800000> : vector<8xf32>
    %255 = vector.multi_reduction <maximumf>, %254, %cst_103 [1] : vector<8x8xf32> to vector<8xf32>
    %256 = vector.shape_cast %255 : vector<8xf32> to vector<8x1xf32>
    %257 = vector.broadcast %256 : vector<8x1xf32> to vector<8x8xf32>
    %258 = arith.subf %254, %257 : vector<8x8xf32>
    %259 = math.exp %258 : vector<8x8xf32>
    %cst_104 = arith.constant dense<0.000000e+00> : vector<8xf32>
    %260 = vector.multi_reduction <add>, %259, %cst_104 [1] : vector<8x8xf32> to vector<8xf32>
    %261 = vector.shape_cast %260 : vector<8xf32> to vector<8x1xf32>
    %262 = tpu.reciprocal %261 {approx = true} : vector<8x1xf32> -> vector<8x1xf32>
    %263 = arith.truncf %259 : vector<8x8xf32> to vector<8x8xbf16>
    %cst_105 = arith.constant dense<0.000000e+00> : vector<8x32xf32>
    %264 = tpu.matmul %263, %253, %cst_105 {dimension_numbers = #tpu.dot_dimension_numbers<[1], [0], [0], [1], [0, 0, 1, 1], [], []>} : vector<8x8xbf16>, vector<8x32xbf16>, vector<8x32xf32> -> vector<8x32xf32>
    %265 = vector.broadcast %262 : vector<8x1xf32> to vector<8x32xf32>
    %266 = arith.mulf %264, %265 : vector<8x32xf32>
    %c0_106 = arith.constant 0 : index
    %c64_107 = arith.constant 64 : index
    %267 = vector.load %arg20[%c0_106, %c64_107] : memref<8x128xf32, #tpu.memory_space<vmem>>, vector<8x32xf32>
    tpu.vector_store %arg20[%c0_106, %c64_107], %266 {strides = array<i32>} : memref<8x128xf32, #tpu.memory_space<vmem>>, vector<8x32xf32>,
    %268 = vector.extract_strided_slice %205 {offsets = [0, 96], sizes = [8, 32], strides = [1, 1]} : vector<8x128xf32> to vector<8x32xf32>
    %269 = arith.truncf %268 : vector<8x32xf32> to vector<8x32xbf16>
    %270 = vector.extract_strided_slice %206 {offsets = [0, 96], sizes = [8, 32], strides = [1, 1]} : vector<8x128xf32> to vector<8x32xf32>
    %271 = arith.truncf %270 : vector<8x32xf32> to vector<8x32xbf16>
    %272 = vector.extract_strided_slice %207 {offsets = [0, 96], sizes = [8, 32], strides = [1, 1]} : vector<8x128xf32> to vector<8x32xf32>
    %273 = arith.truncf %272 : vector<8x32xf32> to vector<8x32xbf16>
    %cst_108 = arith.constant dense<0.000000e+00> : vector<8x8xf32>
    %274 = tpu.matmul %269, %271, %cst_108 {dimension_numbers = #tpu.dot_dimension_numbers<[1], [1], [0], [0], [0, 0, 1, 0], [], []>} : vector<8x32xbf16>, vector<8x32xbf16>, vector<8x8xf32> -> vector<8x8xf32>
    %cst_109 = arith.constant dense<0xFF800000> : vector<8xf32>
    %275 = vector.multi_reduction <maximumf>, %274, %cst_109 [1] : vector<8x8xf32> to vector<8xf32>
    %276 = vector.shape_cast %275 : vector<8xf32> to vector<8x1xf32>
    %277 = vector.broadcast %276 : vector<8x1xf32> to vector<8x8xf32>
    %278 = arith.subf %274, %277 : vector<8x8xf32>
    %279 = math.exp %278 : vector<8x8xf32>
    %cst_110 = arith.constant dense<0.000000e+00> : vector<8xf32>
    %280 = vector.multi_reduction <add>, %279, %cst_110 [1] : vector<8x8xf32> to vector<8xf32>
    %281 = vector.shape_cast %280 : vector<8xf32> to vector<8x1xf32>
    %282 = tpu.reciprocal %281 {approx = true} : vector<8x1xf32> -> vector<8x1xf32>
    %283 = arith.truncf %279 : vector<8x8xf32> to vector<8x8xbf16>
    %cst_111 = arith.constant dense<0.000000e+00> : vector<8x32xf32>
    %284 = tpu.matmul %283, %273, %cst_111 {dimension_numbers = #tpu.dot_dimension_numbers<[1], [0], [0], [1], [0, 0, 1, 1], [], []>} : vector<8x8xbf16>, vector<8x32xbf16>, vector<8x32xf32> -> vector<8x32xf32>
    %285 = vector.broadcast %282 : vector<8x1xf32> to vector<8x32xf32>
    %286 = arith.mulf %284, %285 : vector<8x32xf32>
    %c0_112 = arith.constant 0 : index
    %c96_113 = arith.constant 96 : index
    %287 = vector.load %arg20[%c0_112, %c96_113] : memref<8x128xf32, #tpu.memory_space<vmem>>, vector<8x32xf32>
    tpu.vector_store %arg20[%c0_112, %c96_113], %286 {strides = array<i32>} : memref<8x128xf32, #tpu.memory_space<vmem>>, vector<8x32xf32>,
    %c0_114 = arith.constant 0 : index
    %c0_115 = arith.constant 0 : index
    %288 = vector.load %arg20[%c0_114, %c0_115] : memref<8x128xf32, #tpu.memory_space<vmem>>, vector<8x128xf32>
    %289 = arith.truncf %288 : vector<8x128xf32> to vector<8x128xbf16>
    %c1_116 = arith.constant 1 : index
    %c0_117 = arith.constant 0 : index
    %c0_118 = arith.constant 0 : index
    %290 = vector.load %arg7[%c1_116, %c0_117, %c0_118] : memref<2x128x128xbf16, #tpu.memory_space<vmem>>, vector<1x128x128xbf16>
    %291 = vector.shape_cast %290 : vector<1x128x128xbf16> to vector<128x128xbf16>
    %cst_119 = arith.constant dense<0.000000e+00> : vector<8x128xf32>
    %292 = tpu.matmul %289, %291, %cst_119 {dimension_numbers = #tpu.dot_dimension_numbers<[1], [0], [0], [1], [0, 0, 1, 1], [], []>} : vector<8x128xbf16>, vector<128x128xbf16>, vector<8x128xf32> -> vector<8x128xf32>
    %c1_120 = arith.constant 1 : index
    %c0_121 = arith.constant 0 : index
    %c0_122 = arith.constant 0 : index
    %293 = vector.load %arg8[%c1_120, %c0_121, %c0_122] : memref<2x1x128xf32, #tpu.memory_space<vmem>>, vector<1x1x128xf32>
    %294 = vector.shape_cast %293 : vector<1x1x128xf32> to vector<1x128xf32>
    %295 = vector.broadcast %294 : vector<1x128xf32> to vector<8x128xf32>
    %296 = arith.addf %292, %295 : vector<8x128xf32>
    %297 = arith.addf %194, %296 : vector<8x128xf32>
    %cst_123 = arith.constant dense<0.000000e+00> : vector<8xf32>
    %298 = vector.multi_reduction <add>, %297, %cst_123 [1] : vector<8x128xf32> to vector<8xf32>
    %299 = vector.shape_cast %298 : vector<8xf32> to vector<8x1xf32>
    %cst_124 = arith.constant 1.280000e+02 : f32
    %300 = vector.broadcast %cst_124 : f32 to vector<8x1xf32>
    %301 = arith.divf %299, %300 : vector<8x1xf32>
    %302 = vector.broadcast %301 : vector<8x1xf32> to vector<8x128xf32>
    %303 = arith.subf %297, %302 : vector<8x128xf32>
    %304 = arith.mulf %303, %303 : vector<8x128xf32>
    %cst_125 = arith.constant dense<0.000000e+00> : vector<8xf32>
    %305 = vector.multi_reduction <add>, %304, %cst_125 [1] : vector<8x128xf32> to vector<8xf32>
    %306 = vector.shape_cast %305 : vector<8xf32> to vector<8x1xf32>
    %cst_126 = arith.constant 1.280000e+02 : f32
    %307 = vector.broadcast %cst_126 : f32 to vector<8x1xf32>
    %308 = arith.divf %306, %307 : vector<8x1xf32>
    %309 = vector.broadcast %301 : vector<8x1xf32> to vector<8x128xf32>
    %310 = arith.subf %297, %309 : vector<8x128xf32>
    %cst_127 = arith.constant 9.99999974E-6 : f32
    %311 = vector.broadcast %cst_127 : f32 to vector<8x1xf32>
    %312 = arith.addf %308, %311 : vector<8x1xf32>
    %313 = math.rsqrt %312 : vector<8x1xf32>
    %314 = vector.broadcast %313 : vector<8x1xf32> to vector<8x128xf32>
    %315 = arith.mulf %310, %314 : vector<8x128xf32>
    %c1_128 = arith.constant 1 : index
    %c0_129 = arith.constant 0 : index
    %c0_130 = arith.constant 0 : index
    %316 = vector.load %arg9[%c1_128, %c0_129, %c0_130] : memref<2x1x128xf32, #tpu.memory_space<vmem>>, vector<1x1x128xf32>
    %317 = vector.shape_cast %316 : vector<1x1x128xf32> to vector<1x128xf32>
    %318 = vector.broadcast %317 : vector<1x128xf32> to vector<8x128xf32>
    %319 = arith.mulf %315, %318 : vector<8x128xf32>
    %c1_131 = arith.constant 1 : index
    %c0_132 = arith.constant 0 : index
    %c0_133 = arith.constant 0 : index
    %320 = vector.load %arg10[%c1_131, %c0_132, %c0_133] : memref<2x1x128xf32, #tpu.memory_space<vmem>>, vector<1x1x128xf32>
    %321 = vector.shape_cast %320 : vector<1x1x128xf32> to vector<1x128xf32>
    %322 = vector.broadcast %321 : vector<1x128xf32> to vector<8x128xf32>
    %323 = arith.addf %319, %322 : vector<8x128xf32>
    %324 = arith.truncf %323 : vector<8x128xf32> to vector<8x128xbf16>
    %c1_134 = arith.constant 1 : index
    %c0_135 = arith.constant 0 : index
    %c0_136 = arith.constant 0 : index
    %325 = vector.load %arg11[%c1_134, %c0_135, %c0_136] : memref<2x128x2048xbf16, #tpu.memory_space<vmem>>, vector<1x128x2048xbf16>
    %326 = vector.shape_cast %325 : vector<1x128x2048xbf16> to vector<128x2048xbf16>
    %cst_137 = arith.constant dense<0.000000e+00> : vector<8x2048xf32>
    %327 = tpu.matmul %324, %326, %cst_137 {dimension_numbers = #tpu.dot_dimension_numbers<[1], [0], [0], [1], [0, 0, 1, 1], [], []>} : vector<8x128xbf16>, vector<128x2048xbf16>, vector<8x2048xf32> -> vector<8x2048xf32>
    %c1_138 = arith.constant 1 : index
    %c0_139 = arith.constant 0 : index
    %c0_140 = arith.constant 0 : index
    %328 = vector.load %arg12[%c1_138, %c0_139, %c0_140] : memref<2x1x2048xf32, #tpu.memory_space<vmem>>, vector<1x1x2048xf32>
    %329 = vector.shape_cast %328 : vector<1x1x2048xf32> to vector<1x2048xf32>
    %330 = vector.broadcast %329 : vector<1x2048xf32> to vector<8x2048xf32>
    %331 = arith.addf %327, %330 : vector<8x2048xf32>
    %cst_141 = arith.constant 0.000000e+00 : f32
    %332 = vector.broadcast %cst_141 : f32 to vector<8x2048xf32>
    %333 = arith.maximumf %331, %332 : vector<8x2048xf32>
    %334 = arith.truncf %333 : vector<8x2048xf32> to vector<8x2048xbf16>
    %c1_142 = arith.constant 1 : index
    %c0_143 = arith.constant 0 : index
    %c0_144 = arith.constant 0 : index
    %335 = vector.load %arg13[%c1_142, %c0_143, %c0_144] : memref<2x2048x128xbf16, #tpu.memory_space<vmem>>, vector<1x2048x128xbf16>
    %336 = vector.shape_cast %335 : vector<1x2048x128xbf16> to vector<2048x128xbf16>
    %cst_145 = arith.constant dense<0.000000e+00> : vector<8x128xf32>
    %337 = tpu.matmul %334, %336, %cst_145 {dimension_numbers = #tpu.dot_dimension_numbers<[1], [0], [0], [1], [0, 0, 1, 1], [], []>} : vector<8x2048xbf16>, vector<2048x128xbf16>, vector<8x128xf32> -> vector<8x128xf32>
    %c1_146 = arith.constant 1 : index
    %c0_147 = arith.constant 0 : index
    %c0_148 = arith.constant 0 : index
    %338 = vector.load %arg14[%c1_146, %c0_147, %c0_148] : memref<2x1x128xf32, #tpu.memory_space<vmem>>, vector<1x1x128xf32>
    %339 = vector.shape_cast %338 : vector<1x1x128xf32> to vector<1x128xf32>
    %340 = vector.broadcast %339 : vector<1x128xf32> to vector<8x128xf32>
    %341 = arith.addf %337, %340 : vector<8x128xf32>
    %342 = arith.addf %323, %341 : vector<8x128xf32>
    %cst_149 = arith.constant dense<0.000000e+00> : vector<8xf32>
    %343 = vector.multi_reduction <add>, %342, %cst_149 [1] : vector<8x128xf32> to vector<8xf32>
    %344 = vector.shape_cast %343 : vector<8xf32> to vector<8x1xf32>
    %cst_150 = arith.constant 1.280000e+02 : f32
    %345 = vector.broadcast %cst_150 : f32 to vector<8x1xf32>
    %346 = arith.divf %344, %345 : vector<8x1xf32>
    %347 = vector.broadcast %346 : vector<8x1xf32> to vector<8x128xf32>
    %348 = arith.subf %342, %347 : vector<8x128xf32>
    %349 = arith.mulf %348, %348 : vector<8x128xf32>
    %cst_151 = arith.constant dense<0.000000e+00> : vector<8xf32>
    %350 = vector.multi_reduction <add>, %349, %cst_151 [1] : vector<8x128xf32> to vector<8xf32>
    %351 = vector.shape_cast %350 : vector<8xf32> to vector<8x1xf32>
    %cst_152 = arith.constant 1.280000e+02 : f32
    %352 = vector.broadcast %cst_152 : f32 to vector<8x1xf32>
    %353 = arith.divf %351, %352 : vector<8x1xf32>
    %354 = vector.broadcast %346 : vector<8x1xf32> to vector<8x128xf32>
    %355 = arith.subf %342, %354 : vector<8x128xf32>
    %cst_153 = arith.constant 9.99999974E-6 : f32
    %356 = vector.broadcast %cst_153 : f32 to vector<8x1xf32>
    %357 = arith.addf %353, %356 : vector<8x1xf32>
    %358 = math.rsqrt %357 : vector<8x1xf32>
    %359 = vector.broadcast %358 : vector<8x1xf32> to vector<8x128xf32>
    %360 = arith.mulf %355, %359 : vector<8x128xf32>
    %c1_154 = arith.constant 1 : index
    %c0_155 = arith.constant 0 : index
    %c0_156 = arith.constant 0 : index
    %361 = vector.load %arg15[%c1_154, %c0_155, %c0_156] : memref<2x1x128xf32, #tpu.memory_space<vmem>>, vector<1x1x128xf32>
    %362 = vector.shape_cast %361 : vector<1x1x128xf32> to vector<1x128xf32>
    %363 = vector.broadcast %362 : vector<1x128xf32> to vector<8x128xf32>
    %364 = arith.mulf %360, %363 : vector<8x128xf32>
    %c1_157 = arith.constant 1 : index
    %c0_158 = arith.constant 0 : index
    %c0_159 = arith.constant 0 : index
    %365 = vector.load %arg16[%c1_157, %c0_158, %c0_159] : memref<2x1x128xf32, #tpu.memory_space<vmem>>, vector<1x1x128xf32>
    %366 = vector.shape_cast %365 : vector<1x1x128xf32> to vector<1x128xf32>
    %367 = vector.broadcast %366 : vector<1x128xf32> to vector<8x128xf32>
    %368 = arith.addf %364, %367 : vector<8x128xf32>
    %369 = arith.truncf %368 : vector<8x128xf32> to vector<8x128xbf16>
    %c0_160 = arith.constant 0 : index
    %c0_161 = arith.constant 0 : index
    %370 = vector.load %arg17[%c0_160, %c0_161] : memref<128x128xbf16, #tpu.memory_space<vmem>>, vector<128x128xbf16>
    %cst_162 = arith.constant dense<0.000000e+00> : vector<8x128xf32>
    %371 = tpu.matmul %369, %370, %cst_162 {dimension_numbers = #tpu.dot_dimension_numbers<[1], [0], [0], [1], [0, 0, 1, 1], [], []>} : vector<8x128xbf16>, vector<128x128xbf16>, vector<8x128xf32> -> vector<8x128xf32>
    %c0_163 = arith.constant 0 : index
    %c0_164 = arith.constant 0 : index
    %372 = vector.load %arg18[%c0_163, %c0_164] : memref<1x128xf32, #tpu.memory_space<vmem>>, vector<1x128xf32>
    %373 = vector.broadcast %372 : vector<1x128xf32> to vector<8x128xf32>
    %374 = arith.addf %371, %373 : vector<8x128xf32>
    %375 = vector.shape_cast %374 : vector<8x128xf32> to vector<1x8x128xf32>
    %c0_165 = arith.constant 0 : index
    %c0_166 = arith.constant 0 : index
    %c0_167 = arith.constant 0 : index
    %376 = vector.load %arg19[%c0_165, %c0_166, %c0_167] : memref<1x8x128xf32, #tpu.memory_space<vmem>>, vector<1x8x128xf32>
    tpu.vector_store %arg19[%c0_165, %c0_166, %c0_167], %375 {strides = array<i32>} : memref<1x8x128xf32, #tpu.memory_space<vmem>>, vector<1x8x128xf32>,
    return
  }
  func.func @transform_0(%arg0: i32) -> (i32, i32, i32) {
    %c0_i32 = arith.constant 0 : i32
    %c0_i32_0 = arith.constant 0 : i32
    %c0_i32_1 = arith.constant 0 : i32
    return %arg0, %c0_i32, %c0_i32_0 : i32, i32, i32
  }
  func.func @transform_1(%arg0: i32) -> (i32, i32) {
    %c0_i32 = arith.constant 0 : i32
    %c0_i32_0 = arith.constant 0 : i32
    %c0_i32_1 = arith.constant 0 : i32
    return %c0_i32, %c0_i32_0 : i32, i32
  }
  func.func @transform_2(%arg0: i32) -> (i32, i32) {
    %c0_i32 = arith.constant 0 : i32
    %c0_i32_0 = arith.constant 0 : i32
    %c0_i32_1 = arith.constant 0 : i32
    return %c0_i32, %c0_i32_0 : i32, i32
  }
  func.func @transform_3(%arg0: i32) -> (i32, i32) {
    %c0_i32 = arith.constant 0 : i32
    %c0_i32_0 = arith.constant 0 : i32
    %c0_i32_1 = arith.constant 0 : i32
    return %c0_i32, %c0_i32_0 : i32, i32
  }
  func.func @transform_4(%arg0: i32) -> (i32, i32, i32) {
    %c0_i32 = arith.constant 0 : i32
    %c0_i32_0 = arith.constant 0 : i32
    %c0_i32_1 = arith.constant 0 : i32
    %c0_i32_2 = arith.constant 0 : i32
    return %c0_i32, %c0_i32_0, %c0_i32_1 : i32, i32, i32
  }
  func.func @transform_5(%arg0: i32) -> (i32, i32, i32) {
    %c0_i32 = arith.constant 0 : i32
    %c0_i32_0 = arith.constant 0 : i32
    %c0_i32_1 = arith.constant 0 : i32
    %c0_i32_2 = arith.constant 0 : i32
    return %c0_i32, %c0_i32_0, %c0_i32_1 : i32, i32, i32
  }
  func.func @transform_6(%arg0: i32) -> (i32, i32, i32) {
    %c0_i32 = arith.constant 0 : i32
    %c0_i32_0 = arith.constant 0 : i32
    %c0_i32_1 = arith.constant 0 : i32
    %c0_i32_2 = arith.constant 0 : i32
    return %c0_i32, %c0_i32_0, %c0_i32_1 : i32, i32, i32
  }
  func.func @transform_7(%arg0: i32) -> (i32, i32, i32) {
    %c0_i32 = arith.constant 0 : i32
    %c0_i32_0 = arith.constant 0 : i32
    %c0_i32_1 = arith.constant 0 : i32
    %c0_i32_2 = arith.constant 0 : i32
    return %c0_i32, %c0_i32_0, %c0_i32_1 : i32, i32, i32
  }
  func.func @transform_8(%arg0: i32) -> (i32, i32, i32) {
    %c0_i32 = arith.constant 0 : i32
    %c0_i32_0 = arith.constant 0 : i32
    %c0_i32_1 = arith.constant 0 : i32
    %c0_i32_2 = arith.constant 0 : i32
    return %c0_i32, %c0_i32_0, %c0_i32_1 : i32, i32, i32
  }
  func.func @transform_9(%arg0: i32) -> (i32, i32, i32) {
    %c0_i32 = arith.constant 0 : i32
    %c0_i32_0 = arith.constant 0 : i32
    %c0_i32_1 = arith.constant 0 : i32
    %c0_i32_2 = arith.constant 0 : i32
    return %c0_i32, %c0_i32_0, %c0_i32_1 : i32, i32, i32
  }
  func.func @transform_10(%arg0: i32) -> (i32, i32, i32) {
    %c0_i32 = arith.constant 0 : i32
    %c0_i32_0 = arith.constant 0 : i32
    %c0_i32_1 = arith.constant 0 : i32
    %c0_i32_2 = arith.constant 0 : i32
    return %c0_i32, %c0_i32_0, %c0_i32_1 : i32, i32, i32
  }
  func.func @transform_11(%arg0: i32) -> (i32, i32, i32) {
    %c0_i32 = arith.constant 0 : i32
    %c0_i32_0 = arith.constant 0 : i32
    %c0_i32_1 = arith.constant 0 : i32
    %c0_i32_2 = arith.constant 0 : i32
    return %c0_i32, %c0_i32_0, %c0_i32_1 : i32, i32, i32
  }
  func.func @transform_12(%arg0: i32) -> (i32, i32, i32) {
    %c0_i32 = arith.constant 0 : i32
    %c0_i32_0 = arith.constant 0 : i32
    %c0_i32_1 = arith.constant 0 : i32
    %c0_i32_2 = arith.constant 0 : i32
    return %c0_i32, %c0_i32_0, %c0_i32_1 : i32, i32, i32
  }
  func.func @transform_13(%arg0: i32) -> (i32, i32, i32) {
    %c0_i32 = arith.constant 0 : i32
    %c0_i32_0 = arith.constant 0 : i32
    %c0_i32_1 = arith.constant 0 : i32
    %c0_i32_2 = arith.constant 0 : i32
    return %c0_i32, %c0_i32_0, %c0_i32_1 : i32, i32, i32
  }
  func.func @transform_14(%arg0: i32) -> (i32, i32, i32) {
    %c0_i32 = arith.constant 0 : i32
    %c0_i32_0 = arith.constant 0 : i32
    %c0_i32_1 = arith.constant 0 : i32
    %c0_i32_2 = arith.constant 0 : i32
    return %c0_i32, %c0_i32_0, %c0_i32_1 : i32, i32, i32
  }
  func.func @transform_15(%arg0: i32) -> (i32, i32, i32) {
    %c0_i32 = arith.constant 0 : i32
    %c0_i32_0 = arith.constant 0 : i32
    %c0_i32_1 = arith.constant 0 : i32
    %c0_i32_2 = arith.constant 0 : i32
    return %c0_i32, %c0_i32_0, %c0_i32_1 : i32, i32, i32
  }
  func.func @transform_16(%arg0: i32) -> (i32, i32) {
    %c0_i32 = arith.constant 0 : i32
    %c0_i32_0 = arith.constant 0 : i32
    %c0_i32_1 = arith.constant 0 : i32
    return %c0_i32, %c0_i32_0 : i32, i32
  }
  func.func @transform_17(%arg0: i32) -> (i32, i32) {
    %c0_i32 = arith.constant 0 : i32
    %c0_i32_0 = arith.constant 0 : i32
    %c0_i32_1 = arith.constant 0 : i32
    return %c0_i32, %c0_i32_0 : i32, i32
  }
  func.func @transform_18(%arg0: i32) -> (i32, i32, i32) {
    %c0_i32 = arith.constant 0 : i32
    %c0_i32_0 = arith.constant 0 : i32
    %c0_i32_1 = arith.constant 0 : i32
    return %arg0, %c0_i32, %c0_i32_0 : i32, i32, i32
  }
}

</mosaic_0001>

<llo_original>
// kernel: trajectory_transformer_forward.1
$region0: #{trajectory_transformer_forward.1}
  #allocation0 [shape = 'u32[]', space=smem, size = 0x4, offset = 0x4, fixed_abs, tag = 'smem constant byte address 0x4 - core index']
  #allocation1 [shape = 'u32[144,128]{1,0:T(1,128)}', space=vmem, size = 0x12000, scoped, tag = 'internal scratch']
  #allocation2 [shape = 'f32[8,128]{1,0:T(8,128)}', space=vmem, size = 0x1000, scoped, tag = 'scratch operand']
  %s0 = inlined_call_operand.vmem [shape: f32[2,8,2], index: 0, kind: input, shape index: {}]
  %s1 = inlined_call_operand.vmem [shape: f32[8,128], index: 1, kind: input, shape index: {}]
  %s2 = inlined_call_operand.vmem [shape: f32[2,128], index: 2, kind: input, shape index: {}]
  %s3 = inlined_call_operand.vmem [shape: f32[1,128], index: 3, kind: input, shape index: {}]
  %s4 = inlined_call_operand.vmem [shape: bf16[2,128,384], index: 4, kind: input, shape index: {}]
  %s5 = inlined_call_operand.vmem [shape: f32[2,1,384], index: 5, kind: input, shape index: {}]
  %s6 = inlined_call_operand.vmem [shape: bf16[2,128,128], index: 6, kind: input, shape index: {}]
  %s7 = inlined_call_operand.vmem [shape: f32[2,1,128], index: 7, kind: input, shape index: {}]
  %s8 = inlined_call_operand.vmem [shape: f32[2,1,128], index: 8, kind: input, shape index: {}]
  %s9 = inlined_call_operand.vmem [shape: f32[2,1,128], index: 9, kind: input, shape index: {}]
  %s10 = inlined_call_operand.hbm [shape: bf16[2,128,2048], index: 10, kind: input, shape index: {}]
  %s11 = inlined_call_operand.vmem [shape: f32[2,1,2048], index: 11, kind: input, shape index: {}]
  %s12 = inlined_call_operand.hbm [shape: bf16[2,2048,128], index: 12, kind: input, shape index: {}]
  %s13 = inlined_call_operand.vmem [shape: f32[2,1,128], index: 13, kind: input, shape index: {}]
  %s14 = inlined_call_operand.vmem [shape: f32[2,1,128], index: 14, kind: input, shape index: {}]
  %s15 = inlined_call_operand.vmem [shape: f32[2,1,128], index: 15, kind: input, shape index: {}]
  %s16 = inlined_call_operand.vmem [shape: bf16[128,128], index: 16, kind: input, shape index: {}]
  %s17 = inlined_call_operand.vmem [shape: f32[1,128], index: 17, kind: input, shape index: {}]
  %s18 = inlined_call_operand.vmem [shape: f32[2,8,128], index: 18, kind: output, shape index: {}]
  %s19 = sld [smem:[#allocation0]]
  $region113: #{trajectory_transformer_forward.1} parent=0
    _
  %s21 = ssub.s32 1, %s19
  %s22 = scalar_select 0, %s21, %s19
  $region1: #{trajectory_transformer_forward.1} parent=0
    #allocation3 [shape = 'u8[1048576]{0}', space=vmem, size = 0x100000, scoped, tag = 'input window, operand 10, single buffered']
    #allocation4 [shape = 's32[2]{0}', space=sflag, size = 0x8, scoped, tag = 'scoped memory for trajectory_transformer_forward.1']
    #allocation5 [shape = 'u8[1048576]{0}', space=vmem, size = 0x100000, scoped, tag = 'input window, operand 12, single buffered']
    #allocation6 [shape = 's32[1]{0}', space=sflag, size = 0x4, scoped, tag = 'scoped memory for trajectory_transformer_forward.1']
    %23 = vsyncpa [#allocation4], 0
    %24 = vsyncpa [#allocation6], 0
    loop: start=0, step=1, limit=4
    $region2: #{trajectory_transformer_forward.1} parent=1 // loop_pre_header
      _
    $region3: #{trajectory_transformer_forward.1} parent=1 // loop_header
      %s26 = sphi 0, %s30
      %p27 = scmp.ge.s32.totalorder %s26, 4
      %s36 = sphi 0, %s38
      %s39 = sphi 0, %s36
      %s40 = sphi 0, %s39
      %s56 = sphi 0, %s40
      %s60 = sphi 0, %s60
      %s62 = sphi 0, %s60
      %s63 = sphi 0, %s62
      %s77 = sphi 0, %s63
      %s81 = sphi 0, %s81
      %s83 = sphi 0, %s81
      %s84 = sphi 0, %s83
      %s98 = sphi 0, %s84
      %s102 = sphi 0, %s102
      %s104 = sphi 0, %s102
      %s105 = sphi 0, %s104
      %s119 = sphi 0, %s105
      %s123 = sphi 0, %s123
      %s125 = sphi 0, %s123
      %s126 = sphi 0, %s125
      %s140 = sphi 0, %s126
      %s144 = sphi 0, %s144
      %s146 = sphi 0, %s144
      %s147 = sphi 0, %s146
      %s161 = sphi 0, %s147
      %s165 = sphi 0, %s165
      %s167 = sphi 0, %s165
      %s168 = sphi 0, %s167
      %s182 = sphi 0, %s168
      %s186 = sphi 0, %s186
      %s188 = sphi 0, %s186
      %s189 = sphi 0, %s188
      %s203 = sphi 0, %s189
      %s207 = sphi 0, %s207
      %s209 = sphi 0, %s207
      %s210 = sphi 0, %s209
      %s224 = sphi 0, %s210
      %s228 = sphi 0, %s228
      %s230 = sphi 0, %s228
      %s231 = sphi 0, %s230
      %s245 = sphi 0, %s231
      %s249 = sphi 0, %s249
      %s251 = sphi 0, %s249
      %s252 = sphi 0, %s251
      %s266 = sphi 0, %s252
      %s270 = sphi 0, %s270
      %s272 = sphi 0, %s270
      %s273 = sphi 0, %s272
      %s287 = sphi 0, %s273
      %s291 = sphi 0, %s291
      %s293 = sphi 0, %s291
      %s294 = sphi 0, %s293
      %s308 = sphi 0, %s294
      %s312 = sphi 0, %s312
      %s314 = sphi 0, %s312
      %s315 = sphi 0, %s314
      %s329 = sphi 0, %s315
      %s333 = sphi 0, %s333
      %s335 = sphi 0, %s333
      %s336 = sphi 0, %s335
      %s350 = sphi 0, %s336
      %s354 = sphi 0, %s354
      %s356 = sphi 0, %s354
      %s357 = sphi 0, %s356
      %s371 = sphi 0, %s357
      %s375 = sphi 0, %s375
      %s377 = sphi 0, %s375
      %s378 = sphi 0, %s377
      %s392 = sphi 0, %s378
      %s396 = sphi 0, %s396
      %s398 = sphi 0, %s396
      %s399 = sphi 0, %s398
      %s413 = sphi 0, %s399
      %s419 = sphi 0, %s421
      %s422 = sphi 0, %s419
      %s423 = sphi 0, %s422
      %s439 = sphi 0, %s423
    $region4: #{trajectory_transformer_forward.1} parent=1 // loop_header_branch
      %29 = sbr.rel (%p27) target = $region8
    $region5: #{trajectory_transformer_forward.1} parent=1 // loop_body
      %s31 = ssub.s32 %s26, 1
      %s32 = ssub.s32 %s26, 2
      %s33 = sadd.s32 %s26, 1
      %s34 = ssub.s32 %s26, %s33
      %p35 = scmp.eq.s32.totalorder %s34, 0
      %s37 = sadd.s32 %s36, 1
      %s38 = scalar_select %p35, %s36, %s37
      %p41 = pneg %p35
      %p42 = scmp.eq.s32.totalorder %s26, 1
      %p43 = por %p41, %p42
      %p44 = scmp.ne.s32.totalorder %s36, %s39
      %p45 = scmp.eq.s32.totalorder %s26, 0
      %p46 = por %p44, %p45
      %p47 = scmp.ne.s32.totalorder %s36, %s39
      %p48 = scmp.eq.s32.totalorder %s31, 1
      %p49 = por %p47, %p48
      %p50 = scmp.ne.s32.totalorder %s39, %s40
      %p51 = scmp.eq.s32.totalorder %s31, 0
      %p52 = por %p50, %p51
      %p53 = scmp.ne.s32.totalorder %s39, %s40
      %p54 = scmp.eq.s32.totalorder %s32, 1
      %p55 = por %p53, %p54
      %p57 = scmp.ne.s32.totalorder %s40, %s56
      %p58 = scmp.eq.s32.totalorder %s32, 0
      %p59 = por %p57, %p58
      %s61 = sadd.s32 %s60, 1
      %p64 = scmp.eq.s32.totalorder %s26, 1
      %p65 = scmp.ne.s32.totalorder %s60, %s62
      %p66 = scmp.eq.s32.totalorder %s26, 0
      %p67 = por %p65, %p66
      %p68 = scmp.ne.s32.totalorder %s60, %s62
      %p69 = scmp.eq.s32.totalorder %s31, 1
      %p70 = por %p68, %p69
      %p71 = scmp.ne.s32.totalorder %s62, %s63
      %p72 = scmp.eq.s32.totalorder %s31, 0
      %p73 = por %p71, %p72
      %p74 = scmp.ne.s32.totalorder %s62, %s63
      %p75 = scmp.eq.s32.totalorder %s32, 1
      %p76 = por %p74, %p75
      %p78 = scmp.ne.s32.totalorder %s63, %s77
      %p79 = scmp.eq.s32.totalorder %s32, 0
      %p80 = por %p78, %p79
      %s82 = sadd.s32 %s81, 1
      %p85 = scmp.eq.s32.totalorder %s26, 1
      %p86 = scmp.ne.s32.totalorder %s81, %s83
      %p87 = scmp.eq.s32.totalorder %s26, 0
      %p88 = por %p86, %p87
      %p89 = scmp.ne.s32.totalorder %s81, %s83
      %p90 = scmp.eq.s32.totalorder %s31, 1
      %p91 = por %p89, %p90
      %p92 = scmp.ne.s32.totalorder %s83, %s84
      %p93 = scmp.eq.s32.totalorder %s31, 0
      %p94 = por %p92, %p93
      %p95 = scmp.ne.s32.totalorder %s83, %s84
      %p96 = scmp.eq.s32.totalorder %s32, 1
      %p97 = por %p95, %p96
      %p99 = scmp.ne.s32.totalorder %s84, %s98
      %p100 = scmp.eq.s32.totalorder %s32, 0
      %p101 = por %p99, %p100
      %s103 = sadd.s32 %s102, 1
      %p106 = scmp.eq.s32.totalorder %s26, 1
      %p107 = scmp.ne.s32.totalorder %s102, %s104
      %p108 = scmp.eq.s32.totalorder %s26, 0
      %p109 = por %p107, %p108
      %p110 = scmp.ne.s32.totalorder %s102, %s104
      %p111 = scmp.eq.s32.totalorder %s31, 1
      %p112 = por %p110, %p111
      %p113 = scmp.ne.s32.totalorder %s104, %s105
      %p114 = scmp.eq.s32.totalorder %s31, 0
      %p115 = por %p113, %p114
      %p116 = scmp.ne.s32.totalorder %s104, %s105
      %p117 = scmp.eq.s32.totalorder %s32, 1
      %p118 = por %p116, %p117
      %p120 = scmp.ne.s32.totalorder %s105, %s119
      %p121 = scmp.eq.s32.totalorder %s32, 0
      %p122 = por %p120, %p121
      %s124 = sadd.s32 %s123, 1
      %p127 = scmp.eq.s32.totalorder %s26, 1
      %p128 = scmp.ne.s32.totalorder %s123, %s125
      %p129 = scmp.eq.s32.totalorder %s26, 0
      %p130 = por %p128, %p129
      %p131 = scmp.ne.s32.totalorder %s123, %s125
      %p132 = scmp.eq.s32.totalorder %s31, 1
      %p133 = por %p131, %p132
      %p134 = scmp.ne.s32.totalorder %s125, %s126
      %p135 = scmp.eq.s32.totalorder %s31, 0
      %p136 = por %p134, %p135
      %p137 = scmp.ne.s32.totalorder %s125, %s126
      %p138 = scmp.eq.s32.totalorder %s32, 1
      %p139 = por %p137, %p138
      %p141 = scmp.ne.s32.totalorder %s126, %s140
      %p142 = scmp.eq.s32.totalorder %s32, 0
      %p143 = por %p141, %p142
      %s145 = sadd.s32 %s144, 1
      %p148 = scmp.eq.s32.totalorder %s26, 1
      %p149 = scmp.ne.s32.totalorder %s144, %s146
      %p150 = scmp.eq.s32.totalorder %s26, 0
      %p151 = por %p149, %p150
      %p152 = scmp.ne.s32.totalorder %s144, %s146
      %p153 = scmp.eq.s32.totalorder %s31, 1
      %p154 = por %p152, %p153
      %p155 = scmp.ne.s32.totalorder %s146, %s147
      %p156 = scmp.eq.s32.totalorder %s31, 0
      %p157 = por %p155, %p156
      %p158 = scmp.ne.s32.totalorder %s146, %s147
      %p159 = scmp.eq.s32.totalorder %s32, 1
      %p160 = por %p158, %p159
      %p162 = scmp.ne.s32.totalorder %s147, %s161
      %p163 = scmp.eq.s32.totalorder %s32, 0
      %p164 = por %p162, %p163
      %s166 = sadd.s32 %s165, 1
      %p169 = scmp.eq.s32.totalorder %s26, 1
      %p170 = scmp.ne.s32.totalorder %s165, %s167
      %p171 = scmp.eq.s32.totalorder %s26, 0
      %p172 = por %p170, %p171
      %p173 = scmp.ne.s32.totalorder %s165, %s167
      %p174 = scmp.eq.s32.totalorder %s31, 1
      %p175 = por %p173, %p174
      %p176 = scmp.ne.s32.totalorder %s167, %s168
      %p177 = scmp.eq.s32.totalorder %s31, 0
      %p178 = por %p176, %p177
      %p179 = scmp.ne.s32.totalorder %s167, %s168
      %p180 = scmp.eq.s32.totalorder %s32, 1
      %p181 = por %p179, %p180
      %p183 = scmp.ne.s32.totalorder %s168, %s182
      %p184 = scmp.eq.s32.totalorder %s32, 0
      %p185 = por %p183, %p184
      %s187 = sadd.s32 %s186, 1
      %p190 = scmp.eq.s32.totalorder %s26, 1
      %p191 = scmp.ne.s32.totalorder %s186, %s188
      %p192 = scmp.eq.s32.totalorder %s26, 0
      %p193 = por %p191, %p192
      %p194 = scmp.ne.s32.totalorder %s186, %s188
      %p195 = scmp.eq.s32.totalorder %s31, 1
      %p196 = por %p194, %p195
      %p197 = scmp.ne.s32.totalorder %s188, %s189
      %p198 = scmp.eq.s32.totalorder %s31, 0
      %p199 = por %p197, %p198
      %p200 = scmp.ne.s32.totalorder %s188, %s189
      %p201 = scmp.eq.s32.totalorder %s32, 1
      %p202 = por %p200, %p201
      %p204 = scmp.ne.s32.totalorder %s189, %s203
      %p205 = scmp.eq.s32.totalorder %s32, 0
      %p206 = por %p204, %p205
      %s208 = sadd.s32 %s207, 1
      %p211 = scmp.eq.s32.totalorder %s26, 1
      %p212 = scmp.ne.s32.totalorder %s207, %s209
      %p213 = scmp.eq.s32.totalorder %s26, 0
      %p214 = por %p212, %p213
      %p215 = scmp.ne.s32.totalorder %s207, %s209
      %p216 = scmp.eq.s32.totalorder %s31, 1
      %p217 = por %p215, %p216
      %p218 = scmp.ne.s32.totalorder %s209, %s210
      %p219 = scmp.eq.s32.totalorder %s31, 0
      %p220 = por %p218, %p219
      %p221 = scmp.ne.s32.totalorder %s209, %s210
      %p222 = scmp.eq.s32.totalorder %s32, 1
      %p223 = por %p221, %p222
      %p225 = scmp.ne.s32.totalorder %s210, %s224
      %p226 = scmp.eq.s32.totalorder %s32, 0
      %p227 = por %p225, %p226
      %s229 = sadd.s32 %s228, 1
      %p232 = scmp.eq.s32.totalorder %s26, 1
      %p233 = scmp.ne.s32.totalorder %s228, %s230
      %p234 = scmp.eq.s32.totalorder %s26, 0
      %p235 = por %p233, %p234
      %p236 = scmp.ne.s32.totalorder %s228, %s230
      %p237 = scmp.eq.s32.totalorder %s31, 1
      %p238 = por %p236, %p237
      %p239 = scmp.ne.s32.totalorder %s230, %s231
      %p240 = scmp.eq.s32.totalorder %s31, 0
      %p241 = por %p239, %p240
      %p242 = scmp.ne.s32.totalorder %s230, %s231
      %p243 = scmp.eq.s32.totalorder %s32, 1
      %p244 = por %p242, %p243
      %p246 = scmp.ne.s32.totalorder %s231, %s245
      %p247 = scmp.eq.s32.totalorder %s32, 0
      %p248 = por %p246, %p247
      %s250 = sadd.s32 %s249, 1
      %p253 = scmp.eq.s32.totalorder %s26, 1
      %p254 = scmp.ne.s32.totalorder %s249, %s251
      %p255 = scmp.eq.s32.totalorder %s26, 0
      %p256 = por %p254, %p255
      %p257 = scmp.ne.s32.totalorder %s249, %s251
      %p258 = scmp.eq.s32.totalorder %s31, 1
      %p259 = por %p257, %p258
      %p260 = scmp.ne.s32.totalorder %s251, %s252
      %p261 = scmp.eq.s32.totalorder %s31, 0
      %p262 = por %p260, %p261
      %p263 = scmp.ne.s32.totalorder %s251, %s252
      %p264 = scmp.eq.s32.totalorder %s32, 1
      %p265 = por %p263, %p264
      %p267 = scmp.ne.s32.totalorder %s252, %s266
      %p268 = scmp.eq.s32.totalorder %s32, 0
      %p269 = por %p267, %p268
      %s271 = sadd.s32 %s270, 1
      %p274 = scmp.eq.s32.totalorder %s26, 1
      %p275 = scmp.ne.s32.totalorder %s270, %s272
      %p276 = scmp.eq.s32.totalorder %s26, 0
      %p277 = por %p275, %p276
      %p278 = scmp.ne.s32.totalorder %s270, %s272
      %p279 = scmp.eq.s32.totalorder %s31, 1
      %p280 = por %p278, %p279
      %p281 = scmp.ne.s32.totalorder %s272, %s273
      %p282 = scmp.eq.s32.totalorder %s31, 0
      %p283 = por %p281, %p282
      %p284 = scmp.ne.s32.totalorder %s272, %s273
      %p285 = scmp.eq.s32.totalorder %s32, 1
      %p286 = por %p284, %p285
      %p288 = scmp.ne.s32.totalorder %s273, %s287
      %p289 = scmp.eq.s32.totalorder %s32, 0
      %p290 = por %p288, %p289
      %s292 = sadd.s32 %s291, 1
      %p295 = scmp.eq.s32.totalorder %s26, 1
      %p296 = scmp.ne.s32.totalorder %s291, %s293
      %p297 = scmp.eq.s32.totalorder %s26, 0
      %p298 = por %p296, %p297
      %p299 = scmp.ne.s32.totalorder %s291, %s293
      %p300 = scmp.eq.s32.totalorder %s31, 1
      %p301 = por %p299, %p300
      %p302 = scmp.ne.s32.totalorder %s293, %s294
      %p303 = scmp.eq.s32.totalorder %s31, 0
      %p304 = por %p302, %p303
      %p305 = scmp.ne.s32.totalorder %s293, %s294
      %p306 = scmp.eq.s32.totalorder %s32, 1
      %p307 = por %p305, %p306
      %p309 = scmp.ne.s32.totalorder %s294, %s308
      %p310 = scmp.eq.s32.totalorder %s32, 0
      %p311 = por %p309, %p310
      %s313 = sadd.s32 %s312, 1
      %p316 = scmp.eq.s32.totalorder %s26, 1
      %p317 = scmp.ne.s32.totalorder %s312, %s314
      %p318 = scmp.eq.s32.totalorder %s26, 0
      %p319 = por %p317, %p318
      %p320 = scmp.ne.s32.totalorder %s312, %s314
      %p321 = scmp.eq.s32.totalorder %s31, 1
      %p322 = por %p320, %p321
      %p323 = scmp.ne.s32.totalorder %s314, %s315
      %p324 = scmp.eq.s32.totalorder %s31, 0
      %p325 = por %p323, %p324
      %p326 = scmp.ne.s32.totalorder %s314, %s315
      %p327 = scmp.eq.s32.totalorder %s32, 1
      %p328 = por %p326, %p327
      %p330 = scmp.ne.s32.totalorder %s315, %s329
      %p331 = scmp.eq.s32.totalorder %s32, 0
      %p332 = por %p330, %p331
      %s334 = sadd.s32 %s333, 1
      %p337 = scmp.eq.s32.totalorder %s26, 1
      %p338 = scmp.ne.s32.totalorder %s333, %s335
      %p339 = scmp.eq.s32.totalorder %s26, 0
      %p340 = por %p338, %p339
      %p341 = scmp.ne.s32.totalorder %s333, %s335
      %p342 = scmp.eq.s32.totalorder %s31, 1
      %p343 = por %p341, %p342
      %p344 = scmp.ne.s32.totalorder %s335, %s336
      %p345 = scmp.eq.s32.totalorder %s31, 0
      %p346 = por %p344, %p345
      %p347 = scmp.ne.s32.totalorder %s335, %s336
      %p348 = scmp.eq.s32.totalorder %s32, 1
      %p349 = por %p347, %p348
      %p351 = scmp.ne.s32.totalorder %s336, %s350
      %p352 = scmp.eq.s32.totalorder %s32, 0
      %p353 = por %p351, %p352
      %s355 = sadd.s32 %s354, 1
      %p358 = scmp.eq.s32.totalorder %s26, 1
      %p359 = scmp.ne.s32.totalorder %s354, %s356
      %p360 = scmp.eq.s32.totalorder %s26, 0
      %p361 = por %p359, %p360
      %p362 = scmp.ne.s32.totalorder %s354, %s356
      %p363 = scmp.eq.s32.totalorder %s31, 1
      %p364 = por %p362, %p363
      %p365 = scmp.ne.s32.totalorder %s356, %s357
      %p366 = scmp.eq.s32.totalorder %s31, 0
      %p367 = por %p365, %p366
      %p368 = scmp.ne.s32.totalorder %s356, %s357
      %p369 = scmp.eq.s32.totalorder %s32, 1
      %p370 = por %p368, %p369
      %p372 = scmp.ne.s32.totalorder %s357, %s371
      %p373 = scmp.eq.s32.totalorder %s32, 0
      %p374 = por %p372, %p373
      %s376 = sadd.s32 %s375, 1
      %p379 = scmp.eq.s32.totalorder %s26, 1
      %p380 = scmp.ne.s32.totalorder %s375, %s377
      %p381 = scmp.eq.s32.totalorder %s26, 0
      %p382 = por %p380, %p381
      %p383 = scmp.ne.s32.totalorder %s375, %s377
      %p384 = scmp.eq.s32.totalorder %s31, 1
      %p385 = por %p383, %p384
      %p386 = scmp.ne.s32.totalorder %s377, %s378
      %p387 = scmp.eq.s32.totalorder %s31, 0
      %p388 = por %p386, %p387
      %p389 = scmp.ne.s32.totalorder %s377, %s378
      %p390 = scmp.eq.s32.totalorder %s32, 1
      %p391 = por %p389, %p390
      %p393 = scmp.ne.s32.totalorder %s378, %s392
      %p394 = scmp.eq.s32.totalorder %s32, 0
      %p395 = por %p393, %p394
      %s397 = sadd.s32 %s396, 1
      %p400 = scmp.eq.s32.totalorder %s26, 1
      %p401 = scmp.ne.s32.totalorder %s396, %s398
      %p402 = scmp.eq.s32.totalorder %s26, 0
      %p403 = por %p401, %p402
      %p404 = scmp.ne.s32.totalorder %s396, %s398
      %p405 = scmp.eq.s32.totalorder %s31, 1
      %p406 = por %p404, %p405
      %p407 = scmp.ne.s32.totalorder %s398, %s399
      %p408 = scmp.eq.s32.totalorder %s31, 0
      %p409 = por %p407, %p408
      %p410 = scmp.ne.s32.totalorder %s398, %s399
      %p411 = scmp.eq.s32.totalorder %s32, 1
      %p412 = por %p410, %p411
      %p414 = scmp.ne.s32.totalorder %s399, %s413
      %p415 = scmp.eq.s32.totalorder %s32, 0
      %p416 = por %p414, %p415
      %s417 = ssub.s32 %s26, %s33
      %p418 = scmp.eq.s32.totalorder %s417, 0
      %s420 = sadd.s32 %s419, 1
      %s421 = scalar_select %p418, %s419, %s420
      %p424 = pneg %p418
      %p425 = scmp.eq.s32.totalorder %s26, 1
      %p426 = por %p424, %p425
      %p427 = scmp.ne.s32.totalorder %s419, %s422
      %p428 = scmp.eq.s32.totalorder %s26, 0
      %p429 = por %p427, %p428
      %p430 = scmp.ne.s32.totalorder %s419, %s422
      %p431 = scmp.eq.s32.totalorder %s31, 1
      %p432 = por %p430, %p431
      %p433 = scmp.ne.s32.totalorder %s422, %s423
      %p434 = scmp.eq.s32.totalorder %s31, 0
      %p435 = por %p433, %p434
      %p436 = scmp.ne.s32.totalorder %s422, %s423
      %p437 = scmp.eq.s32.totalorder %s32, 1
      %p438 = por %p436, %p437
      %p440 = scmp.ne.s32.totalorder %s423, %s439
      %p441 = scmp.eq.s32.totalorder %s32, 0
      %p442 = por %p440, %p441
      %p443 = scmp.le.s32.totalorder 1, %s26
      %p444 = scmp.lt.s32.totalorder %s26, 3
      %p445 = pnand %p443, %p444
      %p446 = pneg %p445
      // Predicated region
      $region9: #{trajectory_transformer_forward.1} parent=5 // pred_check
        _
      $region10: #{trajectory_transformer_forward.1} parent=5 // pred_check_branch
        %448 = sbr.rel (%p445) target = $region12
      $region11: #{trajectory_transformer_forward.1} parent=5 // pred_region
        %s449 = ssub.s32 %s26, 1
        // Predicated region
        $region13: #{trajectory_transformer_forward.1} parent=11 // pred_check
          %p450 = pneg %p73
        $region14: #{trajectory_transformer_forward.1} parent=11 // pred_check_branch
          %452 = sbr.rel (%p450) target = $region16
        $region15: #{trajectory_transformer_forward.1} parent=11 // pred_region
          _
        $region16: #{trajectory_transformer_forward.1} parent=11 // pred_fallthru
          _
        // Predicated region
        $region17: #{trajectory_transformer_forward.1} parent=11 // pred_check
          %p453 = pneg %p94
        $region18: #{trajectory_transformer_forward.1} parent=11 // pred_check_branch
          %455 = sbr.rel (%p453) target = $region20
        $region19: #{trajectory_transformer_forward.1} parent=11 // pred_region
          _
        $region20: #{trajectory_transformer_forward.1} parent=11 // pred_fallthru
          _
        // Predicated region
        $region21: #{trajectory_transformer_forward.1} parent=11 // pred_check
          %p456 = pneg %p115
        $region22: #{trajectory_transformer_forward.1} parent=11 // pred_check_branch
          %458 = sbr.rel (%p456) target = $region24
        $region23: #{trajectory_transformer_forward.1} parent=11 // pred_region
          _
        $region24: #{trajectory_transformer_forward.1} parent=11 // pred_fallthru
          _
        // Predicated region
        $region25: #{trajectory_transformer_forward.1} parent=11 // pred_check
          %p459 = pneg %p136
        $region26: #{trajectory_transformer_forward.1} parent=11 // pred_check_branch
          %461 = sbr.rel (%p459) target = $region28
        $region27: #{trajectory_transformer_forward.1} parent=11 // pred_region
          _
        $region28: #{trajectory_transformer_forward.1} parent=11 // pred_fallthru
          _
        // Predicated region
        $region29: #{trajectory_transformer_forward.1} parent=11 // pred_check
          %p462 = pneg %p157
        $region30: #{trajectory_transformer_forward.1} parent=11 // pred_check_branch
          %464 = sbr.rel (%p462) target = $region32
        $region31: #{trajectory_transformer_forward.1} parent=11 // pred_region
          _
        $region32: #{trajectory_transformer_forward.1} parent=11 // pred_fallthru
          _
        // Predicated region
        $region33: #{trajectory_transformer_forward.1} parent=11 // pred_check
          %p465 = pneg %p178
        $region34: #{trajectory_transformer_forward.1} parent=11 // pred_check_branch
          %467 = sbr.rel (%p465) target = $region36
        $region35: #{trajectory_transformer_forward.1} parent=11 // pred_region
          _
        $region36: #{trajectory_transformer_forward.1} parent=11 // pred_fallthru
          _
        // Predicated region
        $region37: #{trajectory_transformer_forward.1} parent=11 // pred_check
          %p468 = pneg %p199
        $region38: #{trajectory_transformer_forward.1} parent=11 // pred_check_branch
          %470 = sbr.rel (%p468) target = $region40
        $region39: #{trajectory_transformer_forward.1} parent=11 // pred_region
          _
        $region40: #{trajectory_transformer_forward.1} parent=11 // pred_fallthru
          _
        // Predicated region
        $region41: #{trajectory_transformer_forward.1} parent=11 // pred_check
          %p471 = pneg %p220
        $region42: #{trajectory_transformer_forward.1} parent=11 // pred_check_branch
          %473 = sbr.rel (%p471) target = $region44
        $region43: #{trajectory_transformer_forward.1} parent=11 // pred_region
          _
        $region44: #{trajectory_transformer_forward.1} parent=11 // pred_fallthru
          _
        // Predicated region
        $region45: #{trajectory_transformer_forward.1} parent=11 // pred_check
          %p474 = pneg %p241
        $region46: #{trajectory_transformer_forward.1} parent=11 // pred_check_branch
          %476 = sbr.rel (%p474) target = $region48
        $region47: #{trajectory_transformer_forward.1} parent=11 // pred_region
          _
        $region48: #{trajectory_transformer_forward.1} parent=11 // pred_fallthru
          _
        // Predicated region
        $region49: #{trajectory_transformer_forward.1} parent=11 // pred_check
          %p477 = pneg %p262
        $region50: #{trajectory_transformer_forward.1} parent=11 // pred_check_branch
          %479 = sbr.rel (%p477) target = $region52
        $region51: #{trajectory_transformer_forward.1} parent=11 // pred_region
          %s481 = ssub.s32 32768, 32768
          %482 = vsyncadd [#allocation4], %s481
          %s483 = sshll.u32 [#allocation3], 4
          %s484 = int_to_ptr.vmem [resolvable:$true] %s483
          %489 = dma.hbm_to_vmem [thread:$0]  %s10, 32768, %s484, [#allocation4], 1024, 1024, 64
        $region52: #{trajectory_transformer_forward.1} parent=11 // pred_fallthru
          _
        // Predicated region
        $region53: #{trajectory_transformer_forward.1} parent=11 // pred_check
          %p490 = pneg %p283
        $region54: #{trajectory_transformer_forward.1} parent=11 // pred_check_branch
          %492 = sbr.rel (%p490) target = $region56
        $region55: #{trajectory_transformer_forward.1} parent=11 // pred_region
          _
        $region56: #{trajectory_transformer_forward.1} parent=11 // pred_fallthru
          _
        // Predicated region
        $region57: #{trajectory_transformer_forward.1} parent=11 // pred_check
          %p493 = pneg %p304
        $region58: #{trajectory_transformer_forward.1} parent=11 // pred_check_branch
          %495 = sbr.rel (%p493) target = $region60
        $region59: #{trajectory_transformer_forward.1} parent=11 // pred_region
          %s497 = ssub.s32 32768, 32768
          %498 = vsyncadd [#allocation6], %s497
          %s499 = sshll.u32 [#allocation5], 4
          %s500 = int_to_ptr.vmem [resolvable:$true] %s499
          %505 = dma.hbm_to_vmem [thread:$0]  %s12, 32768, %s500, [#allocation6], 64, 64, 4
        $region60: #{trajectory_transformer_forward.1} parent=11 // pred_fallthru
          _
        // Predicated region
        $region61: #{trajectory_transformer_forward.1} parent=11 // pred_check
          %p506 = pneg %p325
        $region62: #{trajectory_transformer_forward.1} parent=11 // pred_check_branch
          %508 = sbr.rel (%p506) target = $region64
        $region63: #{trajectory_transformer_forward.1} parent=11 // pred_region
          _
        $region64: #{trajectory_transformer_forward.1} parent=11 // pred_fallthru
          _
        // Predicated region
        $region65: #{trajectory_transformer_forward.1} parent=11 // pred_check
          %p509 = pneg %p346
        $region66: #{trajectory_transformer_forward.1} parent=11 // pred_check_branch
          %511 = sbr.rel (%p509) target = $region68
        $region67: #{trajectory_transformer_forward.1} parent=11 // pred_region
          _
        $region68: #{trajectory_transformer_forward.1} parent=11 // pred_fallthru
          _
        // Predicated region
        $region69: #{trajectory_transformer_forward.1} parent=11 // pred_check
          %p512 = pneg %p367
        $region70: #{trajectory_transformer_forward.1} parent=11 // pred_check_branch
          %514 = sbr.rel (%p512) target = $region72
        $region71: #{trajectory_transformer_forward.1} parent=11 // pred_region
          _
        $region72: #{trajectory_transformer_forward.1} parent=11 // pred_fallthru
          _
        // Predicated region
        $region73: #{trajectory_transformer_forward.1} parent=11 // pred_check
          %p515 = pneg %p388
        $region74: #{trajectory_transformer_forward.1} parent=11 // pred_check_branch
          %517 = sbr.rel (%p515) target = $region76
        $region75: #{trajectory_transformer_forward.1} parent=11 // pred_region
          _
        $region76: #{trajectory_transformer_forward.1} parent=11 // pred_fallthru
          _
        // Predicated region
        $region77: #{trajectory_transformer_forward.1} parent=11 // pred_check
          %p518 = pneg %p409
        $region78: #{trajectory_transformer_forward.1} parent=11 // pred_check_branch
          %520 = sbr.rel (%p518) target = $region80
        $region79: #{trajectory_transformer_forward.1} parent=11 // pred_region
          _
        $region80: #{trajectory_transformer_forward.1} parent=11 // pred_fallthru
          _
      $region12: #{trajectory_transformer_forward.1} parent=5 // pred_fallthru
        _
      %p521 = scmp.lt.s32.totalorder %s26, 2
      // Predicated region
      $region81: #{trajectory_transformer_forward.1} parent=5 // pred_check
        %p522 = pneg %p521
      $region82: #{trajectory_transformer_forward.1} parent=5 // pred_check_branch
        %524 = sbr.rel (%p522) target = $region84
      $region83: #{trajectory_transformer_forward.1} parent=5 // pred_region
        // Predicated region
        $region85: #{trajectory_transformer_forward.1} parent=83 // pred_check
          %p525 = pneg %p46
        $region86: #{trajectory_transformer_forward.1} parent=83 // pred_check_branch
          %527 = sbr.rel (%p525) target = $region88
        $region87: #{trajectory_transformer_forward.1} parent=83 // pred_region
          %p528 = scmp.lt.s32.totalorder %s26, 1
          %s529 = scalar_select %p528, %s26, 1
          %s530 = smul.addr %s529, 8
          %s531 = scalar_lea.vmem %s0, %s530
        $region88: #{trajectory_transformer_forward.1} parent=83 // pred_fallthru
          _
      $region84: #{trajectory_transformer_forward.1} parent=5 // pred_fallthru
        _
      %p532 = scmp.le.s32.totalorder 1, %s26
      %p533 = scmp.lt.s32.totalorder %s26, 3
      %p534 = pnand %p532, %p533
      %p535 = pneg %p534
      // Predicated region
      $region89: #{trajectory_transformer_forward.1} parent=5 // pred_check
        _
      $region90: #{trajectory_transformer_forward.1} parent=5 // pred_check_branch
        %537 = sbr.rel (%p534) target = $region92
      $region91: #{trajectory_transformer_forward.1} parent=5 // pred_region
        %s538 = ssub.s32 %s26, 1
        // Predicated region
        $region93: #{trajectory_transformer_forward.1} parent=91 // pred_check
          %p539 = pneg %p262
        $region94: #{trajectory_transformer_forward.1} parent=91 // pred_check_branch
          %541 = sbr.rel (%p539) target = $region96
        $region95: #{trajectory_transformer_forward.1} parent=91 // pred_region
          %542 = dma.done [#allocation4], 32768
        $region96: #{trajectory_transformer_forward.1} parent=91 // pred_fallthru
          _
        // Predicated region
        $region97: #{trajectory_transformer_forward.1} parent=91 // pred_check
          %p543 = pneg %p304
        $region98: #{trajectory_transformer_forward.1} parent=91 // pred_check_branch
          %545 = sbr.rel (%p543) target = $region100
        $region99: #{trajectory_transformer_forward.1} parent=91 // pred_region
          %546 = dma.done [#allocation6], 32768
        $region100: #{trajectory_transformer_forward.1} parent=91 // pred_fallthru
          _
        %p547 = scmp.lt.s32.totalorder %s31, 1
        %s548 = scalar_select %p547, %s31, 1
        %s549 = smul.addr %s548, 8
        %s550 = scalar_lea.vmem %s0, %s549
        %p551 = pneg %p52
        %p552 = pneg %p49
        %p553 = pneg %p73
        %p554 = pneg %p70
        %p555 = pneg %p94
        %p556 = pneg %p91
        %p557 = pneg %p115
        %p558 = pneg %p112
        %p559 = pneg %p136
        %p560 = pneg %p133
        %p561 = pneg %p157
        %p562 = pneg %p154
        %p563 = pneg %p178
        %p564 = pneg %p175
        %p565 = pneg %p199
        %p566 = pneg %p196
        %p567 = pneg %p220
        %p568 = pneg %p217
        %p569 = pneg %p241
        %p570 = pneg %p238
        %p571 = pneg %p262
        %p572 = pneg %p259
        %p573 = pneg %p283
        %p574 = pneg %p280
        %p575 = pneg %p304
        %p576 = pneg %p301
        %p577 = pneg %p325
        %p578 = pneg %p322
        %p579 = pneg %p346
        %p580 = pneg %p343
        %p581 = pneg %p367
        %p582 = pneg %p364
        %p583 = pneg %p388
        %p584 = pneg %p385
        %p585 = pneg %p409
        %p586 = pneg %p406
        %p587 = pneg %p435
        %p588 = pneg %p432
        %p589 = scmp.lt.s32.totalorder %s31, 1
        %s590 = scalar_select %p589, %s31, 1
        %s591 = smul.addr %s590, 8
        %s592 = scalar_lea.vmem %s18, %s591
        %p593 = scmp.lt.s32.totalorder %s31, 1
        %s594 = scalar_select %p593, %s31, 1
        %s595 = smul.addr %s594, 8
        %s596 = scalar_lea.vmem %s0, %s595
        %p597 = scmp.lt.s32.totalorder %s31, 1
        %s598 = scalar_select %p597, %s31, 1
        %s599 = smul.addr %s598, 8
        %s600 = scalar_lea.vmem %s18, %s599
        %v602 = vld [vmem:[%s596] sm:$0xff]
        %v603 = vld [vmem:[%s2] sm:$0x3]
        %605 = vset.pattern.permute.xlu0 0
        %606 = vperm.xlu0 %605, %v602
        %v607 = vpop.permute.xlu0 %606
        %v609 = vlaneseq
        %v610 = vshrl.u32 %v609, 7
        %v611 = vsub.s32 0, %v610
        %v612 = vrot.slane %v603, %v611
        %v613 = vmul.f32 %v607, %v612
        %v614 = vadd.f32 %v613, 0.0
        %615 = vset.pattern.permute.xlu0 1
        %616 = vperm.xlu0 %615, %v602
        %v617 = vpop.permute.xlu0 %616
        %v619 = vlaneseq
        %v620 = vshrl.u32 %v619, 7
        %v621 = vsub.s32 1, %v620
        %v622 = vrot.slane %v603, %v621
        %v623 = vmul.f32 %v617, %v622
        %v624 = vadd.f32 %v614, %v623
        %v625 = vld [vmem:[%s3] sm:$0x1]
        %v627 = vlaneseq
        %v628 = vshrl.u32 %v627, 7
        %v629 = vsub.s32 0, %v628
        %v630 = vrot.slane %v625, %v629
        %v632 = vadd.f32 %v624, %v630
        %v633 = vld [vmem:[%s1] sm:$0xff]
        %v634 = vadd.f32 %v632, %v633
        %v635 = vpack.c.bf16 %v634, %v634
        %v636 = vld [vmem:[%s4] sm:$0xff]
        %v637 = vld [vmem:[%s4 + $0x8] sm:$0xf]
        %v638 = vld [vmem:[%s4 + $0xc] sm:$0xff]
        %v639 = vld [vmem:[%s4 + $0x14] sm:$0xf]
        %v640 = vld [vmem:[%s4 + $0x18] sm:$0xff]
        %v641 = vld [vmem:[%s4 + $0x20] sm:$0xf]
        %v642 = vld [vmem:[%s4 + $0x24] sm:$0xff]
        %v643 = vld [vmem:[%s4 + $0x2c] sm:$0xf]
        %v644 = vld [vmem:[%s4 + $0x30] sm:$0xff]
        %v645 = vld [vmem:[%s4 + $0x38] sm:$0xf]
        %v646 = vld [vmem:[%s4 + $0x3c] sm:$0xff]
        %v647 = vld [vmem:[%s4 + $0x44] sm:$0xf]
        %v648 = vld [vmem:[%s4 + $0x48] sm:$0xff]
        %v649 = vld [vmem:[%s4 + $0x50] sm:$0xf]
        %v650 = vld [vmem:[%s4 + $0x54] sm:$0xff]
        %v651 = vld [vmem:[%s4 + $0x5c] sm:$0xf]
        %v652 = vld [vmem:[%s4 + $0x60] sm:$0xff]
        %v653 = vld [vmem:[%s4 + $0x68] sm:$0xf]
        %v654 = vld [vmem:[%s4 + $0x6c] sm:$0xff]
        %v655 = vld [vmem:[%s4 + $0x74] sm:$0xf]
        %v656 = vld [vmem:[%s4 + $0x78] sm:$0xff]
        %v657 = vld [vmem:[%s4 + $0x80] sm:$0xf]
        %v658 = vld [vmem:[%s4 + $0x84] sm:$0xff]
        %v659 = vld [vmem:[%s4 + $0x8c] sm:$0xf]
        %v660 = vld [vmem:[%s4 + $0x90] sm:$0xff]
        %v661 = vld [vmem:[%s4 + $0x98] sm:$0xf]
        %v662 = vld [vmem:[%s4 + $0x9c] sm:$0xff]
        %v663 = vld [vmem:[%s4 + $0xa4] sm:$0xf]
        %v664 = vld [vmem:[%s4 + $0xa8] sm:$0xff]
        %v665 = vld [vmem:[%s4 + $0xb0] sm:$0xf]
        %v666 = vld [vmem:[%s4 + $0xb4] sm:$0xff]
        %v667 = vld [vmem:[%s4 + $0xbc] sm:$0xf]
        %v668 = vld [vmem:[%s5] sm:$0x7]
        %v670 = vlaneseq
        %v671 = vshrl.u32 %v670, 7
        %v672 = vsub.s32 0, %v671
        %v673 = vrot.slane %v668, %v672
        %v674 = vlaneseq
        %v675 = vshrl.u32 %v674, 7
        %v676 = vsub.s32 1, %v675
        %v677 = vrot.slane %v668, %v676
        %v678 = vlaneseq
        %v679 = vshrl.u32 %v678, 7
        %v680 = vsub.s32 2, %v679
        %v681 = vrot.slane %v668, %v680
        %v717 = vunpack.c.l.b16 %v636
        %v718 = vunpack.c.h.b16 %v636
        %v719 = vunpack.c.l.b16 %v637
        %v720 = vunpack.c.l.b16 %v638
        %v721 = vunpack.c.h.b16 %v638
        %v722 = vunpack.c.l.b16 %v639
        %v723 = vunpack.c.l.b16 %v640
        %v724 = vunpack.c.h.b16 %v640
        %v725 = vunpack.c.l.b16 %v641
        %v726 = vunpack.c.l.b16 %v642
        %v727 = vunpack.c.h.b16 %v642
        %v728 = vunpack.c.l.b16 %v643
        %v729 = vunpack.c.l.b16 %v644
        %v730 = vunpack.c.h.b16 %v644
        %v731 = vunpack.c.l.b16 %v645
        %v732 = vunpack.c.l.b16 %v646
        %v733 = vunpack.c.h.b16 %v646
        %v734 = vunpack.c.l.b16 %v647
        %v735 = vunpack.c.l.b16 %v648
        %v736 = vunpack.c.h.b16 %v648
        %v737 = vunpack.c.l.b16 %v649
        %v738 = vunpack.c.l.b16 %v650
        %v739 = vunpack.c.h.b16 %v650
        %v740 = vunpack.c.l.b16 %v651
        %v741 = vunpack.c.l.b16 %v652
        %v742 = vunpack.c.h.b16 %v652
        %v743 = vunpack.c.l.b16 %v653
        %v744 = vunpack.c.l.b16 %v654
        %v745 = vunpack.c.h.b16 %v654
        %v746 = vunpack.c.l.b16 %v655
        %v747 = vunpack.c.l.b16 %v656
        %v748 = vunpack.c.h.b16 %v656
        %v749 = vunpack.c.l.b16 %v657
        %v750 = vunpack.c.l.b16 %v658
        %v751 = vunpack.c.h.b16 %v658
        %v752 = vunpack.c.l.b16 %v659
        %v753 = vunpack.c.l.b16 %v660
        %v754 = vunpack.c.h.b16 %v660
        %v755 = vunpack.c.l.b16 %v661
        %v756 = vunpack.c.l.b16 %v662
        %v757 = vunpack.c.h.b16 %v662
        %v758 = vunpack.c.l.b16 %v663
        %v759 = vunpack.c.l.b16 %v664
        %v760 = vunpack.c.h.b16 %v664
        %v761 = vunpack.c.l.b16 %v665
        %v762 = vunpack.c.l.b16 %v666
        %v763 = vunpack.c.h.b16 %v666
        %v764 = vunpack.c.l.b16 %v667
        %v765 = vpack.c.b16 %v720, %v717
        %v766 = vpack.c.b16 %v721, %v718
        %v767 = vpack.c.b16 %v722, %v719
        %v768 = vpack.c.b16 %v726, %v723
        %v769 = vpack.c.b16 %v727, %v724
        %v770 = vpack.c.b16 %v728, %v725
        %v771 = vpack.c.b16 %v732, %v729
        %v772 = vpack.c.b16 %v733, %v730
        %v773 = vpack.c.b16 %v734, %v731
        %v774 = vpack.c.b16 %v738, %v735
        %v775 = vpack.c.b16 %v739, %v736
        %v776 = vpack.c.b16 %v740, %v737
        %v777 = vpack.c.b16 %v744, %v741
        %v778 = vpack.c.b16 %v745, %v742
        %v779 = vpack.c.b16 %v746, %v743
        %v780 = vpack.c.b16 %v750, %v747
        %v781 = vpack.c.b16 %v751, %v748
        %v782 = vpack.c.b16 %v752, %v749
        %v783 = vpack.c.b16 %v756, %v753
        %v784 = vpack.c.b16 %v757, %v754
        %v785 = vpack.c.b16 %v758, %v755
        %v786 = vpack.c.b16 %v762, %v759
        %v787 = vpack.c.b16 %v763, %v760
        %v788 = vpack.c.b16 %v764, %v761
        %813 = vmatprep.subr.bf16.mxu0 %v787
        %814 = vmatpush1.bf16.msra.mxu0 %v786
        %815 = vmatprep.subr.bf16.mxu0 %v784
        %816 = vmatpush1.bf16.msra.mxu0 %v783
        %817 = vmatprep.subr.bf16.mxu0 %v781
        %818 = vmatpush1.bf16.msra.mxu0 %v780
        %819 = vmatprep.subr.bf16.mxu0 %v778
        %820 = vmatpush1.bf16.msra.mxu0 %v777
        %821 = vmatprep.subr.bf16.mxu0 %v775
        %822 = vmatpush1.bf16.msra.mxu0 %v774
        %823 = vmatprep.subr.bf16.mxu0 %v772
        %824 = vmatpush1.bf16.msra.mxu0 %v771
        %825 = vmatprep.subr.bf16.mxu0 %v769
        %826 = vmatpush1.bf16.msra.mxu0 %v768
        %827 = vmatprep.subr.bf16.mxu0 %v766
        %828 = vmatpush1.bf16.msra.mxu0 %v765
        %829 = vmatprep.subr.bf16.mxu0 0
        %830 = vmatpush2.bf16.msra.mxu0 0
        %831 = vmatprep.subr.bf16.mxu0 0
        %832 = vmatpush2.bf16.msra.mxu0 0
        %833 = vmatprep.subr.bf16.mxu0 0
        %834 = vmatpush2.bf16.msra.mxu0 0
        %835 = vmatprep.subr.bf16.mxu0 0
        %836 = vmatpush2.bf16.msra.mxu0 0
        %837 = vmatprep.subr.bf16.mxu0 0
        %838 = vmatpush2.bf16.msra.mxu0 0
        %839 = vmatprep.subr.bf16.mxu0 0
        %840 = vmatpush2.bf16.msra.mxu0 0
        %841 = vmatprep.subr.bf16.mxu0 0
        %842 = vmatpush2.bf16.msra.mxu0 0
        %843 = vmatprep.subr.bf16.mxu0 0
        %844 = vmatpush2.bf16.msra.mxu0 0
        %845 = vmatprep.mubr.bf16.mxu0 0
        %846 = vmatmul.mubr.bf16.gmra.mxu0 %v635
        %v847 = vpop.f32.mrf.mxu0
        %v848 = vadd.f32 %v673, %v847
        %v849 = vpop.f32.mrf.mxu0
        %v850 = vadd.f32 %v677, %v849
        %v851 = vpop.f32.mrf.mxu0
        %v852 = vpop.f32.mrf.mxu0
        %853 = vdwg.mxu0
        %854 = vmatprep.subr.bf16.mxu0 0
        %855 = vmatpush1.bf16.msra.mxu0 %v788
        %856 = vmatprep.subr.bf16.mxu0 0
        %857 = vmatpush1.bf16.msra.mxu0 %v785
        %858 = vmatprep.subr.bf16.mxu0 0
        %859 = vmatpush1.bf16.msra.mxu0 %v782
        %860 = vmatprep.subr.bf16.mxu0 0
        %861 = vmatpush1.bf16.msra.mxu0 %v779
        %862 = vmatprep.subr.bf16.mxu0 0
        %863 = vmatpush1.bf16.msra.mxu0 %v776
        %864 = vmatprep.subr.bf16.mxu0 0
        %865 = vmatpush1.bf16.msra.mxu0 %v773
        %866 = vmatprep.subr.bf16.mxu0 0
        %867 = vmatpush1.bf16.msra.mxu0 %v770
        %868 = vmatprep.subr.bf16.mxu0 0
        %869 = vmatpush1.bf16.msra.mxu0 %v767
        %870 = vmatprep.subr.bf16.mxu0 0
        %871 = vmatpush2.bf16.msra.mxu0 0
        %872 = vmatprep.subr.bf16.mxu0 0
        %873 = vmatpush2.bf16.msra.mxu0 0
        %874 = vmatprep.subr.bf16.mxu0 0
        %875 = vmatpush2.bf16.msra.mxu0 0
        %876 = vmatprep.subr.bf16.mxu0 0
        %877 = vmatpush2.bf16.msra.mxu0 0
        %878 = vmatprep.subr.bf16.mxu0 0
        %879 = vmatpush2.bf16.msra.mxu0 0
        %880 = vmatprep.subr.bf16.mxu0 0
        %881 = vmatpush2.bf16.msra.mxu0 0
        %882 = vmatprep.subr.bf16.mxu0 0
        %883 = vmatpush2.bf16.msra.mxu0 0
        %884 = vmatprep.subr.bf16.mxu0 0
        %885 = vmatpush2.bf16.msra.mxu0 0
        %886 = vmatprep.mubr.bf16.mxu0 0
        %887 = vmatmul.mubr.bf16.gmra.mxu0 %v635
        %v888 = vpop.f32.mrf.mxu0
        %v889 = vadd.f32 %v681, %v888
        %v890 = vpop.f32.mrf.mxu0
        %v891 = vpop.f32.mrf.mxu0
        %v892 = vpop.f32.mrf.mxu0
        %893 = vdwg.mxu0
        %v894 = vmul.f32 %v848, 0.17677669
        %v895 = vpack.c.bf16 %v894, %v894
        %v896 = vpack.c.bf16 %v850, %v850
        %v897 = vpack.c.bf16 %v889, %v889
        %vm898 = vcmask 261120
        %v900 = vsel %vm898, %v895, 0
        %v903 = vsel %vm898, %v896, 0
        %905 = vmatprep.subr.bf16.mxu0 0
        %906 = vmatpush1.bf16.xpose.msra.mxu0 0
        %907 = vmatprep.subr.bf16.mxu0 0
        %908 = vmatpush1.bf16.xpose.msra.mxu0 0
        %909 = vmatprep.subr.bf16.mxu0 0
        %910 = vmatpush1.bf16.xpose.msra.mxu0 0
        %911 = vmatprep.subr.bf16.mxu0 0
        %912 = vmatpush1.bf16.xpose.msra.mxu0 0
        %913 = vmatprep.subr.bf16.mxu0 0
        %914 = vmatpush1.bf16.xpose.msra.mxu0 0
        %915 = vmatprep.subr.bf16.mxu0 0
        %916 = vmatpush1.bf16.xpose.msra.mxu0 0
        %917 = vmatprep.subr.bf16.mxu0 0
        %918 = vmatpush1.bf16.xpose.msra.mxu0 0
        %919 = vmatprep.subr.bf16.mxu0 0
        %920 = vmatpush1.bf16.xpose.msra.mxu0 %v903
        %921 = vmatprep.subr.bf16.mxu0 0
        %922 = vmatpush2.bf16.xpose.msra.mxu0 0
        %923 = vmatprep.subr.bf16.mxu0 0
        %924 = vmatpush2.bf16.xpose.msra.mxu0 0
        %925 = vmatprep.subr.bf16.mxu0 0
        %926 = vmatpush2.bf16.xpose.msra.mxu0 0
        %927 = vmatprep.subr.bf16.mxu0 0
        %928 = vmatpush2.bf16.xpose.msra.mxu0 0
        %929 = vmatprep.subr.bf16.mxu0 0
        %930 = vmatpush2.bf16.xpose.msra.mxu0 0
        %931 = vmatprep.subr.bf16.mxu0 0
        %932 = vmatpush2.bf16.xpose.msra.mxu0 0
        %933 = vmatprep.subr.bf16.mxu0 0
        %934 = vmatpush2.bf16.xpose.msra.mxu0 0
        %935 = vmatprep.subr.bf16.mxu0 0
        %936 = vmatpush2.bf16.xpose.msra.mxu0 0
        %937 = vmatprep.mubr.bf16.mxu0 0
        %938 = vmatmul.mubr.bf16.gmra.mxu0 %v900
        %v939 = vpop.f32.mrf.mxu0
        %v940 = vadd.f32 0.0, %v939
        %v941 = vpop.f32.mrf.mxu0
        %v942 = vpop.f32.mrf.mxu0
        %v943 = vpop.f32.mrf.mxu0
        %944 = vdwg.mxu0
        %vm945 = vcmask 64512
        %v946 = vsel %vm945, %v940, -inf
        %947 = vmax.xlane.f32.xlu0 %v946
        %v948 = vpop.xlane.xlu0 %947
        %v949 = vsub.f32 %v940, %v948
        %v950 = vmul.f32 %v949, 1.442695
        %v951 = vpow.pop %v950
        %v952 = vsel %vm945, %v951, 0.0
        %953 = vadd.xlane.f32.xlu0 %v952
        %v954 = vpop.xlane.xlu0 %953
        %v955 = vrcp.pop %v954
        %v956 = vpack.c.bf16 %v951, %v951
        %v958 = vsel %vm945, %v956, 0
        %vm960 = vcmask 1043456
        %v962 = vsel %vm960, %v897, 0
        %964 = vmatprep.subr.bf16.mxu0 0
        %965 = vmatpush1.bf16.msra.mxu0 0
        %966 = vmatprep.subr.bf16.mxu0 0
        %967 = vmatpush1.bf16.msra.mxu0 0
        %968 = vmatprep.subr.bf16.mxu0 0
        %969 = vmatpush1.bf16.msra.mxu0 0
        %970 = vmatprep.subr.bf16.mxu0 0
        %971 = vmatpush1.bf16.msra.mxu0 0
        %972 = vmatprep.subr.bf16.mxu0 0
        %973 = vmatpush1.bf16.msra.mxu0 0
        %974 = vmatprep.subr.bf16.mxu0 0
        %975 = vmatpush1.bf16.msra.mxu0 0
        %976 = vmatprep.subr.bf16.mxu0 0
        %977 = vmatpush1.bf16.msra.mxu0 0
        %978 = vmatprep.subr.bf16.mxu0 0
        %979 = vmatpush1.bf16.msra.mxu0 %v962
        %980 = vmatprep.subr.bf16.mxu0 0
        %981 = vmatpush2.bf16.msra.mxu0 0
        %982 = vmatprep.subr.bf16.mxu0 0
        %983 = vmatpush2.bf16.msra.mxu0 0
        %984 = vmatprep.subr.bf16.mxu0 0
        %985 = vmatpush2.bf16.msra.mxu0 0
        %986 = vmatprep.subr.bf16.mxu0 0
        %987 = vmatpush2.bf16.msra.mxu0 0
        %988 = vmatprep.subr.bf16.mxu0 0
        %989 = vmatpush2.bf16.msra.mxu0 0
        %990 = vmatprep.subr.bf16.mxu0 0
        %991 = vmatpush2.bf16.msra.mxu0 0
        %992 = vmatprep.subr.bf16.mxu0 0
        %993 = vmatpush2.bf16.msra.mxu0 0
        %994 = vmatprep.subr.bf16.mxu0 0
        %995 = vmatpush2.bf16.msra.mxu0 0
        %996 = vmatprep.mubr.bf16.mxu0 0
        %997 = vmatmul.mubr.bf16.gmra.mxu0 %v958
        %v998 = vpop.f32.mrf.mxu0
        %v999 = vadd.f32 0.0, %v998
        %v1000 = vpop.f32.mrf.mxu0
        %v1001 = vpop.f32.mrf.mxu0
        %v1002 = vpop.f32.mrf.mxu0
        %1003 = vdwg.mxu0
        %v1004 = vmul.f32 %v999, %v955
        %1005 = vst.msk [vmem:[#allocation2] sm:$0xff] %vm898, %v1004
        %1007 = vrot.lane.b32.xlu0 %v895, 96
        %v1008 = vpop.permute.xlu0 %1007
        %1010 = vrot.lane.b32.xlu0 %v896, 96
        %v1011 = vpop.permute.xlu0 %1010
        %v1013 = vsel %vm898, %v1008, 0
        %v1016 = vsel %vm898, %v1011, 0
        %1018 = vmatprep.subr.bf16.mxu0 0
        %1019 = vmatpush1.bf16.xpose.msra.mxu0 0
        %1020 = vmatprep.subr.bf16.mxu0 0
        %1021 = vmatpush1.bf16.xpose.msra.mxu0 0
        %1022 = vmatprep.subr.bf16.mxu0 0
        %1023 = vmatpush1.bf16.xpose.msra.mxu0 0
        %1024 = vmatprep.subr.bf16.mxu0 0
        %1025 = vmatpush1.bf16.xpose.msra.mxu0 0
        %1026 = vmatprep.subr.bf16.mxu0 0
        %1027 = vmatpush1.bf16.xpose.msra.mxu0 0
        %1028 = vmatprep.subr.bf16.mxu0 0
        %1029 = vmatpush1.bf16.xpose.msra.mxu0 0
        %1030 = vmatprep.subr.bf16.mxu0 0
        %1031 = vmatpush1.bf16.xpose.msra.mxu0 0
        %1032 = vmatprep.subr.bf16.mxu0 0
        %1033 = vmatpush1.bf16.xpose.msra.mxu0 %v1016
        %1034 = vmatprep.subr.bf16.mxu0 0
        %1035 = vmatpush2.bf16.xpose.msra.mxu0 0
        %1036 = vmatprep.subr.bf16.mxu0 0
        %1037 = vmatpush2.bf16.xpose.msra.mxu0 0
        %1038 = vmatprep.subr.bf16.mxu0 0
        %1039 = vmatpush2.bf16.xpose.msra.mxu0 0
        %1040 = vmatprep.subr.bf16.mxu0 0
        %1041 = vmatpush2.bf16.xpose.msra.mxu0 0
        %1042 = vmatprep.subr.bf16.mxu0 0
        %1043 = vmatpush2.bf16.xpose.msra.mxu0 0
        %1044 = vmatprep.subr.bf16.mxu0 0
        %1045 = vmatpush2.bf16.xpose.msra.mxu0 0
        %1046 = vmatprep.subr.bf16.mxu0 0
        %1047 = vmatpush2.bf16.xpose.msra.mxu0 0
        %1048 = vmatprep.subr.bf16.mxu0 0
        %1049 = vmatpush2.bf16.xpose.msra.mxu0 0
        %1050 = vmatprep.mubr.bf16.mxu0 0
        %1051 = vmatmul.mubr.bf16.gmra.mxu0 %v1013
        %v1052 = vpop.f32.mrf.mxu0
        %v1053 = vadd.f32 0.0, %v1052
        %v1054 = vpop.f32.mrf.mxu0
        %v1055 = vpop.f32.mrf.mxu0
        %v1056 = vpop.f32.mrf.mxu0
        %1057 = vdwg.mxu0
        %v1058 = vsel %vm945, %v1053, -inf
        %1059 = vmax.xlane.f32.xlu0 %v1058
        %v1060 = vpop.xlane.xlu0 %1059
        %v1061 = vsub.f32 %v1053, %v1060
        %v1062 = vmul.f32 %v1061, 1.442695
        %v1063 = vpow.pop %v1062
        %v1064 = vsel %vm945, %v1063, 0.0
        %1065 = vadd.xlane.f32.xlu0 %v1064
        %v1066 = vpop.xlane.xlu0 %1065
        %v1067 = vrcp.pop %v1066
        %v1068 = vpack.c.bf16 %v1063, %v1063
        %1070 = vrot.lane.b32.xlu0 %v897, 96
        %v1071 = vpop.permute.xlu0 %1070
        %v1073 = vsel %vm945, %v1068, 0
        %v1076 = vsel %vm960, %v1071, 0
        %1078 = vmatprep.subr.bf16.mxu0 0
        %1079 = vmatpush1.bf16.msra.mxu0 0
        %1080 = vmatprep.subr.bf16.mxu0 0
        %1081 = vmatpush1.bf16.msra.mxu0 0
        %1082 = vmatprep.subr.bf16.mxu0 0
        %1083 = vmatpush1.bf16.msra.mxu0 0
        %1084 = vmatprep.subr.bf16.mxu0 0
        %1085 = vmatpush1.bf16.msra.mxu0 0
        %1086 = vmatprep.subr.bf16.mxu0 0
        %1087 = vmatpush1.bf16.msra.mxu0 0
        %1088 = vmatprep.subr.bf16.mxu0 0
        %1089 = vmatpush1.bf16.msra.mxu0 0
        %1090 = vmatprep.subr.bf16.mxu0 0
        %1091 = vmatpush1.bf16.msra.mxu0 0
        %1092 = vmatprep.subr.bf16.mxu0 0
        %1093 = vmatpush1.bf16.msra.mxu0 %v1076
        %1094 = vmatprep.subr.bf16.mxu0 0
        %1095 = vmatpush2.bf16.msra.mxu0 0
        %1096 = vmatprep.subr.bf16.mxu0 0
        %1097 = vmatpush2.bf16.msra.mxu0 0
        %1098 = vmatprep.subr.bf16.mxu0 0
        %1099 = vmatpush2.bf16.msra.mxu0 0
        %1100 = vmatprep.subr.bf16.mxu0 0
        %1101 = vmatpush2.bf16.msra.mxu0 0
        %1102 = vmatprep.subr.bf16.mxu0 0
        %1103 = vmatpush2.bf16.msra.mxu0 0
        %1104 = vmatprep.subr.bf16.mxu0 0
        %1105 = vmatpush2.bf16.msra.mxu0 0
        %1106 = vmatprep.subr.bf16.mxu0 0
        %1107 = vmatpush2.bf16.msra.mxu0 0
        %1108 = vmatprep.subr.bf16.mxu0 0
        %1109 = vmatpush2.bf16.msra.mxu0 0
        %1110 = vmatprep.mubr.bf16.mxu0 0
        %1111 = vmatmul.mubr.bf16.gmra.mxu0 %v1073
        %v1112 = vpop.f32.mrf.mxu0
        %v1113 = vadd.f32 0.0, %v1112
        %v1114 = vpop.f32.mrf.mxu0
        %v1115 = vpop.f32.mrf.mxu0
        %v1116 = vpop.f32.mrf.mxu0
        %1117 = vdwg.mxu0
        %v1118 = vmul.f32 %v1113, %v1067
        %1120 = vrot.lane.b32.xlu0 %v1118, 32
        %v1121 = vpop.permute.xlu0 %1120
        %vm1123 = vcmask 523520
        %1124 = vst.msk [vmem:[#allocation2] sm:$0xff] %vm1123, %v1121
        %1125 = vrot.lane.b32.xlu0 %v895, 64
        %v1126 = vpop.permute.xlu0 %1125
        %1127 = vrot.lane.b32.xlu0 %v896, 64
        %v1128 = vpop.permute.xlu0 %1127
        %v1130 = vsel %vm898, %v1126, 0
        %v1133 = vsel %vm898, %v1128, 0
        %1135 = vmatprep.subr.bf16.mxu0 0
        %1136 = vmatpush1.bf16.xpose.msra.mxu0 0
        %1137 = vmatprep.subr.bf16.mxu0 0
        %1138 = vmatpush1.bf16.xpose.msra.mxu0 0
        %1139 = vmatprep.subr.bf16.mxu0 0
        %1140 = vmatpush1.bf16.xpose.msra.mxu0 0
        %1141 = vmatprep.subr.bf16.mxu0 0
        %1142 = vmatpush1.bf16.xpose.msra.mxu0 0
        %1143 = vmatprep.subr.bf16.mxu0 0
        %1144 = vmatpush1.bf16.xpose.msra.mxu0 0
        %1145 = vmatprep.subr.bf16.mxu0 0
        %1146 = vmatpush1.bf16.xpose.msra.mxu0 0
        %1147 = vmatprep.subr.bf16.mxu0 0
        %1148 = vmatpush1.bf16.xpose.msra.mxu0 0
        %1149 = vmatprep.subr.bf16.mxu0 0
        %1150 = vmatpush1.bf16.xpose.msra.mxu0 %v1133
        %1151 = vmatprep.subr.bf16.mxu0 0
        %1152 = vmatpush2.bf16.xpose.msra.mxu0 0
        %1153 = vmatprep.subr.bf16.mxu0 0
        %1154 = vmatpush2.bf16.xpose.msra.mxu0 0
        %1155 = vmatprep.subr.bf16.mxu0 0
        %1156 = vmatpush2.bf16.xpose.msra.mxu0 0
        %1157 = vmatprep.subr.bf16.mxu0 0
        %1158 = vmatpush2.bf16.xpose.msra.mxu0 0
        %1159 = vmatprep.subr.bf16.mxu0 0
        %1160 = vmatpush2.bf16.xpose.msra.mxu0 0
        %1161 = vmatprep.subr.bf16.mxu0 0
        %1162 = vmatpush2.bf16.xpose.msra.mxu0 0
        %1163 = vmatprep.subr.bf16.mxu0 0
        %1164 = vmatpush2.bf16.xpose.msra.mxu0 0
        %1165 = vmatprep.subr.bf16.mxu0 0
        %1166 = vmatpush2.bf16.xpose.msra.mxu0 0
        %1167 = vmatprep.mubr.bf16.mxu0 0
        %1168 = vmatmul.mubr.bf16.gmra.mxu0 %v1130
        %v1169 = vpop.f32.mrf.mxu0
        %v1170 = vadd.f32 0.0, %v1169
        %v1171 = vpop.f32.mrf.mxu0
        %v1172 = vpop.f32.mrf.mxu0
        %v1173 = vpop.f32.mrf.mxu0
        %1174 = vdwg.mxu0
        %v1175 = vsel %vm945, %v1170, -inf
        %1176 = vmax.xlane.f32.xlu0 %v1175
        %v1177 = vpop.xlane.xlu0 %1176
        %v1178 = vsub.f32 %v1170, %v1177
        %v1179 = vmul.f32 %v1178, 1.442695
        %v1180 = vpow.pop %v1179
        %v1181 = vsel %vm945, %v1180, 0.0
        %1182 = vadd.xlane.f32.xlu0 %v1181
        %v1183 = vpop.xlane.xlu0 %1182
        %v1184 = vrcp.pop %v1183
        %v1185 = vpack.c.bf16 %v1180, %v1180
        %1186 = vrot.lane.b32.xlu0 %v897, 64
        %v1187 = vpop.permute.xlu0 %1186
        %v1189 = vsel %vm945, %v1185, 0
        %v1192 = vsel %vm960, %v1187, 0
        %1194 = vmatprep.subr.bf16.mxu0 0
        %1195 = vmatpush1.bf16.msra.mxu0 0
        %1196 = vmatprep.subr.bf16.mxu0 0
        %1197 = vmatpush1.bf16.msra.mxu0 0
        %1198 = vmatprep.subr.bf16.mxu0 0
        %1199 = vmatpush1.bf16.msra.mxu0 0
        %1200 = vmatprep.subr.bf16.mxu0 0
        %1201 = vmatpush1.bf16.msra.mxu0 0
        %1202 = vmatprep.subr.bf16.mxu0 0
        %1203 = vmatpush1.bf16.msra.mxu0 0
        %1204 = vmatprep.subr.bf16.mxu0 0
        %1205 = vmatpush1.bf16.msra.mxu0 0
        %1206 = vmatprep.subr.bf16.mxu0 0
        %1207 = vmatpush1.bf16.msra.mxu0 0
        %1208 = vmatprep.subr.bf16.mxu0 0
        %1209 = vmatpush1.bf16.msra.mxu0 %v1192
        %1210 = vmatprep.subr.bf16.mxu0 0
        %1211 = vmatpush2.bf16.msra.mxu0 0
        %1212 = vmatprep.subr.bf16.mxu0 0
        %1213 = vmatpush2.bf16.msra.mxu0 0
        %1214 = vmatprep.subr.bf16.mxu0 0
        %1215 = vmatpush2.bf16.msra.mxu0 0
        %1216 = vmatprep.subr.bf16.mxu0 0
        %1217 = vmatpush2.bf16.msra.mxu0 0
        %1218 = vmatprep.subr.bf16.mxu0 0
        %1219 = vmatpush2.bf16.msra.mxu0 0
        %1220 = vmatprep.subr.bf16.mxu0 0
        %1221 = vmatpush2.bf16.msra.mxu0 0
        %1222 = vmatprep.subr.bf16.mxu0 0
        %1223 = vmatpush2.bf16.msra.mxu0 0
        %1224 = vmatprep.subr.bf16.mxu0 0
        %1225 = vmatpush2.bf16.msra.mxu0 0
        %1226 = vmatprep.mubr.bf16.mxu0 0
        %1227 = vmatmul.mubr.bf16.gmra.mxu0 %v1189
        %v1228 = vpop.f32.mrf.mxu0
        %v1229 = vadd.f32 0.0, %v1228
        %v1230 = vpop.f32.mrf.mxu0
        %v1231 = vpop.f32.mrf.mxu0
        %v1232 = vpop.f32.mrf.mxu0
        %1233 = vdwg.mxu0
        %v1234 = vmul.f32 %v1229, %v1184
        %1236 = vrot.lane.b32.xlu0 %v1234, 64
        %v1237 = vpop.permute.xlu0 %1236
        %vm1239 = vcmask 785920
        %1240 = vst.msk [vmem:[#allocation2] sm:$0xff] %vm1239, %v1237
        %1241 = vrot.lane.b32.xlu0 %v895, 32
        %v1242 = vpop.permute.xlu0 %1241
        %1243 = vrot.lane.b32.xlu0 %v896, 32
        %v1244 = vpop.permute.xlu0 %1243
        %v1246 = vsel %vm898, %v1242, 0
        %v1249 = vsel %vm898, %v1244, 0
        %1251 = vmatprep.subr.bf16.mxu0 0
        %1252 = vmatpush1.bf16.xpose.msra.mxu0 0
        %1253 = vmatprep.subr.bf16.mxu0 0
        %1254 = vmatpush1.bf16.xpose.msra.mxu0 0
        %1255 = vmatprep.subr.bf16.mxu0 0
        %1256 = vmatpush1.bf16.xpose.msra.mxu0 0
        %1257 = vmatprep.subr.bf16.mxu0 0
        %1258 = vmatpush1.bf16.xpose.msra.mxu0 0
        %1259 = vmatprep.subr.bf16.mxu0 0
        %1260 = vmatpush1.bf16.xpose.msra.mxu0 0
        %1261 = vmatprep.subr.bf16.mxu0 0
        %1262 = vmatpush1.bf16.xpose.msra.mxu0 0
        %1263 = vmatprep.subr.bf16.mxu0 0
        %1264 = vmatpush1.bf16.xpose.msra.mxu0 0
        %1265 = vmatprep.subr.bf16.mxu0 0
        %1266 = vmatpush1.bf16.xpose.msra.mxu0 %v1249
        %1267 = vmatprep.subr.bf16.mxu0 0
        %1268 = vmatpush2.bf16.xpose.msra.mxu0 0
        %1269 = vmatprep.subr.bf16.mxu0 0
        %1270 = vmatpush2.bf16.xpose.msra.mxu0 0
        %1271 = vmatprep.subr.bf16.mxu0 0
        %1272 = vmatpush2.bf16.xpose.msra.mxu0 0
        %1273 = vmatprep.subr.bf16.mxu0 0
        %1274 = vmatpush2.bf16.xpose.msra.mxu0 0
        %1275 = vmatprep.subr.bf16.mxu0 0
        %1276 = vmatpush2.bf16.xpose.msra.mxu0 0
        %1277 = vmatprep.subr.bf16.mxu0 0
        %1278 = vmatpush2.bf16.xpose.msra.mxu0 0
        %1279 = vmatprep.subr.bf16.mxu0 0
        %1280 = vmatpush2.bf16.xpose.msra.mxu0 0
        %1281 = vmatprep.subr.bf16.mxu0 0
        %1282 = vmatpush2.bf16.xpose.msra.mxu0 0
        %1283 = vmatprep.mubr.bf16.mxu0 0
        %1284 = vmatmul.mubr.bf16.gmra.mxu0 %v1246
        %v1285 = vpop.f32.mrf.mxu0
        %v1286 = vadd.f32 0.0, %v1285
        %v1287 = vpop.f32.mrf.mxu0
        %v1288 = vpop.f32.mrf.mxu0
        %v1289 = vpop.f32.mrf.mxu0
        %1290 = vdwg.mxu0
        %v1291 = vsel %vm945, %v1286, -inf
        %1292 = vmax.xlane.f32.xlu0 %v1291
        %v1293 = vpop.xlane.xlu0 %1292
        %v1294 = vsub.f32 %v1286, %v1293
        %v1295 = vmul.f32 %v1294, 1.442695
        %v1296 = vpow.pop %v1295
        %v1297 = vsel %vm945, %v1296, 0.0
        %1298 = vadd.xlane.f32.xlu0 %v1297
        %v1299 = vpop.xlane.xlu0 %1298
        %v1300 = vrcp.pop %v1299
        %v1301 = vpack.c.bf16 %v1296, %v1296
        %1302 = vrot.lane.b32.xlu0 %v897, 32
        %v1303 = vpop.permute.xlu0 %1302
        %v1305 = vsel %vm945, %v1301, 0
        %v1308 = vsel %vm960, %v1303, 0
        %1310 = vmatprep.subr.bf16.mxu0 0
        %1311 = vmatpush1.bf16.msra.mxu0 0
        %1312 = vmatprep.subr.bf16.mxu0 0
        %1313 = vmatpush1.bf16.msra.mxu0 0
        %1314 = vmatprep.subr.bf16.mxu0 0
        %1315 = vmatpush1.bf16.msra.mxu0 0
        %1316 = vmatprep.subr.bf16.mxu0 0
        %1317 = vmatpush1.bf16.msra.mxu0 0
        %1318 = vmatprep.subr.bf16.mxu0 0
        %1319 = vmatpush1.bf16.msra.mxu0 0
        %1320 = vmatprep.subr.bf16.mxu0 0
        %1321 = vmatpush1.bf16.msra.mxu0 0
        %1322 = vmatprep.subr.bf16.mxu0 0
        %1323 = vmatpush1.bf16.msra.mxu0 0
        %1324 = vmatprep.subr.bf16.mxu0 0
        %1325 = vmatpush1.bf16.msra.mxu0 %v1308
        %1326 = vmatprep.subr.bf16.mxu0 0
        %1327 = vmatpush2.bf16.msra.mxu0 0
        %1328 = vmatprep.subr.bf16.mxu0 0
        %1329 = vmatpush2.bf16.msra.mxu0 0
        %1330 = vmatprep.subr.bf16.mxu0 0
        %1331 = vmatpush2.bf16.msra.mxu0 0
        %1332 = vmatprep.subr.bf16.mxu0 0
        %1333 = vmatpush2.bf16.msra.mxu0 0
        %1334 = vmatprep.subr.bf16.mxu0 0
        %1335 = vmatpush2.bf16.msra.mxu0 0
        %1336 = vmatprep.subr.bf16.mxu0 0
        %1337 = vmatpush2.bf16.msra.mxu0 0
        %1338 = vmatprep.subr.bf16.mxu0 0
        %1339 = vmatpush2.bf16.msra.mxu0 0
        %1340 = vmatprep.subr.bf16.mxu0 0
        %1341 = vmatpush2.bf16.msra.mxu0 0
        %1342 = vmatprep.mubr.bf16.mxu0 0
        %1343 = vmatmul.mubr.bf16.gmra.mxu0 %v1305
        %v1344 = vpop.f32.mrf.mxu0
        %v1345 = vadd.f32 0.0, %v1344
        %v1346 = vpop.f32.mrf.mxu0
        %v1347 = vpop.f32.mrf.mxu0
        %v1348 = vpop.f32.mrf.mxu0
        %1349 = vdwg.mxu0
        %v1350 = vmul.f32 %v1345, %v1300
        %1352 = vrot.lane.b32.xlu0 %v1350, 96
        %v1353 = vpop.permute.xlu0 %1352
        %vm1355 = vcmask 1048320
        %1356 = vst.msk [vmem:[#allocation2] sm:$0xff] %vm1355, %v1353
        %v1357 = vld [vmem:[#allocation2] sm:$0xff]
        %v1358 = vpack.c.bf16 %v1357, %v1357
        %v1359 = vld [vmem:[%s6] sm:$0xf]
        %v1360 = vld [vmem:[%s6 + $0x4] sm:$0xf]
        %v1361 = vld [vmem:[%s6 + $0x8] sm:$0xf]
        %v1362 = vld [vmem:[%s6 + $0xc] sm:$0xf]
        %v1363 = vld [vmem:[%s6 + $0x10] sm:$0xf]
        %v1364 = vld [vmem:[%s6 + $0x14] sm:$0xf]
        %v1365 = vld [vmem:[%s6 + $0x18] sm:$0xf]
        %v1366 = vld [vmem:[%s6 + $0x1c] sm:$0xf]
        %v1367 = vld [vmem:[%s6 + $0x20] sm:$0xf]
        %v1368 = vld [vmem:[%s6 + $0x24] sm:$0xf]
        %v1369 = vld [vmem:[%s6 + $0x28] sm:$0xf]
        %v1370 = vld [vmem:[%s6 + $0x2c] sm:$0xf]
        %v1371 = vld [vmem:[%s6 + $0x30] sm:$0xf]
        %v1372 = vld [vmem:[%s6 + $0x34] sm:$0xf]
        %v1373 = vld [vmem:[%s6 + $0x38] sm:$0xf]
        %v1374 = vld [vmem:[%s6 + $0x3c] sm:$0xf]
        %v1375 = vld [vmem:[%s7] sm:$0x1]
        %v1377 = vlaneseq
        %v1378 = vshrl.u32 %v1377, 7
        %v1379 = vsub.s32 0, %v1378
        %v1380 = vrot.slane %v1375, %v1379
        %v1398 = vunpack.c.l.b16 %v1359
        %v1399 = vunpack.c.l.b16 %v1360
        %v1400 = vunpack.c.l.b16 %v1361
        %v1401 = vunpack.c.l.b16 %v1362
        %v1402 = vunpack.c.l.b16 %v1363
        %v1403 = vunpack.c.l.b16 %v1364
        %v1404 = vunpack.c.l.b16 %v1365
        %v1405 = vunpack.c.l.b16 %v1366
        %v1406 = vunpack.c.l.b16 %v1367
        %v1407 = vunpack.c.l.b16 %v1368
        %v1408 = vunpack.c.l.b16 %v1369
        %v1409 = vunpack.c.l.b16 %v1370
        %v1410 = vunpack.c.l.b16 %v1371
        %v1411 = vunpack.c.l.b16 %v1372
        %v1412 = vunpack.c.l.b16 %v1373
        %v1413 = vunpack.c.l.b16 %v1374
        %v1414 = vpack.c.b16 %v1399, %v1398
        %v1415 = vpack.c.b16 %v1401, %v1400
        %v1416 = vpack.c.b16 %v1403, %v1402
        %v1417 = vpack.c.b16 %v1405, %v1404
        %v1418 = vpack.c.b16 %v1407, %v1406
        %v1419 = vpack.c.b16 %v1409, %v1408
        %v1420 = vpack.c.b16 %v1411, %v1410
        %v1421 = vpack.c.b16 %v1413, %v1412
        %1430 = vmatprep.subr.bf16.mxu0 0
        %1431 = vmatpush1.bf16.msra.mxu0 %v1421
        %1432 = vmatprep.subr.bf16.mxu0 0
        %1433 = vmatpush1.bf16.msra.mxu0 %v1420
        %1434 = vmatprep.subr.bf16.mxu0 0
        %1435 = vmatpush1.bf16.msra.mxu0 %v1419
        %1436 = vmatprep.subr.bf16.mxu0 0
        %1437 = vmatpush1.bf16.msra.mxu0 %v1418
        %1438 = vmatprep.subr.bf16.mxu0 0
        %1439 = vmatpush1.bf16.msra.mxu0 %v1417
        %1440 = vmatprep.subr.bf16.mxu0 0
        %1441 = vmatpush1.bf16.msra.mxu0 %v1416
        %1442 = vmatprep.subr.bf16.mxu0 0
        %1443 = vmatpush1.bf16.msra.mxu0 %v1415
        %1444 = vmatprep.subr.bf16.mxu0 0
        %1445 = vmatpush1.bf16.msra.mxu0 %v1414
        %1446 = vmatprep.subr.bf16.mxu0 0
        %1447 = vmatpush2.bf16.msra.mxu0 0
        %1448 = vmatprep.subr.bf16.mxu0 0
        %1449 = vmatpush2.bf16.msra.mxu0 0
        %1450 = vmatprep.subr.bf16.mxu0 0
        %1451 = vmatpush2.bf16.msra.mxu0 0
        %1452 = vmatprep.subr.bf16.mxu0 0
        %1453 = vmatpush2.bf16.msra.mxu0 0
        %1454 = vmatprep.subr.bf16.mxu0 0
        %1455 = vmatpush2.bf16.msra.mxu0 0
        %1456 = vmatprep.subr.bf16.mxu0 0
        %1457 = vmatpush2.bf16.msra.mxu0 0
        %1458 = vmatprep.subr.bf16.mxu0 0
        %1459 = vmatpush2.bf16.msra.mxu0 0
        %1460 = vmatprep.subr.bf16.mxu0 0
        %1461 = vmatpush2.bf16.msra.mxu0 0
        %1462 = vmatprep.mubr.bf16.mxu0 0
        %1463 = vmatmul.mubr.bf16.gmra.mxu0 %v1358
        %v1464 = vpop.f32.mrf.mxu0
        %v1465 = vadd.f32 %v1380, %v1464
        %v1466 = vpop.f32.mrf.mxu0
        %v1467 = vpop.f32.mrf.mxu0
        %v1468 = vpop.f32.mrf.mxu0
        %1469 = vdwg.mxu0
        %v1470 = vadd.f32 %v634, %v1465
        %1471 = vadd.xlane.f32.xlu0 %v1470
        %v1472 = vpop.xlane.xlu0 %1471
        %v1473 = vrcp.pop 128.0
        %v1474 = vmul.f32 %v1472, %v1473
        %v1475 = vsub.f32 %v1470, %v1474
        %v1476 = vmul.f32 %v1475, %v1475
        %1477 = vadd.xlane.f32.xlu0 %v1476
        %v1478 = vpop.xlane.xlu0 %1477
        %v1479 = vmul.f32 %v1478, %v1473
        %v1480 = vadd.f32 %v1479, 1e-05
        %v1481 = vrsqrt.pop %v1480
        %v1482 = vmul.f32 %v1475, %v1481
        %v1483 = vld [vmem:[%s8] sm:$0x1]
        %v1485 = vlaneseq
        %v1486 = vshrl.u32 %v1485, 7
        %v1487 = vsub.s32 0, %v1486
        %v1488 = vrot.slane %v1483, %v1487
        %v1490 = vmul.f32 %v1482, %v1488
        %v1491 = vld [vmem:[%s9] sm:$0x1]
        %v1493 = vlaneseq
        %v1494 = vshrl.u32 %v1493, 7
        %v1495 = vsub.s32 0, %v1494
        %v1496 = vrot.slane %v1491, %v1495
        %v1498 = vadd.f32 %v1490, %v1496
        %v1499 = vpack.c.bf16 %v1498, %v1498
        %v1500 = vld [vmem:[#allocation3] sm:$0xff]
        %v1501 = vld [vmem:[#allocation3 + $0x8] sm:$0xff]
        %v1502 = vld [vmem:[#allocation3 + $0x10] sm:$0xff]
        %v1503 = vld [vmem:[#allocation3 + $0x18] sm:$0xff]
        %v1504 = vld [vmem:[#allocation3 + $0x20] sm:$0xff]
        %v1505 = vld [vmem:[#allocation3 + $0x28] sm:$0xff]
        %v1506 = vld [vmem:[#allocation3 + $0x30] sm:$0xff]
        %v1507 = vld [vmem:[#allocation3 + $0x38] sm:$0xff]
        %v1508 = vld [vmem:[#allocation3 + $0x40] sm:$0xff]
        %v1509 = vld [vmem:[#allocation3 + $0x48] sm:$0xff]
        %v1510 = vld [vmem:[#allocation3 + $0x50] sm:$0xff]
        %v1511 = vld [vmem:[#allocation3 + $0x58] sm:$0xff]
        %v1512 = vld [vmem:[#allocation3 + $0x60] sm:$0xff]
        %v1513 = vld [vmem:[#allocation3 + $0x68] sm:$0xff]
        %v1514 = vld [vmem:[#allocation3 + $0x70] sm:$0xff]
        %v1515 = vld [vmem:[#allocation3 + $0x78] sm:$0xff]
        %v1516 = vld [vmem:[#allocation3 + $0x80] sm:$0xff]
        %v1517 = vld [vmem:[#allocation3 + $0x88] sm:$0xff]
        %v1518 = vld [vmem:[#allocation3 + $0x90] sm:$0xff]
        %v1519 = vld [vmem:[#allocation3 + $0x98] sm:$0xff]
        %v1520 = vld [vmem:[#allocation3 + $0xa0] sm:$0xff]
        %v1521 = vld [vmem:[#allocation3 + $0xa8] sm:$0xff]
        %v1522 = vld [vmem:[#allocation3 + $0xb0] sm:$0xff]
        %v1523 = vld [vmem:[#allocation3 + $0xb8] sm:$0xff]
        %v1524 = vld [vmem:[#allocation3 + $0xc0] sm:$0xff]
        %v1525 = vld [vmem:[#allocation3 + $0xc8] sm:$0xff]
        %v1526 = vld [vmem:[#allocation3 + $0xd0] sm:$0xff]
        %v1527 = vld [vmem:[#allocation3 + $0xd8] sm:$0xff]
        %v1528 = vld [vmem:[#allocation3 + $0xe0] sm:$0xff]
        %v1529 = vld [vmem:[#allocation3 + $0xe8] sm:$0xff]
        %v1530 = vld [vmem:[#allocation3 + $0xf0] sm:$0xff]
        %v1531 = vld [vmem:[#allocation3 + $0xf8] sm:$0xff]
        %v1532 = vld [vmem:[#allocation3 + $0x100] sm:$0xff]
        %v1533 = vld [vmem:[#allocation3 + $0x108] sm:$0xff]
        %v1534 = vld [vmem:[#allocation3 + $0x110] sm:$0xff]
        %v1535 = vld [vmem:[#allocation3 + $0x118] sm:$0xff]
        %v1536 = vld [vmem:[#allocation3 + $0x120] sm:$0xff]
        %v1537 = vld [vmem:[#allocation3 + $0x128] sm:$0xff]
        %v1538 = vld [vmem:[#allocation3 + $0x130] sm:$0xff]
        %v1539 = vld [vmem:[#allocation3 + $0x138] sm:$0xff]
        %v1540 = vld [vmem:[#allocation3 + $0x140] sm:$0xff]
        %v1541 = vld [vmem:[#allocation3 + $0x148] sm:$0xff]
        %v1542 = vld [vmem:[#allocation3 + $0x150] sm:$0xff]
        %v1543 = vld [vmem:[#allocation3 + $0x158] sm:$0xff]
        %v1544 = vld [vmem:[#allocation3 + $0x160] sm:$0xff]
        %v1545 = vld [vmem:[#allocation3 + $0x168] sm:$0xff]
        %v1546 = vld [vmem:[#allocation3 + $0x170] sm:$0xff]
        %v1547 = vld [vmem:[#allocation3 + $0x178] sm:$0xff]
        %v1548 = vld [vmem:[#allocation3 + $0x180] sm:$0xff]
        %v1549 = vld [vmem:[#allocation3 + $0x188] sm:$0xff]
        %v1550 = vld [vmem:[#allocation3 + $0x190] sm:$0xff]
        %v1551 = vld [vmem:[#allocation3 + $0x198] sm:$0xff]
        %v1552 = vld [vmem:[#allocation3 + $0x1a0] sm:$0xff]
        %v1553 = vld [vmem:[#allocation3 + $0x1a8] sm:$0xff]
        %v1554 = vld [vmem:[#allocation3 + $0x1b0] sm:$0xff]
        %v1555 = vld [vmem:[#allocation3 + $0x1b8] sm:$0xff]
        %v1556 = vld [vmem:[#allocation3 + $0x1c0] sm:$0xff]
        %v1557 = vld [vmem:[#allocation3 + $0x1c8] sm:$0xff]
        %v1558 = vld [vmem:[#allocation3 + $0x1d0] sm:$0xff]
        %v1559 = vld [vmem:[#allocation3 + $0x1d8] sm:$0xff]
        %v1560 = vld [vmem:[#allocation3 + $0x1e0] sm:$0xff]
        %v1561 = vld [vmem:[#allocation3 + $0x1e8] sm:$0xff]
        %v1562 = vld [vmem:[#allocation3 + $0x1f0] sm:$0xff]
        %v1563 = vld [vmem:[#allocation3 + $0x1f8] sm:$0xff]
        %v1564 = vld [vmem:[#allocation3 + $0x200] sm:$0xff]
        %v1565 = vld [vmem:[#allocation3 + $0x208] sm:$0xff]
        %v1566 = vld [vmem:[#allocation3 + $0x210] sm:$0xff]
        %v1567 = vld [vmem:[#allocation3 + $0x218] sm:$0xff]
        %v1568 = vld [vmem:[#allocation3 + $0x220] sm:$0xff]
        %v1569 = vld [vmem:[#allocation3 + $0x228] sm:$0xff]
        %v1570 = vld [vmem:[#allocation3 + $0x230] sm:$0xff]
        %v1571 = vld [vmem:[#allocation3 + $0x238] sm:$0xff]
        %v1572 = vld [vmem:[#allocation3 + $0x240] sm:$0xff]
        %v1573 = vld [vmem:[#allocation3 + $0x248] sm:$0xff]
        %v1574 = vld [vmem:[#allocation3 + $0x250] sm:$0xff]
        %v1575 = vld [vmem:[#allocation3 + $0x258] sm:$0xff]
        %v1576 = vld [vmem:[#allocation3 + $0x260] sm:$0xff]
        %v1577 = vld [vmem:[#allocation3 + $0x268] sm:$0xff]
        %v1578 = vld [vmem:[#allocation3 + $0x270] sm:$0xff]
        %v1579 = vld [vmem:[#allocation3 + $0x278] sm:$0xff]
        %v1580 = vld [vmem:[#allocation3 + $0x280] sm:$0xff]
        %v1581 = vld [vmem:[#allocation3 + $0x288] sm:$0xff]
        %v1582 = vld [vmem:[#allocation3 + $0x290] sm:$0xff]
        %v1583 = vld [vmem:[#allocation3 + $0x298] sm:$0xff]
        %v1584 = vld [vmem:[#allocation3 + $0x2a0] sm:$0xff]
        %v1585 = vld [vmem:[#allocation3 + $0x2a8] sm:$0xff]
        %v1586 = vld [vmem:[#allocation3 + $0x2b0] sm:$0xff]
        %v1587 = vld [vmem:[#allocation3 + $0x2b8] sm:$0xff]
        %v1588 = vld [vmem:[#allocation3 + $0x2c0] sm:$0xff]
        %v1589 = vld [vmem:[#allocation3 + $0x2c8] sm:$0xff]
        %v1590 = vld [vmem:[#allocation3 + $0x2d0] sm:$0xff]
        %v1591 = vld [vmem:[#allocation3 + $0x2d8] sm:$0xff]
        %v1592 = vld [vmem:[#allocation3 + $0x2e0] sm:$0xff]
        %v1593 = vld [vmem:[#allocation3 + $0x2e8] sm:$0xff]
        %v1594 = vld [vmem:[#allocation3 + $0x2f0] sm:$0xff]
        %v1595 = vld [vmem:[#allocation3 + $0x2f8] sm:$0xff]
        %v1596 = vld [vmem:[#allocation3 + $0x300] sm:$0xff]
        %v1597 = vld [vmem:[#allocation3 + $0x308] sm:$0xff]
        %v1598 = vld [vmem:[#allocation3 + $0x310] sm:$0xff]
        %v1599 = vld [vmem:[#allocation3 + $0x318] sm:$0xff]
        %v1600 = vld [vmem:[#allocation3 + $0x320] sm:$0xff]
        %v1601 = vld [vmem:[#allocation3 + $0x328] sm:$0xff]
        %v1602 = vld [vmem:[#allocation3 + $0x330] sm:$0xff]
        %v1603 = vld [vmem:[#allocation3 + $0x338] sm:$0xff]
        %v1604 = vld [vmem:[#allocation3 + $0x340] sm:$0xff]
        %v1605 = vld [vmem:[#allocation3 + $0x348] sm:$0xff]
        %v1606 = vld [vmem:[#allocation3 + $0x350] sm:$0xff]
        %v1607 = vld [vmem:[#allocation3 + $0x358] sm:$0xff]
        %v1608 = vld [vmem:[#allocation3 + $0x360] sm:$0xff]
        %v1609 = vld [vmem:[#allocation3 + $0x368] sm:$0xff]
        %v1610 = vld [vmem:[#allocation3 + $0x370] sm:$0xff]
        %v1611 = vld [vmem:[#allocation3 + $0x378] sm:$0xff]
        %v1612 = vld [vmem:[#allocation3 + $0x380] sm:$0xff]
        %v1613 = vld [vmem:[#allocation3 + $0x388] sm:$0xff]
        %v1614 = vld [vmem:[#allocation3 + $0x390] sm:$0xff]
        %v1615 = vld [vmem:[#allocation3 + $0x398] sm:$0xff]
        %v1616 = vld [vmem:[#allocation3 + $0x3a0] sm:$0xff]
        %v1617 = vld [vmem:[#allocation3 + $0x3a8] sm:$0xff]
        %v1618 = vld [vmem:[#allocation3 + $0x3b0] sm:$0xff]
        %v1619 = vld [vmem:[#allocation3 + $0x3b8] sm:$0xff]
        %v1620 = vld [vmem:[#allocation3 + $0x3c0] sm:$0xff]
        %v1621 = vld [vmem:[#allocation3 + $0x3c8] sm:$0xff]
        %v1622 = vld [vmem:[#allocation3 + $0x3d0] sm:$0xff]
        %v1623 = vld [vmem:[#allocation3 + $0x3d8] sm:$0xff]
        %v1624 = vld [vmem:[#allocation3 + $0x3e0] sm:$0xff]
        %v1625 = vld [vmem:[#allocation3 + $0x3e8] sm:$0xff]
        %v1626 = vld [vmem:[#allocation3 + $0x3f0] sm:$0xff]
        %v1627 = vld [vmem:[#allocation3 + $0x3f8] sm:$0xff]
        %v1628 = vld [vmem:[%s11] sm:$0xff]
        %v1629 = vld [vmem:[%s11 + $0x8] sm:$0xff]
        %v1632 = vlaneseq
        %v1633 = vshrl.u32 %v1632, 7
        %v1634 = vsub.s32 0, %v1633
        %v1635 = vrot.slane %v1628, %v1634
        %v1636 = vlaneseq
        %v1637 = vshrl.u32 %v1636, 7
        %v1638 = vsub.s32 1, %v1637
        %v1639 = vrot.slane %v1628, %v1638
        %v1640 = vlaneseq
        %v1641 = vshrl.u32 %v1640, 7
        %v1642 = vsub.s32 2, %v1641
        %v1643 = vrot.slane %v1628, %v1642
        %v1644 = vlaneseq
        %v1645 = vshrl.u32 %v1644, 7
        %v1646 = vsub.s32 3, %v1645
        %v1647 = vrot.slane %v1628, %v1646
        %v1648 = vlaneseq
        %v1649 = vshrl.u32 %v1648, 7
        %v1650 = vsub.s32 4, %v1649
        %v1651 = vrot.slane %v1628, %v1650
        %v1652 = vlaneseq
        %v1653 = vshrl.u32 %v1652, 7
        %v1654 = vsub.s32 5, %v1653
        %v1655 = vrot.slane %v1628, %v1654
        %v1656 = vlaneseq
        %v1657 = vshrl.u32 %v1656, 7
        %v1658 = vsub.s32 6, %v1657
        %v1659 = vrot.slane %v1628, %v1658
        %v1660 = vlaneseq
        %v1661 = vshrl.u32 %v1660, 7
        %v1662 = vsub.s32 7, %v1661
        %v1663 = vrot.slane %v1628, %v1662
        %v1664 = vlaneseq
        %v1665 = vshrl.u32 %v1664, 7
        %v1666 = vsub.s32 0, %v1665
        %v1667 = vrot.slane %v1629, %v1666
        %v1668 = vlaneseq
        %v1669 = vshrl.u32 %v1668, 7
        %v1670 = vsub.s32 1, %v1669
        %v1671 = vrot.slane %v1629, %v1670
        %v1672 = vlaneseq
        %v1673 = vshrl.u32 %v1672, 7
        %v1674 = vsub.s32 2, %v1673
        %v1675 = vrot.slane %v1629, %v1674
        %v1676 = vlaneseq
        %v1677 = vshrl.u32 %v1676, 7
        %v1678 = vsub.s32 3, %v1677
        %v1679 = vrot.slane %v1629, %v1678
        %v1680 = vlaneseq
        %v1681 = vshrl.u32 %v1680, 7
        %v1682 = vsub.s32 4, %v1681
        %v1683 = vrot.slane %v1629, %v1682
        %v1684 = vlaneseq
        %v1685 = vshrl.u32 %v1684, 7
        %v1686 = vsub.s32 5, %v1685
        %v1687 = vrot.slane %v1629, %v1686
        %v1688 = vlaneseq
        %v1689 = vshrl.u32 %v1688, 7
        %v1690 = vsub.s32 6, %v1689
        %v1691 = vrot.slane %v1629, %v1690
        %v1692 = vlaneseq
        %v1693 = vshrl.u32 %v1692, 7
        %v1694 = vsub.s32 7, %v1693
        %v1695 = vrot.slane %v1629, %v1694
        %v1840 = vunpack.c.l.b16 %v1500
        %v1841 = vunpack.c.h.b16 %v1500
        %v1842 = vunpack.c.l.b16 %v1501
        %v1843 = vunpack.c.h.b16 %v1501
        %v1844 = vunpack.c.l.b16 %v1502
        %v1845 = vunpack.c.h.b16 %v1502
        %v1846 = vunpack.c.l.b16 %v1503
        %v1847 = vunpack.c.h.b16 %v1503
        %v1848 = vunpack.c.l.b16 %v1504
        %v1849 = vunpack.c.h.b16 %v1504
        %v1850 = vunpack.c.l.b16 %v1505
        %v1851 = vunpack.c.h.b16 %v1505
        %v1852 = vunpack.c.l.b16 %v1506
        %v1853 = vunpack.c.h.b16 %v1506
        %v1854 = vunpack.c.l.b16 %v1507
        %v1855 = vunpack.c.h.b16 %v1507
        %v1856 = vunpack.c.l.b16 %v1508
        %v1857 = vunpack.c.h.b16 %v1508
        %v1858 = vunpack.c.l.b16 %v1509
        %v1859 = vunpack.c.h.b16 %v1509
        %v1860 = vunpack.c.l.b16 %v1510
        %v1861 = vunpack.c.h.b16 %v1510
        %v1862 = vunpack.c.l.b16 %v1511
        %v1863 = vunpack.c.h.b16 %v1511
        %v1864 = vunpack.c.l.b16 %v1512
        %v1865 = vunpack.c.h.b16 %v1512
        %v1866 = vunpack.c.l.b16 %v1513
        %v1867 = vunpack.c.h.b16 %v1513
        %v1868 = vunpack.c.l.b16 %v1514
        %v1869 = vunpack.c.h.b16 %v1514
        %v1870 = vunpack.c.l.b16 %v1515
        %v1871 = vunpack.c.h.b16 %v1515
        %v1872 = vunpack.c.l.b16 %v1516
        %v1873 = vunpack.c.h.b16 %v1516
        %v1874 = vunpack.c.l.b16 %v1517
        %v1875 = vunpack.c.h.b16 %v1517
        %v1876 = vunpack.c.l.b16 %v1518
        %v1877 = vunpack.c.h.b16 %v1518
        %v1878 = vunpack.c.l.b16 %v1519
        %v1879 = vunpack.c.h.b16 %v1519
        %v1880 = vunpack.c.l.b16 %v1520
        %v1881 = vunpack.c.h.b16 %v1520
        %v1882 = vunpack.c.l.b16 %v1521
        %v1883 = vunpack.c.h.b16 %v1521
        %v1884 = vunpack.c.l.b16 %v1522
        %v1885 = vunpack.c.h.b16 %v1522
        %v1886 = vunpack.c.l.b16 %v1523
        %v1887 = vunpack.c.h.b16 %v1523
        %v1888 = vunpack.c.l.b16 %v1524
        %v1889 = vunpack.c.h.b16 %v1524
        %v1890 = vunpack.c.l.b16 %v1525
        %v1891 = vunpack.c.h.b16 %v1525
        %v1892 = vunpack.c.l.b16 %v1526
        %v1893 = vunpack.c.h.b16 %v1526
        %v1894 = vunpack.c.l.b16 %v1527
        %v1895 = vunpack.c.h.b16 %v1527
        %v1896 = vunpack.c.l.b16 %v1528
        %v1897 = vunpack.c.h.b16 %v1528
        %v1898 = vunpack.c.l.b16 %v1529
        %v1899 = vunpack.c.h.b16 %v1529
        %v1900 = vunpack.c.l.b16 %v1530
        %v1901 = vunpack.c.h.b16 %v1530
        %v1902 = vunpack.c.l.b16 %v1531
        %v1903 = vunpack.c.h.b16 %v1531
        %v1904 = vunpack.c.l.b16 %v1532
        %v1905 = vunpack.c.h.b16 %v1532
        %v1906 = vunpack.c.l.b16 %v1533
        %v1907 = vunpack.c.h.b16 %v1533
        %v1908 = vunpack.c.l.b16 %v1534
        %v1909 = vunpack.c.h.b16 %v1534
        %v1910 = vunpack.c.l.b16 %v1535
        %v1911 = vunpack.c.h.b16 %v1535
        %v1912 = vunpack.c.l.b16 %v1536
        %v1913 = vunpack.c.h.b16 %v1536
        %v1914 = vunpack.c.l.b16 %v1537
        %v1915 = vunpack.c.h.b16 %v1537
        %v1916 = vunpack.c.l.b16 %v1538
        %v1917 = vunpack.c.h.b16 %v1538
        %v1918 = vunpack.c.l.b16 %v1539
        %v1919 = vunpack.c.h.b16 %v1539
        %v1920 = vunpack.c.l.b16 %v1540
        %v1921 = vunpack.c.h.b16 %v1540
        %v1922 = vunpack.c.l.b16 %v1541
        %v1923 = vunpack.c.h.b16 %v1541
        %v1924 = vunpack.c.l.b16 %v1542
        %v1925 = vunpack.c.h.b16 %v1542
        %v1926 = vunpack.c.l.b16 %v1543
        %v1927 = vunpack.c.h.b16 %v1543
        %v1928 = vunpack.c.l.b16 %v1544
        %v1929 = vunpack.c.h.b16 %v1544
        %v1930 = vunpack.c.l.b16 %v1545
        %v1931 = vunpack.c.h.b16 %v1545
        %v1932 = vunpack.c.l.b16 %v1546
        %v1933 = vunpack.c.h.b16 %v1546
        %v1934 = vunpack.c.l.b16 %v1547
        %v1935 = vunpack.c.h.b16 %v1547
        %v1936 = vunpack.c.l.b16 %v1548
        %v1937 = vunpack.c.h.b16 %v1548
        %v1938 = vunpack.c.l.b16 %v1549
        %v1939 = vunpack.c.h.b16 %v1549
        %v1940 = vunpack.c.l.b16 %v1550
        %v1941 = vunpack.c.h.b16 %v1550
        %v1942 = vunpack.c.l.b16 %v1551
        %v1943 = vunpack.c.h.b16 %v1551
        %v1944 = vunpack.c.l.b16 %v1552
        %v1945 = vunpack.c.h.b16 %v1552
        %v1946 = vunpack.c.l.b16 %v1553
        %v1947 = vunpack.c.h.b16 %v1553
        %v1948 = vunpack.c.l.b16 %v1554
        %v1949 = vunpack.c.h.b16 %v1554
        %v1950 = vunpack.c.l.b16 %v1555
        %v1951 = vunpack.c.h.b16 %v1555
        %v1952 = vunpack.c.l.b16 %v1556
        %v1953 = vunpack.c.h.b16 %v1556
        %v1954 = vunpack.c.l.b16 %v1557
        %v1955 = vunpack.c.h.b16 %v1557
        %v1956 = vunpack.c.l.b16 %v1558
        %v1957 = vunpack.c.h.b16 %v1558
        %v1958 = vunpack.c.l.b16 %v1559
        %v1959 = vunpack.c.h.b16 %v1559
        %v1960 = vunpack.c.l.b16 %v1560
        %v1961 = vunpack.c.h.b16 %v1560
        %v1962 = vunpack.c.l.b16 %v1561
        %v1963 = vunpack.c.h.b16 %v1561
        %v1964 = vunpack.c.l.b16 %v1562
        %v1965 = vunpack.c.h.b16 %v1562
        %v1966 = vunpack.c.l.b16 %v1563
        %v1967 = vunpack.c.h.b16 %v1563
        %v1968 = vunpack.c.l.b16 %v1564
        %v1969 = vunpack.c.h.b16 %v1564
        %v1970 = vunpack.c.l.b16 %v1565
        %v1971 = vunpack.c.h.b16 %v1565
        %v1972 = vunpack.c.l.b16 %v1566
        %v1973 = vunpack.c.h.b16 %v1566
        %v1974 = vunpack.c.l.b16 %v1567
        %v1975 = vunpack.c.h.b16 %v1567
        %v1976 = vunpack.c.l.b16 %v1568
        %v1977 = vunpack.c.h.b16 %v1568
        %v1978 = vunpack.c.l.b16 %v1569
        %v1979 = vunpack.c.h.b16 %v1569
        %v1980 = vunpack.c.l.b16 %v1570
        %v1981 = vunpack.c.h.b16 %v1570
        %v1982 = vunpack.c.l.b16 %v1571
        %v1983 = vunpack.c.h.b16 %v1571
        %v1984 = vunpack.c.l.b16 %v1572
        %v1985 = vunpack.c.h.b16 %v1572
        %v1986 = vunpack.c.l.b16 %v1573
        %v1987 = vunpack.c.h.b16 %v1573
        %v1988 = vunpack.c.l.b16 %v1574
        %v1989 = vunpack.c.h.b16 %v1574
        %v1990 = vunpack.c.l.b16 %v1575
        %v1991 = vunpack.c.h.b16 %v1575
        %v1992 = vunpack.c.l.b16 %v1576
        %v1993 = vunpack.c.h.b16 %v1576
        %v1994 = vunpack.c.l.b16 %v1577
        %v1995 = vunpack.c.h.b16 %v1577
        %v1996 = vunpack.c.l.b16 %v1578
        %v1997 = vunpack.c.h.b16 %v1578
        %v1998 = vunpack.c.l.b16 %v1579
        %v1999 = vunpack.c.h.b16 %v1579
        %v2000 = vunpack.c.l.b16 %v1580
        %v2001 = vunpack.c.h.b16 %v1580
        %v2002 = vunpack.c.l.b16 %v1581
        %v2003 = vunpack.c.h.b16 %v1581
        %v2004 = vunpack.c.l.b16 %v1582
        %v2005 = vunpack.c.h.b16 %v1582
        %v2006 = vunpack.c.l.b16 %v1583
        %v2007 = vunpack.c.h.b16 %v1583
        %v2008 = vunpack.c.l.b16 %v1584
        %v2009 = vunpack.c.h.b16 %v1584
        %v2010 = vunpack.c.l.b16 %v1585
        %v2011 = vunpack.c.h.b16 %v1585
        %v2012 = vunpack.c.l.b16 %v1586
        %v2013 = vunpack.c.h.b16 %v1586
        %v2014 = vunpack.c.l.b16 %v1587
        %v2015 = vunpack.c.h.b16 %v1587
        %v2016 = vunpack.c.l.b16 %v1588
        %v2017 = vunpack.c.h.b16 %v1588
        %v2018 = vunpack.c.l.b16 %v1589
        %v2019 = vunpack.c.h.b16 %v1589
        %v2020 = vunpack.c.l.b16 %v1590
        %v2021 = vunpack.c.h.b16 %v1590
        %v2022 = vunpack.c.l.b16 %v1591
        %v2023 = vunpack.c.h.b16 %v1591
        %v2024 = vunpack.c.l.b16 %v1592
        %v2025 = vunpack.c.h.b16 %v1592
        %v2026 = vunpack.c.l.b16 %v1593
        %v2027 = vunpack.c.h.b16 %v1593
        %v2028 = vunpack.c.l.b16 %v1594
        %v2029 = vunpack.c.h.b16 %v1594
        %v2030 = vunpack.c.l.b16 %v1595
        %v2031 = vunpack.c.h.b16 %v1595
        %v2032 = vunpack.c.l.b16 %v1596
        %v2033 = vunpack.c.h.b16 %v1596
        %v2034 = vunpack.c.l.b16 %v1597
        %v2035 = vunpack.c.h.b16 %v1597
        %v2036 = vunpack.c.l.b16 %v1598
        %v2037 = vunpack.c.h.b16 %v1598
        %v2038 = vunpack.c.l.b16 %v1599
        %v2039 = vunpack.c.h.b16 %v1599
        %v2040 = vunpack.c.l.b16 %v1600
        %v2041 = vunpack.c.h.b16 %v1600
        %v2042 = vunpack.c.l.b16 %v1601
        %v2043 = vunpack.c.h.b16 %v1601
        %v2044 = vunpack.c.l.b16 %v1602
        %v2045 = vunpack.c.h.b16 %v1602
        %v2046 = vunpack.c.l.b16 %v1603
        %v2047 = vunpack.c.h.b16 %v1603
        %v2048 = vunpack.c.l.b16 %v1604
        %v2049 = vunpack.c.h.b16 %v1604
        %v2050 = vunpack.c.l.b16 %v1605
        %v2051 = vunpack.c.h.b16 %v1605
        %v2052 = vunpack.c.l.b16 %v1606
        %v2053 = vunpack.c.h.b16 %v1606
        %v2054 = vunpack.c.l.b16 %v1607
        %v2055 = vunpack.c.h.b16 %v1607
        %v2056 = vunpack.c.l.b16 %v1608
        %v2057 = vunpack.c.h.b16 %v1608
        %v2058 = vunpack.c.l.b16 %v1609
        %v2059 = vunpack.c.h.b16 %v1609
        %v2060 = vunpack.c.l.b16 %v1610
        %v2061 = vunpack.c.h.b16 %v1610
        %v2062 = vunpack.c.l.b16 %v1611
        %v2063 = vunpack.c.h.b16 %v1611
        %v2064 = vunpack.c.l.b16 %v1612
        %v2065 = vunpack.c.h.b16 %v1612
        %v2066 = vunpack.c.l.b16 %v1613
        %v2067 = vunpack.c.h.b16 %v1613
        %v2068 = vunpack.c.l.b16 %v1614
        %v2069 = vunpack.c.h.b16 %v1614
        %v2070 = vunpack.c.l.b16 %v1615
        %v2071 = vunpack.c.h.b16 %v1615
        %v2072 = vunpack.c.l.b16 %v1616
        %v2073 = vunpack.c.h.b16 %v1616
        %v2074 = vunpack.c.l.b16 %v1617
        %v2075 = vunpack.c.h.b16 %v1617
        %v2076 = vunpack.c.l.b16 %v1618
        %v2077 = vunpack.c.h.b16 %v1618
        %v2078 = vunpack.c.l.b16 %v1619
        %v2079 = vunpack.c.h.b16 %v1619
        %v2080 = vunpack.c.l.b16 %v1620
        %v2081 = vunpack.c.h.b16 %v1620
        %v2082 = vunpack.c.l.b16 %v1621
        %v2083 = vunpack.c.h.b16 %v1621
        %v2084 = vunpack.c.l.b16 %v1622
        %v2085 = vunpack.c.h.b16 %v1622
        %v2086 = vunpack.c.l.b16 %v1623
        %v2087 = vunpack.c.h.b16 %v1623
        %v2088 = vunpack.c.l.b16 %v1624
        %v2089 = vunpack.c.h.b16 %v1624
        %v2090 = vunpack.c.l.b16 %v1625
        %v2091 = vunpack.c.h.b16 %v1625
        %v2092 = vunpack.c.l.b16 %v1626
        %v2093 = vunpack.c.h.b16 %v1626
        %v2094 = vunpack.c.l.b16 %v1627
        %v2095 = vunpack.c.h.b16 %v1627
        %v2096 = vpack.c.b16 %v1856, %v1840
        %v2097 = vpack.c.b16 %v1857, %v1841
        %v2098 = vpack.c.b16 %v1858, %v1842
        %v2099 = vpack.c.b16 %v1859, %v1843
        %v2100 = vpack.c.b16 %v1860, %v1844
        %v2101 = vpack.c.b16 %v1861, %v1845
        %v2102 = vpack.c.b16 %v1862, %v1846
        %v2103 = vpack.c.b16 %v1863, %v1847
        %v2104 = vpack.c.b16 %v1864, %v1848
        %v2105 = vpack.c.b16 %v1865, %v1849
        %v2106 = vpack.c.b16 %v1866, %v1850
        %v2107 = vpack.c.b16 %v1867, %v1851
        %v2108 = vpack.c.b16 %v1868, %v1852
        %v2109 = vpack.c.b16 %v1869, %v1853
        %v2110 = vpack.c.b16 %v1870, %v1854
        %v2111 = vpack.c.b16 %v1871, %v1855
        %v2112 = vpack.c.b16 %v1888, %v1872
        %v2113 = vpack.c.b16 %v1889, %v1873
        %v2114 = vpack.c.b16 %v1890, %v1874
        %v2115 = vpack.c.b16 %v1891, %v1875
        %v2116 = vpack.c.b16 %v1892, %v1876
        %v2117 = vpack.c.b16 %v1893, %v1877
        %v2118 = vpack.c.b16 %v1894, %v1878
        %v2119 = vpack.c.b16 %v1895, %v1879
        %v2120 = vpack.c.b16 %v1896, %v1880
        %v2121 = vpack.c.b16 %v1897, %v1881
        %v2122 = vpack.c.b16 %v1898, %v1882
        %v2123 = vpack.c.b16 %v1899, %v1883
        %v2124 = vpack.c.b16 %v1900, %v1884
        %v2125 = vpack.c.b16 %v1901, %v1885
        %v2126 = vpack.c.b16 %v1902, %v1886
        %v2127 = vpack.c.b16 %v1903, %v1887
        %v2128 = vpack.c.b16 %v1920, %v1904
        %v2129 = vpack.c.b16 %v1921, %v1905
        %v2130 = vpack.c.b16 %v1922, %v1906
        %v2131 = vpack.c.b16 %v1923, %v1907
        %v2132 = vpack.c.b16 %v1924, %v1908
        %v2133 = vpack.c.b16 %v1925, %v1909
        %v2134 = vpack.c.b16 %v1926, %v1910
        %v2135 = vpack.c.b16 %v1927, %v1911
        %v2136 = vpack.c.b16 %v1928, %v1912
        %v2137 = vpack.c.b16 %v1929, %v1913
        %v2138 = vpack.c.b16 %v1930, %v1914
        %v2139 = vpack.c.b16 %v1931, %v1915
        %v2140 = vpack.c.b16 %v1932, %v1916
        %v2141 = vpack.c.b16 %v1933, %v1917
        %v2142 = vpack.c.b16 %v1934, %v1918
        %v2143 = vpack.c.b16 %v1935, %v1919
        %v2144 = vpack.c.b16 %v1952, %v1936
        %v2145 = vpack.c.b16 %v1953, %v1937
        %v2146 = vpack.c.b16 %v1954, %v1938
        %v2147 = vpack.c.b16 %v1955, %v1939
        %v2148 = vpack.c.b16 %v1956, %v1940
        %v2149 = vpack.c.b16 %v1957, %v1941
        %v2150 = vpack.c.b16 %v1958, %v1942
        %v2151 = vpack.c.b16 %v1959, %v1943
        %v2152 = vpack.c.b16 %v1960, %v1944
        %v2153 = vpack.c.b16 %v1961, %v1945
        %v2154 = vpack.c.b16 %v1962, %v1946
        %v2155 = vpack.c.b16 %v1963, %v1947
        %v2156 = vpack.c.b16 %v1964, %v1948
        %v2157 = vpack.c.b16 %v1965, %v1949
        %v2158 = vpack.c.b16 %v1966, %v1950
        %v2159 = vpack.c.b16 %v1967, %v1951
        %v2160 = vpack.c.b16 %v1984, %v1968
        %v2161 = vpack.c.b16 %v1985, %v1969
        %v2162 = vpack.c.b16 %v1986, %v1970
        %v2163 = vpack.c.b16 %v1987, %v1971
        %v2164 = vpack.c.b16 %v1988, %v1972
        %v2165 = vpack.c.b16 %v1989, %v1973
        %v2166 = vpack.c.b16 %v1990, %v1974
        %v2167 = vpack.c.b16 %v1991, %v1975
        %v2168 = vpack.c.b16 %v1992, %v1976
        %v2169 = vpack.c.b16 %v1993, %v1977
        %v2170 = vpack.c.b16 %v1994, %v1978
        %v2171 = vpack.c.b16 %v1995, %v1979
        %v2172 = vpack.c.b16 %v1996, %v1980
        %v2173 = vpack.c.b16 %v1997, %v1981
        %v2174 = vpack.c.b16 %v1998, %v1982
        %v2175 = vpack.c.b16 %v1999, %v1983
        %v2176 = vpack.c.b16 %v2016, %v2000
        %v2177 = vpack.c.b16 %v2017, %v2001
        %v2178 = vpack.c.b16 %v2018, %v2002
        %v2179 = vpack.c.b16 %v2019, %v2003
        %v2180 = vpack.c.b16 %v2020, %v2004
        %v2181 = vpack.c.b16 %v2021, %v2005
        %v2182 = vpack.c.b16 %v2022, %v2006
        %v2183 = vpack.c.b16 %v2023, %v2007
        %v2184 = vpack.c.b16 %v2024, %v2008
        %v2185 = vpack.c.b16 %v2025, %v2009
        %v2186 = vpack.c.b16 %v2026, %v2010
        %v2187 = vpack.c.b16 %v2027, %v2011
        %v2188 = vpack.c.b16 %v2028, %v2012
        %v2189 = vpack.c.b16 %v2029, %v2013
        %v2190 = vpack.c.b16 %v2030, %v2014
        %v2191 = vpack.c.b16 %v2031, %v2015
        %v2192 = vpack.c.b16 %v2048, %v2032
        %v2193 = vpack.c.b16 %v2049, %v2033
        %v2194 = vpack.c.b16 %v2050, %v2034
        %v2195 = vpack.c.b16 %v2051, %v2035
        %v2196 = vpack.c.b16 %v2052, %v2036
        %v2197 = vpack.c.b16 %v2053, %v2037
        %v2198 = vpack.c.b16 %v2054, %v2038
        %v2199 = vpack.c.b16 %v2055, %v2039
        %v2200 = vpack.c.b16 %v2056, %v2040
        %v2201 = vpack.c.b16 %v2057, %v2041
        %v2202 = vpack.c.b16 %v2058, %v2042
        %v2203 = vpack.c.b16 %v2059, %v2043
        %v2204 = vpack.c.b16 %v2060, %v2044
        %v2205 = vpack.c.b16 %v2061, %v2045
        %v2206 = vpack.c.b16 %v2062, %v2046
        %v2207 = vpack.c.b16 %v2063, %v2047
        %v2208 = vpack.c.b16 %v2080, %v2064
        %v2209 = vpack.c.b16 %v2081, %v2065
        %v2210 = vpack.c.b16 %v2082, %v2066
        %v2211 = vpack.c.b16 %v2083, %v2067
        %v2212 = vpack.c.b16 %v2084, %v2068
        %v2213 = vpack.c.b16 %v2085, %v2069
        %v2214 = vpack.c.b16 %v2086, %v2070
        %v2215 = vpack.c.b16 %v2087, %v2071
        %v2216 = vpack.c.b16 %v2088, %v2072
        %v2217 = vpack.c.b16 %v2089, %v2073
        %v2218 = vpack.c.b16 %v2090, %v2074
        %v2219 = vpack.c.b16 %v2091, %v2075
        %v2220 = vpack.c.b16 %v2092, %v2076
        %v2221 = vpack.c.b16 %v2093, %v2077
        %v2222 = vpack.c.b16 %v2094, %v2078
        %v2223 = vpack.c.b16 %v2095, %v2079
        %2352 = vmatprep.subr.bf16.mxu0 %v2209
        %2353 = vmatpush1.bf16.msra.mxu0 %v2208
        %2354 = vmatprep.subr.bf16.mxu0 %v2193
        %2355 = vmatpush1.bf16.msra.mxu0 %v2192
        %2356 = vmatprep.subr.bf16.mxu0 %v2177
        %2357 = vmatpush1.bf16.msra.mxu0 %v2176
        %2358 = vmatprep.subr.bf16.mxu0 %v2161
        %2359 = vmatpush1.bf16.msra.mxu0 %v2160
        %2360 = vmatprep.subr.bf16.mxu0 %v2145
        %2361 = vmatpush1.bf16.msra.mxu0 %v2144
        %2362 = vmatprep.subr.bf16.mxu0 %v2129
        %2363 = vmatpush1.bf16.msra.mxu0 %v2128
        %2364 = vmatprep.subr.bf16.mxu0 %v2113
        %2365 = vmatpush1.bf16.msra.mxu0 %v2112
        %2366 = vmatprep.subr.bf16.mxu0 %v2097
        %2367 = vmatpush1.bf16.msra.mxu0 %v2096
        %2368 = vmatprep.subr.bf16.mxu0 0
        %2369 = vmatpush2.bf16.msra.mxu0 0
        %2370 = vmatprep.subr.bf16.mxu0 0
        %2371 = vmatpush2.bf16.msra.mxu0 0
        %2372 = vmatprep.subr.bf16.mxu0 0
        %2373 = vmatpush2.bf16.msra.mxu0 0
        %2374 = vmatprep.subr.bf16.mxu0 0
        %2375 = vmatpush2.bf16.msra.mxu0 0
        %2376 = vmatprep.subr.bf16.mxu0 0
        %2377 = vmatpush2.bf16.msra.mxu0 0
        %2378 = vmatprep.subr.bf16.mxu0 0
        %2379 = vmatpush2.bf16.msra.mxu0 0
        %2380 = vmatprep.subr.bf16.mxu0 0
        %2381 = vmatpush2.bf16.msra.mxu0 0
        %2382 = vmatprep.subr.bf16.mxu0 0
        %2383 = vmatpush2.bf16.msra.mxu0 0
        %2384 = vmatprep.mubr.bf16.mxu0 0
        %2385 = vmatmul.mubr.bf16.gmra.mxu0 %v1499
        %v2386 = vpop.f32.mrf.mxu0
        %v2387 = vadd.f32 %v1635, %v2386
        %v2388 = vpop.f32.mrf.mxu0
        %v2389 = vadd.f32 %v1639, %v2388
        %v2390 = vpop.f32.mrf.mxu0
        %v2391 = vpop.f32.mrf.mxu0
        %2392 = vdwg.mxu0
        %2393 = vmatprep.subr.bf16.mxu0 %v2211
        %2394 = vmatpush1.bf16.msra.mxu0 %v2210
        %2395 = vmatprep.subr.bf16.mxu0 %v2195
        %2396 = vmatpush1.bf16.msra.mxu0 %v2194
        %2397 = vmatprep.subr.bf16.mxu0 %v2179
        %2398 = vmatpush1.bf16.msra.mxu0 %v2178
        %2399 = vmatprep.subr.bf16.mxu0 %v2163
        %2400 = vmatpush1.bf16.msra.mxu0 %v2162
        %2401 = vmatprep.subr.bf16.mxu0 %v2147
        %2402 = vmatpush1.bf16.msra.mxu0 %v2146
        %2403 = vmatprep.subr.bf16.mxu0 %v2131
        %2404 = vmatpush1.bf16.msra.mxu0 %v2130
        %2405 = vmatprep.subr.bf16.mxu0 %v2115
        %2406 = vmatpush1.bf16.msra.mxu0 %v2114
        %2407 = vmatprep.subr.bf16.mxu0 %v2099
        %2408 = vmatpush1.bf16.msra.mxu0 %v2098
        %2409 = vmatprep.subr.bf16.mxu0 0
        %2410 = vmatpush2.bf16.msra.mxu0 0
        %2411 = vmatprep.subr.bf16.mxu0 0
        %2412 = vmatpush2.bf16.msra.mxu0 0
        %2413 = vmatprep.subr.bf16.mxu0 0
        %2414 = vmatpush2.bf16.msra.mxu0 0
        %2415 = vmatprep.subr.bf16.mxu0 0
        %2416 = vmatpush2.bf16.msra.mxu0 0
        %2417 = vmatprep.subr.bf16.mxu0 0
        %2418 = vmatpush2.bf16.msra.mxu0 0
        %2419 = vmatprep.subr.bf16.mxu0 0
        %2420 = vmatpush2.bf16.msra.mxu0 0
        %2421 = vmatprep.subr.bf16.mxu0 0
        %2422 = vmatpush2.bf16.msra.mxu0 0
        %2423 = vmatprep.subr.bf16.mxu0 0
        %2424 = vmatpush2.bf16.msra.mxu0 0
        %2425 = vmatprep.mubr.bf16.mxu0 0
        %2426 = vmatmul.mubr.bf16.gmra.mxu0 %v1499
        %v2427 = vpop.f32.mrf.mxu0
        %v2428 = vadd.f32 %v1643, %v2427
        %v2429 = vpop.f32.mrf.mxu0
        %v2430 = vadd.f32 %v1647, %v2429
        %v2431 = vpop.f32.mrf.mxu0
        %v2432 = vpop.f32.mrf.mxu0
        %2433 = vdwg.mxu0
        %2434 = vmatprep.subr.bf16.mxu0 %v2213
        %2435 = vmatpush1.bf16.msra.mxu0 %v2212
        %2436 = vmatprep.subr.bf16.mxu0 %v2197
        %2437 = vmatpush1.bf16.msra.mxu0 %v2196
        %2438 = vmatprep.subr.bf16.mxu0 %v2181
        %2439 = vmatpush1.bf16.msra.mxu0 %v2180
        %2440 = vmatprep.subr.bf16.mxu0 %v2165
        %2441 = vmatpush1.bf16.msra.mxu0 %v2164
        %2442 = vmatprep.subr.bf16.mxu0 %v2149
        %2443 = vmatpush1.bf16.msra.mxu0 %v2148
        %2444 = vmatprep.subr.bf16.mxu0 %v2133
        %2445 = vmatpush1.bf16.msra.mxu0 %v2132
        %2446 = vmatprep.subr.bf16.mxu0 %v2117
        %2447 = vmatpush1.bf16.msra.mxu0 %v2116
        %2448 = vmatprep.subr.bf16.mxu0 %v2101
        %2449 = vmatpush1.bf16.msra.mxu0 %v2100
        %2450 = vmatprep.subr.bf16.mxu0 0
        %2451 = vmatpush2.bf16.msra.mxu0 0
        %2452 = vmatprep.subr.bf16.mxu0 0
        %2453 = vmatpush2.bf16.msra.mxu0 0
        %2454 = vmatprep.subr.bf16.mxu0 0
        %2455 = vmatpush2.bf16.msra.mxu0 0
        %2456 = vmatprep.subr.bf16.mxu0 0
        %2457 = vmatpush2.bf16.msra.mxu0 0
        %2458 = vmatprep.subr.bf16.mxu0 0
        %2459 = vmatpush2.bf16.msra.mxu0 0
        %2460 = vmatprep.subr.bf16.mxu0 0
        %2461 = vmatpush2.bf16.msra.mxu0 0
        %2462 = vmatprep.subr.bf16.mxu0 0
        %2463 = vmatpush2.bf16.msra.mxu0 0
        %2464 = vmatprep.subr.bf16.mxu0 0
        %2465 = vmatpush2.bf16.msra.mxu0 0
        %2466 = vmatprep.mubr.bf16.mxu0 0
        %2467 = vmatmul.mubr.bf16.gmra.mxu0 %v1499
        %v2468 = vpop.f32.mrf.mxu0
        %v2469 = vadd.f32 %v1651, %v2468
        %v2470 = vpop.f32.mrf.mxu0
        %v2471 = vadd.f32 %v1655, %v2470
        %v2472 = vpop.f32.mrf.mxu0
        %v2473 = vpop.f32.mrf.mxu0
        %2474 = vdwg.mxu0
        %2475 = vmatprep.subr.bf16.mxu0 %v2215
        %2476 = vmatpush1.bf16.msra.mxu0 %v2214
        %2477 = vmatprep.subr.bf16.mxu0 %v2199
        %2478 = vmatpush1.bf16.msra.mxu0 %v2198
        %2479 = vmatprep.subr.bf16.mxu0 %v2183
        %2480 = vmatpush1.bf16.msra.mxu0 %v2182
        %2481 = vmatprep.subr.bf16.mxu0 %v2167
        %2482 = vmatpush1.bf16.msra.mxu0 %v2166
        %2483 = vmatprep.subr.bf16.mxu0 %v2151
        %2484 = vmatpush1.bf16.msra.mxu0 %v2150
        %2485 = vmatprep.subr.bf16.mxu0 %v2135
        %2486 = vmatpush1.bf16.msra.mxu0 %v2134
        %2487 = vmatprep.subr.bf16.mxu0 %v2119
        %2488 = vmatpush1.bf16.msra.mxu0 %v2118
        %2489 = vmatprep.subr.bf16.mxu0 %v2103
        %2490 = vmatpush1.bf16.msra.mxu0 %v2102
        %2491 = vmatprep.subr.bf16.mxu0 0
        %2492 = vmatpush2.bf16.msra.mxu0 0
        %2493 = vmatprep.subr.bf16.mxu0 0
        %2494 = vmatpush2.bf16.msra.mxu0 0
        %2495 = vmatprep.subr.bf16.mxu0 0
        %2496 = vmatpush2.bf16.msra.mxu0 0
        %2497 = vmatprep.subr.bf16.mxu0 0
        %2498 = vmatpush2.bf16.msra.mxu0 0
        %2499 = vmatprep.subr.bf16.mxu0 0
        %2500 = vmatpush2.bf16.msra.mxu0 0
        %2501 = vmatprep.subr.bf16.mxu0 0
        %2502 = vmatpush2.bf16.msra.mxu0 0
        %2503 = vmatprep.subr.bf16.mxu0 0
        %2504 = vmatpush2.bf16.msra.mxu0 0
        %2505 = vmatprep.subr.bf16.mxu0 0
        %2506 = vmatpush2.bf16.msra.mxu0 0
        %2507 = vmatprep.mubr.bf16.mxu0 0
        %2508 = vmatmul.mubr.bf16.gmra.mxu0 %v1499
        %v2509 = vpop.f32.mrf.mxu0
        %v2510 = vadd.f32 %v1659, %v2509
        %v2511 = vpop.f32.mrf.mxu0
        %v2512 = vadd.f32 %v1663, %v2511
        %v2513 = vpop.f32.mrf.mxu0
        %v2514 = vpop.f32.mrf.mxu0
        %2515 = vdwg.mxu0
        %2516 = vmatprep.subr.bf16.mxu0 %v2217
        %2517 = vmatpush1.bf16.msra.mxu0 %v2216
        %2518 = vmatprep.subr.bf16.mxu0 %v2201
        %2519 = vmatpush1.bf16.msra.mxu0 %v2200
        %2520 = vmatprep.subr.bf16.mxu0 %v2185
        %2521 = vmatpush1.bf16.msra.mxu0 %v2184
        %2522 = vmatprep.subr.bf16.mxu0 %v2169
        %2523 = vmatpush1.bf16.msra.mxu0 %v2168
        %2524 = vmatprep.subr.bf16.mxu0 %v2153
        %2525 = vmatpush1.bf16.msra.mxu0 %v2152
        %2526 = vmatprep.subr.bf16.mxu0 %v2137
        %2527 = vmatpush1.bf16.msra.mxu0 %v2136
        %2528 = vmatprep.subr.bf16.mxu0 %v2121
        %2529 = vmatpush1.bf16.msra.mxu0 %v2120
        %2530 = vmatprep.subr.bf16.mxu0 %v2105
        %2531 = vmatpush1.bf16.msra.mxu0 %v2104
        %2532 = vmatprep.subr.bf16.mxu0 0
        %2533 = vmatpush2.bf16.msra.mxu0 0
        %2534 = vmatprep.subr.bf16.mxu0 0
        %2535 = vmatpush2.bf16.msra.mxu0 0
        %2536 = vmatprep.subr.bf16.mxu0 0
        %2537 = vmatpush2.bf16.msra.mxu0 0
        %2538 = vmatprep.subr.bf16.mxu0 0
        %2539 = vmatpush2.bf16.msra.mxu0 0
        %2540 = vmatprep.subr.bf16.mxu0 0
        %2541 = vmatpush2.bf16.msra.mxu0 0
        %2542 = vmatprep.subr.bf16.mxu0 0
        %2543 = vmatpush2.bf16.msra.mxu0 0
        %2544 = vmatprep.subr.bf16.mxu0 0
        %2545 = vmatpush2.bf16.msra.mxu0 0
        %2546 = vmatprep.subr.bf16.mxu0 0
        %2547 = vmatpush2.bf16.msra.mxu0 0
        %2548 = vmatprep.mubr.bf16.mxu0 0
        %2549 = vmatmul.mubr.bf16.gmra.mxu0 %v1499
        %v2550 = vpop.f32.mrf.mxu0
        %v2551 = vadd.f32 %v1667, %v2550
        %v2552 = vpop.f32.mrf.mxu0
        %v2553 = vadd.f32 %v1671, %v2552
        %v2554 = vpop.f32.mrf.mxu0
        %v2555 = vpop.f32.mrf.mxu0
        %2556 = vdwg.mxu0
        %2557 = vmatprep.subr.bf16.mxu0 %v2219
        %2558 = vmatpush1.bf16.msra.mxu0 %v2218
        %2559 = vmatprep.subr.bf16.mxu0 %v2203
        %2560 = vmatpush1.bf16.msra.mxu0 %v2202
        %2561 = vmatprep.subr.bf16.mxu0 %v2187
        %2562 = vmatpush1.bf16.msra.mxu0 %v2186
        %2563 = vmatprep.subr.bf16.mxu0 %v2171
        %2564 = vmatpush1.bf16.msra.mxu0 %v2170
        %2565 = vmatprep.subr.bf16.mxu0 %v2155
        %2566 = vmatpush1.bf16.msra.mxu0 %v2154
        %2567 = vmatprep.subr.bf16.mxu0 %v2139
        %2568 = vmatpush1.bf16.msra.mxu0 %v2138
        %2569 = vmatprep.subr.bf16.mxu0 %v2123
        %2570 = vmatpush1.bf16.msra.mxu0 %v2122
        %2571 = vmatprep.subr.bf16.mxu0 %v2107
        %2572 = vmatpush1.bf16.msra.mxu0 %v2106
        %2573 = vmatprep.subr.bf16.mxu0 0
        %2574 = vmatpush2.bf16.msra.mxu0 0
        %2575 = vmatprep.subr.bf16.mxu0 0
        %2576 = vmatpush2.bf16.msra.mxu0 0
        %2577 = vmatprep.subr.bf16.mxu0 0
        %2578 = vmatpush2.bf16.msra.mxu0 0
        %2579 = vmatprep.subr.bf16.mxu0 0
        %2580 = vmatpush2.bf16.msra.mxu0 0
        %2581 = vmatprep.subr.bf16.mxu0 0
        %2582 = vmatpush2.bf16.msra.mxu0 0
        %2583 = vmatprep.subr.bf16.mxu0 0
        %2584 = vmatpush2.bf16.msra.mxu0 0
        %2585 = vmatprep.subr.bf16.mxu0 0
        %2586 = vmatpush2.bf16.msra.mxu0 0
        %2587 = vmatprep.subr.bf16.mxu0 0
        %2588 = vmatpush2.bf16.msra.mxu0 0
        %2589 = vmatprep.mubr.bf16.mxu0 0
        %2590 = vmatmul.mubr.bf16.gmra.mxu0 %v1499
        %v2591 = vpop.f32.mrf.mxu0
        %v2592 = vadd.f32 %v1675, %v2591
        %v2593 = vpop.f32.mrf.mxu0
        %v2594 = vadd.f32 %v1679, %v2593
        %v2595 = vpop.f32.mrf.mxu0
        %v2596 = vpop.f32.mrf.mxu0
        %2597 = vdwg.mxu0
        %2598 = vmatprep.subr.bf16.mxu0 %v2221
        %2599 = vmatpush1.bf16.msra.mxu0 %v2220
        %2600 = vmatprep.subr.bf16.mxu0 %v2205
        %2601 = vmatpush1.bf16.msra.mxu0 %v2204
        %2602 = vmatprep.subr.bf16.mxu0 %v2189
        %2603 = vmatpush1.bf16.msra.mxu0 %v2188
        %2604 = vmatprep.subr.bf16.mxu0 %v2173
        %2605 = vmatpush1.bf16.msra.mxu0 %v2172
        %2606 = vmatprep.subr.bf16.mxu0 %v2157
        %2607 = vmatpush1.bf16.msra.mxu0 %v2156
        %2608 = vmatprep.subr.bf16.mxu0 %v2141
        %2609 = vmatpush1.bf16.msra.mxu0 %v2140
        %2610 = vmatprep.subr.bf16.mxu0 %v2125
        %2611 = vmatpush1.bf16.msra.mxu0 %v2124
        %2612 = vmatprep.subr.bf16.mxu0 %v2109
        %2613 = vmatpush1.bf16.msra.mxu0 %v2108
        %2614 = vmatprep.subr.bf16.mxu0 0
        %2615 = vmatpush2.bf16.msra.mxu0 0
        %2616 = vmatprep.subr.bf16.mxu0 0
        %2617 = vmatpush2.bf16.msra.mxu0 0
        %2618 = vmatprep.subr.bf16.mxu0 0
        %2619 = vmatpush2.bf16.msra.mxu0 0
        %2620 = vmatprep.subr.bf16.mxu0 0
        %2621 = vmatpush2.bf16.msra.mxu0 0
        %2622 = vmatprep.subr.bf16.mxu0 0
        %2623 = vmatpush2.bf16.msra.mxu0 0
        %2624 = vmatprep.subr.bf16.mxu0 0
        %2625 = vmatpush2.bf16.msra.mxu0 0
        %2626 = vmatprep.subr.bf16.mxu0 0
        %2627 = vmatpush2.bf16.msra.mxu0 0
        %2628 = vmatprep.subr.bf16.mxu0 0
        %2629 = vmatpush2.bf16.msra.mxu0 0
        %2630 = vmatprep.mubr.bf16.mxu0 0
        %2631 = vmatmul.mubr.bf16.gmra.mxu0 %v1499
        %v2632 = vpop.f32.mrf.mxu0
        %v2633 = vadd.f32 %v1683, %v2632
        %v2634 = vpop.f32.mrf.mxu0
        %v2635 = vadd.f32 %v1687, %v2634
        %v2636 = vpop.f32.mrf.mxu0
        %v2637 = vpop.f32.mrf.mxu0
        %2638 = vdwg.mxu0
        %2639 = vmatprep.subr.bf16.mxu0 %v2223
        %2640 = vmatpush1.bf16.msra.mxu0 %v2222
        %2641 = vmatprep.subr.bf16.mxu0 %v2207
        %2642 = vmatpush1.bf16.msra.mxu0 %v2206
        %2643 = vmatprep.subr.bf16.mxu0 %v2191
        %2644 = vmatpush1.bf16.msra.mxu0 %v2190
        %2645 = vmatprep.subr.bf16.mxu0 %v2175
        %2646 = vmatpush1.bf16.msra.mxu0 %v2174
        %2647 = vmatprep.subr.bf16.mxu0 %v2159
        %2648 = vmatpush1.bf16.msra.mxu0 %v2158
        %2649 = vmatprep.subr.bf16.mxu0 %v2143
        %2650 = vmatpush1.bf16.msra.mxu0 %v2142
        %2651 = vmatprep.subr.bf16.mxu0 %v2127
        %2652 = vmatpush1.bf16.msra.mxu0 %v2126
        %2653 = vmatprep.subr.bf16.mxu0 %v2111
        %2654 = vmatpush1.bf16.msra.mxu0 %v2110
        %2655 = vmatprep.subr.bf16.mxu0 0
        %2656 = vmatpush2.bf16.msra.mxu0 0
        %2657 = vmatprep.subr.bf16.mxu0 0
        %2658 = vmatpush2.bf16.msra.mxu0 0
        %2659 = vmatprep.subr.bf16.mxu0 0
        %2660 = vmatpush2.bf16.msra.mxu0 0
        %2661 = vmatprep.subr.bf16.mxu0 0
        %2662 = vmatpush2.bf16.msra.mxu0 0
        %2663 = vmatprep.subr.bf16.mxu0 0
        %2664 = vmatpush2.bf16.msra.mxu0 0
        %2665 = vmatprep.subr.bf16.mxu0 0
        %2666 = vmatpush2.bf16.msra.mxu0 0
        %2667 = vmatprep.subr.bf16.mxu0 0
        %2668 = vmatpush2.bf16.msra.mxu0 0
        %2669 = vmatprep.subr.bf16.mxu0 0
        %2670 = vmatpush2.bf16.msra.mxu0 0
        %2671 = vmatprep.mubr.bf16.mxu0 0
        %2672 = vmatmul.mubr.bf16.gmra.mxu0 %v1499
        %v2673 = vpop.f32.mrf.mxu0
        %v2674 = vadd.f32 %v1691, %v2673
        %v2675 = vpop.f32.mrf.mxu0
        %v2676 = vadd.f32 %v1695, %v2675
        %v2677 = vpop.f32.mrf.mxu0
        %v2678 = vpop.f32.mrf.mxu0
        %2679 = vdwg.mxu0
        %v2680 = vmax.f32 %v2387, 0.0
        %v2681 = vmax.f32 %v2389, 0.0
        %v2682 = vmax.f32 %v2428, 0.0
        %v2683 = vmax.f32 %v2430, 0.0
        %v2684 = vmax.f32 %v2469, 0.0
        %v2685 = vmax.f32 %v2471, 0.0
        %v2686 = vmax.f32 %v2510, 0.0
        %v2687 = vmax.f32 %v2512, 0.0
        %v2688 = vmax.f32 %v2551, 0.0
        %v2689 = vmax.f32 %v2553, 0.0
        %v2690 = vmax.f32 %v2592, 0.0
        %v2691 = vmax.f32 %v2594, 0.0
        %v2692 = vmax.f32 %v2633, 0.0
        %v2693 = vmax.f32 %v2635, 0.0
        %v2694 = vmax.f32 %v2674, 0.0
        %v2695 = vmax.f32 %v2676, 0.0
        %v2696 = vpack.c.bf16 %v2680, %v2680
        %v2697 = vpack.c.bf16 %v2681, %v2681
        %v2698 = vpack.c.bf16 %v2682, %v2682
        %v2699 = vpack.c.bf16 %v2683, %v2683
        %v2700 = vpack.c.bf16 %v2684, %v2684
        %v2701 = vpack.c.bf16 %v2685, %v2685
        %v2702 = vpack.c.bf16 %v2686, %v2686
        %v2703 = vpack.c.bf16 %v2687, %v2687
        %v2704 = vpack.c.bf16 %v2688, %v2688
        %v2705 = vpack.c.bf16 %v2689, %v2689
        %v2706 = vpack.c.bf16 %v2690, %v2690
        %v2707 = vpack.c.bf16 %v2691, %v2691
        %v2708 = vpack.c.bf16 %v2692, %v2692
        %v2709 = vpack.c.bf16 %v2693, %v2693
        %v2710 = vpack.c.bf16 %v2694, %v2694
        %v2711 = vpack.c.bf16 %v2695, %v2695
        %v2712 = vld [vmem:[#allocation5] sm:$0xf]
        %v2713 = vld [vmem:[#allocation5 + $0x4] sm:$0xf]
        %v2714 = vld [vmem:[#allocation5 + $0x8] sm:$0xf]
        %v2715 = vld [vmem:[#allocation5 + $0xc] sm:$0xf]
        %v2716 = vld [vmem:[#allocation5 + $0x10] sm:$0xf]
        %v2717 = vld [vmem:[#allocation5 + $0x14] sm:$0xf]
        %v2718 = vld [vmem:[#allocation5 + $0x18] sm:$0xf]
        %v2719 = vld [vmem:[#allocation5 + $0x1c] sm:$0xf]
        %v2720 = vld [vmem:[#allocation5 + $0x20] sm:$0xf]
        %v2721 = vld [vmem:[#allocation5 + $0x24] sm:$0xf]
        %v2722 = vld [vmem:[#allocation5 + $0x28] sm:$0xf]
        %v2723 = vld [vmem:[#allocation5 + $0x2c] sm:$0xf]
        %v2724 = vld [vmem:[#allocation5 + $0x30] sm:$0xf]
        %v2725 = vld [vmem:[#allocation5 + $0x34] sm:$0xf]
        %v2726 = vld [vmem:[#allocation5 + $0x38] sm:$0xf]
        %v2727 = vld [vmem:[#allocation5 + $0x3c] sm:$0xf]
        %v2728 = vld [vmem:[#allocation5 + $0x40] sm:$0xf]
        %v2729 = vld [vmem:[#allocation5 + $0x44] sm:$0xf]
        %v2730 = vld [vmem:[#allocation5 + $0x48] sm:$0xf]
        %v2731 = vld [vmem:[#allocation5 + $0x4c] sm:$0xf]
        %v2732 = vld [vmem:[#allocation5 + $0x50] sm:$0xf]
        %v2733 = vld [vmem:[#allocation5 + $0x54] sm:$0xf]
        %v2734 = vld [vmem:[#allocation5 + $0x58] sm:$0xf]
        %v2735 = vld [vmem:[#allocation5 + $0x5c] sm:$0xf]
        %v2736 = vld [vmem:[#allocation5 + $0x60] sm:$0xf]
        %v2737 = vld [vmem:[#allocation5 + $0x64] sm:$0xf]
        %v2738 = vld [vmem:[#allocation5 + $0x68] sm:$0xf]
        %v2739 = vld [vmem:[#allocation5 + $0x6c] sm:$0xf]
        %v2740 = vld [vmem:[#allocation5 + $0x70] sm:$0xf]
        %v2741 = vld [vmem:[#allocation5 + $0x74] sm:$0xf]
        %v2742 = vld [vmem:[#allocation5 + $0x78] sm:$0xf]
        %v2743 = vld [vmem:[#allocation5 + $0x7c] sm:$0xf]
        %v2744 = vld [vmem:[#allocation5 + $0x80] sm:$0xf]
        %v2745 = vld [vmem:[#allocation5 + $0x84] sm:$0xf]
        %v2746 = vld [vmem:[#allocation5 + $0x88] sm:$0xf]
        %v2747 = vld [vmem:[#allocation5 + $0x8c] sm:$0xf]
        %v2748 = vld [vmem:[#allocation5 + $0x90] sm:$0xf]
        %v2749 = vld [vmem:[#allocation5 + $0x94] sm:$0xf]
        %v2750 = vld [vmem:[#allocation5 + $0x98] sm:$0xf]
        %v2751 = vld [vmem:[#allocation5 + $0x9c] sm:$0xf]
        %v2752 = vld [vmem:[#allocation5 + $0xa0] sm:$0xf]
        %v2753 = vld [vmem:[#allocation5 + $0xa4] sm:$0xf]
        %v2754 = vld [vmem:[#allocation5 + $0xa8] sm:$0xf]
        %v2755 = vld [vmem:[#allocation5 + $0xac] sm:$0xf]
        %v2756 = vld [vmem:[#allocation5 + $0xb0] sm:$0xf]
        %v2757 = vld [vmem:[#allocation5 + $0xb4] sm:$0xf]
        %v2758 = vld [vmem:[#allocation5 + $0xb8] sm:$0xf]
        %v2759 = vld [vmem:[#allocation5 + $0xbc] sm:$0xf]
        %v2760 = vld [vmem:[#allocation5 + $0xc0] sm:$0xf]
        %v2761 = vld [vmem:[#allocation5 + $0xc4] sm:$0xf]
        %v2762 = vld [vmem:[#allocation5 + $0xc8] sm:$0xf]
        %v2763 = vld [vmem:[#allocation5 + $0xcc] sm:$0xf]
        %v2764 = vld [vmem:[#allocation5 + $0xd0] sm:$0xf]
        %v2765 = vld [vmem:[#allocation5 + $0xd4] sm:$0xf]
        %v2766 = vld [vmem:[#allocation5 + $0xd8] sm:$0xf]
        %v2767 = vld [vmem:[#allocation5 + $0xdc] sm:$0xf]
        %v2768 = vld [vmem:[#allocation5 + $0xe0] sm:$0xf]
        %v2769 = vld [vmem:[#allocation5 + $0xe4] sm:$0xf]
        %v2770 = vld [vmem:[#allocation5 + $0xe8] sm:$0xf]
        %v2771 = vld [vmem:[#allocation5 + $0xec] sm:$0xf]
        %v2772 = vld [vmem:[#allocation5 + $0xf0] sm:$0xf]
        %v2773 = vld [vmem:[#allocation5 + $0xf4] sm:$0xf]
        %v2774 = vld [vmem:[#allocation5 + $0xf8] sm:$0xf]
        %v2775 = vld [vmem:[#allocation5 + $0xfc] sm:$0xf]
        %v2776 = vld [vmem:[#allocation5 + $0x100] sm:$0xf]
        %v2777 = vld [vmem:[#allocation5 + $0x104] sm:$0xf]
        %v2778 = vld [vmem:[#allocation5 + $0x108] sm:$0xf]
        %v2779 = vld [vmem:[#allocation5 + $0x10c] sm:$0xf]
        %v2780 = vld [vmem:[#allocation5 + $0x110] sm:$0xf]
        %v2781 = vld [vmem:[#allocation5 + $0x114] sm:$0xf]
        %v2782 = vld [vmem:[#allocation5 + $0x118] sm:$0xf]
        %v2783 = vld [vmem:[#allocation5 + $0x11c] sm:$0xf]
        %v2784 = vld [vmem:[#allocation5 + $0x120] sm:$0xf]
        %v2785 = vld [vmem:[#allocation5 + $0x124] sm:$0xf]
        %v2786 = vld [vmem:[#allocation5 + $0x128] sm:$0xf]
        %v2787 = vld [vmem:[#allocation5 + $0x12c] sm:$0xf]
        %v2788 = vld [vmem:[#allocation5 + $0x130] sm:$0xf]
        %v2789 = vld [vmem:[#allocation5 + $0x134] sm:$0xf]
        %v2790 = vld [vmem:[#allocation5 + $0x138] sm:$0xf]
        %v2791 = vld [vmem:[#allocation5 + $0x13c] sm:$0xf]
        %v2792 = vld [vmem:[#allocation5 + $0x140] sm:$0xf]
        %v2793 = vld [vmem:[#allocation5 + $0x144] sm:$0xf]
        %v2794 = vld [vmem:[#allocation5 + $0x148] sm:$0xf]
        %v2795 = vld [vmem:[#allocation5 + $0x14c] sm:$0xf]
        %v2796 = vld [vmem:[#allocation5 + $0x150] sm:$0xf]
        %v2797 = vld [vmem:[#allocation5 + $0x154] sm:$0xf]
        %v2798 = vld [vmem:[#allocation5 + $0x158] sm:$0xf]
        %v2799 = vld [vmem:[#allocation5 + $0x15c] sm:$0xf]
        %v2800 = vld [vmem:[#allocation5 + $0x160] sm:$0xf]
        %v2801 = vld [vmem:[#allocation5 + $0x164] sm:$0xf]
        %v2802 = vld [vmem:[#allocation5 + $0x168] sm:$0xf]
        %v2803 = vld [vmem:[#allocation5 + $0x16c] sm:$0xf]
        %v2804 = vld [vmem:[#allocation5 + $0x170] sm:$0xf]
        %v2805 = vld [vmem:[#allocation5 + $0x174] sm:$0xf]
        %v2806 = vld [vmem:[#allocation5 + $0x178] sm:$0xf]
        %v2807 = vld [vmem:[#allocation5 + $0x17c] sm:$0xf]
        %v2808 = vld [vmem:[#allocation5 + $0x180] sm:$0xf]
        %v2809 = vld [vmem:[#allocation5 + $0x184] sm:$0xf]
        %v2810 = vld [vmem:[#allocation5 + $0x188] sm:$0xf]
        %v2811 = vld [vmem:[#allocation5 + $0x18c] sm:$0xf]
        %v2812 = vld [vmem:[#allocation5 + $0x190] sm:$0xf]
        %v2813 = vld [vmem:[#allocation5 + $0x194] sm:$0xf]
        %v2814 = vld [vmem:[#allocation5 + $0x198] sm:$0xf]
        %v2815 = vld [vmem:[#allocation5 + $0x19c] sm:$0xf]
        %v2816 = vld [vmem:[#allocation5 + $0x1a0] sm:$0xf]
        %v2817 = vld [vmem:[#allocation5 + $0x1a4] sm:$0xf]
        %v2818 = vld [vmem:[#allocation5 + $0x1a8] sm:$0xf]
        %v2819 = vld [vmem:[#allocation5 + $0x1ac] sm:$0xf]
        %v2820 = vld [vmem:[#allocation5 + $0x1b0] sm:$0xf]
        %v2821 = vld [vmem:[#allocation5 + $0x1b4] sm:$0xf]
        %v2822 = vld [vmem:[#allocation5 + $0x1b8] sm:$0xf]
        %v2823 = vld [vmem:[#allocation5 + $0x1bc] sm:$0xf]
        %v2824 = vld [vmem:[#allocation5 + $0x1c0] sm:$0xf]
        %v2825 = vld [vmem:[#allocation5 + $0x1c4] sm:$0xf]
        %v2826 = vld [vmem:[#allocation5 + $0x1c8] sm:$0xf]
        %v2827 = vld [vmem:[#allocation5 + $0x1cc] sm:$0xf]
        %v2828 = vld [vmem:[#allocation5 + $0x1d0] sm:$0xf]
        %v2829 = vld [vmem:[#allocation5 + $0x1d4] sm:$0xf]
        %v2830 = vld [vmem:[#allocation5 + $0x1d8] sm:$0xf]
        %v2831 = vld [vmem:[#allocation5 + $0x1dc] sm:$0xf]
        %v2832 = vld [vmem:[#allocation5 + $0x1e0] sm:$0xf]
        %v2833 = vld [vmem:[#allocation5 + $0x1e4] sm:$0xf]
        %v2834 = vld [vmem:[#allocation5 + $0x1e8] sm:$0xf]
        %v2835 = vld [vmem:[#allocation5 + $0x1ec] sm:$0xf]
        %v2836 = vld [vmem:[#allocation5 + $0x1f0] sm:$0xf]
        %v2837 = vld [vmem:[#allocation5 + $0x1f4] sm:$0xf]
        %v2838 = vld [vmem:[#allocation5 + $0x1f8] sm:$0xf]
        %v2839 = vld [vmem:[#allocation5 + $0x1fc] sm:$0xf]
        %v2840 = vld [vmem:[#allocation5 + $0x200] sm:$0xf]
        %v2841 = vld [vmem:[#allocation5 + $0x204] sm:$0xf]
        %v2842 = vld [vmem:[#allocation5 + $0x208] sm:$0xf]
        %v2843 = vld [vmem:[#allocation5 + $0x20c] sm:$0xf]
        %v2844 = vld [vmem:[#allocation5 + $0x210] sm:$0xf]
        %v2845 = vld [vmem:[#allocation5 + $0x214] sm:$0xf]
        %v2846 = vld [vmem:[#allocation5 + $0x218] sm:$0xf]
        %v2847 = vld [vmem:[#allocation5 + $0x21c] sm:$0xf]
        %v2848 = vld [vmem:[#allocation5 + $0x220] sm:$0xf]
        %v2849 = vld [vmem:[#allocation5 + $0x224] sm:$0xf]
        %v2850 = vld [vmem:[#allocation5 + $0x228] sm:$0xf]
        %v2851 = vld [vmem:[#allocation5 + $0x22c] sm:$0xf]
        %v2852 = vld [vmem:[#allocation5 + $0x230] sm:$0xf]
        %v2853 = vld [vmem:[#allocation5 + $0x234] sm:$0xf]
        %v2854 = vld [vmem:[#allocation5 + $0x238] sm:$0xf]
        %v2855 = vld [vmem:[#allocation5 + $0x23c] sm:$0xf]
        %v2856 = vld [vmem:[#allocation5 + $0x240] sm:$0xf]
        %v2857 = vld [vmem:[#allocation5 + $0x244] sm:$0xf]
        %v2858 = vld [vmem:[#allocation5 + $0x248] sm:$0xf]
        %v2859 = vld [vmem:[#allocation5 + $0x24c] sm:$0xf]
        %v2860 = vld [vmem:[#allocation5 + $0x250] sm:$0xf]
        %v2861 = vld [vmem:[#allocation5 + $0x254] sm:$0xf]
        %v2862 = vld [vmem:[#allocation5 + $0x258] sm:$0xf]
        %v2863 = vld [vmem:[#allocation5 + $0x25c] sm:$0xf]
        %v2864 = vld [vmem:[#allocation5 + $0x260] sm:$0xf]
        %v2865 = vld [vmem:[#allocation5 + $0x264] sm:$0xf]
        %v2866 = vld [vmem:[#allocation5 + $0x268] sm:$0xf]
        %v2867 = vld [vmem:[#allocation5 + $0x26c] sm:$0xf]
        %v2868 = vld [vmem:[#allocation5 + $0x270] sm:$0xf]
        %v2869 = vld [vmem:[#allocation5 + $0x274] sm:$0xf]
        %v2870 = vld [vmem:[#allocation5 + $0x278] sm:$0xf]
        %v2871 = vld [vmem:[#allocation5 + $0x27c] sm:$0xf]
        %v2872 = vld [vmem:[#allocation5 + $0x280] sm:$0xf]
        %v2873 = vld [vmem:[#allocation5 + $0x284] sm:$0xf]
        %v2874 = vld [vmem:[#allocation5 + $0x288] sm:$0xf]
        %v2875 = vld [vmem:[#allocation5 + $0x28c] sm:$0xf]
        %v2876 = vld [vmem:[#allocation5 + $0x290] sm:$0xf]
        %v2877 = vld [vmem:[#allocation5 + $0x294] sm:$0xf]
        %v2878 = vld [vmem:[#allocation5 + $0x298] sm:$0xf]
        %v2879 = vld [vmem:[#allocation5 + $0x29c] sm:$0xf]
        %v2880 = vld [vmem:[#allocation5 + $0x2a0] sm:$0xf]
        %v2881 = vld [vmem:[#allocation5 + $0x2a4] sm:$0xf]
        %v2882 = vld [vmem:[#allocation5 + $0x2a8] sm:$0xf]
        %v2883 = vld [vmem:[#allocation5 + $0x2ac] sm:$0xf]
        %v2884 = vld [vmem:[#allocation5 + $0x2b0] sm:$0xf]
        %v2885 = vld [vmem:[#allocation5 + $0x2b4] sm:$0xf]
        %v2886 = vld [vmem:[#allocation5 + $0x2b8] sm:$0xf]
        %v2887 = vld [vmem:[#allocation5 + $0x2bc] sm:$0xf]
        %v2888 = vld [vmem:[#allocation5 + $0x2c0] sm:$0xf]
        %v2889 = vld [vmem:[#allocation5 + $0x2c4] sm:$0xf]
        %v2890 = vld [vmem:[#allocation5 + $0x2c8] sm:$0xf]
        %v2891 = vld [vmem:[#allocation5 + $0x2cc] sm:$0xf]
        %v2892 = vld [vmem:[#allocation5 + $0x2d0] sm:$0xf]
        %v2893 = vld [vmem:[#allocation5 + $0x2d4] sm:$0xf]
        %v2894 = vld [vmem:[#allocation5 + $0x2d8] sm:$0xf]
        %v2895 = vld [vmem:[#allocation5 + $0x2dc] sm:$0xf]
        %v2896 = vld [vmem:[#allocation5 + $0x2e0] sm:$0xf]
        %v2897 = vld [vmem:[#allocation5 + $0x2e4] sm:$0xf]
        %v2898 = vld [vmem:[#allocation5 + $0x2e8] sm:$0xf]
        %v2899 = vld [vmem:[#allocation5 + $0x2ec] sm:$0xf]
        %v2900 = vld [vmem:[#allocation5 + $0x2f0] sm:$0xf]
        %v2901 = vld [vmem:[#allocation5 + $0x2f4] sm:$0xf]
        %v2902 = vld [vmem:[#allocation5 + $0x2f8] sm:$0xf]
        %v2903 = vld [vmem:[#allocation5 + $0x2fc] sm:$0xf]
        %v2904 = vld [vmem:[#allocation5 + $0x300] sm:$0xf]
        %v2905 = vld [vmem:[#allocation5 + $0x304] sm:$0xf]
        %v2906 = vld [vmem:[#allocation5 + $0x308] sm:$0xf]
        %v2907 = vld [vmem:[#allocation5 + $0x30c] sm:$0xf]
        %v2908 = vld [vmem:[#allocation5 + $0x310] sm:$0xf]
        %v2909 = vld [vmem:[#allocation5 + $0x314] sm:$0xf]
        %v2910 = vld [vmem:[#allocation5 + $0x318] sm:$0xf]
        %v2911 = vld [vmem:[#allocation5 + $0x31c] sm:$0xf]
        %v2912 = vld [vmem:[#allocation5 + $0x320] sm:$0xf]
        %v2913 = vld [vmem:[#allocation5 + $0x324] sm:$0xf]
        %v2914 = vld [vmem:[#allocation5 + $0x328] sm:$0xf]
        %v2915 = vld [vmem:[#allocation5 + $0x32c] sm:$0xf]
        %v2916 = vld [vmem:[#allocation5 + $0x330] sm:$0xf]
        %v2917 = vld [vmem:[#allocation5 + $0x334] sm:$0xf]
        %v2918 = vld [vmem:[#allocation5 + $0x338] sm:$0xf]
        %v2919 = vld [vmem:[#allocation5 + $0x33c] sm:$0xf]
        %v2920 = vld [vmem:[#allocation5 + $0x340] sm:$0xf]
        %v2921 = vld [vmem:[#allocation5 + $0x344] sm:$0xf]
        %v2922 = vld [vmem:[#allocation5 + $0x348] sm:$0xf]
        %v2923 = vld [vmem:[#allocation5 + $0x34c] sm:$0xf]
        %v2924 = vld [vmem:[#allocation5 + $0x350] sm:$0xf]
        %v2925 = vld [vmem:[#allocation5 + $0x354] sm:$0xf]
        %v2926 = vld [vmem:[#allocation5 + $0x358] sm:$0xf]
        %v2927 = vld [vmem:[#allocation5 + $0x35c] sm:$0xf]
        %v2928 = vld [vmem:[#allocation5 + $0x360] sm:$0xf]
        %v2929 = vld [vmem:[#allocation5 + $0x364] sm:$0xf]
        %v2930 = vld [vmem:[#allocation5 + $0x368] sm:$0xf]
        %v2931 = vld [vmem:[#allocation5 + $0x36c] sm:$0xf]
        %v2932 = vld [vmem:[#allocation5 + $0x370] sm:$0xf]
        %v2933 = vld [vmem:[#allocation5 + $0x374] sm:$0xf]
        %v2934 = vld [vmem:[#allocation5 + $0x378] sm:$0xf]
        %v2935 = vld [vmem:[#allocation5 + $0x37c] sm:$0xf]
        %v2936 = vld [vmem:[#allocation5 + $0x380] sm:$0xf]
        %v2937 = vld [vmem:[#allocation5 + $0x384] sm:$0xf]
        %v2938 = vld [vmem:[#allocation5 + $0x388] sm:$0xf]
        %v2939 = vld [vmem:[#allocation5 + $0x38c] sm:$0xf]
        %v2940 = vld [vmem:[#allocation5 + $0x390] sm:$0xf]
        %v2941 = vld [vmem:[#allocation5 + $0x394] sm:$0xf]
        %v2942 = vld [vmem:[#allocation5 + $0x398] sm:$0xf]
        %v2943 = vld [vmem:[#allocation5 + $0x39c] sm:$0xf]
        %v2944 = vld [vmem:[#allocation5 + $0x3a0] sm:$0xf]
        %v2945 = vld [vmem:[#allocation5 + $0x3a4] sm:$0xf]
        %v2946 = vld [vmem:[#allocation5 + $0x3a8] sm:$0xf]
        %v2947 = vld [vmem:[#allocation5 + $0x3ac] sm:$0xf]
        %v2948 = vld [vmem:[#allocation5 + $0x3b0] sm:$0xf]
        %v2949 = vld [vmem:[#allocation5 + $0x3b4] sm:$0xf]
        %v2950 = vld [vmem:[#allocation5 + $0x3b8] sm:$0xf]
        %v2951 = vld [vmem:[#allocation5 + $0x3bc] sm:$0xf]
        %v2952 = vld [vmem:[#allocation5 + $0x3c0] sm:$0xf]
        %v2953 = vld [vmem:[#allocation5 + $0x3c4] sm:$0xf]
        %v2954 = vld [vmem:[#allocation5 + $0x3c8] sm:$0xf]
        %v2955 = vld [vmem:[#allocation5 + $0x3cc] sm:$0xf]
        %v2956 = vld [vmem:[#allocation5 + $0x3d0] sm:$0xf]
        %v2957 = vld [vmem:[#allocation5 + $0x3d4] sm:$0xf]
        %v2958 = vld [vmem:[#allocation5 + $0x3d8] sm:$0xf]
        %v2959 = vld [vmem:[#allocation5 + $0x3dc] sm:$0xf]
        %v2960 = vld [vmem:[#allocation5 + $0x3e0] sm:$0xf]
        %v2961 = vld [vmem:[#allocation5 + $0x3e4] sm:$0xf]
        %v2962 = vld [vmem:[#allocation5 + $0x3e8] sm:$0xf]
        %v2963 = vld [vmem:[#allocation5 + $0x3ec] sm:$0xf]
        %v2964 = vld [vmem:[#allocation5 + $0x3f0] sm:$0xf]
        %v2965 = vld [vmem:[#allocation5 + $0x3f4] sm:$0xf]
        %v2966 = vld [vmem:[#allocation5 + $0x3f8] sm:$0xf]
        %v2967 = vld [vmem:[#allocation5 + $0x3fc] sm:$0xf]
        %v2968 = vld [vmem:[%s13] sm:$0x1]
        %v2970 = vlaneseq
        %v2971 = vshrl.u32 %v2970, 7
        %v2972 = vsub.s32 0, %v2971
        %v2973 = vrot.slane %v2968, %v2972
        %v3231 = vunpack.c.l.b16 %v2712
        %v3232 = vunpack.c.l.b16 %v2713
        %v3233 = vunpack.c.l.b16 %v2714
        %v3234 = vunpack.c.l.b16 %v2715
        %v3235 = vunpack.c.l.b16 %v2716
        %v3236 = vunpack.c.l.b16 %v2717
        %v3237 = vunpack.c.l.b16 %v2718
        %v3238 = vunpack.c.l.b16 %v2719
        %v3239 = vunpack.c.l.b16 %v2720
        %v3240 = vunpack.c.l.b16 %v2721
        %v3241 = vunpack.c.l.b16 %v2722
        %v3242 = vunpack.c.l.b16 %v2723
        %v3243 = vunpack.c.l.b16 %v2724
        %v3244 = vunpack.c.l.b16 %v2725
        %v3245 = vunpack.c.l.b16 %v2726
        %v3246 = vunpack.c.l.b16 %v2727
        %v3247 = vunpack.c.l.b16 %v2728
        %v3248 = vunpack.c.l.b16 %v2729
        %v3249 = vunpack.c.l.b16 %v2730
        %v3250 = vunpack.c.l.b16 %v2731
        %v3251 = vunpack.c.l.b16 %v2732
        %v3252 = vunpack.c.l.b16 %v2733
        %v3253 = vunpack.c.l.b16 %v2734
        %v3254 = vunpack.c.l.b16 %v2735
        %v3255 = vunpack.c.l.b16 %v2736
        %v3256 = vunpack.c.l.b16 %v2737
        %v3257 = vunpack.c.l.b16 %v2738
        %v3258 = vunpack.c.l.b16 %v2739
        %v3259 = vunpack.c.l.b16 %v2740
        %v3260 = vunpack.c.l.b16 %v2741
        %v3261 = vunpack.c.l.b16 %v2742
        %v3262 = vunpack.c.l.b16 %v2743
        %v3263 = vunpack.c.l.b16 %v2744
        %v3264 = vunpack.c.l.b16 %v2745
        %v3265 = vunpack.c.l.b16 %v2746
        %v3266 = vunpack.c.l.b16 %v2747
        %v3267 = vunpack.c.l.b16 %v2748
        %v3268 = vunpack.c.l.b16 %v2749
        %v3269 = vunpack.c.l.b16 %v2750
        %v3270 = vunpack.c.l.b16 %v2751
        %v3271 = vunpack.c.l.b16 %v2752
        %v3272 = vunpack.c.l.b16 %v2753
        %v3273 = vunpack.c.l.b16 %v2754
        %v3274 = vunpack.c.l.b16 %v2755
        %v3275 = vunpack.c.l.b16 %v2756
        %v3276 = vunpack.c.l.b16 %v2757
        %v3277 = vunpack.c.l.b16 %v2758
        %v3278 = vunpack.c.l.b16 %v2759
        %v3279 = vunpack.c.l.b16 %v2760
        %v3280 = vunpack.c.l.b16 %v2761
        %v3281 = vunpack.c.l.b16 %v2762
        %v3282 = vunpack.c.l.b16 %v2763
        %v3283 = vunpack.c.l.b16 %v2764
        %v3284 = vunpack.c.l.b16 %v2765
        %v3285 = vunpack.c.l.b16 %v2766
        %v3286 = vunpack.c.l.b16 %v2767
        %v3287 = vunpack.c.l.b16 %v2768
        %v3288 = vunpack.c.l.b16 %v2769
        %v3289 = vunpack.c.l.b16 %v2770
        %v3290 = vunpack.c.l.b16 %v2771
        %v3291 = vunpack.c.l.b16 %v2772
        %v3292 = vunpack.c.l.b16 %v2773
        %v3293 = vunpack.c.l.b16 %v2774
        %v3294 = vunpack.c.l.b16 %v2775
        %v3295 = vunpack.c.l.b16 %v2776
        %v3296 = vunpack.c.l.b16 %v2777
        %v3297 = vunpack.c.l.b16 %v2778
        %v3298 = vunpack.c.l.b16 %v2779
        %v3299 = vunpack.c.l.b16 %v2780
        %v3300 = vunpack.c.l.b16 %v2781
        %v3301 = vunpack.c.l.b16 %v2782
        %v3302 = vunpack.c.l.b16 %v2783
        %v3303 = vunpack.c.l.b16 %v2784
        %v3304 = vunpack.c.l.b16 %v2785
        %v3305 = vunpack.c.l.b16 %v2786
        %v3306 = vunpack.c.l.b16 %v2787
        %v3307 = vunpack.c.l.b16 %v2788
        %v3308 = vunpack.c.l.b16 %v2789
        %v3309 = vunpack.c.l.b16 %v2790
        %v3310 = vunpack.c.l.b16 %v2791
        %v3311 = vunpack.c.l.b16 %v2792
        %v3312 = vunpack.c.l.b16 %v2793
        %v3313 = vunpack.c.l.b16 %v2794
        %v3314 = vunpack.c.l.b16 %v2795
        %v3315 = vunpack.c.l.b16 %v2796
        %v3316 = vunpack.c.l.b16 %v2797
        %v3317 = vunpack.c.l.b16 %v2798
        %v3318 = vunpack.c.l.b16 %v2799
        %v3319 = vunpack.c.l.b16 %v2800
        %v3320 = vunpack.c.l.b16 %v2801
        %v3321 = vunpack.c.l.b16 %v2802
        %v3322 = vunpack.c.l.b16 %v2803
        %v3323 = vunpack.c.l.b16 %v2804
        %v3324 = vunpack.c.l.b16 %v2805
        %v3325 = vunpack.c.l.b16 %v2806
        %v3326 = vunpack.c.l.b16 %v2807
        %v3327 = vunpack.c.l.b16 %v2808
        %v3328 = vunpack.c.l.b16 %v2809
        %v3329 = vunpack.c.l.b16 %v2810
        %v3330 = vunpack.c.l.b16 %v2811
        %v3331 = vunpack.c.l.b16 %v2812
        %v3332 = vunpack.c.l.b16 %v2813
        %v3333 = vunpack.c.l.b16 %v2814
        %v3334 = vunpack.c.l.b16 %v2815
        %v3335 = vunpack.c.l.b16 %v2816
        %v3336 = vunpack.c.l.b16 %v2817
        %v3337 = vunpack.c.l.b16 %v2818
        %v3338 = vunpack.c.l.b16 %v2819
        %v3339 = vunpack.c.l.b16 %v2820
        %v3340 = vunpack.c.l.b16 %v2821
        %v3341 = vunpack.c.l.b16 %v2822
        %v3342 = vunpack.c.l.b16 %v2823
        %v3343 = vunpack.c.l.b16 %v2824
        %v3344 = vunpack.c.l.b16 %v2825
        %v3345 = vunpack.c.l.b16 %v2826
        %v3346 = vunpack.c.l.b16 %v2827
        %v3347 = vunpack.c.l.b16 %v2828
        %v3348 = vunpack.c.l.b16 %v2829
        %v3349 = vunpack.c.l.b16 %v2830
        %v3350 = vunpack.c.l.b16 %v2831
        %v3351 = vunpack.c.l.b16 %v2832
        %v3352 = vunpack.c.l.b16 %v2833
        %v3353 = vunpack.c.l.b16 %v2834
        %v3354 = vunpack.c.l.b16 %v2835
        %v3355 = vunpack.c.l.b16 %v2836
        %v3356 = vunpack.c.l.b16 %v2837
        %v3357 = vunpack.c.l.b16 %v2838
        %v3358 = vunpack.c.l.b16 %v2839
        %v3359 = vunpack.c.l.b16 %v2840
        %v3360 = vunpack.c.l.b16 %v2841
        %v3361 = vunpack.c.l.b16 %v2842
        %v3362 = vunpack.c.l.b16 %v2843
        %v3363 = vunpack.c.l.b16 %v2844
        %v3364 = vunpack.c.l.b16 %v2845
        %v3365 = vunpack.c.l.b16 %v2846
        %v3366 = vunpack.c.l.b16 %v2847
        %v3367 = vunpack.c.l.b16 %v2848
        %v3368 = vunpack.c.l.b16 %v2849
        %v3369 = vunpack.c.l.b16 %v2850
        %v3370 = vunpack.c.l.b16 %v2851
        %v3371 = vunpack.c.l.b16 %v2852
        %v3372 = vunpack.c.l.b16 %v2853
        %v3373 = vunpack.c.l.b16 %v2854
        %v3374 = vunpack.c.l.b16 %v2855
        %v3375 = vunpack.c.l.b16 %v2856
        %v3376 = vunpack.c.l.b16 %v2857
        %v3377 = vunpack.c.l.b16 %v2858
        %v3378 = vunpack.c.l.b16 %v2859
        %v3379 = vunpack.c.l.b16 %v2860
        %v3380 = vunpack.c.l.b16 %v2861
        %v3381 = vunpack.c.l.b16 %v2862
        %v3382 = vunpack.c.l.b16 %v2863
        %v3383 = vunpack.c.l.b16 %v2864
        %v3384 = vunpack.c.l.b16 %v2865
        %v3385 = vunpack.c.l.b16 %v2866
        %v3386 = vunpack.c.l.b16 %v2867
        %v3387 = vunpack.c.l.b16 %v2868
        %v3388 = vunpack.c.l.b16 %v2869
        %v3389 = vunpack.c.l.b16 %v2870
        %v3390 = vunpack.c.l.b16 %v2871
        %v3391 = vunpack.c.l.b16 %v2872
        %v3392 = vunpack.c.l.b16 %v2873
        %v3393 = vunpack.c.l.b16 %v2874
        %v3394 = vunpack.c.l.b16 %v2875
        %v3395 = vunpack.c.l.b16 %v2876
        %v3396 = vunpack.c.l.b16 %v2877
        %v3397 = vunpack.c.l.b16 %v2878
        %v3398 = vunpack.c.l.b16 %v2879
        %v3399 = vunpack.c.l.b16 %v2880
        %v3400 = vunpack.c.l.b16 %v2881
        %v3401 = vunpack.c.l.b16 %v2882
        %v3402 = vunpack.c.l.b16 %v2883
        %v3403 = vunpack.c.l.b16 %v2884
        %v3404 = vunpack.c.l.b16 %v2885
        %v3405 = vunpack.c.l.b16 %v2886
        %v3406 = vunpack.c.l.b16 %v2887
        %v3407 = vunpack.c.l.b16 %v2888
        %v3408 = vunpack.c.l.b16 %v2889
        %v3409 = vunpack.c.l.b16 %v2890
        %v3410 = vunpack.c.l.b16 %v2891
        %v3411 = vunpack.c.l.b16 %v2892
        %v3412 = vunpack.c.l.b16 %v2893
        %v3413 = vunpack.c.l.b16 %v2894
        %v3414 = vunpack.c.l.b16 %v2895
        %v3415 = vunpack.c.l.b16 %v2896
        %v3416 = vunpack.c.l.b16 %v2897
        %v3417 = vunpack.c.l.b16 %v2898
        %v3418 = vunpack.c.l.b16 %v2899
        %v3419 = vunpack.c.l.b16 %v2900
        %v3420 = vunpack.c.l.b16 %v2901
        %v3421 = vunpack.c.l.b16 %v2902
        %v3422 = vunpack.c.l.b16 %v2903
        %v3423 = vunpack.c.l.b16 %v2904
        %v3424 = vunpack.c.l.b16 %v2905
        %v3425 = vunpack.c.l.b16 %v2906
        %v3426 = vunpack.c.l.b16 %v2907
        %v3427 = vunpack.c.l.b16 %v2908
        %v3428 = vunpack.c.l.b16 %v2909
        %v3429 = vunpack.c.l.b16 %v2910
        %v3430 = vunpack.c.l.b16 %v2911
        %v3431 = vunpack.c.l.b16 %v2912
        %v3432 = vunpack.c.l.b16 %v2913
        %v3433 = vunpack.c.l.b16 %v2914
        %v3434 = vunpack.c.l.b16 %v2915
        %v3435 = vunpack.c.l.b16 %v2916
        %v3436 = vunpack.c.l.b16 %v2917
        %v3437 = vunpack.c.l.b16 %v2918
        %v3438 = vunpack.c.l.b16 %v2919
        %v3439 = vunpack.c.l.b16 %v2920
        %v3440 = vunpack.c.l.b16 %v2921
        %v3441 = vunpack.c.l.b16 %v2922
        %v3442 = vunpack.c.l.b16 %v2923
        %v3443 = vunpack.c.l.b16 %v2924
        %v3444 = vunpack.c.l.b16 %v2925
        %v3445 = vunpack.c.l.b16 %v2926
        %v3446 = vunpack.c.l.b16 %v2927
        %v3447 = vunpack.c.l.b16 %v2928
        %v3448 = vunpack.c.l.b16 %v2929
        %v3449 = vunpack.c.l.b16 %v2930
        %v3450 = vunpack.c.l.b16 %v2931
        %v3451 = vunpack.c.l.b16 %v2932
        %v3452 = vunpack.c.l.b16 %v2933
        %v3453 = vunpack.c.l.b16 %v2934
        %v3454 = vunpack.c.l.b16 %v2935
        %v3455 = vunpack.c.l.b16 %v2936
        %v3456 = vunpack.c.l.b16 %v2937
        %v3457 = vunpack.c.l.b16 %v2938
        %v3458 = vunpack.c.l.b16 %v2939
        %v3459 = vunpack.c.l.b16 %v2940
        %v3460 = vunpack.c.l.b16 %v2941
        %v3461 = vunpack.c.l.b16 %v2942
        %v3462 = vunpack.c.l.b16 %v2943
        %v3463 = vunpack.c.l.b16 %v2944
        %v3464 = vunpack.c.l.b16 %v2945
        %v3465 = vunpack.c.l.b16 %v2946
        %v3466 = vunpack.c.l.b16 %v2947
        %v3467 = vunpack.c.l.b16 %v2948
        %v3468 = vunpack.c.l.b16 %v2949
        %v3469 = vunpack.c.l.b16 %v2950
        %v3470 = vunpack.c.l.b16 %v2951
        %v3471 = vunpack.c.l.b16 %v2952
        %v3472 = vunpack.c.l.b16 %v2953
        %v3473 = vunpack.c.l.b16 %v2954
        %v3474 = vunpack.c.l.b16 %v2955
        %v3475 = vunpack.c.l.b16 %v2956
        %v3476 = vunpack.c.l.b16 %v2957
        %v3477 = vunpack.c.l.b16 %v2958
        %v3478 = vunpack.c.l.b16 %v2959
        %v3479 = vunpack.c.l.b16 %v2960
        %v3480 = vunpack.c.l.b16 %v2961
        %v3481 = vunpack.c.l.b16 %v2962
        %v3482 = vunpack.c.l.b16 %v2963
        %v3483 = vunpack.c.l.b16 %v2964
        %v3484 = vunpack.c.l.b16 %v2965
        %v3485 = vunpack.c.l.b16 %v2966
        %v3486 = vunpack.c.l.b16 %v2967
        %v3487 = vpack.c.b16 %v3232, %v3231
        %v3488 = vpack.c.b16 %v3234, %v3233
        %v3489 = vpack.c.b16 %v3236, %v3235
        %v3490 = vpack.c.b16 %v3238, %v3237
        %v3491 = vpack.c.b16 %v3240, %v3239
        %v3492 = vpack.c.b16 %v3242, %v3241
        %v3493 = vpack.c.b16 %v3244, %v3243
        %v3494 = vpack.c.b16 %v3246, %v3245
        %v3495 = vpack.c.b16 %v3248, %v3247
        %v3496 = vpack.c.b16 %v3250, %v3249
        %v3497 = vpack.c.b16 %v3252, %v3251
        %v3498 = vpack.c.b16 %v3254, %v3253
        %v3499 = vpack.c.b16 %v3256, %v3255
        %v3500 = vpack.c.b16 %v3258, %v3257
        %v3501 = vpack.c.b16 %v3260, %v3259
        %v3502 = vpack.c.b16 %v3262, %v3261
        %v3503 = vpack.c.b16 %v3264, %v3263
        %v3504 = vpack.c.b16 %v3266, %v3265
        %v3505 = vpack.c.b16 %v3268, %v3267
        %v3506 = vpack.c.b16 %v3270, %v3269
        %v3507 = vpack.c.b16 %v3272, %v3271
        %v3508 = vpack.c.b16 %v3274, %v3273
        %v3509 = vpack.c.b16 %v3276, %v3275
        %v3510 = vpack.c.b16 %v3278, %v3277
        %v3511 = vpack.c.b16 %v3280, %v3279
        %v3512 = vpack.c.b16 %v3282, %v3281
        %v3513 = vpack.c.b16 %v3284, %v3283
        %v3514 = vpack.c.b16 %v3286, %v3285
        %v3515 = vpack.c.b16 %v3288, %v3287
        %v3516 = vpack.c.b16 %v3290, %v3289
        %v3517 = vpack.c.b16 %v3292, %v3291
        %v3518 = vpack.c.b16 %v3294, %v3293
        %v3519 = vpack.c.b16 %v3296, %v3295
        %v3520 = vpack.c.b16 %v3298, %v3297
        %v3521 = vpack.c.b16 %v3300, %v3299
        %v3522 = vpack.c.b16 %v3302, %v3301
        %v3523 = vpack.c.b16 %v3304, %v3303
        %v3524 = vpack.c.b16 %v3306, %v3305
        %v3525 = vpack.c.b16 %v3308, %v3307
        %v3526 = vpack.c.b16 %v3310, %v3309
        %v3527 = vpack.c.b16 %v3312, %v3311
        %v3528 = vpack.c.b16 %v3314, %v3313
        %v3529 = vpack.c.b16 %v3316, %v3315
        %v3530 = vpack.c.b16 %v3318, %v3317
        %v3531 = vpack.c.b16 %v3320, %v3319
        %v3532 = vpack.c.b16 %v3322, %v3321
        %v3533 = vpack.c.b16 %v3324, %v3323
        %v3534 = vpack.c.b16 %v3326, %v3325
        %v3535 = vpack.c.b16 %v3328, %v3327
        %v3536 = vpack.c.b16 %v3330, %v3329
        %v3537 = vpack.c.b16 %v3332, %v3331
        %v3538 = vpack.c.b16 %v3334, %v3333
        %v3539 = vpack.c.b16 %v3336, %v3335
        %v3540 = vpack.c.b16 %v3338, %v3337
        %v3541 = vpack.c.b16 %v3340, %v3339
        %v3542 = vpack.c.b16 %v3342, %v3341
        %v3543 = vpack.c.b16 %v3344, %v3343
        %v3544 = vpack.c.b16 %v3346, %v3345
        %v3545 = vpack.c.b16 %v3348, %v3347
        %v3546 = vpack.c.b16 %v3350, %v3349
        %v3547 = vpack.c.b16 %v3352, %v3351
        %v3548 = vpack.c.b16 %v3354, %v3353
        %v3549 = vpack.c.b16 %v3356, %v3355
        %v3550 = vpack.c.b16 %v3358, %v3357
        %v3551 = vpack.c.b16 %v3360, %v3359
        %v3552 = vpack.c.b16 %v3362, %v3361
        %v3553 = vpack.c.b16 %v3364, %v3363
        %v3554 = vpack.c.b16 %v3366, %v3365
        %v3555 = vpack.c.b16 %v3368, %v3367
        %v3556 = vpack.c.b16 %v3370, %v3369
        %v3557 = vpack.c.b16 %v3372, %v3371
        %v3558 = vpack.c.b16 %v3374, %v3373
        %v3559 = vpack.c.b16 %v3376, %v3375
        %v3560 = vpack.c.b16 %v3378, %v3377
        %v3561 = vpack.c.b16 %v3380, %v3379
        %v3562 = vpack.c.b16 %v3382, %v3381
        %v3563 = vpack.c.b16 %v3384, %v3383
        %v3564 = vpack.c.b16 %v3386, %v3385
        %v3565 = vpack.c.b16 %v3388, %v3387
        %v3566 = vpack.c.b16 %v3390, %v3389
        %v3567 = vpack.c.b16 %v3392, %v3391
        %v3568 = vpack.c.b16 %v3394, %v3393
        %v3569 = vpack.c.b16 %v3396, %v3395
        %v3570 = vpack.c.b16 %v3398, %v3397
        %v3571 = vpack.c.b16 %v3400, %v3399
        %v3572 = vpack.c.b16 %v3402, %v3401
        %v3573 = vpack.c.b16 %v3404, %v3403
        %v3574 = vpack.c.b16 %v3406, %v3405
        %v3575 = vpack.c.b16 %v3408, %v3407
        %v3576 = vpack.c.b16 %v3410, %v3409
        %v3577 = vpack.c.b16 %v3412, %v3411
        %v3578 = vpack.c.b16 %v3414, %v3413
        %v3579 = vpack.c.b16 %v3416, %v3415
        %v3580 = vpack.c.b16 %v3418, %v3417
        %v3581 = vpack.c.b16 %v3420, %v3419
        %v3582 = vpack.c.b16 %v3422, %v3421
        %v3583 = vpack.c.b16 %v3424, %v3423
        %v3584 = vpack.c.b16 %v3426, %v3425
        %v3585 = vpack.c.b16 %v3428, %v3427
        %v3586 = vpack.c.b16 %v3430, %v3429
        %v3587 = vpack.c.b16 %v3432, %v3431
        %v3588 = vpack.c.b16 %v3434, %v3433
        %v3589 = vpack.c.b16 %v3436, %v3435
        %v3590 = vpack.c.b16 %v3438, %v3437
        %v3591 = vpack.c.b16 %v3440, %v3439
        %v3592 = vpack.c.b16 %v3442, %v3441
        %v3593 = vpack.c.b16 %v3444, %v3443
        %v3594 = vpack.c.b16 %v3446, %v3445
        %v3595 = vpack.c.b16 %v3448, %v3447
        %v3596 = vpack.c.b16 %v3450, %v3449
        %v3597 = vpack.c.b16 %v3452, %v3451
        %v3598 = vpack.c.b16 %v3454, %v3453
        %v3599 = vpack.c.b16 %v3456, %v3455
        %v3600 = vpack.c.b16 %v3458, %v3457
        %v3601 = vpack.c.b16 %v3460, %v3459
        %v3602 = vpack.c.b16 %v3462, %v3461
        %v3603 = vpack.c.b16 %v3464, %v3463
        %v3604 = vpack.c.b16 %v3466, %v3465
        %v3605 = vpack.c.b16 %v3468, %v3467
        %v3606 = vpack.c.b16 %v3470, %v3469
        %v3607 = vpack.c.b16 %v3472, %v3471
        %v3608 = vpack.c.b16 %v3474, %v3473
        %v3609 = vpack.c.b16 %v3476, %v3475
        %v3610 = vpack.c.b16 %v3478, %v3477
        %v3611 = vpack.c.b16 %v3480, %v3479
        %v3612 = vpack.c.b16 %v3482, %v3481
        %v3613 = vpack.c.b16 %v3484, %v3483
        %v3614 = vpack.c.b16 %v3486, %v3485
        %3743 = vmatprep.subr.bf16.mxu0 0
        %3744 = vmatpush1.bf16.msra.mxu0 %v3494
        %3745 = vmatprep.subr.bf16.mxu0 0
        %3746 = vmatpush1.bf16.msra.mxu0 %v3493
        %3747 = vmatprep.subr.bf16.mxu0 0
        %3748 = vmatpush1.bf16.msra.mxu0 %v3492
        %3749 = vmatprep.subr.bf16.mxu0 0
        %3750 = vmatpush1.bf16.msra.mxu0 %v3491
        %3751 = vmatprep.subr.bf16.mxu0 0
        %3752 = vmatpush1.bf16.msra.mxu0 %v3490
        %3753 = vmatprep.subr.bf16.mxu0 0
        %3754 = vmatpush1.bf16.msra.mxu0 %v3489
        %3755 = vmatprep.subr.bf16.mxu0 0
        %3756 = vmatpush1.bf16.msra.mxu0 %v3488
        %3757 = vmatprep.subr.bf16.mxu0 0
        %3758 = vmatpush1.bf16.msra.mxu0 %v3487
        %3759 = vmatprep.subr.bf16.mxu0 0
        %3760 = vmatpush2.bf16.msra.mxu0 %v3502
        %3761 = vmatprep.subr.bf16.mxu0 0
        %3762 = vmatpush2.bf16.msra.mxu0 %v3501
        %3763 = vmatprep.subr.bf16.mxu0 0
        %3764 = vmatpush2.bf16.msra.mxu0 %v3500
        %3765 = vmatprep.subr.bf16.mxu0 0
        %3766 = vmatpush2.bf16.msra.mxu0 %v3499
        %3767 = vmatprep.subr.bf16.mxu0 0
        %3768 = vmatpush2.bf16.msra.mxu0 %v3498
        %3769 = vmatprep.subr.bf16.mxu0 0
        %3770 = vmatpush2.bf16.msra.mxu0 %v3497
        %3771 = vmatprep.subr.bf16.mxu0 0
        %3772 = vmatpush2.bf16.msra.mxu0 %v3496
        %3773 = vmatprep.subr.bf16.mxu0 0
        %3774 = vmatpush2.bf16.msra.mxu0 %v3495
        %3775 = vmatprep.mubr.bf16.mxu0 %v2697
        %3776 = vmatmul.mubr.bf16.gmra.mxu0 %v2696
        %v3777 = vpop.f32.mrf.mxu0
        %v3778 = vadd.f32 %v2973, %v3777
        %v3779 = vpop.f32.mrf.mxu0
        %v3780 = vpop.f32.mrf.mxu0
        %v3781 = vpop.f32.mrf.mxu0
        %3782 = vdwg.mxu0
        %3783 = vmatprep.subr.bf16.mxu0 0
        %3784 = vmatpush1.bf16.msra.mxu0 %v3510
        %3785 = vmatprep.subr.bf16.mxu0 0
        %3786 = vmatpush1.bf16.msra.mxu0 %v3509
        %3787 = vmatprep.subr.bf16.mxu0 0
        %3788 = vmatpush1.bf16.msra.mxu0 %v3508
        %3789 = vmatprep.subr.bf16.mxu0 0
        %3790 = vmatpush1.bf16.msra.mxu0 %v3507
        %3791 = vmatprep.subr.bf16.mxu0 0
        %3792 = vmatpush1.bf16.msra.mxu0 %v3506
        %3793 = vmatprep.subr.bf16.mxu0 0
        %3794 = vmatpush1.bf16.msra.mxu0 %v3505
        %3795 = vmatprep.subr.bf16.mxu0 0
        %3796 = vmatpush1.bf16.msra.mxu0 %v3504
        %3797 = vmatprep.subr.bf16.mxu0 0
        %3798 = vmatpush1.bf16.msra.mxu0 %v3503
        %3799 = vmatprep.subr.bf16.mxu0 0
        %3800 = vmatpush2.bf16.msra.mxu0 %v3518
        %3801 = vmatprep.subr.bf16.mxu0 0
        %3802 = vmatpush2.bf16.msra.mxu0 %v3517
        %3803 = vmatprep.subr.bf16.mxu0 0
        %3804 = vmatpush2.bf16.msra.mxu0 %v3516
        %3805 = vmatprep.subr.bf16.mxu0 0
        %3806 = vmatpush2.bf16.msra.mxu0 %v3515
        %3807 = vmatprep.subr.bf16.mxu0 0
        %3808 = vmatpush2.bf16.msra.mxu0 %v3514
        %3809 = vmatprep.subr.bf16.mxu0 0
        %3810 = vmatpush2.bf16.msra.mxu0 %v3513
        %3811 = vmatprep.subr.bf16.mxu0 0
        %3812 = vmatpush2.bf16.msra.mxu0 %v3512
        %3813 = vmatprep.subr.bf16.mxu0 0
        %3814 = vmatpush2.bf16.msra.mxu0 %v3511
        %3815 = vmatprep.mubr.bf16.mxu0 %v2699
        %3816 = vmatmul.mubr.bf16.gmra.mxu0 %v2698
        %v3817 = vpop.f32.mrf.mxu0
        %v3818 = vadd.f32 %v3778, %v3817
        %v3819 = vpop.f32.mrf.mxu0
        %v3820 = vpop.f32.mrf.mxu0
        %v3821 = vpop.f32.mrf.mxu0
        %3822 = vdwg.mxu0
        %3823 = vmatprep.subr.bf16.mxu0 0
        %3824 = vmatpush1.bf16.msra.mxu0 %v3526
        %3825 = vmatprep.subr.bf16.mxu0 0
        %3826 = vmatpush1.bf16.msra.mxu0 %v3525
        %3827 = vmatprep.subr.bf16.mxu0 0
        %3828 = vmatpush1.bf16.msra.mxu0 %v3524
        %3829 = vmatprep.subr.bf16.mxu0 0
        %3830 = vmatpush1.bf16.msra.mxu0 %v3523
        %3831 = vmatprep.subr.bf16.mxu0 0
        %3832 = vmatpush1.bf16.msra.mxu0 %v3522
        %3833 = vmatprep.subr.bf16.mxu0 0
        %3834 = vmatpush1.bf16.msra.mxu0 %v3521
        %3835 = vmatprep.subr.bf16.mxu0 0
        %3836 = vmatpush1.bf16.msra.mxu0 %v3520
        %3837 = vmatprep.subr.bf16.mxu0 0
        %3838 = vmatpush1.bf16.msra.mxu0 %v3519
        %3839 = vmatprep.subr.bf16.mxu0 0
        %3840 = vmatpush2.bf16.msra.mxu0 %v3534
        %3841 = vmatprep.subr.bf16.mxu0 0
        %3842 = vmatpush2.bf16.msra.mxu0 %v3533
        %3843 = vmatprep.subr.bf16.mxu0 0
        %3844 = vmatpush2.bf16.msra.mxu0 %v3532
        %3845 = vmatprep.subr.bf16.mxu0 0
        %3846 = vmatpush2.bf16.msra.mxu0 %v3531
        %3847 = vmatprep.subr.bf16.mxu0 0
        %3848 = vmatpush2.bf16.msra.mxu0 %v3530
        %3849 = vmatprep.subr.bf16.mxu0 0
        %3850 = vmatpush2.bf16.msra.mxu0 %v3529
        %3851 = vmatprep.subr.bf16.mxu0 0
        %3852 = vmatpush2.bf16.msra.mxu0 %v3528
        %3853 = vmatprep.subr.bf16.mxu0 0
        %3854 = vmatpush2.bf16.msra.mxu0 %v3527
        %3855 = vmatprep.mubr.bf16.mxu0 %v2701
        %3856 = vmatmul.mubr.bf16.gmra.mxu0 %v2700
        %v3857 = vpop.f32.mrf.mxu0
        %v3858 = vadd.f32 %v3818, %v3857
        %v3859 = vpop.f32.mrf.mxu0
        %v3860 = vpop.f32.mrf.mxu0
        %v3861 = vpop.f32.mrf.mxu0
        %3862 = vdwg.mxu0
        %3863 = vmatprep.subr.bf16.mxu0 0
        %3864 = vmatpush1.bf16.msra.mxu0 %v3542
        %3865 = vmatprep.subr.bf16.mxu0 0
        %3866 = vmatpush1.bf16.msra.mxu0 %v3541
        %3867 = vmatprep.subr.bf16.mxu0 0
        %3868 = vmatpush1.bf16.msra.mxu0 %v3540
        %3869 = vmatprep.subr.bf16.mxu0 0
        %3870 = vmatpush1.bf16.msra.mxu0 %v3539
        %3871 = vmatprep.subr.bf16.mxu0 0
        %3872 = vmatpush1.bf16.msra.mxu0 %v3538
        %3873 = vmatprep.subr.bf16.mxu0 0
        %3874 = vmatpush1.bf16.msra.mxu0 %v3537
        %3875 = vmatprep.subr.bf16.mxu0 0
        %3876 = vmatpush1.bf16.msra.mxu0 %v3536
        %3877 = vmatprep.subr.bf16.mxu0 0
        %3878 = vmatpush1.bf16.msra.mxu0 %v3535
        %3879 = vmatprep.subr.bf16.mxu0 0
        %3880 = vmatpush2.bf16.msra.mxu0 %v3550
        %3881 = vmatprep.subr.bf16.mxu0 0
        %3882 = vmatpush2.bf16.msra.mxu0 %v3549
        %3883 = vmatprep.subr.bf16.mxu0 0
        %3884 = vmatpush2.bf16.msra.mxu0 %v3548
        %3885 = vmatprep.subr.bf16.mxu0 0
        %3886 = vmatpush2.bf16.msra.mxu0 %v3547
        %3887 = vmatprep.subr.bf16.mxu0 0
        %3888 = vmatpush2.bf16.msra.mxu0 %v3546
        %3889 = vmatprep.subr.bf16.mxu0 0
        %3890 = vmatpush2.bf16.msra.mxu0 %v3545
        %3891 = vmatprep.subr.bf16.mxu0 0
        %3892 = vmatpush2.bf16.msra.mxu0 %v3544
        %3893 = vmatprep.subr.bf16.mxu0 0
        %3894 = vmatpush2.bf16.msra.mxu0 %v3543
        %3895 = vmatprep.mubr.bf16.mxu0 %v2703
        %3896 = vmatmul.mubr.bf16.gmra.mxu0 %v2702
        %v3897 = vpop.f32.mrf.mxu0
        %v3898 = vadd.f32 %v3858, %v3897
        %v3899 = vpop.f32.mrf.mxu0
        %v3900 = vpop.f32.mrf.mxu0
        %v3901 = vpop.f32.mrf.mxu0
        %3902 = vdwg.mxu0
        %3903 = vmatprep.subr.bf16.mxu0 0
        %3904 = vmatpush1.bf16.msra.mxu0 %v3558
        %3905 = vmatprep.subr.bf16.mxu0 0
        %3906 = vmatpush1.bf16.msra.mxu0 %v3557
        %3907 = vmatprep.subr.bf16.mxu0 0
        %3908 = vmatpush1.bf16.msra.mxu0 %v3556
        %3909 = vmatprep.subr.bf16.mxu0 0
        %3910 = vmatpush1.bf16.msra.mxu0 %v3555
        %3911 = vmatprep.subr.bf16.mxu0 0
        %3912 = vmatpush1.bf16.msra.mxu0 %v3554
        %3913 = vmatprep.subr.bf16.mxu0 0
        %3914 = vmatpush1.bf16.msra.mxu0 %v3553
        %3915 = vmatprep.subr.bf16.mxu0 0
        %3916 = vmatpush1.bf16.msra.mxu0 %v3552
        %3917 = vmatprep.subr.bf16.mxu0 0
        %3918 = vmatpush1.bf16.msra.mxu0 %v3551
        %3919 = vmatprep.subr.bf16.mxu0 0
        %3920 = vmatpush2.bf16.msra.mxu0 %v3566
        %3921 = vmatprep.subr.bf16.mxu0 0
        %3922 = vmatpush2.bf16.msra.mxu0 %v3565
        %3923 = vmatprep.subr.bf16.mxu0 0
        %3924 = vmatpush2.bf16.msra.mxu0 %v3564
        %3925 = vmatprep.subr.bf16.mxu0 0
        %3926 = vmatpush2.bf16.msra.mxu0 %v3563
        %3927 = vmatprep.subr.bf16.mxu0 0
        %3928 = vmatpush2.bf16.msra.mxu0 %v3562
        %3929 = vmatprep.subr.bf16.mxu0 0
        %3930 = vmatpush2.bf16.msra.mxu0 %v3561
        %3931 = vmatprep.subr.bf16.mxu0 0
        %3932 = vmatpush2.bf16.msra.mxu0 %v3560
        %3933 = vmatprep.subr.bf16.mxu0 0
        %3934 = vmatpush2.bf16.msra.mxu0 %v3559
        %3935 = vmatprep.mubr.bf16.mxu0 %v2705
        %3936 = vmatmul.mubr.bf16.gmra.mxu0 %v2704
        %v3937 = vpop.f32.mrf.mxu0
        %v3938 = vadd.f32 %v3898, %v3937
        %v3939 = vpop.f32.mrf.mxu0
        %v3940 = vpop.f32.mrf.mxu0
        %v3941 = vpop.f32.mrf.mxu0
        %3942 = vdwg.mxu0
        %3943 = vmatprep.subr.bf16.mxu0 0
        %3944 = vmatpush1.bf16.msra.mxu0 %v3574
        %3945 = vmatprep.subr.bf16.mxu0 0
        %3946 = vmatpush1.bf16.msra.mxu0 %v3573
        %3947 = vmatprep.subr.bf16.mxu0 0
        %3948 = vmatpush1.bf16.msra.mxu0 %v3572
        %3949 = vmatprep.subr.bf16.mxu0 0
        %3950 = vmatpush1.bf16.msra.mxu0 %v3571
        %3951 = vmatprep.subr.bf16.mxu0 0
        %3952 = vmatpush1.bf16.msra.mxu0 %v3570
        %3953 = vmatprep.subr.bf16.mxu0 0
        %3954 = vmatpush1.bf16.msra.mxu0 %v3569
        %3955 = vmatprep.subr.bf16.mxu0 0
        %3956 = vmatpush1.bf16.msra.mxu0 %v3568
        %3957 = vmatprep.subr.bf16.mxu0 0
        %3958 = vmatpush1.bf16.msra.mxu0 %v3567
        %3959 = vmatprep.subr.bf16.mxu0 0
        %3960 = vmatpush2.bf16.msra.mxu0 %v3582
        %3961 = vmatprep.subr.bf16.mxu0 0
        %3962 = vmatpush2.bf16.msra.mxu0 %v3581
        %3963 = vmatprep.subr.bf16.mxu0 0
        %3964 = vmatpush2.bf16.msra.mxu0 %v3580
        %3965 = vmatprep.subr.bf16.mxu0 0
        %3966 = vmatpush2.bf16.msra.mxu0 %v3579
        %3967 = vmatprep.subr.bf16.mxu0 0
        %3968 = vmatpush2.bf16.msra.mxu0 %v3578
        %3969 = vmatprep.subr.bf16.mxu0 0
        %3970 = vmatpush2.bf16.msra.mxu0 %v3577
        %3971 = vmatprep.subr.bf16.mxu0 0
        %3972 = vmatpush2.bf16.msra.mxu0 %v3576
        %3973 = vmatprep.subr.bf16.mxu0 0
        %3974 = vmatpush2.bf16.msra.mxu0 %v3575
        %3975 = vmatprep.mubr.bf16.mxu0 %v2707
        %3976 = vmatmul.mubr.bf16.gmra.mxu0 %v2706
        %v3977 = vpop.f32.mrf.mxu0
        %v3978 = vadd.f32 %v3938, %v3977
        %v3979 = vpop.f32.mrf.mxu0
        %v3980 = vpop.f32.mrf.mxu0
        %v3981 = vpop.f32.mrf.mxu0
        %3982 = vdwg.mxu0
        %3983 = vmatprep.subr.bf16.mxu0 0
        %3984 = vmatpush1.bf16.msra.mxu0 %v3590
        %3985 = vmatprep.subr.bf16.mxu0 0
        %3986 = vmatpush1.bf16.msra.mxu0 %v3589
        %3987 = vmatprep.subr.bf16.mxu0 0
        %3988 = vmatpush1.bf16.msra.mxu0 %v3588
        %3989 = vmatprep.subr.bf16.mxu0 0
        %3990 = vmatpush1.bf16.msra.mxu0 %v3587
        %3991 = vmatprep.subr.bf16.mxu0 0
        %3992 = vmatpush1.bf16.msra.mxu0 %v3586
        %3993 = vmatprep.subr.bf16.mxu0 0
        %3994 = vmatpush1.bf16.msra.mxu0 %v3585
        %3995 = vmatprep.subr.bf16.mxu0 0
        %3996 = vmatpush1.bf16.msra.mxu0 %v3584
        %3997 = vmatprep.subr.bf16.mxu0 0
        %3998 = vmatpush1.bf16.msra.mxu0 %v3583
        %3999 = vmatprep.subr.bf16.mxu0 0
        %4000 = vmatpush2.bf16.msra.mxu0 %v3598
        %4001 = vmatprep.subr.bf16.mxu0 0
        %4002 = vmatpush2.bf16.msra.mxu0 %v3597
        %4003 = vmatprep.subr.bf16.mxu0 0
        %4004 = vmatpush2.bf16.msra.mxu0 %v3596
        %4005 = vmatprep.subr.bf16.mxu0 0
        %4006 = vmatpush2.bf16.msra.mxu0 %v3595
        %4007 = vmatprep.subr.bf16.mxu0 0
        %4008 = vmatpush2.bf16.msra.mxu0 %v3594
        %4009 = vmatprep.subr.bf16.mxu0 0
        %4010 = vmatpush2.bf16.msra.mxu0 %v3593
        %4011 = vmatprep.subr.bf16.mxu0 0
        %4012 = vmatpush2.bf16.msra.mxu0 %v3592
        %4013 = vmatprep.subr.bf16.mxu0 0
        %4014 = vmatpush2.bf16.msra.mxu0 %v3591
        %4015 = vmatprep.mubr.bf16.mxu0 %v2709
        %4016 = vmatmul.mubr.bf16.gmra.mxu0 %v2708
        %v4017 = vpop.f32.mrf.mxu0
        %v4018 = vadd.f32 %v3978, %v4017
        %v4019 = vpop.f32.mrf.mxu0
        %v4020 = vpop.f32.mrf.mxu0
        %v4021 = vpop.f32.mrf.mxu0
        %4022 = vdwg.mxu0
        %4023 = vmatprep.subr.bf16.mxu0 0
        %4024 = vmatpush1.bf16.msra.mxu0 %v3606
        %4025 = vmatprep.subr.bf16.mxu0 0
        %4026 = vmatpush1.bf16.msra.mxu0 %v3605
        %4027 = vmatprep.subr.bf16.mxu0 0
        %4028 = vmatpush1.bf16.msra.mxu0 %v3604
        %4029 = vmatprep.subr.bf16.mxu0 0
        %4030 = vmatpush1.bf16.msra.mxu0 %v3603
        %4031 = vmatprep.subr.bf16.mxu0 0
        %4032 = vmatpush1.bf16.msra.mxu0 %v3602
        %4033 = vmatprep.subr.bf16.mxu0 0
        %4034 = vmatpush1.bf16.msra.mxu0 %v3601
        %4035 = vmatprep.subr.bf16.mxu0 0
        %4036 = vmatpush1.bf16.msra.mxu0 %v3600
        %4037 = vmatprep.subr.bf16.mxu0 0
        %4038 = vmatpush1.bf16.msra.mxu0 %v3599
        %4039 = vmatprep.subr.bf16.mxu0 0
        %4040 = vmatpush2.bf16.msra.mxu0 %v3614
        %4041 = vmatprep.subr.bf16.mxu0 0
        %4042 = vmatpush2.bf16.msra.mxu0 %v3613
        %4043 = vmatprep.subr.bf16.mxu0 0
        %4044 = vmatpush2.bf16.msra.mxu0 %v3612
        %4045 = vmatprep.subr.bf16.mxu0 0
        %4046 = vmatpush2.bf16.msra.mxu0 %v3611
        %4047 = vmatprep.subr.bf16.mxu0 0
        %4048 = vmatpush2.bf16.msra.mxu0 %v3610
        %4049 = vmatprep.subr.bf16.mxu0 0
        %4050 = vmatpush2.bf16.msra.mxu0 %v3609
        %4051 = vmatprep.subr.bf16.mxu0 0
        %4052 = vmatpush2.bf16.msra.mxu0 %v3608
        %4053 = vmatprep.subr.bf16.mxu0 0
        %4054 = vmatpush2.bf16.msra.mxu0 %v3607
        %4055 = vmatprep.mubr.bf16.mxu0 %v2711
        %4056 = vmatmul.mubr.bf16.gmra.mxu0 %v2710
        %v4057 = vpop.f32.mrf.mxu0
        %v4058 = vadd.f32 %v4018, %v4057
        %v4059 = vpop.f32.mrf.mxu0
        %v4060 = vpop.f32.mrf.mxu0
        %v4061 = vpop.f32.mrf.mxu0
        %4062 = vdwg.mxu0
        %v4063 = vadd.f32 %v1498, %v4058
        %4064 = vadd.xlane.f32.xlu0 %v4063
        %v4065 = vpop.xlane.xlu0 %4064
        %v4066 = vmul.f32 %v4065, %v1473
        %v4067 = vsub.f32 %v4063, %v4066
        %v4068 = vmul.f32 %v4067, %v4067
        %4069 = vadd.xlane.f32.xlu0 %v4068
        %v4070 = vpop.xlane.xlu0 %4069
        %v4071 = vmul.f32 %v4070, %v1473
        %v4072 = vadd.f32 %v4071, 1e-05
        %v4073 = vrsqrt.pop %v4072
        %v4074 = vmul.f32 %v4067, %v4073
        %v4075 = vld [vmem:[%s14] sm:$0x1]
        %v4077 = vlaneseq
        %v4078 = vshrl.u32 %v4077, 7
        %v4079 = vsub.s32 0, %v4078
        %v4080 = vrot.slane %v4075, %v4079
        %v4082 = vmul.f32 %v4074, %v4080
        %v4083 = vld [vmem:[%s15] sm:$0x1]
        %v4085 = vlaneseq
        %v4086 = vshrl.u32 %v4085, 7
        %v4087 = vsub.s32 0, %v4086
        %v4088 = vrot.slane %v4083, %v4087
        %v4090 = vadd.f32 %v4082, %v4088
        %v4091 = vpack.c.bf16 %v4090, %v4090
        %s4092 = scalar_lea.vmem %s4, 192
        %v4093 = vld [vmem:[%s4092] sm:$0xff]
        %v4094 = vld [vmem:[%s4092 + $0x8] sm:$0xf]
        %v4095 = vld [vmem:[%s4092 + $0xc] sm:$0xff]
        %v4096 = vld [vmem:[%s4092 + $0x14] sm:$0xf]
        %v4097 = vld [vmem:[%s4092 + $0x18] sm:$0xff]
        %v4098 = vld [vmem:[%s4092 + $0x20] sm:$0xf]
        %v4099 = vld [vmem:[%s4092 + $0x24] sm:$0xff]
        %v4100 = vld [vmem:[%s4092 + $0x2c] sm:$0xf]
        %v4101 = vld [vmem:[%s4092 + $0x30] sm:$0xff]
        %v4102 = vld [vmem:[%s4092 + $0x38] sm:$0xf]
        %v4103 = vld [vmem:[%s4092 + $0x3c] sm:$0xff]
        %v4104 = vld [vmem:[%s4092 + $0x44] sm:$0xf]
        %v4105 = vld [vmem:[%s4092 + $0x48] sm:$0xff]
        %v4106 = vld [vmem:[%s4092 + $0x50] sm:$0xf]
        %v4107 = vld [vmem:[%s4092 + $0x54] sm:$0xff]
        %v4108 = vld [vmem:[%s4092 + $0x5c] sm:$0xf]
        %v4109 = vld [vmem:[%s4092 + $0x60] sm:$0xff]
        %v4110 = vld [vmem:[%s4092 + $0x68] sm:$0xf]
        %v4111 = vld [vmem:[%s4092 + $0x6c] sm:$0xff]
        %v4112 = vld [vmem:[%s4092 + $0x74] sm:$0xf]
        %v4113 = vld [vmem:[%s4092 + $0x78] sm:$0xff]
        %v4114 = vld [vmem:[%s4092 + $0x80] sm:$0xf]
        %v4115 = vld [vmem:[%s4092 + $0x84] sm:$0xff]
        %v4116 = vld [vmem:[%s4092 + $0x8c] sm:$0xf]
        %v4117 = vld [vmem:[%s4092 + $0x90] sm:$0xff]
        %v4118 = vld [vmem:[%s4092 + $0x98] sm:$0xf]
        %v4119 = vld [vmem:[%s4092 + $0x9c] sm:$0xff]
        %v4120 = vld [vmem:[%s4092 + $0xa4] sm:$0xf]
        %v4121 = vld [vmem:[%s4092 + $0xa8] sm:$0xff]
        %v4122 = vld [vmem:[%s4092 + $0xb0] sm:$0xf]
        %v4123 = vld [vmem:[%s4092 + $0xb4] sm:$0xff]
        %v4124 = vld [vmem:[%s4092 + $0xbc] sm:$0xf]
        %s4125 = scalar_lea.vmem %s5, 3
        %v4126 = vld [vmem:[%s4125] sm:$0x7]
        %v4128 = vlaneseq
        %v4129 = vshrl.u32 %v4128, 7
        %v4130 = vsub.s32 0, %v4129
        %v4131 = vrot.slane %v4126, %v4130
        %v4132 = vlaneseq
        %v4133 = vshrl.u32 %v4132, 7
        %v4134 = vsub.s32 1, %v4133
        %v4135 = vrot.slane %v4126, %v4134
        %v4136 = vlaneseq
        %v4137 = vshrl.u32 %v4136, 7
        %v4138 = vsub.s32 2, %v4137
        %v4139 = vrot.slane %v4126, %v4138
        %v4175 = vunpack.c.l.b16 %v4093
        %v4176 = vunpack.c.h.b16 %v4093
        %v4177 = vunpack.c.l.b16 %v4094
        %v4178 = vunpack.c.l.b16 %v4095
        %v4179 = vunpack.c.h.b16 %v4095
        %v4180 = vunpack.c.l.b16 %v4096
        %v4181 = vunpack.c.l.b16 %v4097
        %v4182 = vunpack.c.h.b16 %v4097
        %v4183 = vunpack.c.l.b16 %v4098
        %v4184 = vunpack.c.l.b16 %v4099
        %v4185 = vunpack.c.h.b16 %v4099
        %v4186 = vunpack.c.l.b16 %v4100
        %v4187 = vunpack.c.l.b16 %v4101
        %v4188 = vunpack.c.h.b16 %v4101
        %v4189 = vunpack.c.l.b16 %v4102
        %v4190 = vunpack.c.l.b16 %v4103
        %v4191 = vunpack.c.h.b16 %v4103
        %v4192 = vunpack.c.l.b16 %v4104
        %v4193 = vunpack.c.l.b16 %v4105
        %v4194 = vunpack.c.h.b16 %v4105
        %v4195 = vunpack.c.l.b16 %v4106
        %v4196 = vunpack.c.l.b16 %v4107
        %v4197 = vunpack.c.h.b16 %v4107
        %v4198 = vunpack.c.l.b16 %v4108
        %v4199 = vunpack.c.l.b16 %v4109
        %v4200 = vunpack.c.h.b16 %v4109
        %v4201 = vunpack.c.l.b16 %v4110
        %v4202 = vunpack.c.l.b16 %v4111
        %v4203 = vunpack.c.h.b16 %v4111
        %v4204 = vunpack.c.l.b16 %v4112
        %v4205 = vunpack.c.l.b16 %v4113
        %v4206 = vunpack.c.h.b16 %v4113
        %v4207 = vunpack.c.l.b16 %v4114
        %v4208 = vunpack.c.l.b16 %v4115
        %v4209 = vunpack.c.h.b16 %v4115
        %v4210 = vunpack.c.l.b16 %v4116
        %v4211 = vunpack.c.l.b16 %v4117
        %v4212 = vunpack.c.h.b16 %v4117
        %v4213 = vunpack.c.l.b16 %v4118
        %v4214 = vunpack.c.l.b16 %v4119
        %v4215 = vunpack.c.h.b16 %v4119
        %v4216 = vunpack.c.l.b16 %v4120
        %v4217 = vunpack.c.l.b16 %v4121
        %v4218 = vunpack.c.h.b16 %v4121
        %v4219 = vunpack.c.l.b16 %v4122
        %v4220 = vunpack.c.l.b16 %v4123
        %v4221 = vunpack.c.h.b16 %v4123
        %v4222 = vunpack.c.l.b16 %v4124
        %v4223 = vpack.c.b16 %v4178, %v4175
        %v4224 = vpack.c.b16 %v4179, %v4176
        %v4225 = vpack.c.b16 %v4180, %v4177
        %v4226 = vpack.c.b16 %v4184, %v4181
        %v4227 = vpack.c.b16 %v4185, %v4182
        %v4228 = vpack.c.b16 %v4186, %v4183
        %v4229 = vpack.c.b16 %v4190, %v4187
        %v4230 = vpack.c.b16 %v4191, %v4188
        %v4231 = vpack.c.b16 %v4192, %v4189
        %v4232 = vpack.c.b16 %v4196, %v4193
        %v4233 = vpack.c.b16 %v4197, %v4194
        %v4234 = vpack.c.b16 %v4198, %v4195
        %v4235 = vpack.c.b16 %v4202, %v4199
        %v4236 = vpack.c.b16 %v4203, %v4200
        %v4237 = vpack.c.b16 %v4204, %v4201
        %v4238 = vpack.c.b16 %v4208, %v4205
        %v4239 = vpack.c.b16 %v4209, %v4206
        %v4240 = vpack.c.b16 %v4210, %v4207
        %v4241 = vpack.c.b16 %v4214, %v4211
        %v4242 = vpack.c.b16 %v4215, %v4212
        %v4243 = vpack.c.b16 %v4216, %v4213
        %v4244 = vpack.c.b16 %v4220, %v4217
        %v4245 = vpack.c.b16 %v4221, %v4218
        %v4246 = vpack.c.b16 %v4222, %v4219
        %4271 = vmatprep.subr.bf16.mxu0 %v4245
        %4272 = vmatpush1.bf16.msra.mxu0 %v4244
        %4273 = vmatprep.subr.bf16.mxu0 %v4242
        %4274 = vmatpush1.bf16.msra.mxu0 %v4241
        %4275 = vmatprep.subr.bf16.mxu0 %v4239
        %4276 = vmatpush1.bf16.msra.mxu0 %v4238
        %4277 = vmatprep.subr.bf16.mxu0 %v4236
        %4278 = vmatpush1.bf16.msra.mxu0 %v4235
        %4279 = vmatprep.subr.bf16.mxu0 %v4233
        %4280 = vmatpush1.bf16.msra.mxu0 %v4232
        %4281 = vmatprep.subr.bf16.mxu0 %v4230
        %4282 = vmatpush1.bf16.msra.mxu0 %v4229
        %4283 = vmatprep.subr.bf16.mxu0 %v4227
        %4284 = vmatpush1.bf16.msra.mxu0 %v4226
        %4285 = vmatprep.subr.bf16.mxu0 %v4224
        %4286 = vmatpush1.bf16.msra.mxu0 %v4223
        %4287 = vmatprep.subr.bf16.mxu0 0
        %4288 = vmatpush2.bf16.msra.mxu0 0
        %4289 = vmatprep.subr.bf16.mxu0 0
        %4290 = vmatpush2.bf16.msra.mxu0 0
        %4291 = vmatprep.subr.bf16.mxu0 0
        %4292 = vmatpush2.bf16.msra.mxu0 0
        %4293 = vmatprep.subr.bf16.mxu0 0
        %4294 = vmatpush2.bf16.msra.mxu0 0
        %4295 = vmatprep.subr.bf16.mxu0 0
        %4296 = vmatpush2.bf16.msra.mxu0 0
        %4297 = vmatprep.subr.bf16.mxu0 0
        %4298 = vmatpush2.bf16.msra.mxu0 0
        %4299 = vmatprep.subr.bf16.mxu0 0
        %4300 = vmatpush2.bf16.msra.mxu0 0
        %4301 = vmatprep.subr.bf16.mxu0 0
        %4302 = vmatpush2.bf16.msra.mxu0 0
        %4303 = vmatprep.mubr.bf16.mxu0 0
        %4304 = vmatmul.mubr.bf16.gmra.mxu0 %v4091
        %v4305 = vpop.f32.mrf.mxu0
        %v4306 = vadd.f32 %v4131, %v4305
        %v4307 = vpop.f32.mrf.mxu0
        %v4308 = vadd.f32 %v4135, %v4307
        %v4309 = vpop.f32.mrf.mxu0
        %v4310 = vpop.f32.mrf.mxu0
        %4311 = vdwg.mxu0
        %4312 = vmatprep.subr.bf16.mxu0 0
        %4313 = vmatpush1.bf16.msra.mxu0 %v4246
        %4314 = vmatprep.subr.bf16.mxu0 0
        %4315 = vmatpush1.bf16.msra.mxu0 %v4243
        %4316 = vmatprep.subr.bf16.mxu0 0
        %4317 = vmatpush1.bf16.msra.mxu0 %v4240
        %4318 = vmatprep.subr.bf16.mxu0 0
        %4319 = vmatpush1.bf16.msra.mxu0 %v4237
        %4320 = vmatprep.subr.bf16.mxu0 0
        %4321 = vmatpush1.bf16.msra.mxu0 %v4234
        %4322 = vmatprep.subr.bf16.mxu0 0
        %4323 = vmatpush1.bf16.msra.mxu0 %v4231
        %4324 = vmatprep.subr.bf16.mxu0 0
        %4325 = vmatpush1.bf16.msra.mxu0 %v4228
        %4326 = vmatprep.subr.bf16.mxu0 0
        %4327 = vmatpush1.bf16.msra.mxu0 %v4225
        %4328 = vmatprep.subr.bf16.mxu0 0
        %4329 = vmatpush2.bf16.msra.mxu0 0
        %4330 = vmatprep.subr.bf16.mxu0 0
        %4331 = vmatpush2.bf16.msra.mxu0 0
        %4332 = vmatprep.subr.bf16.mxu0 0
        %4333 = vmatpush2.bf16.msra.mxu0 0
        %4334 = vmatprep.subr.bf16.mxu0 0
        %4335 = vmatpush2.bf16.msra.mxu0 0
        %4336 = vmatprep.subr.bf16.mxu0 0
        %4337 = vmatpush2.bf16.msra.mxu0 0
        %4338 = vmatprep.subr.bf16.mxu0 0
        %4339 = vmatpush2.bf16.msra.mxu0 0
        %4340 = vmatprep.subr.bf16.mxu0 0
        %4341 = vmatpush2.bf16.msra.mxu0 0
        %4342 = vmatprep.subr.bf16.mxu0 0
        %4343 = vmatpush2.bf16.msra.mxu0 0
        %4344 = vmatprep.mubr.bf16.mxu0 0
        %4345 = vmatmul.mubr.bf16.gmra.mxu0 %v4091
        %v4346 = vpop.f32.mrf.mxu0
        %v4347 = vadd.f32 %v4139, %v4346
        %v4348 = vpop.f32.mrf.mxu0
        %v4349 = vpop.f32.mrf.mxu0
        %v4350 = vpop.f32.mrf.mxu0
        %4351 = vdwg.mxu0
        %v4352 = vmul.f32 %v4306, 0.17677669
        %v4353 = vpack.c.bf16 %v4352, %v4352
        %v4354 = vpack.c.bf16 %v4308, %v4308
        %v4355 = vpack.c.bf16 %v4347, %v4347
        %v4357 = vsel %vm898, %v4353, 0
        %v4360 = vsel %vm898, %v4354, 0
        %4362 = vmatprep.subr.bf16.mxu0 0
        %4363 = vmatpush1.bf16.xpose.msra.mxu0 0
        %4364 = vmatprep.subr.bf16.mxu0 0
        %4365 = vmatpush1.bf16.xpose.msra.mxu0 0
        %4366 = vmatprep.subr.bf16.mxu0 0
        %4367 = vmatpush1.bf16.xpose.msra.mxu0 0
        %4368 = vmatprep.subr.bf16.mxu0 0
        %4369 = vmatpush1.bf16.xpose.msra.mxu0 0
        %4370 = vmatprep.subr.bf16.mxu0 0
        %4371 = vmatpush1.bf16.xpose.msra.mxu0 0
        %4372 = vmatprep.subr.bf16.mxu0 0
        %4373 = vmatpush1.bf16.xpose.msra.mxu0 0
        %4374 = vmatprep.subr.bf16.mxu0 0
        %4375 = vmatpush1.bf16.xpose.msra.mxu0 0
        %4376 = vmatprep.subr.bf16.mxu0 0
        %4377 = vmatpush1.bf16.xpose.msra.mxu0 %v4360
        %4378 = vmatprep.subr.bf16.mxu0 0
        %4379 = vmatpush2.bf16.xpose.msra.mxu0 0
        %4380 = vmatprep.subr.bf16.mxu0 0
        %4381 = vmatpush2.bf16.xpose.msra.mxu0 0
        %4382 = vmatprep.subr.bf16.mxu0 0
        %4383 = vmatpush2.bf16.xpose.msra.mxu0 0
        %4384 = vmatprep.subr.bf16.mxu0 0
        %4385 = vmatpush2.bf16.xpose.msra.mxu0 0
        %4386 = vmatprep.subr.bf16.mxu0 0
        %4387 = vmatpush2.bf16.xpose.msra.mxu0 0
        %4388 = vmatprep.subr.bf16.mxu0 0
        %4389 = vmatpush2.bf16.xpose.msra.mxu0 0
        %4390 = vmatprep.subr.bf16.mxu0 0
        %4391 = vmatpush2.bf16.xpose.msra.mxu0 0
        %4392 = vmatprep.subr.bf16.mxu0 0
        %4393 = vmatpush2.bf16.xpose.msra.mxu0 0
        %4394 = vmatprep.mubr.bf16.mxu0 0
        %4395 = vmatmul.mubr.bf16.gmra.mxu0 %v4357
        %v4396 = vpop.f32.mrf.mxu0
        %v4397 = vadd.f32 0.0, %v4396
        %v4398 = vpop.f32.mrf.mxu0
        %v4399 = vpop.f32.mrf.mxu0
        %v4400 = vpop.f32.mrf.mxu0
        %4401 = vdwg.mxu0
        %v4402 = vsel %vm945, %v4397, -inf
        %4403 = vmax.xlane.f32.xlu0 %v4402
        %v4404 = vpop.xlane.xlu0 %4403
        %v4405 = vsub.f32 %v4397, %v4404
        %v4406 = vmul.f32 %v4405, 1.442695
        %v4407 = vpow.pop %v4406
        %v4408 = vsel %vm945, %v4407, 0.0
        %4409 = vadd.xlane.f32.xlu0 %v4408
        %v4410 = vpop.xlane.xlu0 %4409
        %v4411 = vrcp.pop %v4410
        %v4412 = vpack.c.bf16 %v4407, %v4407
        %v4414 = vsel %vm945, %v4412, 0
        %v4417 = vsel %vm960, %v4355, 0
        %4419 = vmatprep.subr.bf16.mxu0 0
        %4420 = vmatpush1.bf16.msra.mxu0 0
        %4421 = vmatprep.subr.bf16.mxu0 0
        %4422 = vmatpush1.bf16.msra.mxu0 0
        %4423 = vmatprep.subr.bf16.mxu0 0
        %4424 = vmatpush1.bf16.msra.mxu0 0
        %4425 = vmatprep.subr.bf16.mxu0 0
        %4426 = vmatpush1.bf16.msra.mxu0 0
        %4427 = vmatprep.subr.bf16.mxu0 0
        %4428 = vmatpush1.bf16.msra.mxu0 0
        %4429 = vmatprep.subr.bf16.mxu0 0
        %4430 = vmatpush1.bf16.msra.mxu0 0
        %4431 = vmatprep.subr.bf16.mxu0 0
        %4432 = vmatpush1.bf16.msra.mxu0 0
        %4433 = vmatprep.subr.bf16.mxu0 0
        %4434 = vmatpush1.bf16.msra.mxu0 %v4417
        %4435 = vmatprep.subr.bf16.mxu0 0
        %4436 = vmatpush2.bf16.msra.mxu0 0
        %4437 = vmatprep.subr.bf16.mxu0 0
        %4438 = vmatpush2.bf16.msra.mxu0 0
        %4439 = vmatprep.subr.bf16.mxu0 0
        %4440 = vmatpush2.bf16.msra.mxu0 0
        %4441 = vmatprep.subr.bf16.mxu0 0
        %4442 = vmatpush2.bf16.msra.mxu0 0
        %4443 = vmatprep.subr.bf16.mxu0 0
        %4444 = vmatpush2.bf16.msra.mxu0 0
        %4445 = vmatprep.subr.bf16.mxu0 0
        %4446 = vmatpush2.bf16.msra.mxu0 0
        %4447 = vmatprep.subr.bf16.mxu0 0
        %4448 = vmatpush2.bf16.msra.mxu0 0
        %4449 = vmatprep.subr.bf16.mxu0 0
        %4450 = vmatpush2.bf16.msra.mxu0 0
        %4451 = vmatprep.mubr.bf16.mxu0 0
        %4452 = vmatmul.mubr.bf16.gmra.mxu0 %v4414
        %v4453 = vpop.f32.mrf.mxu0
        %v4454 = vadd.f32 0.0, %v4453
        %v4455 = vpop.f32.mrf.mxu0
        %v4456 = vpop.f32.mrf.mxu0
        %v4457 = vpop.f32.mrf.mxu0
        %4458 = vdwg.mxu0
        %v4459 = vmul.f32 %v4454, %v4411
        %4460 = vst.msk [vmem:[#allocation2] sm:$0xff] %vm898, %v4459
        %4462 = vrot.lane.b32.xlu0 %v4353, 96
        %v4463 = vpop.permute.xlu0 %4462
        %4465 = vrot.lane.b32.xlu0 %v4354, 96
        %v4466 = vpop.permute.xlu0 %4465
        %v4468 = vsel %vm898, %v4463, 0
        %v4471 = vsel %vm898, %v4466, 0
        %4473 = vmatprep.subr.bf16.mxu0 0
        %4474 = vmatpush1.bf16.xpose.msra.mxu0 0
        %4475 = vmatprep.subr.bf16.mxu0 0
        %4476 = vmatpush1.bf16.xpose.msra.mxu0 0
        %4477 = vmatprep.subr.bf16.mxu0 0
        %4478 = vmatpush1.bf16.xpose.msra.mxu0 0
        %4479 = vmatprep.subr.bf16.mxu0 0
        %4480 = vmatpush1.bf16.xpose.msra.mxu0 0
        %4481 = vmatprep.subr.bf16.mxu0 0
        %4482 = vmatpush1.bf16.xpose.msra.mxu0 0
        %4483 = vmatprep.subr.bf16.mxu0 0
        %4484 = vmatpush1.bf16.xpose.msra.mxu0 0
        %4485 = vmatprep.subr.bf16.mxu0 0
        %4486 = vmatpush1.bf16.xpose.msra.mxu0 0
        %4487 = vmatprep.subr.bf16.mxu0 0
        %4488 = vmatpush1.bf16.xpose.msra.mxu0 %v4471
        %4489 = vmatprep.subr.bf16.mxu0 0
        %4490 = vmatpush2.bf16.xpose.msra.mxu0 0
        %4491 = vmatprep.subr.bf16.mxu0 0
        %4492 = vmatpush2.bf16.xpose.msra.mxu0 0
        %4493 = vmatprep.subr.bf16.mxu0 0
        %4494 = vmatpush2.bf16.xpose.msra.mxu0 0
        %4495 = vmatprep.subr.bf16.mxu0 0
        %4496 = vmatpush2.bf16.xpose.msra.mxu0 0
        %4497 = vmatprep.subr.bf16.mxu0 0
        %4498 = vmatpush2.bf16.xpose.msra.mxu0 0
        %4499 = vmatprep.subr.bf16.mxu0 0
        %4500 = vmatpush2.bf16.xpose.msra.mxu0 0
        %4501 = vmatprep.subr.bf16.mxu0 0
        %4502 = vmatpush2.bf16.xpose.msra.mxu0 0
        %4503 = vmatprep.subr.bf16.mxu0 0
        %4504 = vmatpush2.bf16.xpose.msra.mxu0 0
        %4505 = vmatprep.mubr.bf16.mxu0 0
        %4506 = vmatmul.mubr.bf16.gmra.mxu0 %v4468
        %v4507 = vpop.f32.mrf.mxu0
        %v4508 = vadd.f32 0.0, %v4507
        %v4509 = vpop.f32.mrf.mxu0
        %v4510 = vpop.f32.mrf.mxu0
        %v4511 = vpop.f32.mrf.mxu0
        %4512 = vdwg.mxu0
        %v4513 = vsel %vm945, %v4508, -inf
        %4514 = vmax.xlane.f32.xlu0 %v4513
        %v4515 = vpop.xlane.xlu0 %4514
        %v4516 = vsub.f32 %v4508, %v4515
        %v4517 = vmul.f32 %v4516, 1.442695
        %v4518 = vpow.pop %v4517
        %v4519 = vsel %vm945, %v4518, 0.0
        %4520 = vadd.xlane.f32.xlu0 %v4519
        %v4521 = vpop.xlane.xlu0 %4520
        %v4522 = vrcp.pop %v4521
        %v4523 = vpack.c.bf16 %v4518, %v4518
        %4525 = vrot.lane.b32.xlu0 %v4355, 96
        %v4526 = vpop.permute.xlu0 %4525
        %v4528 = vsel %vm945, %v4523, 0
        %v4531 = vsel %vm960, %v4526, 0
        %4533 = vmatprep.subr.bf16.mxu0 0
        %4534 = vmatpush1.bf16.msra.mxu0 0
        %4535 = vmatprep.subr.bf16.mxu0 0
        %4536 = vmatpush1.bf16.msra.mxu0 0
        %4537 = vmatprep.subr.bf16.mxu0 0
        %4538 = vmatpush1.bf16.msra.mxu0 0
        %4539 = vmatprep.subr.bf16.mxu0 0
        %4540 = vmatpush1.bf16.msra.mxu0 0
        %4541 = vmatprep.subr.bf16.mxu0 0
        %4542 = vmatpush1.bf16.msra.mxu0 0
        %4543 = vmatprep.subr.bf16.mxu0 0
        %4544 = vmatpush1.bf16.msra.mxu0 0
        %4545 = vmatprep.subr.bf16.mxu0 0
        %4546 = vmatpush1.bf16.msra.mxu0 0
        %4547 = vmatprep.subr.bf16.mxu0 0
        %4548 = vmatpush1.bf16.msra.mxu0 %v4531
        %4549 = vmatprep.subr.bf16.mxu0 0
        %4550 = vmatpush2.bf16.msra.mxu0 0
        %4551 = vmatprep.subr.bf16.mxu0 0
        %4552 = vmatpush2.bf16.msra.mxu0 0
        %4553 = vmatprep.subr.bf16.mxu0 0
        %4554 = vmatpush2.bf16.msra.mxu0 0
        %4555 = vmatprep.subr.bf16.mxu0 0
        %4556 = vmatpush2.bf16.msra.mxu0 0
        %4557 = vmatprep.subr.bf16.mxu0 0
        %4558 = vmatpush2.bf16.msra.mxu0 0
        %4559 = vmatprep.subr.bf16.mxu0 0
        %4560 = vmatpush2.bf16.msra.mxu0 0
        %4561 = vmatprep.subr.bf16.mxu0 0
        %4562 = vmatpush2.bf16.msra.mxu0 0
        %4563 = vmatprep.subr.bf16.mxu0 0
        %4564 = vmatpush2.bf16.msra.mxu0 0
        %4565 = vmatprep.mubr.bf16.mxu0 0
        %4566 = vmatmul.mubr.bf16.gmra.mxu0 %v4528
        %v4567 = vpop.f32.mrf.mxu0
        %v4568 = vadd.f32 0.0, %v4567
        %v4569 = vpop.f32.mrf.mxu0
        %v4570 = vpop.f32.mrf.mxu0
        %v4571 = vpop.f32.mrf.mxu0
        %4572 = vdwg.mxu0
        %v4573 = vmul.f32 %v4568, %v4522
        %4575 = vrot.lane.b32.xlu0 %v4573, 32
        %v4576 = vpop.permute.xlu0 %4575
        %4578 = vst.msk [vmem:[#allocation2] sm:$0xff] %vm1123, %v4576
        %4579 = vrot.lane.b32.xlu0 %v4353, 64
        %v4580 = vpop.permute.xlu0 %4579
        %4581 = vrot.lane.b32.xlu0 %v4354, 64
        %v4582 = vpop.permute.xlu0 %4581
        %v4584 = vsel %vm898, %v4580, 0
        %v4587 = vsel %vm898, %v4582, 0
        %4589 = vmatprep.subr.bf16.mxu0 0
        %4590 = vmatpush1.bf16.xpose.msra.mxu0 0
        %4591 = vmatprep.subr.bf16.mxu0 0
        %4592 = vmatpush1.bf16.xpose.msra.mxu0 0
        %4593 = vmatprep.subr.bf16.mxu0 0
        %4594 = vmatpush1.bf16.xpose.msra.mxu0 0
        %4595 = vmatprep.subr.bf16.mxu0 0
        %4596 = vmatpush1.bf16.xpose.msra.mxu0 0
        %4597 = vmatprep.subr.bf16.mxu0 0
        %4598 = vmatpush1.bf16.xpose.msra.mxu0 0
        %4599 = vmatprep.subr.bf16.mxu0 0
        %4600 = vmatpush1.bf16.xpose.msra.mxu0 0
        %4601 = vmatprep.subr.bf16.mxu0 0
        %4602 = vmatpush1.bf16.xpose.msra.mxu0 0
        %4603 = vmatprep.subr.bf16.mxu0 0
        %4604 = vmatpush1.bf16.xpose.msra.mxu0 %v4587
        %4605 = vmatprep.subr.bf16.mxu0 0
        %4606 = vmatpush2.bf16.xpose.msra.mxu0 0
        %4607 = vmatprep.subr.bf16.mxu0 0
        %4608 = vmatpush2.bf16.xpose.msra.mxu0 0
        %4609 = vmatprep.subr.bf16.mxu0 0
        %4610 = vmatpush2.bf16.xpose.msra.mxu0 0
        %4611 = vmatprep.subr.bf16.mxu0 0
        %4612 = vmatpush2.bf16.xpose.msra.mxu0 0
        %4613 = vmatprep.subr.bf16.mxu0 0
        %4614 = vmatpush2.bf16.xpose.msra.mxu0 0
        %4615 = vmatprep.subr.bf16.mxu0 0
        %4616 = vmatpush2.bf16.xpose.msra.mxu0 0
        %4617 = vmatprep.subr.bf16.mxu0 0
        %4618 = vmatpush2.bf16.xpose.msra.mxu0 0
        %4619 = vmatprep.subr.bf16.mxu0 0
        %4620 = vmatpush2.bf16.xpose.msra.mxu0 0
        %4621 = vmatprep.mubr.bf16.mxu0 0
        %4622 = vmatmul.mubr.bf16.gmra.mxu0 %v4584
        %v4623 = vpop.f32.mrf.mxu0
        %v4624 = vadd.f32 0.0, %v4623
        %v4625 = vpop.f32.mrf.mxu0
        %v4626 = vpop.f32.mrf.mxu0
        %v4627 = vpop.f32.mrf.mxu0
        %4628 = vdwg.mxu0
        %v4629 = vsel %vm945, %v4624, -inf
        %4630 = vmax.xlane.f32.xlu0 %v4629
        %v4631 = vpop.xlane.xlu0 %4630
        %v4632 = vsub.f32 %v4624, %v4631
        %v4633 = vmul.f32 %v4632, 1.442695
        %v4634 = vpow.pop %v4633
        %v4635 = vsel %vm945, %v4634, 0.0
        %4636 = vadd.xlane.f32.xlu0 %v4635
        %v4637 = vpop.xlane.xlu0 %4636
        %v4638 = vrcp.pop %v4637
        %v4639 = vpack.c.bf16 %v4634, %v4634
        %4640 = vrot.lane.b32.xlu0 %v4355, 64
        %v4641 = vpop.permute.xlu0 %4640
        %v4643 = vsel %vm945, %v4639, 0
        %v4646 = vsel %vm960, %v4641, 0
        %4648 = vmatprep.subr.bf16.mxu0 0
        %4649 = vmatpush1.bf16.msra.mxu0 0
        %4650 = vmatprep.subr.bf16.mxu0 0
        %4651 = vmatpush1.bf16.msra.mxu0 0
        %4652 = vmatprep.subr.bf16.mxu0 0
        %4653 = vmatpush1.bf16.msra.mxu0 0
        %4654 = vmatprep.subr.bf16.mxu0 0
        %4655 = vmatpush1.bf16.msra.mxu0 0
        %4656 = vmatprep.subr.bf16.mxu0 0
        %4657 = vmatpush1.bf16.msra.mxu0 0
        %4658 = vmatprep.subr.bf16.mxu0 0
        %4659 = vmatpush1.bf16.msra.mxu0 0
        %4660 = vmatprep.subr.bf16.mxu0 0
        %4661 = vmatpush1.bf16.msra.mxu0 0
        %4662 = vmatprep.subr.bf16.mxu0 0
        %4663 = vmatpush1.bf16.msra.mxu0 %v4646
        %4664 = vmatprep.subr.bf16.mxu0 0
        %4665 = vmatpush2.bf16.msra.mxu0 0
        %4666 = vmatprep.subr.bf16.mxu0 0
        %4667 = vmatpush2.bf16.msra.mxu0 0
        %4668 = vmatprep.subr.bf16.mxu0 0
        %4669 = vmatpush2.bf16.msra.mxu0 0
        %4670 = vmatprep.subr.bf16.mxu0 0
        %4671 = vmatpush2.bf16.msra.mxu0 0
        %4672 = vmatprep.subr.bf16.mxu0 0
        %4673 = vmatpush2.bf16.msra.mxu0 0
        %4674 = vmatprep.subr.bf16.mxu0 0
        %4675 = vmatpush2.bf16.msra.mxu0 0
        %4676 = vmatprep.subr.bf16.mxu0 0
        %4677 = vmatpush2.bf16.msra.mxu0 0
        %4678 = vmatprep.subr.bf16.mxu0 0
        %4679 = vmatpush2.bf16.msra.mxu0 0
        %4680 = vmatprep.mubr.bf16.mxu0 0
        %4681 = vmatmul.mubr.bf16.gmra.mxu0 %v4643
        %v4682 = vpop.f32.mrf.mxu0
        %v4683 = vadd.f32 0.0, %v4682
        %v4684 = vpop.f32.mrf.mxu0
        %v4685 = vpop.f32.mrf.mxu0
        %v4686 = vpop.f32.mrf.mxu0
        %4687 = vdwg.mxu0
        %v4688 = vmul.f32 %v4683, %v4638
        %4690 = vrot.lane.b32.xlu0 %v4688, 64
        %v4691 = vpop.permute.xlu0 %4690
        %4693 = vst.msk [vmem:[#allocation2] sm:$0xff] %vm1239, %v4691
        %4694 = vrot.lane.b32.xlu0 %v4353, 32
        %v4695 = vpop.permute.xlu0 %4694
        %4696 = vrot.lane.b32.xlu0 %v4354, 32
        %v4697 = vpop.permute.xlu0 %4696
        %v4699 = vsel %vm898, %v4695, 0
        %v4702 = vsel %vm898, %v4697, 0
        %4704 = vmatprep.subr.bf16.mxu0 0
        %4705 = vmatpush1.bf16.xpose.msra.mxu0 0
        %4706 = vmatprep.subr.bf16.mxu0 0
        %4707 = vmatpush1.bf16.xpose.msra.mxu0 0
        %4708 = vmatprep.subr.bf16.mxu0 0
        %4709 = vmatpush1.bf16.xpose.msra.mxu0 0
        %4710 = vmatprep.subr.bf16.mxu0 0
        %4711 = vmatpush1.bf16.xpose.msra.mxu0 0
        %4712 = vmatprep.subr.bf16.mxu0 0
        %4713 = vmatpush1.bf16.xpose.msra.mxu0 0
        %4714 = vmatprep.subr.bf16.mxu0 0
        %4715 = vmatpush1.bf16.xpose.msra.mxu0 0
        %4716 = vmatprep.subr.bf16.mxu0 0
        %4717 = vmatpush1.bf16.xpose.msra.mxu0 0
        %4718 = vmatprep.subr.bf16.mxu0 0
        %4719 = vmatpush1.bf16.xpose.msra.mxu0 %v4702
        %4720 = vmatprep.subr.bf16.mxu0 0
        %4721 = vmatpush2.bf16.xpose.msra.mxu0 0
        %4722 = vmatprep.subr.bf16.mxu0 0
        %4723 = vmatpush2.bf16.xpose.msra.mxu0 0
        %4724 = vmatprep.subr.bf16.mxu0 0
        %4725 = vmatpush2.bf16.xpose.msra.mxu0 0
        %4726 = vmatprep.subr.bf16.mxu0 0
        %4727 = vmatpush2.bf16.xpose.msra.mxu0 0
        %4728 = vmatprep.subr.bf16.mxu0 0
        %4729 = vmatpush2.bf16.xpose.msra.mxu0 0
        %4730 = vmatprep.subr.bf16.mxu0 0
        %4731 = vmatpush2.bf16.xpose.msra.mxu0 0
        %4732 = vmatprep.subr.bf16.mxu0 0
        %4733 = vmatpush2.bf16.xpose.msra.mxu0 0
        %4734 = vmatprep.subr.bf16.mxu0 0
        %4735 = vmatpush2.bf16.xpose.msra.mxu0 0
        %4736 = vmatprep.mubr.bf16.mxu0 0
        %4737 = vmatmul.mubr.bf16.gmra.mxu0 %v4699
        %v4738 = vpop.f32.mrf.mxu0
        %v4739 = vadd.f32 0.0, %v4738
        %v4740 = vpop.f32.mrf.mxu0
        %v4741 = vpop.f32.mrf.mxu0
        %v4742 = vpop.f32.mrf.mxu0
        %4743 = vdwg.mxu0
        %v4744 = vsel %vm945, %v4739, -inf
        %4745 = vmax.xlane.f32.xlu0 %v4744
        %v4746 = vpop.xlane.xlu0 %4745
        %v4747 = vsub.f32 %v4739, %v4746
        %v4748 = vmul.f32 %v4747, 1.442695
        %v4749 = vpow.pop %v4748
        %v4750 = vsel %vm945, %v4749, 0.0
        %4751 = vadd.xlane.f32.xlu0 %v4750
        %v4752 = vpop.xlane.xlu0 %4751
        %v4753 = vrcp.pop %v4752
        %v4754 = vpack.c.bf16 %v4749, %v4749
        %4755 = vrot.lane.b32.xlu0 %v4355, 32
        %v4756 = vpop.permute.xlu0 %4755
        %v4758 = vsel %vm945, %v4754, 0
        %v4761 = vsel %vm960, %v4756, 0
        %4763 = vmatprep.subr.bf16.mxu0 0
        %4764 = vmatpush1.bf16.msra.mxu0 0
        %4765 = vmatprep.subr.bf16.mxu0 0
        %4766 = vmatpush1.bf16.msra.mxu0 0
        %4767 = vmatprep.subr.bf16.mxu0 0
        %4768 = vmatpush1.bf16.msra.mxu0 0
        %4769 = vmatprep.subr.bf16.mxu0 0
        %4770 = vmatpush1.bf16.msra.mxu0 0
        %4771 = vmatprep.subr.bf16.mxu0 0
        %4772 = vmatpush1.bf16.msra.mxu0 0
        %4773 = vmatprep.subr.bf16.mxu0 0
        %4774 = vmatpush1.bf16.msra.mxu0 0
        %4775 = vmatprep.subr.bf16.mxu0 0
        %4776 = vmatpush1.bf16.msra.mxu0 0
        %4777 = vmatprep.subr.bf16.mxu0 0
        %4778 = vmatpush1.bf16.msra.mxu0 %v4761
        %4779 = vmatprep.subr.bf16.mxu0 0
        %4780 = vmatpush2.bf16.msra.mxu0 0
        %4781 = vmatprep.subr.bf16.mxu0 0
        %4782 = vmatpush2.bf16.msra.mxu0 0
        %4783 = vmatprep.subr.bf16.mxu0 0
        %4784 = vmatpush2.bf16.msra.mxu0 0
        %4785 = vmatprep.subr.bf16.mxu0 0
        %4786 = vmatpush2.bf16.msra.mxu0 0
        %4787 = vmatprep.subr.bf16.mxu0 0
        %4788 = vmatpush2.bf16.msra.mxu0 0
        %4789 = vmatprep.subr.bf16.mxu0 0
        %4790 = vmatpush2.bf16.msra.mxu0 0
        %4791 = vmatprep.subr.bf16.mxu0 0
        %4792 = vmatpush2.bf16.msra.mxu0 0
        %4793 = vmatprep.subr.bf16.mxu0 0
        %4794 = vmatpush2.bf16.msra.mxu0 0
        %4795 = vmatprep.mubr.bf16.mxu0 0
        %4796 = vmatmul.mubr.bf16.gmra.mxu0 %v4758
        %v4797 = vpop.f32.mrf.mxu0
        %v4798 = vadd.f32 0.0, %v4797
        %v4799 = vpop.f32.mrf.mxu0
        %v4800 = vpop.f32.mrf.mxu0
        %v4801 = vpop.f32.mrf.mxu0
        %4802 = vdwg.mxu0
        %v4803 = vmul.f32 %v4798, %v4753
        %4805 = vrot.lane.b32.xlu0 %v4803, 96
        %v4806 = vpop.permute.xlu0 %4805
        %4808 = vst.msk [vmem:[#allocation2] sm:$0xff] %vm1355, %v4806
        %v4809 = vld [vmem:[#allocation2] sm:$0xff]
        %v4810 = vpack.c.bf16 %v4809, %v4809
        %s4811 = scalar_lea.vmem %s6, 64
        %v4812 = vld [vmem:[%s4811] sm:$0xf]
        %v4813 = vld [vmem:[%s4811 + $0x4] sm:$0xf]
        %v4814 = vld [vmem:[%s4811 + $0x8] sm:$0xf]
        %v4815 = vld [vmem:[%s4811 + $0xc] sm:$0xf]
        %v4816 = vld [vmem:[%s4811 + $0x10] sm:$0xf]
        %v4817 = vld [vmem:[%s4811 + $0x14] sm:$0xf]
        %v4818 = vld [vmem:[%s4811 + $0x18] sm:$0xf]
        %v4819 = vld [vmem:[%s4811 + $0x1c] sm:$0xf]
        %v4820 = vld [vmem:[%s4811 + $0x20] sm:$0xf]
        %v4821 = vld [vmem:[%s4811 + $0x24] sm:$0xf]
        %v4822 = vld [vmem:[%s4811 + $0x28] sm:$0xf]
        %v4823 = vld [vmem:[%s4811 + $0x2c] sm:$0xf]
        %v4824 = vld [vmem:[%s4811 + $0x30] sm:$0xf]
        %v4825 = vld [vmem:[%s4811 + $0x34] sm:$0xf]
        %v4826 = vld [vmem:[%s4811 + $0x38] sm:$0xf]
        %v4827 = vld [vmem:[%s4811 + $0x3c] sm:$0xf]
        %s4828 = scalar_lea.vmem %s7, 1
        %v4829 = vld [vmem:[%s4828] sm:$0x1]
        %v4831 = vlaneseq
        %v4832 = vshrl.u32 %v4831, 7
        %v4833 = vsub.s32 0, %v4832
        %v4834 = vrot.slane %v4829, %v4833
        %v4852 = vunpack.c.l.b16 %v4812
        %v4853 = vunpack.c.l.b16 %v4813
        %v4854 = vunpack.c.l.b16 %v4814
        %v4855 = vunpack.c.l.b16 %v4815
        %v4856 = vunpack.c.l.b16 %v4816
        %v4857 = vunpack.c.l.b16 %v4817
        %v4858 = vunpack.c.l.b16 %v4818
        %v4859 = vunpack.c.l.b16 %v4819
        %v4860 = vunpack.c.l.b16 %v4820
        %v4861 = vunpack.c.l.b16 %v4821
        %v4862 = vunpack.c.l.b16 %v4822
        %v4863 = vunpack.c.l.b16 %v4823
        %v4864 = vunpack.c.l.b16 %v4824
        %v4865 = vunpack.c.l.b16 %v4825
        %v4866 = vunpack.c.l.b16 %v4826
        %v4867 = vunpack.c.l.b16 %v4827
        %v4868 = vpack.c.b16 %v4853, %v4852
        %v4869 = vpack.c.b16 %v4855, %v4854
        %v4870 = vpack.c.b16 %v4857, %v4856
        %v4871 = vpack.c.b16 %v4859, %v4858
        %v4872 = vpack.c.b16 %v4861, %v4860
        %v4873 = vpack.c.b16 %v4863, %v4862
        %v4874 = vpack.c.b16 %v4865, %v4864
        %v4875 = vpack.c.b16 %v4867, %v4866
        %4884 = vmatprep.subr.bf16.mxu0 0
        %4885 = vmatpush1.bf16.msra.mxu0 %v4875
        %4886 = vmatprep.subr.bf16.mxu0 0
        %4887 = vmatpush1.bf16.msra.mxu0 %v4874
        %4888 = vmatprep.subr.bf16.mxu0 0
        %4889 = vmatpush1.bf16.msra.mxu0 %v4873
        %4890 = vmatprep.subr.bf16.mxu0 0
        %4891 = vmatpush1.bf16.msra.mxu0 %v4872
        %4892 = vmatprep.subr.bf16.mxu0 0
        %4893 = vmatpush1.bf16.msra.mxu0 %v4871
        %4894 = vmatprep.subr.bf16.mxu0 0
        %4895 = vmatpush1.bf16.msra.mxu0 %v4870
        %4896 = vmatprep.subr.bf16.mxu0 0
        %4897 = vmatpush1.bf16.msra.mxu0 %v4869
        %4898 = vmatprep.subr.bf16.mxu0 0
        %4899 = vmatpush1.bf16.msra.mxu0 %v4868
        %4900 = vmatprep.subr.bf16.mxu0 0
        %4901 = vmatpush2.bf16.msra.mxu0 0
        %4902 = vmatprep.subr.bf16.mxu0 0
        %4903 = vmatpush2.bf16.msra.mxu0 0
        %4904 = vmatprep.subr.bf16.mxu0 0
        %4905 = vmatpush2.bf16.msra.mxu0 0
        %4906 = vmatprep.subr.bf16.mxu0 0
        %4907 = vmatpush2.bf16.msra.mxu0 0
        %4908 = vmatprep.subr.bf16.mxu0 0
        %4909 = vmatpush2.bf16.msra.mxu0 0
        %4910 = vmatprep.subr.bf16.mxu0 0
        %4911 = vmatpush2.bf16.msra.mxu0 0
        %4912 = vmatprep.subr.bf16.mxu0 0
        %4913 = vmatpush2.bf16.msra.mxu0 0
        %4914 = vmatprep.subr.bf16.mxu0 0
        %4915 = vmatpush2.bf16.msra.mxu0 0
        %4916 = vmatprep.mubr.bf16.mxu0 0
        %4917 = vmatmul.mubr.bf16.gmra.mxu0 %v4810
        %v4918 = vpop.f32.mrf.mxu0
        %v4919 = vadd.f32 %v4834, %v4918
        %v4920 = vpop.f32.mrf.mxu0
        %v4921 = vpop.f32.mrf.mxu0
        %v4922 = vpop.f32.mrf.mxu0
        %4923 = vdwg.mxu0
        %v4924 = vadd.f32 %v4090, %v4919
        %4925 = vadd.xlane.f32.xlu0 %v4924
        %v4926 = vpop.xlane.xlu0 %4925
        %v4927 = vmul.f32 %v4926, %v1473
        %v4928 = vsub.f32 %v4924, %v4927
        %v4929 = vmul.f32 %v4928, %v4928
        %4930 = vadd.xlane.f32.xlu0 %v4929
        %v4931 = vpop.xlane.xlu0 %4930
        %v4932 = vmul.f32 %v4931, %v1473
        %v4933 = vadd.f32 %v4932, 1e-05
        %v4934 = vrsqrt.pop %v4933
        %v4935 = vmul.f32 %v4928, %v4934
        %s4936 = scalar_lea.vmem %s8, 1
        %v4937 = vld [vmem:[%s4936] sm:$0x1]
        %v4939 = vlaneseq
        %v4940 = vshrl.u32 %v4939, 7
        %v4941 = vsub.s32 0, %v4940
        %v4942 = vrot.slane %v4937, %v4941
        %v4944 = vmul.f32 %v4935, %v4942
        %s4945 = scalar_lea.vmem %s9, 1
        %v4946 = vld [vmem:[%s4945] sm:$0x1]
        %v4948 = vlaneseq
        %v4949 = vshrl.u32 %v4948, 7
        %v4950 = vsub.s32 0, %v4949
        %v4951 = vrot.slane %v4946, %v4950
        %v4953 = vadd.f32 %v4944, %v4951
        %v4954 = vpack.c.bf16 %v4953, %v4953
        %s4955 = scalar_lea.vmem [#allocation3], 1024
        %v4956 = vld [vmem:[%s4955] sm:$0xff]
        %v4957 = vld [vmem:[%s4955 + $0x8] sm:$0xff]
        %v4958 = vld [vmem:[%s4955 + $0x10] sm:$0xff]
        %v4959 = vld [vmem:[%s4955 + $0x18] sm:$0xff]
        %v4960 = vld [vmem:[%s4955 + $0x20] sm:$0xff]
        %v4961 = vld [vmem:[%s4955 + $0x28] sm:$0xff]
        %v4962 = vld [vmem:[%s4955 + $0x30] sm:$0xff]
        %v4963 = vld [vmem:[%s4955 + $0x38] sm:$0xff]
        %v4964 = vld [vmem:[%s4955 + $0x40] sm:$0xff]
        %v4965 = vld [vmem:[%s4955 + $0x48] sm:$0xff]
        %v4966 = vld [vmem:[%s4955 + $0x50] sm:$0xff]
        %v4967 = vld [vmem:[%s4955 + $0x58] sm:$0xff]
        %v4968 = vld [vmem:[%s4955 + $0x60] sm:$0xff]
        %v4969 = vld [vmem:[%s4955 + $0x68] sm:$0xff]
        %v4970 = vld [vmem:[%s4955 + $0x70] sm:$0xff]
        %v4971 = vld [vmem:[%s4955 + $0x78] sm:$0xff]
        %v4972 = vld [vmem:[%s4955 + $0x80] sm:$0xff]
        %v4973 = vld [vmem:[%s4955 + $0x88] sm:$0xff]
        %v4974 = vld [vmem:[%s4955 + $0x90] sm:$0xff]
        %v4975 = vld [vmem:[%s4955 + $0x98] sm:$0xff]
        %v4976 = vld [vmem:[%s4955 + $0xa0] sm:$0xff]
        %v4977 = vld [vmem:[%s4955 + $0xa8] sm:$0xff]
        %v4978 = vld [vmem:[%s4955 + $0xb0] sm:$0xff]
        %v4979 = vld [vmem:[%s4955 + $0xb8] sm:$0xff]
        %v4980 = vld [vmem:[%s4955 + $0xc0] sm:$0xff]
        %v4981 = vld [vmem:[%s4955 + $0xc8] sm:$0xff]
        %v4982 = vld [vmem:[%s4955 + $0xd0] sm:$0xff]
        %v4983 = vld [vmem:[%s4955 + $0xd8] sm:$0xff]
        %v4984 = vld [vmem:[%s4955 + $0xe0] sm:$0xff]
        %v4985 = vld [vmem:[%s4955 + $0xe8] sm:$0xff]
        %v4986 = vld [vmem:[%s4955 + $0xf0] sm:$0xff]
        %v4987 = vld [vmem:[%s4955 + $0xf8] sm:$0xff]
        %v4988 = vld [vmem:[%s4955 + $0x100] sm:$0xff]
        %v4989 = vld [vmem:[%s4955 + $0x108] sm:$0xff]
        %v4990 = vld [vmem:[%s4955 + $0x110] sm:$0xff]
        %v4991 = vld [vmem:[%s4955 + $0x118] sm:$0xff]
        %v4992 = vld [vmem:[%s4955 + $0x120] sm:$0xff]
        %v4993 = vld [vmem:[%s4955 + $0x128] sm:$0xff]
        %v4994 = vld [vmem:[%s4955 + $0x130] sm:$0xff]
        %v4995 = vld [vmem:[%s4955 + $0x138] sm:$0xff]
        %v4996 = vld [vmem:[%s4955 + $0x140] sm:$0xff]
        %v4997 = vld [vmem:[%s4955 + $0x148] sm:$0xff]
        %v4998 = vld [vmem:[%s4955 + $0x150] sm:$0xff]
        %v4999 = vld [vmem:[%s4955 + $0x158] sm:$0xff]
        %v5000 = vld [vmem:[%s4955 + $0x160] sm:$0xff]
        %v5001 = vld [vmem:[%s4955 + $0x168] sm:$0xff]
        %v5002 = vld [vmem:[%s4955 + $0x170] sm:$0xff]
        %v5003 = vld [vmem:[%s4955 + $0x178] sm:$0xff]
        %v5004 = vld [vmem:[%s4955 + $0x180] sm:$0xff]
        %v5005 = vld [vmem:[%s4955 + $0x188] sm:$0xff]
        %v5006 = vld [vmem:[%s4955 + $0x190] sm:$0xff]
        %v5007 = vld [vmem:[%s4955 + $0x198] sm:$0xff]
        %v5008 = vld [vmem:[%s4955 + $0x1a0] sm:$0xff]
        %v5009 = vld [vmem:[%s4955 + $0x1a8] sm:$0xff]
        %v5010 = vld [vmem:[%s4955 + $0x1b0] sm:$0xff]
        %v5011 = vld [vmem:[%s4955 + $0x1b8] sm:$0xff]
        %v5012 = vld [vmem:[%s4955 + $0x1c0] sm:$0xff]
        %v5013 = vld [vmem:[%s4955 + $0x1c8] sm:$0xff]
        %v5014 = vld [vmem:[%s4955 + $0x1d0] sm:$0xff]
        %v5015 = vld [vmem:[%s4955 + $0x1d8] sm:$0xff]
        %v5016 = vld [vmem:[%s4955 + $0x1e0] sm:$0xff]
        %v5017 = vld [vmem:[%s4955 + $0x1e8] sm:$0xff]
        %v5018 = vld [vmem:[%s4955 + $0x1f0] sm:$0xff]
        %v5019 = vld [vmem:[%s4955 + $0x1f8] sm:$0xff]
        %v5020 = vld [vmem:[%s4955 + $0x200] sm:$0xff]
        %v5021 = vld [vmem:[%s4955 + $0x208] sm:$0xff]
        %v5022 = vld [vmem:[%s4955 + $0x210] sm:$0xff]
        %v5023 = vld [vmem:[%s4955 + $0x218] sm:$0xff]
        %v5024 = vld [vmem:[%s4955 + $0x220] sm:$0xff]
        %v5025 = vld [vmem:[%s4955 + $0x228] sm:$0xff]
        %v5026 = vld [vmem:[%s4955 + $0x230] sm:$0xff]
        %v5027 = vld [vmem:[%s4955 + $0x238] sm:$0xff]
        %v5028 = vld [vmem:[%s4955 + $0x240] sm:$0xff]
        %v5029 = vld [vmem:[%s4955 + $0x248] sm:$0xff]
        %v5030 = vld [vmem:[%s4955 + $0x250] sm:$0xff]
        %v5031 = vld [vmem:[%s4955 + $0x258] sm:$0xff]
        %v5032 = vld [vmem:[%s4955 + $0x260] sm:$0xff]
        %v5033 = vld [vmem:[%s4955 + $0x268] sm:$0xff]
        %v5034 = vld [vmem:[%s4955 + $0x270] sm:$0xff]
        %v5035 = vld [vmem:[%s4955 + $0x278] sm:$0xff]
        %v5036 = vld [vmem:[%s4955 + $0x280] sm:$0xff]
        %v5037 = vld [vmem:[%s4955 + $0x288] sm:$0xff]
        %v5038 = vld [vmem:[%s4955 + $0x290] sm:$0xff]
        %v5039 = vld [vmem:[%s4955 + $0x298] sm:$0xff]
        %v5040 = vld [vmem:[%s4955 + $0x2a0] sm:$0xff]
        %v5041 = vld [vmem:[%s4955 + $0x2a8] sm:$0xff]
        %v5042 = vld [vmem:[%s4955 + $0x2b0] sm:$0xff]
        %v5043 = vld [vmem:[%s4955 + $0x2b8] sm:$0xff]
        %v5044 = vld [vmem:[%s4955 + $0x2c0] sm:$0xff]
        %v5045 = vld [vmem:[%s4955 + $0x2c8] sm:$0xff]
        %v5046 = vld [vmem:[%s4955 + $0x2d0] sm:$0xff]
        %v5047 = vld [vmem:[%s4955 + $0x2d8] sm:$0xff]
        %v5048 = vld [vmem:[%s4955 + $0x2e0] sm:$0xff]
        %v5049 = vld [vmem:[%s4955 + $0x2e8] sm:$0xff]
        %v5050 = vld [vmem:[%s4955 + $0x2f0] sm:$0xff]
        %v5051 = vld [vmem:[%s4955 + $0x2f8] sm:$0xff]
        %v5052 = vld [vmem:[%s4955 + $0x300] sm:$0xff]
        %v5053 = vld [vmem:[%s4955 + $0x308] sm:$0xff]
        %v5054 = vld [vmem:[%s4955 + $0x310] sm:$0xff]
        %v5055 = vld [vmem:[%s4955 + $0x318] sm:$0xff]
        %v5056 = vld [vmem:[%s4955 + $0x320] sm:$0xff]
        %v5057 = vld [vmem:[%s4955 + $0x328] sm:$0xff]
        %v5058 = vld [vmem:[%s4955 + $0x330] sm:$0xff]
        %v5059 = vld [vmem:[%s4955 + $0x338] sm:$0xff]
        %v5060 = vld [vmem:[%s4955 + $0x340] sm:$0xff]
        %v5061 = vld [vmem:[%s4955 + $0x348] sm:$0xff]
        %v5062 = vld [vmem:[%s4955 + $0x350] sm:$0xff]
        %v5063 = vld [vmem:[%s4955 + $0x358] sm:$0xff]
        %v5064 = vld [vmem:[%s4955 + $0x360] sm:$0xff]
        %v5065 = vld [vmem:[%s4955 + $0x368] sm:$0xff]
        %v5066 = vld [vmem:[%s4955 + $0x370] sm:$0xff]
        %v5067 = vld [vmem:[%s4955 + $0x378] sm:$0xff]
        %v5068 = vld [vmem:[%s4955 + $0x380] sm:$0xff]
        %v5069 = vld [vmem:[%s4955 + $0x388] sm:$0xff]
        %v5070 = vld [vmem:[%s4955 + $0x390] sm:$0xff]
        %v5071 = vld [vmem:[%s4955 + $0x398] sm:$0xff]
        %v5072 = vld [vmem:[%s4955 + $0x3a0] sm:$0xff]
        %v5073 = vld [vmem:[%s4955 + $0x3a8] sm:$0xff]
        %v5074 = vld [vmem:[%s4955 + $0x3b0] sm:$0xff]
        %v5075 = vld [vmem:[%s4955 + $0x3b8] sm:$0xff]
        %v5076 = vld [vmem:[%s4955 + $0x3c0] sm:$0xff]
        %v5077 = vld [vmem:[%s4955 + $0x3c8] sm:$0xff]
        %v5078 = vld [vmem:[%s4955 + $0x3d0] sm:$0xff]
        %v5079 = vld [vmem:[%s4955 + $0x3d8] sm:$0xff]
        %v5080 = vld [vmem:[%s4955 + $0x3e0] sm:$0xff]
        %v5081 = vld [vmem:[%s4955 + $0x3e8] sm:$0xff]
        %v5082 = vld [vmem:[%s4955 + $0x3f0] sm:$0xff]
        %v5083 = vld [vmem:[%s4955 + $0x3f8] sm:$0xff]
        %s5084 = scalar_lea.vmem %s11, 16
        %v5085 = vld [vmem:[%s5084] sm:$0xff]
        %v5086 = vld [vmem:[%s5084 + $0x8] sm:$0xff]
        %v5089 = vlaneseq
        %v5090 = vshrl.u32 %v5089, 7
        %v5091 = vsub.s32 0, %v5090
        %v5092 = vrot.slane %v5085, %v5091
        %v5093 = vlaneseq
        %v5094 = vshrl.u32 %v5093, 7
        %v5095 = vsub.s32 1, %v5094
        %v5096 = vrot.slane %v5085, %v5095
        %v5097 = vlaneseq
        %v5098 = vshrl.u32 %v5097, 7
        %v5099 = vsub.s32 2, %v5098
        %v5100 = vrot.slane %v5085, %v5099
        %v5101 = vlaneseq
        %v5102 = vshrl.u32 %v5101, 7
        %v5103 = vsub.s32 3, %v5102
        %v5104 = vrot.slane %v5085, %v5103
        %v5105 = vlaneseq
        %v5106 = vshrl.u32 %v5105, 7
        %v5107 = vsub.s32 4, %v5106
        %v5108 = vrot.slane %v5085, %v5107
        %v5109 = vlaneseq
        %v5110 = vshrl.u32 %v5109, 7
        %v5111 = vsub.s32 5, %v5110
        %v5112 = vrot.slane %v5085, %v5111
        %v5113 = vlaneseq
        %v5114 = vshrl.u32 %v5113, 7
        %v5115 = vsub.s32 6, %v5114
        %v5116 = vrot.slane %v5085, %v5115
        %v5117 = vlaneseq
        %v5118 = vshrl.u32 %v5117, 7
        %v5119 = vsub.s32 7, %v5118
        %v5120 = vrot.slane %v5085, %v5119
        %v5121 = vlaneseq
        %v5122 = vshrl.u32 %v5121, 7
        %v5123 = vsub.s32 0, %v5122
        %v5124 = vrot.slane %v5086, %v5123
        %v5125 = vlaneseq
        %v5126 = vshrl.u32 %v5125, 7
        %v5127 = vsub.s32 1, %v5126
        %v5128 = vrot.slane %v5086, %v5127
        %v5129 = vlaneseq
        %v5130 = vshrl.u32 %v5129, 7
        %v5131 = vsub.s32 2, %v5130
        %v5132 = vrot.slane %v5086, %v5131
        %v5133 = vlaneseq
        %v5134 = vshrl.u32 %v5133, 7
        %v5135 = vsub.s32 3, %v5134
        %v5136 = vrot.slane %v5086, %v5135
        %v5137 = vlaneseq
        %v5138 = vshrl.u32 %v5137, 7
        %v5139 = vsub.s32 4, %v5138
        %v5140 = vrot.slane %v5086, %v5139
        %v5141 = vlaneseq
        %v5142 = vshrl.u32 %v5141, 7
        %v5143 = vsub.s32 5, %v5142
        %v5144 = vrot.slane %v5086, %v5143
        %v5145 = vlaneseq
        %v5146 = vshrl.u32 %v5145, 7
        %v5147 = vsub.s32 6, %v5146
        %v5148 = vrot.slane %v5086, %v5147
        %v5149 = vlaneseq
        %v5150 = vshrl.u32 %v5149, 7
        %v5151 = vsub.s32 7, %v5150
        %v5152 = vrot.slane %v5086, %v5151
        %v5297 = vunpack.c.l.b16 %v4956
        %v5298 = vunpack.c.h.b16 %v4956
        %v5299 = vunpack.c.l.b16 %v4957
        %v5300 = vunpack.c.h.b16 %v4957
        %v5301 = vunpack.c.l.b16 %v4958
        %v5302 = vunpack.c.h.b16 %v4958
        %v5303 = vunpack.c.l.b16 %v4959
        %v5304 = vunpack.c.h.b16 %v4959
        %v5305 = vunpack.c.l.b16 %v4960
        %v5306 = vunpack.c.h.b16 %v4960
        %v5307 = vunpack.c.l.b16 %v4961
        %v5308 = vunpack.c.h.b16 %v4961
        %v5309 = vunpack.c.l.b16 %v4962
        %v5310 = vunpack.c.h.b16 %v4962
        %v5311 = vunpack.c.l.b16 %v4963
        %v5312 = vunpack.c.h.b16 %v4963
        %v5313 = vunpack.c.l.b16 %v4964
        %v5314 = vunpack.c.h.b16 %v4964
        %v5315 = vunpack.c.l.b16 %v4965
        %v5316 = vunpack.c.h.b16 %v4965
        %v5317 = vunpack.c.l.b16 %v4966
        %v5318 = vunpack.c.h.b16 %v4966
        %v5319 = vunpack.c.l.b16 %v4967
        %v5320 = vunpack.c.h.b16 %v4967
        %v5321 = vunpack.c.l.b16 %v4968
        %v5322 = vunpack.c.h.b16 %v4968
        %v5323 = vunpack.c.l.b16 %v4969
        %v5324 = vunpack.c.h.b16 %v4969
        %v5325 = vunpack.c.l.b16 %v4970
        %v5326 = vunpack.c.h.b16 %v4970
        %v5327 = vunpack.c.l.b16 %v4971
        %v5328 = vunpack.c.h.b16 %v4971
        %v5329 = vunpack.c.l.b16 %v4972
        %v5330 = vunpack.c.h.b16 %v4972
        %v5331 = vunpack.c.l.b16 %v4973
        %v5332 = vunpack.c.h.b16 %v4973
        %v5333 = vunpack.c.l.b16 %v4974
        %v5334 = vunpack.c.h.b16 %v4974
        %v5335 = vunpack.c.l.b16 %v4975
        %v5336 = vunpack.c.h.b16 %v4975
        %v5337 = vunpack.c.l.b16 %v4976
        %v5338 = vunpack.c.h.b16 %v4976
        %v5339 = vunpack.c.l.b16 %v4977
        %v5340 = vunpack.c.h.b16 %v4977
        %v5341 = vunpack.c.l.b16 %v4978
        %v5342 = vunpack.c.h.b16 %v4978
        %v5343 = vunpack.c.l.b16 %v4979
        %v5344 = vunpack.c.h.b16 %v4979
        %v5345 = vunpack.c.l.b16 %v4980
        %v5346 = vunpack.c.h.b16 %v4980
        %v5347 = vunpack.c.l.b16 %v4981
        %v5348 = vunpack.c.h.b16 %v4981
        %v5349 = vunpack.c.l.b16 %v4982
        %v5350 = vunpack.c.h.b16 %v4982
        %v5351 = vunpack.c.l.b16 %v4983
        %v5352 = vunpack.c.h.b16 %v4983
        %v5353 = vunpack.c.l.b16 %v4984
        %v5354 = vunpack.c.h.b16 %v4984
        %v5355 = vunpack.c.l.b16 %v4985
        %v5356 = vunpack.c.h.b16 %v4985
        %v5357 = vunpack.c.l.b16 %v4986
        %v5358 = vunpack.c.h.b16 %v4986
        %v5359 = vunpack.c.l.b16 %v4987
        %v5360 = vunpack.c.h.b16 %v4987
        %v5361 = vunpack.c.l.b16 %v4988
        %v5362 = vunpack.c.h.b16 %v4988
        %v5363 = vunpack.c.l.b16 %v4989
        %v5364 = vunpack.c.h.b16 %v4989
        %v5365 = vunpack.c.l.b16 %v4990
        %v5366 = vunpack.c.h.b16 %v4990
        %v5367 = vunpack.c.l.b16 %v4991
        %v5368 = vunpack.c.h.b16 %v4991
        %v5369 = vunpack.c.l.b16 %v4992
        %v5370 = vunpack.c.h.b16 %v4992
        %v5371 = vunpack.c.l.b16 %v4993
        %v5372 = vunpack.c.h.b16 %v4993
        %v5373 = vunpack.c.l.b16 %v4994
        %v5374 = vunpack.c.h.b16 %v4994
        %v5375 = vunpack.c.l.b16 %v4995
        %v5376 = vunpack.c.h.b16 %v4995
        %v5377 = vunpack.c.l.b16 %v4996
        %v5378 = vunpack.c.h.b16 %v4996
        %v5379 = vunpack.c.l.b16 %v4997
        %v5380 = vunpack.c.h.b16 %v4997
        %v5381 = vunpack.c.l.b16 %v4998
        %v5382 = vunpack.c.h.b16 %v4998
        %v5383 = vunpack.c.l.b16 %v4999
        %v5384 = vunpack.c.h.b16 %v4999
        %v5385 = vunpack.c.l.b16 %v5000
        %v5386 = vunpack.c.h.b16 %v5000
        %v5387 = vunpack.c.l.b16 %v5001
        %v5388 = vunpack.c.h.b16 %v5001
        %v5389 = vunpack.c.l.b16 %v5002
        %v5390 = vunpack.c.h.b16 %v5002
        %v5391 = vunpack.c.l.b16 %v5003
        %v5392 = vunpack.c.h.b16 %v5003
        %v5393 = vunpack.c.l.b16 %v5004
        %v5394 = vunpack.c.h.b16 %v5004
        %v5395 = vunpack.c.l.b16 %v5005
        %v5396 = vunpack.c.h.b16 %v5005
        %v5397 = vunpack.c.l.b16 %v5006
        %v5398 = vunpack.c.h.b16 %v5006
        %v5399 = vunpack.c.l.b16 %v5007
        %v5400 = vunpack.c.h.b16 %v5007
        %v5401 = vunpack.c.l.b16 %v5008
        %v5402 = vunpack.c.h.b16 %v5008
        %v5403 = vunpack.c.l.b16 %v5009
        %v5404 = vunpack.c.h.b16 %v5009
        %v5405 = vunpack.c.l.b16 %v5010
        %v5406 = vunpack.c.h.b16 %v5010
        %v5407 = vunpack.c.l.b16 %v5011
        %v5408 = vunpack.c.h.b16 %v5011
        %v5409 = vunpack.c.l.b16 %v5012
        %v5410 = vunpack.c.h.b16 %v5012
        %v5411 = vunpack.c.l.b16 %v5013
        %v5412 = vunpack.c.h.b16 %v5013
        %v5413 = vunpack.c.l.b16 %v5014
        %v5414 = vunpack.c.h.b16 %v5014
        %v5415 = vunpack.c.l.b16 %v5015
        %v5416 = vunpack.c.h.b16 %v5015
        %v5417 = vunpack.c.l.b16 %v5016
        %v5418 = vunpack.c.h.b16 %v5016
        %v5419 = vunpack.c.l.b16 %v5017
        %v5420 = vunpack.c.h.b16 %v5017
        %v5421 = vunpack.c.l.b16 %v5018
        %v5422 = vunpack.c.h.b16 %v5018
        %v5423 = vunpack.c.l.b16 %v5019
        %v5424 = vunpack.c.h.b16 %v5019
        %v5425 = vunpack.c.l.b16 %v5020
        %v5426 = vunpack.c.h.b16 %v5020
        %v5427 = vunpack.c.l.b16 %v5021
        %v5428 = vunpack.c.h.b16 %v5021
        %v5429 = vunpack.c.l.b16 %v5022
        %v5430 = vunpack.c.h.b16 %v5022
        %v5431 = vunpack.c.l.b16 %v5023
        %v5432 = vunpack.c.h.b16 %v5023
        %v5433 = vunpack.c.l.b16 %v5024
        %v5434 = vunpack.c.h.b16 %v5024
        %v5435 = vunpack.c.l.b16 %v5025
        %v5436 = vunpack.c.h.b16 %v5025
        %v5437 = vunpack.c.l.b16 %v5026
        %v5438 = vunpack.c.h.b16 %v5026
        %v5439 = vunpack.c.l.b16 %v5027
        %v5440 = vunpack.c.h.b16 %v5027
        %v5441 = vunpack.c.l.b16 %v5028
        %v5442 = vunpack.c.h.b16 %v5028
        %v5443 = vunpack.c.l.b16 %v5029
        %v5444 = vunpack.c.h.b16 %v5029
        %v5445 = vunpack.c.l.b16 %v5030
        %v5446 = vunpack.c.h.b16 %v5030
        %v5447 = vunpack.c.l.b16 %v5031
        %v5448 = vunpack.c.h.b16 %v5031
        %v5449 = vunpack.c.l.b16 %v5032
        %v5450 = vunpack.c.h.b16 %v5032
        %v5451 = vunpack.c.l.b16 %v5033
        %v5452 = vunpack.c.h.b16 %v5033
        %v5453 = vunpack.c.l.b16 %v5034
        %v5454 = vunpack.c.h.b16 %v5034
        %v5455 = vunpack.c.l.b16 %v5035
        %v5456 = vunpack.c.h.b16 %v5035
        %v5457 = vunpack.c.l.b16 %v5036
        %v5458 = vunpack.c.h.b16 %v5036
        %v5459 = vunpack.c.l.b16 %v5037
        %v5460 = vunpack.c.h.b16 %v5037
        %v5461 = vunpack.c.l.b16 %v5038
        %v5462 = vunpack.c.h.b16 %v5038
        %v5463 = vunpack.c.l.b16 %v5039
        %v5464 = vunpack.c.h.b16 %v5039
        %v5465 = vunpack.c.l.b16 %v5040
        %v5466 = vunpack.c.h.b16 %v5040
        %v5467 = vunpack.c.l.b16 %v5041
        %v5468 = vunpack.c.h.b16 %v5041
        %v5469 = vunpack.c.l.b16 %v5042
        %v5470 = vunpack.c.h.b16 %v5042
        %v5471 = vunpack.c.l.b16 %v5043
        %v5472 = vunpack.c.h.b16 %v5043
        %v5473 = vunpack.c.l.b16 %v5044
        %v5474 = vunpack.c.h.b16 %v5044
        %v5475 = vunpack.c.l.b16 %v5045
        %v5476 = vunpack.c.h.b16 %v5045
        %v5477 = vunpack.c.l.b16 %v5046
        %v5478 = vunpack.c.h.b16 %v5046
        %v5479 = vunpack.c.l.b16 %v5047
        %v5480 = vunpack.c.h.b16 %v5047
        %v5481 = vunpack.c.l.b16 %v5048
        %v5482 = vunpack.c.h.b16 %v5048
        %v5483 = vunpack.c.l.b16 %v5049
        %v5484 = vunpack.c.h.b16 %v5049
        %v5485 = vunpack.c.l.b16 %v5050
        %v5486 = vunpack.c.h.b16 %v5050
        %v5487 = vunpack.c.l.b16 %v5051
        %v5488 = vunpack.c.h.b16 %v5051
        %v5489 = vunpack.c.l.b16 %v5052
        %v5490 = vunpack.c.h.b16 %v5052
        %v5491 = vunpack.c.l.b16 %v5053
        %v5492 = vunpack.c.h.b16 %v5053
        %v5493 = vunpack.c.l.b16 %v5054
        %v5494 = vunpack.c.h.b16 %v5054
        %v5495 = vunpack.c.l.b16 %v5055
        %v5496 = vunpack.c.h.b16 %v5055
        %v5497 = vunpack.c.l.b16 %v5056
        %v5498 = vunpack.c.h.b16 %v5056
        %v5499 = vunpack.c.l.b16 %v5057
        %v5500 = vunpack.c.h.b16 %v5057
        %v5501 = vunpack.c.l.b16 %v5058
        %v5502 = vunpack.c.h.b16 %v5058
        %v5503 = vunpack.c.l.b16 %v5059
        %v5504 = vunpack.c.h.b16 %v5059
        %v5505 = vunpack.c.l.b16 %v5060
        %v5506 = vunpack.c.h.b16 %v5060
        %v5507 = vunpack.c.l.b16 %v5061
        %v5508 = vunpack.c.h.b16 %v5061
        %v5509 = vunpack.c.l.b16 %v5062
        %v5510 = vunpack.c.h.b16 %v5062
        %v5511 = vunpack.c.l.b16 %v5063
        %v5512 = vunpack.c.h.b16 %v5063
        %v5513 = vunpack.c.l.b16 %v5064
        %v5514 = vunpack.c.h.b16 %v5064
        %v5515 = vunpack.c.l.b16 %v5065
        %v5516 = vunpack.c.h.b16 %v5065
        %v5517 = vunpack.c.l.b16 %v5066
        %v5518 = vunpack.c.h.b16 %v5066
        %v5519 = vunpack.c.l.b16 %v5067
        %v5520 = vunpack.c.h.b16 %v5067
        %v5521 = vunpack.c.l.b16 %v5068
        %v5522 = vunpack.c.h.b16 %v5068
        %v5523 = vunpack.c.l.b16 %v5069
        %v5524 = vunpack.c.h.b16 %v5069
        %v5525 = vunpack.c.l.b16 %v5070
        %v5526 = vunpack.c.h.b16 %v5070
        %v5527 = vunpack.c.l.b16 %v5071
        %v5528 = vunpack.c.h.b16 %v5071
        %v5529 = vunpack.c.l.b16 %v5072
        %v5530 = vunpack.c.h.b16 %v5072
        %v5531 = vunpack.c.l.b16 %v5073
        %v5532 = vunpack.c.h.b16 %v5073
        %v5533 = vunpack.c.l.b16 %v5074
        %v5534 = vunpack.c.h.b16 %v5074
        %v5535 = vunpack.c.l.b16 %v5075
        %v5536 = vunpack.c.h.b16 %v5075
        %v5537 = vunpack.c.l.b16 %v5076
        %v5538 = vunpack.c.h.b16 %v5076
        %v5539 = vunpack.c.l.b16 %v5077
        %v5540 = vunpack.c.h.b16 %v5077
        %v5541 = vunpack.c.l.b16 %v5078
        %v5542 = vunpack.c.h.b16 %v5078
        %v5543 = vunpack.c.l.b16 %v5079
        %v5544 = vunpack.c.h.b16 %v5079
        %v5545 = vunpack.c.l.b16 %v5080
        %v5546 = vunpack.c.h.b16 %v5080
        %v5547 = vunpack.c.l.b16 %v5081
        %v5548 = vunpack.c.h.b16 %v5081
        %v5549 = vunpack.c.l.b16 %v5082
        %v5550 = vunpack.c.h.b16 %v5082
        %v5551 = vunpack.c.l.b16 %v5083
        %v5552 = vunpack.c.h.b16 %v5083
        %v5553 = vpack.c.b16 %v5313, %v5297
        %v5554 = vpack.c.b16 %v5314, %v5298
        %v5555 = vpack.c.b16 %v5315, %v5299
        %v5556 = vpack.c.b16 %v5316, %v5300
        %v5557 = vpack.c.b16 %v5317, %v5301
        %v5558 = vpack.c.b16 %v5318, %v5302
        %v5559 = vpack.c.b16 %v5319, %v5303
        %v5560 = vpack.c.b16 %v5320, %v5304
        %v5561 = vpack.c.b16 %v5321, %v5305
        %v5562 = vpack.c.b16 %v5322, %v5306
        %v5563 = vpack.c.b16 %v5323, %v5307
        %v5564 = vpack.c.b16 %v5324, %v5308
        %v5565 = vpack.c.b16 %v5325, %v5309
        %v5566 = vpack.c.b16 %v5326, %v5310
        %v5567 = vpack.c.b16 %v5327, %v5311
        %v5568 = vpack.c.b16 %v5328, %v5312
        %v5569 = vpack.c.b16 %v5345, %v5329
        %v5570 = vpack.c.b16 %v5346, %v5330
        %v5571 = vpack.c.b16 %v5347, %v5331
        %v5572 = vpack.c.b16 %v5348, %v5332
        %v5573 = vpack.c.b16 %v5349, %v5333
        %v5574 = vpack.c.b16 %v5350, %v5334
        %v5575 = vpack.c.b16 %v5351, %v5335
        %v5576 = vpack.c.b16 %v5352, %v5336
        %v5577 = vpack.c.b16 %v5353, %v5337
        %v5578 = vpack.c.b16 %v5354, %v5338
        %v5579 = vpack.c.b16 %v5355, %v5339
        %v5580 = vpack.c.b16 %v5356, %v5340
        %v5581 = vpack.c.b16 %v5357, %v5341
        %v5582 = vpack.c.b16 %v5358, %v5342
        %v5583 = vpack.c.b16 %v5359, %v5343
        %v5584 = vpack.c.b16 %v5360, %v5344
        %v5585 = vpack.c.b16 %v5377, %v5361
        %v5586 = vpack.c.b16 %v5378, %v5362
        %v5587 = vpack.c.b16 %v5379, %v5363
        %v5588 = vpack.c.b16 %v5380, %v5364
        %v5589 = vpack.c.b16 %v5381, %v5365
        %v5590 = vpack.c.b16 %v5382, %v5366
        %v5591 = vpack.c.b16 %v5383, %v5367
        %v5592 = vpack.c.b16 %v5384, %v5368
        %v5593 = vpack.c.b16 %v5385, %v5369
        %v5594 = vpack.c.b16 %v5386, %v5370
        %v5595 = vpack.c.b16 %v5387, %v5371
        %v5596 = vpack.c.b16 %v5388, %v5372
        %v5597 = vpack.c.b16 %v5389, %v5373
        %v5598 = vpack.c.b16 %v5390, %v5374
        %v5599 = vpack.c.b16 %v5391, %v5375
        %v5600 = vpack.c.b16 %v5392, %v5376
        %v5601 = vpack.c.b16 %v5409, %v5393
        %v5602 = vpack.c.b16 %v5410, %v5394
        %v5603 = vpack.c.b16 %v5411, %v5395
        %v5604 = vpack.c.b16 %v5412, %v5396
        %v5605 = vpack.c.b16 %v5413, %v5397
        %v5606 = vpack.c.b16 %v5414, %v5398
        %v5607 = vpack.c.b16 %v5415, %v5399
        %v5608 = vpack.c.b16 %v5416, %v5400
        %v5609 = vpack.c.b16 %v5417, %v5401
        %v5610 = vpack.c.b16 %v5418, %v5402
        %v5611 = vpack.c.b16 %v5419, %v5403
        %v5612 = vpack.c.b16 %v5420, %v5404
        %v5613 = vpack.c.b16 %v5421, %v5405
        %v5614 = vpack.c.b16 %v5422, %v5406
        %v5615 = vpack.c.b16 %v5423, %v5407
        %v5616 = vpack.c.b16 %v5424, %v5408
        %v5617 = vpack.c.b16 %v5441, %v5425
        %v5618 = vpack.c.b16 %v5442, %v5426
        %v5619 = vpack.c.b16 %v5443, %v5427
        %v5620 = vpack.c.b16 %v5444, %v5428
        %v5621 = vpack.c.b16 %v5445, %v5429
        %v5622 = vpack.c.b16 %v5446, %v5430
        %v5623 = vpack.c.b16 %v5447, %v5431
        %v5624 = vpack.c.b16 %v5448, %v5432
        %v5625 = vpack.c.b16 %v5449, %v5433
        %v5626 = vpack.c.b16 %v5450, %v5434
        %v5627 = vpack.c.b16 %v5451, %v5435
        %v5628 = vpack.c.b16 %v5452, %v5436
        %v5629 = vpack.c.b16 %v5453, %v5437
        %v5630 = vpack.c.b16 %v5454, %v5438
        %v5631 = vpack.c.b16 %v5455, %v5439
        %v5632 = vpack.c.b16 %v5456, %v5440
        %v5633 = vpack.c.b16 %v5473, %v5457
        %v5634 = vpack.c.b16 %v5474, %v5458
        %v5635 = vpack.c.b16 %v5475, %v5459
        %v5636 = vpack.c.b16 %v5476, %v5460
        %v5637 = vpack.c.b16 %v5477, %v5461
        %v5638 = vpack.c.b16 %v5478, %v5462
        %v5639 = vpack.c.b16 %v5479, %v5463
        %v5640 = vpack.c.b16 %v5480, %v5464
        %v5641 = vpack.c.b16 %v5481, %v5465
        %v5642 = vpack.c.b16 %v5482, %v5466
        %v5643 = vpack.c.b16 %v5483, %v5467
        %v5644 = vpack.c.b16 %v5484, %v5468
        %v5645 = vpack.c.b16 %v5485, %v5469
        %v5646 = vpack.c.b16 %v5486, %v5470
        %v5647 = vpack.c.b16 %v5487, %v5471
        %v5648 = vpack.c.b16 %v5488, %v5472
        %v5649 = vpack.c.b16 %v5505, %v5489
        %v5650 = vpack.c.b16 %v5506, %v5490
        %v5651 = vpack.c.b16 %v5507, %v5491
        %v5652 = vpack.c.b16 %v5508, %v5492
        %v5653 = vpack.c.b16 %v5509, %v5493
        %v5654 = vpack.c.b16 %v5510, %v5494
        %v5655 = vpack.c.b16 %v5511, %v5495
        %v5656 = vpack.c.b16 %v5512, %v5496
        %v5657 = vpack.c.b16 %v5513, %v5497
        %v5658 = vpack.c.b16 %v5514, %v5498
        %v5659 = vpack.c.b16 %v5515, %v5499
        %v5660 = vpack.c.b16 %v5516, %v5500
        %v5661 = vpack.c.b16 %v5517, %v5501
        %v5662 = vpack.c.b16 %v5518, %v5502
        %v5663 = vpack.c.b16 %v5519, %v5503
        %v5664 = vpack.c.b16 %v5520, %v5504
        %v5665 = vpack.c.b16 %v5537, %v5521
        %v5666 = vpack.c.b16 %v5538, %v5522
        %v5667 = vpack.c.b16 %v5539, %v5523
        %v5668 = vpack.c.b16 %v5540, %v5524
        %v5669 = vpack.c.b16 %v5541, %v5525
        %v5670 = vpack.c.b16 %v5542, %v5526
        %v5671 = vpack.c.b16 %v5543, %v5527
        %v5672 = vpack.c.b16 %v5544, %v5528
        %v5673 = vpack.c.b16 %v5545, %v5529
        %v5674 = vpack.c.b16 %v5546, %v5530
        %v5675 = vpack.c.b16 %v5547, %v5531
        %v5676 = vpack.c.b16 %v5548, %v5532
        %v5677 = vpack.c.b16 %v5549, %v5533
        %v5678 = vpack.c.b16 %v5550, %v5534
        %v5679 = vpack.c.b16 %v5551, %v5535
        %v5680 = vpack.c.b16 %v5552, %v5536
        %5809 = vmatprep.subr.bf16.mxu0 %v5666
        %5810 = vmatpush1.bf16.msra.mxu0 %v5665
        %5811 = vmatprep.subr.bf16.mxu0 %v5650
        %5812 = vmatpush1.bf16.msra.mxu0 %v5649
        %5813 = vmatprep.subr.bf16.mxu0 %v5634
        %5814 = vmatpush1.bf16.msra.mxu0 %v5633
        %5815 = vmatprep.subr.bf16.mxu0 %v5618
        %5816 = vmatpush1.bf16.msra.mxu0 %v5617
        %5817 = vmatprep.subr.bf16.mxu0 %v5602
        %5818 = vmatpush1.bf16.msra.mxu0 %v5601
        %5819 = vmatprep.subr.bf16.mxu0 %v5586
        %5820 = vmatpush1.bf16.msra.mxu0 %v5585
        %5821 = vmatprep.subr.bf16.mxu0 %v5570
        %5822 = vmatpush1.bf16.msra.mxu0 %v5569
        %5823 = vmatprep.subr.bf16.mxu0 %v5554
        %5824 = vmatpush1.bf16.msra.mxu0 %v5553
        %5825 = vmatprep.subr.bf16.mxu0 0
        %5826 = vmatpush2.bf16.msra.mxu0 0
        %5827 = vmatprep.subr.bf16.mxu0 0
        %5828 = vmatpush2.bf16.msra.mxu0 0
        %5829 = vmatprep.subr.bf16.mxu0 0
        %5830 = vmatpush2.bf16.msra.mxu0 0
        %5831 = vmatprep.subr.bf16.mxu0 0
        %5832 = vmatpush2.bf16.msra.mxu0 0
        %5833 = vmatprep.subr.bf16.mxu0 0
        %5834 = vmatpush2.bf16.msra.mxu0 0
        %5835 = vmatprep.subr.bf16.mxu0 0
        %5836 = vmatpush2.bf16.msra.mxu0 0
        %5837 = vmatprep.subr.bf16.mxu0 0
        %5838 = vmatpush2.bf16.msra.mxu0 0
        %5839 = vmatprep.subr.bf16.mxu0 0
        %5840 = vmatpush2.bf16.msra.mxu0 0
        %5841 = vmatprep.mubr.bf16.mxu0 0
        %5842 = vmatmul.mubr.bf16.gmra.mxu0 %v4954
        %v5843 = vpop.f32.mrf.mxu0
        %v5844 = vadd.f32 %v5092, %v5843
        %v5845 = vpop.f32.mrf.mxu0
        %v5846 = vadd.f32 %v5096, %v5845
        %v5847 = vpop.f32.mrf.mxu0
        %v5848 = vpop.f32.mrf.mxu0
        %5849 = vdwg.mxu0
        %5850 = vmatprep.subr.bf16.mxu0 %v5668
        %5851 = vmatpush1.bf16.msra.mxu0 %v5667
        %5852 = vmatprep.subr.bf16.mxu0 %v5652
        %5853 = vmatpush1.bf16.msra.mxu0 %v5651
        %5854 = vmatprep.subr.bf16.mxu0 %v5636
        %5855 = vmatpush1.bf16.msra.mxu0 %v5635
        %5856 = vmatprep.subr.bf16.mxu0 %v5620
        %5857 = vmatpush1.bf16.msra.mxu0 %v5619
        %5858 = vmatprep.subr.bf16.mxu0 %v5604
        %5859 = vmatpush1.bf16.msra.mxu0 %v5603
        %5860 = vmatprep.subr.bf16.mxu0 %v5588
        %5861 = vmatpush1.bf16.msra.mxu0 %v5587
        %5862 = vmatprep.subr.bf16.mxu0 %v5572
        %5863 = vmatpush1.bf16.msra.mxu0 %v5571
        %5864 = vmatprep.subr.bf16.mxu0 %v5556
        %5865 = vmatpush1.bf16.msra.mxu0 %v5555
        %5866 = vmatprep.subr.bf16.mxu0 0
        %5867 = vmatpush2.bf16.msra.mxu0 0
        %5868 = vmatprep.subr.bf16.mxu0 0
        %5869 = vmatpush2.bf16.msra.mxu0 0
        %5870 = vmatprep.subr.bf16.mxu0 0
        %5871 = vmatpush2.bf16.msra.mxu0 0
        %5872 = vmatprep.subr.bf16.mxu0 0
        %5873 = vmatpush2.bf16.msra.mxu0 0
        %5874 = vmatprep.subr.bf16.mxu0 0
        %5875 = vmatpush2.bf16.msra.mxu0 0
        %5876 = vmatprep.subr.bf16.mxu0 0
        %5877 = vmatpush2.bf16.msra.mxu0 0
        %5878 = vmatprep.subr.bf16.mxu0 0
        %5879 = vmatpush2.bf16.msra.mxu0 0
        %5880 = vmatprep.subr.bf16.mxu0 0
        %5881 = vmatpush2.bf16.msra.mxu0 0
        %5882 = vmatprep.mubr.bf16.mxu0 0
        %5883 = vmatmul.mubr.bf16.gmra.mxu0 %v4954
        %v5884 = vpop.f32.mrf.mxu0
        %v5885 = vadd.f32 %v5100, %v5884
        %v5886 = vpop.f32.mrf.mxu0
        %v5887 = vadd.f32 %v5104, %v5886
        %v5888 = vpop.f32.mrf.mxu0
        %v5889 = vpop.f32.mrf.mxu0
        %5890 = vdwg.mxu0
        %5891 = vmatprep.subr.bf16.mxu0 %v5670
        %5892 = vmatpush1.bf16.msra.mxu0 %v5669
        %5893 = vmatprep.subr.bf16.mxu0 %v5654
        %5894 = vmatpush1.bf16.msra.mxu0 %v5653
        %5895 = vmatprep.subr.bf16.mxu0 %v5638
        %5896 = vmatpush1.bf16.msra.mxu0 %v5637
        %5897 = vmatprep.subr.bf16.mxu0 %v5622
        %5898 = vmatpush1.bf16.msra.mxu0 %v5621
        %5899 = vmatprep.subr.bf16.mxu0 %v5606
        %5900 = vmatpush1.bf16.msra.mxu0 %v5605
        %5901 = vmatprep.subr.bf16.mxu0 %v5590
        %5902 = vmatpush1.bf16.msra.mxu0 %v5589
        %5903 = vmatprep.subr.bf16.mxu0 %v5574
        %5904 = vmatpush1.bf16.msra.mxu0 %v5573
        %5905 = vmatprep.subr.bf16.mxu0 %v5558
        %5906 = vmatpush1.bf16.msra.mxu0 %v5557
        %5907 = vmatprep.subr.bf16.mxu0 0
        %5908 = vmatpush2.bf16.msra.mxu0 0
        %5909 = vmatprep.subr.bf16.mxu0 0
        %5910 = vmatpush2.bf16.msra.mxu0 0
        %5911 = vmatprep.subr.bf16.mxu0 0
        %5912 = vmatpush2.bf16.msra.mxu0 0
        %5913 = vmatprep.subr.bf16.mxu0 0
        %5914 = vmatpush2.bf16.msra.mxu0 0
        %5915 = vmatprep.subr.bf16.mxu0 0
        %5916 = vmatpush2.bf16.msra.mxu0 0
        %5917 = vmatprep.subr.bf16.mxu0 0
        %5918 = vmatpush2.bf16.msra.mxu0 0
        %5919 = vmatprep.subr.bf16.mxu0 0
        %5920 = vmatpush2.bf16.msra.mxu0 0
        %5921 = vmatprep.subr.bf16.mxu0 0
        %5922 = vmatpush2.bf16.msra.mxu0 0
        %5923 = vmatprep.mubr.bf16.mxu0 0
        %5924 = vmatmul.mubr.bf16.gmra.mxu0 %v4954
        %v5925 = vpop.f32.mrf.mxu0
        %v5926 = vadd.f32 %v5108, %v5925
        %v5927 = vpop.f32.mrf.mxu0
        %v5928 = vadd.f32 %v5112, %v5927
        %v5929 = vpop.f32.mrf.mxu0
        %v5930 = vpop.f32.mrf.mxu0
        %5931 = vdwg.mxu0
        %5932 = vmatprep.subr.bf16.mxu0 %v5672
        %5933 = vmatpush1.bf16.msra.mxu0 %v5671
        %5934 = vmatprep.subr.bf16.mxu0 %v5656
        %5935 = vmatpush1.bf16.msra.mxu0 %v5655
        %5936 = vmatprep.subr.bf16.mxu0 %v5640
        %5937 = vmatpush1.bf16.msra.mxu0 %v5639
        %5938 = vmatprep.subr.bf16.mxu0 %v5624
        %5939 = vmatpush1.bf16.msra.mxu0 %v5623
        %5940 = vmatprep.subr.bf16.mxu0 %v5608
        %5941 = vmatpush1.bf16.msra.mxu0 %v5607
        %5942 = vmatprep.subr.bf16.mxu0 %v5592
        %5943 = vmatpush1.bf16.msra.mxu0 %v5591
        %5944 = vmatprep.subr.bf16.mxu0 %v5576
        %5945 = vmatpush1.bf16.msra.mxu0 %v5575
        %5946 = vmatprep.subr.bf16.mxu0 %v5560
        %5947 = vmatpush1.bf16.msra.mxu0 %v5559
        %5948 = vmatprep.subr.bf16.mxu0 0
        %5949 = vmatpush2.bf16.msra.mxu0 0
        %5950 = vmatprep.subr.bf16.mxu0 0
        %5951 = vmatpush2.bf16.msra.mxu0 0
        %5952 = vmatprep.subr.bf16.mxu0 0
        %5953 = vmatpush2.bf16.msra.mxu0 0
        %5954 = vmatprep.subr.bf16.mxu0 0
        %5955 = vmatpush2.bf16.msra.mxu0 0
        %5956 = vmatprep.subr.bf16.mxu0 0
        %5957 = vmatpush2.bf16.msra.mxu0 0
        %5958 = vmatprep.subr.bf16.mxu0 0
        %5959 = vmatpush2.bf16.msra.mxu0 0
        %5960 = vmatprep.subr.bf16.mxu0 0
        %5961 = vmatpush2.bf16.msra.mxu0 0
        %5962 = vmatprep.subr.bf16.mxu0 0
        %5963 = vmatpush2.bf16.msra.mxu0 0
        %5964 = vmatprep.mubr.bf16.mxu0 0
        %5965 = vmatmul.mubr.bf16.gmra.mxu0 %v4954
        %v5966 = vpop.f32.mrf.mxu0
        %v5967 = vadd.f32 %v5116, %v5966
        %v5968 = vpop.f32.mrf.mxu0
        %v5969 = vadd.f32 %v5120, %v5968
        %v5970 = vpop.f32.mrf.mxu0
        %v5971 = vpop.f32.mrf.mxu0
        %5972 = vdwg.mxu0
        %5973 = vmatprep.subr.bf16.mxu0 %v5674
        %5974 = vmatpush1.bf16.msra.mxu0 %v5673
        %5975 = vmatprep.subr.bf16.mxu0 %v5658
        %5976 = vmatpush1.bf16.msra.mxu0 %v5657
        %5977 = vmatprep.subr.bf16.mxu0 %v5642
        %5978 = vmatpush1.bf16.msra.mxu0 %v5641
        %5979 = vmatprep.subr.bf16.mxu0 %v5626
        %5980 = vmatpush1.bf16.msra.mxu0 %v5625
        %5981 = vmatprep.subr.bf16.mxu0 %v5610
        %5982 = vmatpush1.bf16.msra.mxu0 %v5609
        %5983 = vmatprep.subr.bf16.mxu0 %v5594
        %5984 = vmatpush1.bf16.msra.mxu0 %v5593
        %5985 = vmatprep.subr.bf16.mxu0 %v5578
        %5986 = vmatpush1.bf16.msra.mxu0 %v5577
        %5987 = vmatprep.subr.bf16.mxu0 %v5562
        %5988 = vmatpush1.bf16.msra.mxu0 %v5561
        %5989 = vmatprep.subr.bf16.mxu0 0
        %5990 = vmatpush2.bf16.msra.mxu0 0
        %5991 = vmatprep.subr.bf16.mxu0 0
        %5992 = vmatpush2.bf16.msra.mxu0 0
        %5993 = vmatprep.subr.bf16.mxu0 0
        %5994 = vmatpush2.bf16.msra.mxu0 0
        %5995 = vmatprep.subr.bf16.mxu0 0
        %5996 = vmatpush2.bf16.msra.mxu0 0
        %5997 = vmatprep.subr.bf16.mxu0 0
        %5998 = vmatpush2.bf16.msra.mxu0 0
        %5999 = vmatprep.subr.bf16.mxu0 0
        %6000 = vmatpush2.bf16.msra.mxu0 0
        %6001 = vmatprep.subr.bf16.mxu0 0
        %6002 = vmatpush2.bf16.msra.mxu0 0
        %6003 = vmatprep.subr.bf16.mxu0 0
        %6004 = vmatpush2.bf16.msra.mxu0 0
        %6005 = vmatprep.mubr.bf16.mxu0 0
        %6006 = vmatmul.mubr.bf16.gmra.mxu0 %v4954
        %v6007 = vpop.f32.mrf.mxu0
        %v6008 = vadd.f32 %v5124, %v6007
        %v6009 = vpop.f32.mrf.mxu0
        %v6010 = vadd.f32 %v5128, %v6009
        %v6011 = vpop.f32.mrf.mxu0
        %v6012 = vpop.f32.mrf.mxu0
        %6013 = vdwg.mxu0
        %6014 = vmatprep.subr.bf16.mxu0 %v5676
        %6015 = vmatpush1.bf16.msra.mxu0 %v5675
        %6016 = vmatprep.subr.bf16.mxu0 %v5660
        %6017 = vmatpush1.bf16.msra.mxu0 %v5659
        %6018 = vmatprep.subr.bf16.mxu0 %v5644
        %6019 = vmatpush1.bf16.msra.mxu0 %v5643
        %6020 = vmatprep.subr.bf16.mxu0 %v5628
        %6021 = vmatpush1.bf16.msra.mxu0 %v5627
        %6022 = vmatprep.subr.bf16.mxu0 %v5612
        %6023 = vmatpush1.bf16.msra.mxu0 %v5611
        %6024 = vmatprep.subr.bf16.mxu0 %v5596
        %6025 = vmatpush1.bf16.msra.mxu0 %v5595
        %6026 = vmatprep.subr.bf16.mxu0 %v5580
        %6027 = vmatpush1.bf16.msra.mxu0 %v5579
        %6028 = vmatprep.subr.bf16.mxu0 %v5564
        %6029 = vmatpush1.bf16.msra.mxu0 %v5563
        %6030 = vmatprep.subr.bf16.mxu0 0
        %6031 = vmatpush2.bf16.msra.mxu0 0
        %6032 = vmatprep.subr.bf16.mxu0 0
        %6033 = vmatpush2.bf16.msra.mxu0 0
        %6034 = vmatprep.subr.bf16.mxu0 0
        %6035 = vmatpush2.bf16.msra.mxu0 0
        %6036 = vmatprep.subr.bf16.mxu0 0
        %6037 = vmatpush2.bf16.msra.mxu0 0
        %6038 = vmatprep.subr.bf16.mxu0 0
        %6039 = vmatpush2.bf16.msra.mxu0 0
        %6040 = vmatprep.subr.bf16.mxu0 0
        %6041 = vmatpush2.bf16.msra.mxu0 0
        %6042 = vmatprep.subr.bf16.mxu0 0
        %6043 = vmatpush2.bf16.msra.mxu0 0
        %6044 = vmatprep.subr.bf16.mxu0 0
        %6045 = vmatpush2.bf16.msra.mxu0 0
        %6046 = vmatprep.mubr.bf16.mxu0 0
        %6047 = vmatmul.mubr.bf16.gmra.mxu0 %v4954
        %v6048 = vpop.f32.mrf.mxu0
        %v6049 = vadd.f32 %v5132, %v6048
        %v6050 = vpop.f32.mrf.mxu0
        %v6051 = vadd.f32 %v5136, %v6050
        %v6052 = vpop.f32.mrf.mxu0
        %v6053 = vpop.f32.mrf.mxu0
        %6054 = vdwg.mxu0
        %6055 = vmatprep.subr.bf16.mxu0 %v5678
        %6056 = vmatpush1.bf16.msra.mxu0 %v5677
        %6057 = vmatprep.subr.bf16.mxu0 %v5662
        %6058 = vmatpush1.bf16.msra.mxu0 %v5661
        %6059 = vmatprep.subr.bf16.mxu0 %v5646
        %6060 = vmatpush1.bf16.msra.mxu0 %v5645
        %6061 = vmatprep.subr.bf16.mxu0 %v5630
        %6062 = vmatpush1.bf16.msra.mxu0 %v5629
        %6063 = vmatprep.subr.bf16.mxu0 %v5614
        %6064 = vmatpush1.bf16.msra.mxu0 %v5613
        %6065 = vmatprep.subr.bf16.mxu0 %v5598
        %6066 = vmatpush1.bf16.msra.mxu0 %v5597
        %6067 = vmatprep.subr.bf16.mxu0 %v5582
        %6068 = vmatpush1.bf16.msra.mxu0 %v5581
        %6069 = vmatprep.subr.bf16.mxu0 %v5566
        %6070 = vmatpush1.bf16.msra.mxu0 %v5565
        %6071 = vmatprep.subr.bf16.mxu0 0
        %6072 = vmatpush2.bf16.msra.mxu0 0
        %6073 = vmatprep.subr.bf16.mxu0 0
        %6074 = vmatpush2.bf16.msra.mxu0 0
        %6075 = vmatprep.subr.bf16.mxu0 0
        %6076 = vmatpush2.bf16.msra.mxu0 0
        %6077 = vmatprep.subr.bf16.mxu0 0
        %6078 = vmatpush2.bf16.msra.mxu0 0
        %6079 = vmatprep.subr.bf16.mxu0 0
        %6080 = vmatpush2.bf16.msra.mxu0 0
        %6081 = vmatprep.subr.bf16.mxu0 0
        %6082 = vmatpush2.bf16.msra.mxu0 0
        %6083 = vmatprep.subr.bf16.mxu0 0
        %6084 = vmatpush2.bf16.msra.mxu0 0
        %6085 = vmatprep.subr.bf16.mxu0 0
        %6086 = vmatpush2.bf16.msra.mxu0 0
        %6087 = vmatprep.mubr.bf16.mxu0 0
        %6088 = vmatmul.mubr.bf16.gmra.mxu0 %v4954
        %v6089 = vpop.f32.mrf.mxu0
        %v6090 = vadd.f32 %v5140, %v6089
        %v6091 = vpop.f32.mrf.mxu0
        %v6092 = vadd.f32 %v5144, %v6091
        %v6093 = vpop.f32.mrf.mxu0
        %v6094 = vpop.f32.mrf.mxu0
        %6095 = vdwg.mxu0
        %6096 = vmatprep.subr.bf16.mxu0 %v5680
        %6097 = vmatpush1.bf16.msra.mxu0 %v5679
        %6098 = vmatprep.subr.bf16.mxu0 %v5664
        %6099 = vmatpush1.bf16.msra.mxu0 %v5663
        %6100 = vmatprep.subr.bf16.mxu0 %v5648
        %6101 = vmatpush1.bf16.msra.mxu0 %v5647
        %6102 = vmatprep.subr.bf16.mxu0 %v5632
        %6103 = vmatpush1.bf16.msra.mxu0 %v5631
        %6104 = vmatprep.subr.bf16.mxu0 %v5616
        %6105 = vmatpush1.bf16.msra.mxu0 %v5615
        %6106 = vmatprep.subr.bf16.mxu0 %v5600
        %6107 = vmatpush1.bf16.msra.mxu0 %v5599
        %6108 = vmatprep.subr.bf16.mxu0 %v5584
        %6109 = vmatpush1.bf16.msra.mxu0 %v5583
        %6110 = vmatprep.subr.bf16.mxu0 %v5568
        %6111 = vmatpush1.bf16.msra.mxu0 %v5567
        %6112 = vmatprep.subr.bf16.mxu0 0
        %6113 = vmatpush2.bf16.msra.mxu0 0
        %6114 = vmatprep.subr.bf16.mxu0 0
        %6115 = vmatpush2.bf16.msra.mxu0 0
        %6116 = vmatprep.subr.bf16.mxu0 0
        %6117 = vmatpush2.bf16.msra.mxu0 0
        %6118 = vmatprep.subr.bf16.mxu0 0
        %6119 = vmatpush2.bf16.msra.mxu0 0
        %6120 = vmatprep.subr.bf16.mxu0 0
        %6121 = vmatpush2.bf16.msra.mxu0 0
        %6122 = vmatprep.subr.bf16.mxu0 0
        %6123 = vmatpush2.bf16.msra.mxu0 0
        %6124 = vmatprep.subr.bf16.mxu0 0
        %6125 = vmatpush2.bf16.msra.mxu0 0
        %6126 = vmatprep.subr.bf16.mxu0 0
        %6127 = vmatpush2.bf16.msra.mxu0 0
        %6128 = vmatprep.mubr.bf16.mxu0 0
        %6129 = vmatmul.mubr.bf16.gmra.mxu0 %v4954
        %v6130 = vpop.f32.mrf.mxu0
        %v6131 = vadd.f32 %v5148, %v6130
        %v6132 = vpop.f32.mrf.mxu0
        %v6133 = vadd.f32 %v5152, %v6132
        %v6134 = vpop.f32.mrf.mxu0
        %v6135 = vpop.f32.mrf.mxu0
        %6136 = vdwg.mxu0
        %v6137 = vmax.f32 %v5844, 0.0
        %v6138 = vmax.f32 %v5846, 0.0
        %v6139 = vmax.f32 %v5885, 0.0
        %v6140 = vmax.f32 %v5887, 0.0
        %v6141 = vmax.f32 %v5926, 0.0
        %v6142 = vmax.f32 %v5928, 0.0
        %v6143 = vmax.f32 %v5967, 0.0
        %v6144 = vmax.f32 %v5969, 0.0
        %v6145 = vmax.f32 %v6008, 0.0
        %v6146 = vmax.f32 %v6010, 0.0
        %v6147 = vmax.f32 %v6049, 0.0
        %v6148 = vmax.f32 %v6051, 0.0
        %v6149 = vmax.f32 %v6090, 0.0
        %v6150 = vmax.f32 %v6092, 0.0
        %v6151 = vmax.f32 %v6131, 0.0
        %v6152 = vmax.f32 %v6133, 0.0
        %v6153 = vpack.c.bf16 %v6137, %v6137
        %v6154 = vpack.c.bf16 %v6138, %v6138
        %v6155 = vpack.c.bf16 %v6139, %v6139
        %v6156 = vpack.c.bf16 %v6140, %v6140
        %v6157 = vpack.c.bf16 %v6141, %v6141
        %v6158 = vpack.c.bf16 %v6142, %v6142
        %v6159 = vpack.c.bf16 %v6143, %v6143
        %v6160 = vpack.c.bf16 %v6144, %v6144
        %v6161 = vpack.c.bf16 %v6145, %v6145
        %v6162 = vpack.c.bf16 %v6146, %v6146
        %v6163 = vpack.c.bf16 %v6147, %v6147
        %v6164 = vpack.c.bf16 %v6148, %v6148
        %v6165 = vpack.c.bf16 %v6149, %v6149
        %v6166 = vpack.c.bf16 %v6150, %v6150
        %v6167 = vpack.c.bf16 %v6151, %v6151
        %v6168 = vpack.c.bf16 %v6152, %v6152
        %s6169 = scalar_lea.vmem [#allocation5], 1024
        %v6170 = vld [vmem:[%s6169] sm:$0xf]
        %v6171 = vld [vmem:[%s6169 + $0x4] sm:$0xf]
        %v6172 = vld [vmem:[%s6169 + $0x8] sm:$0xf]
        %v6173 = vld [vmem:[%s6169 + $0xc] sm:$0xf]
        %v6174 = vld [vmem:[%s6169 + $0x10] sm:$0xf]
        %v6175 = vld [vmem:[%s6169 + $0x14] sm:$0xf]
        %v6176 = vld [vmem:[%s6169 + $0x18] sm:$0xf]
        %v6177 = vld [vmem:[%s6169 + $0x1c] sm:$0xf]
        %v6178 = vld [vmem:[%s6169 + $0x20] sm:$0xf]
        %v6179 = vld [vmem:[%s6169 + $0x24] sm:$0xf]
        %v6180 = vld [vmem:[%s6169 + $0x28] sm:$0xf]
        %v6181 = vld [vmem:[%s6169 + $0x2c] sm:$0xf]
        %v6182 = vld [vmem:[%s6169 + $0x30] sm:$0xf]
        %v6183 = vld [vmem:[%s6169 + $0x34] sm:$0xf]
        %v6184 = vld [vmem:[%s6169 + $0x38] sm:$0xf]
        %v6185 = vld [vmem:[%s6169 + $0x3c] sm:$0xf]
        %v6186 = vld [vmem:[%s6169 + $0x40] sm:$0xf]
        %v6187 = vld [vmem:[%s6169 + $0x44] sm:$0xf]
        %v6188 = vld [vmem:[%s6169 + $0x48] sm:$0xf]
        %v6189 = vld [vmem:[%s6169 + $0x4c] sm:$0xf]
        %v6190 = vld [vmem:[%s6169 + $0x50] sm:$0xf]
        %v6191 = vld [vmem:[%s6169 + $0x54] sm:$0xf]
        %v6192 = vld [vmem:[%s6169 + $0x58] sm:$0xf]
        %v6193 = vld [vmem:[%s6169 + $0x5c] sm:$0xf]
        %v6194 = vld [vmem:[%s6169 + $0x60] sm:$0xf]
        %v6195 = vld [vmem:[%s6169 + $0x64] sm:$0xf]
        %v6196 = vld [vmem:[%s6169 + $0x68] sm:$0xf]
        %v6197 = vld [vmem:[%s6169 + $0x6c] sm:$0xf]
        %v6198 = vld [vmem:[%s6169 + $0x70] sm:$0xf]
        %v6199 = vld [vmem:[%s6169 + $0x74] sm:$0xf]
        %v6200 = vld [vmem:[%s6169 + $0x78] sm:$0xf]
        %v6201 = vld [vmem:[%s6169 + $0x7c] sm:$0xf]
        %v6202 = vld [vmem:[%s6169 + $0x80] sm:$0xf]
        %v6203 = vld [vmem:[%s6169 + $0x84] sm:$0xf]
        %v6204 = vld [vmem:[%s6169 + $0x88] sm:$0xf]
        %v6205 = vld [vmem:[%s6169 + $0x8c] sm:$0xf]
        %v6206 = vld [vmem:[%s6169 + $0x90] sm:$0xf]
        %v6207 = vld [vmem:[%s6169 + $0x94] sm:$0xf]
        %v6208 = vld [vmem:[%s6169 + $0x98] sm:$0xf]
        %v6209 = vld [vmem:[%s6169 + $0x9c] sm:$0xf]
        %v6210 = vld [vmem:[%s6169 + $0xa0] sm:$0xf]
        %v6211 = vld [vmem:[%s6169 + $0xa4] sm:$0xf]
        %v6212 = vld [vmem:[%s6169 + $0xa8] sm:$0xf]
        %v6213 = vld [vmem:[%s6169 + $0xac] sm:$0xf]
        %v6214 = vld [vmem:[%s6169 + $0xb0] sm:$0xf]
        %v6215 = vld [vmem:[%s6169 + $0xb4] sm:$0xf]
        %v6216 = vld [vmem:[%s6169 + $0xb8] sm:$0xf]
        %v6217 = vld [vmem:[%s6169 + $0xbc] sm:$0xf]
        %v6218 = vld [vmem:[%s6169 + $0xc0] sm:$0xf]
        %v6219 = vld [vmem:[%s6169 + $0xc4] sm:$0xf]
        %v6220 = vld [vmem:[%s6169 + $0xc8] sm:$0xf]
        %v6221 = vld [vmem:[%s6169 + $0xcc] sm:$0xf]
        %v6222 = vld [vmem:[%s6169 + $0xd0] sm:$0xf]
        %v6223 = vld [vmem:[%s6169 + $0xd4] sm:$0xf]
        %v6224 = vld [vmem:[%s6169 + $0xd8] sm:$0xf]
        %v6225 = vld [vmem:[%s6169 + $0xdc] sm:$0xf]
        %v6226 = vld [vmem:[%s6169 + $0xe0] sm:$0xf]
        %v6227 = vld [vmem:[%s6169 + $0xe4] sm:$0xf]
        %v6228 = vld [vmem:[%s6169 + $0xe8] sm:$0xf]
        %v6229 = vld [vmem:[%s6169 + $0xec] sm:$0xf]
        %v6230 = vld [vmem:[%s6169 + $0xf0] sm:$0xf]
        %v6231 = vld [vmem:[%s6169 + $0xf4] sm:$0xf]
        %v6232 = vld [vmem:[%s6169 + $0xf8] sm:$0xf]
        %v6233 = vld [vmem:[%s6169 + $0xfc] sm:$0xf]
        %v6234 = vld [vmem:[%s6169 + $0x100] sm:$0xf]
        %v6235 = vld [vmem:[%s6169 + $0x104] sm:$0xf]
        %v6236 = vld [vmem:[%s6169 + $0x108] sm:$0xf]
        %v6237 = vld [vmem:[%s6169 + $0x10c] sm:$0xf]
        %v6238 = vld [vmem:[%s6169 + $0x110] sm:$0xf]
        %v6239 = vld [vmem:[%s6169 + $0x114] sm:$0xf]
        %v6240 = vld [vmem:[%s6169 + $0x118] sm:$0xf]
        %v6241 = vld [vmem:[%s6169 + $0x11c] sm:$0xf]
        %v6242 = vld [vmem:[%s6169 + $0x120] sm:$0xf]
        %v6243 = vld [vmem:[%s6169 + $0x124] sm:$0xf]
        %v6244 = vld [vmem:[%s6169 + $0x128] sm:$0xf]
        %v6245 = vld [vmem:[%s6169 + $0x12c] sm:$0xf]
        %v6246 = vld [vmem:[%s6169 + $0x130] sm:$0xf]
        %v6247 = vld [vmem:[%s6169 + $0x134] sm:$0xf]
        %v6248 = vld [vmem:[%s6169 + $0x138] sm:$0xf]
        %v6249 = vld [vmem:[%s6169 + $0x13c] sm:$0xf]
        %v6250 = vld [vmem:[%s6169 + $0x140] sm:$0xf]
        %v6251 = vld [vmem:[%s6169 + $0x144] sm:$0xf]
        %v6252 = vld [vmem:[%s6169 + $0x148] sm:$0xf]
        %v6253 = vld [vmem:[%s6169 + $0x14c] sm:$0xf]
        %v6254 = vld [vmem:[%s6169 + $0x150] sm:$0xf]
        %v6255 = vld [vmem:[%s6169 + $0x154] sm:$0xf]
        %v6256 = vld [vmem:[%s6169 + $0x158] sm:$0xf]
        %v6257 = vld [vmem:[%s6169 + $0x15c] sm:$0xf]
        %v6258 = vld [vmem:[%s6169 + $0x160] sm:$0xf]
        %v6259 = vld [vmem:[%s6169 + $0x164] sm:$0xf]
        %v6260 = vld [vmem:[%s6169 + $0x168] sm:$0xf]
        %v6261 = vld [vmem:[%s6169 + $0x16c] sm:$0xf]
        %v6262 = vld [vmem:[%s6169 + $0x170] sm:$0xf]
        %v6263 = vld [vmem:[%s6169 + $0x174] sm:$0xf]
        %v6264 = vld [vmem:[%s6169 + $0x178] sm:$0xf]
        %v6265 = vld [vmem:[%s6169 + $0x17c] sm:$0xf]
        %v6266 = vld [vmem:[%s6169 + $0x180] sm:$0xf]
        %v6267 = vld [vmem:[%s6169 + $0x184] sm:$0xf]
        %v6268 = vld [vmem:[%s6169 + $0x188] sm:$0xf]
        %v6269 = vld [vmem:[%s6169 + $0x18c] sm:$0xf]
        %v6270 = vld [vmem:[%s6169 + $0x190] sm:$0xf]
        %v6271 = vld [vmem:[%s6169 + $0x194] sm:$0xf]
        %v6272 = vld [vmem:[%s6169 + $0x198] sm:$0xf]
        %v6273 = vld [vmem:[%s6169 + $0x19c] sm:$0xf]
        %v6274 = vld [vmem:[%s6169 + $0x1a0] sm:$0xf]
        %v6275 = vld [vmem:[%s6169 + $0x1a4] sm:$0xf]
        %v6276 = vld [vmem:[%s6169 + $0x1a8] sm:$0xf]
        %v6277 = vld [vmem:[%s6169 + $0x1ac] sm:$0xf]
        %v6278 = vld [vmem:[%s6169 + $0x1b0] sm:$0xf]
        %v6279 = vld [vmem:[%s6169 + $0x1b4] sm:$0xf]
        %v6280 = vld [vmem:[%s6169 + $0x1b8] sm:$0xf]
        %v6281 = vld [vmem:[%s6169 + $0x1bc] sm:$0xf]
        %v6282 = vld [vmem:[%s6169 + $0x1c0] sm:$0xf]
        %v6283 = vld [vmem:[%s6169 + $0x1c4] sm:$0xf]
        %v6284 = vld [vmem:[%s6169 + $0x1c8] sm:$0xf]
        %v6285 = vld [vmem:[%s6169 + $0x1cc] sm:$0xf]
        %v6286 = vld [vmem:[%s6169 + $0x1d0] sm:$0xf]
        %v6287 = vld [vmem:[%s6169 + $0x1d4] sm:$0xf]
        %v6288 = vld [vmem:[%s6169 + $0x1d8] sm:$0xf]
        %v6289 = vld [vmem:[%s6169 + $0x1dc] sm:$0xf]
        %v6290 = vld [vmem:[%s6169 + $0x1e0] sm:$0xf]
        %v6291 = vld [vmem:[%s6169 + $0x1e4] sm:$0xf]
        %v6292 = vld [vmem:[%s6169 + $0x1e8] sm:$0xf]
        %v6293 = vld [vmem:[%s6169 + $0x1ec] sm:$0xf]
        %v6294 = vld [vmem:[%s6169 + $0x1f0] sm:$0xf]
        %v6295 = vld [vmem:[%s6169 + $0x1f4] sm:$0xf]
        %v6296 = vld [vmem:[%s6169 + $0x1f8] sm:$0xf]
        %v6297 = vld [vmem:[%s6169 + $0x1fc] sm:$0xf]
        %v6298 = vld [vmem:[%s6169 + $0x200] sm:$0xf]
        %v6299 = vld [vmem:[%s6169 + $0x204] sm:$0xf]
        %v6300 = vld [vmem:[%s6169 + $0x208] sm:$0xf]
        %v6301 = vld [vmem:[%s6169 + $0x20c] sm:$0xf]
        %v6302 = vld [vmem:[%s6169 + $0x210] sm:$0xf]
        %v6303 = vld [vmem:[%s6169 + $0x214] sm:$0xf]
        %v6304 = vld [vmem:[%s6169 + $0x218] sm:$0xf]
        %v6305 = vld [vmem:[%s6169 + $0x21c] sm:$0xf]
        %v6306 = vld [vmem:[%s6169 + $0x220] sm:$0xf]
        %v6307 = vld [vmem:[%s6169 + $0x224] sm:$0xf]
        %v6308 = vld [vmem:[%s6169 + $0x228] sm:$0xf]
        %v6309 = vld [vmem:[%s6169 + $0x22c] sm:$0xf]
        %v6310 = vld [vmem:[%s6169 + $0x230] sm:$0xf]
        %v6311 = vld [vmem:[%s6169 + $0x234] sm:$0xf]
        %v6312 = vld [vmem:[%s6169 + $0x238] sm:$0xf]
        %v6313 = vld [vmem:[%s6169 + $0x23c] sm:$0xf]
        %v6314 = vld [vmem:[%s6169 + $0x240] sm:$0xf]
        %v6315 = vld [vmem:[%s6169 + $0x244] sm:$0xf]
        %v6316 = vld [vmem:[%s6169 + $0x248] sm:$0xf]
        %v6317 = vld [vmem:[%s6169 + $0x24c] sm:$0xf]
        %v6318 = vld [vmem:[%s6169 + $0x250] sm:$0xf]
        %v6319 = vld [vmem:[%s6169 + $0x254] sm:$0xf]
        %v6320 = vld [vmem:[%s6169 + $0x258] sm:$0xf]
        %v6321 = vld [vmem:[%s6169 + $0x25c] sm:$0xf]
        %v6322 = vld [vmem:[%s6169 + $0x260] sm:$0xf]
        %v6323 = vld [vmem:[%s6169 + $0x264] sm:$0xf]
        %v6324 = vld [vmem:[%s6169 + $0x268] sm:$0xf]
        %v6325 = vld [vmem:[%s6169 + $0x26c] sm:$0xf]
        %v6326 = vld [vmem:[%s6169 + $0x270] sm:$0xf]
        %v6327 = vld [vmem:[%s6169 + $0x274] sm:$0xf]
        %v6328 = vld [vmem:[%s6169 + $0x278] sm:$0xf]
        %v6329 = vld [vmem:[%s6169 + $0x27c] sm:$0xf]
        %v6330 = vld [vmem:[%s6169 + $0x280] sm:$0xf]
        %v6331 = vld [vmem:[%s6169 + $0x284] sm:$0xf]
        %v6332 = vld [vmem:[%s6169 + $0x288] sm:$0xf]
        %v6333 = vld [vmem:[%s6169 + $0x28c] sm:$0xf]
        %v6334 = vld [vmem:[%s6169 + $0x290] sm:$0xf]
        %v6335 = vld [vmem:[%s6169 + $0x294] sm:$0xf]
        %v6336 = vld [vmem:[%s6169 + $0x298] sm:$0xf]
        %v6337 = vld [vmem:[%s6169 + $0x29c] sm:$0xf]
        %v6338 = vld [vmem:[%s6169 + $0x2a0] sm:$0xf]
        %v6339 = vld [vmem:[%s6169 + $0x2a4] sm:$0xf]
        %v6340 = vld [vmem:[%s6169 + $0x2a8] sm:$0xf]
        %v6341 = vld [vmem:[%s6169 + $0x2ac] sm:$0xf]
        %v6342 = vld [vmem:[%s6169 + $0x2b0] sm:$0xf]
        %v6343 = vld [vmem:[%s6169 + $0x2b4] sm:$0xf]
        %v6344 = vld [vmem:[%s6169 + $0x2b8] sm:$0xf]
        %v6345 = vld [vmem:[%s6169 + $0x2bc] sm:$0xf]
        %v6346 = vld [vmem:[%s6169 + $0x2c0] sm:$0xf]
        %v6347 = vld [vmem:[%s6169 + $0x2c4] sm:$0xf]
        %v6348 = vld [vmem:[%s6169 + $0x2c8] sm:$0xf]
        %v6349 = vld [vmem:[%s6169 + $0x2cc] sm:$0xf]
        %v6350 = vld [vmem:[%s6169 + $0x2d0] sm:$0xf]
        %v6351 = vld [vmem:[%s6169 + $0x2d4] sm:$0xf]
        %v6352 = vld [vmem:[%s6169 + $0x2d8] sm:$0xf]
        %v6353 = vld [vmem:[%s6169 + $0x2dc] sm:$0xf]
        %v6354 = vld [vmem:[%s6169 + $0x2e0] sm:$0xf]
        %v6355 = vld [vmem:[%s6169 + $0x2e4] sm:$0xf]
        %v6356 = vld [vmem:[%s6169 + $0x2e8] sm:$0xf]
        %v6357 = vld [vmem:[%s6169 + $0x2ec] sm:$0xf]
        %v6358 = vld [vmem:[%s6169 + $0x2f0] sm:$0xf]
        %v6359 = vld [vmem:[%s6169 + $0x2f4] sm:$0xf]
        %v6360 = vld [vmem:[%s6169 + $0x2f8] sm:$0xf]
        %v6361 = vld [vmem:[%s6169 + $0x2fc] sm:$0xf]
        %v6362 = vld [vmem:[%s6169 + $0x300] sm:$0xf]
        %v6363 = vld [vmem:[%s6169 + $0x304] sm:$0xf]
        %v6364 = vld [vmem:[%s6169 + $0x308] sm:$0xf]
        %v6365 = vld [vmem:[%s6169 + $0x30c] sm:$0xf]
        %v6366 = vld [vmem:[%s6169 + $0x310] sm:$0xf]
        %v6367 = vld [vmem:[%s6169 + $0x314] sm:$0xf]
        %v6368 = vld [vmem:[%s6169 + $0x318] sm:$0xf]
        %v6369 = vld [vmem:[%s6169 + $0x31c] sm:$0xf]
        %v6370 = vld [vmem:[%s6169 + $0x320] sm:$0xf]
        %v6371 = vld [vmem:[%s6169 + $0x324] sm:$0xf]
        %v6372 = vld [vmem:[%s6169 + $0x328] sm:$0xf]
        %v6373 = vld [vmem:[%s6169 + $0x32c] sm:$0xf]
        %v6374 = vld [vmem:[%s6169 + $0x330] sm:$0xf]
        %v6375 = vld [vmem:[%s6169 + $0x334] sm:$0xf]
        %v6376 = vld [vmem:[%s6169 + $0x338] sm:$0xf]
        %v6377 = vld [vmem:[%s6169 + $0x33c] sm:$0xf]
        %v6378 = vld [vmem:[%s6169 + $0x340] sm:$0xf]
        %v6379 = vld [vmem:[%s6169 + $0x344] sm:$0xf]
        %v6380 = vld [vmem:[%s6169 + $0x348] sm:$0xf]
        %v6381 = vld [vmem:[%s6169 + $0x34c] sm:$0xf]
        %v6382 = vld [vmem:[%s6169 + $0x350] sm:$0xf]
        %v6383 = vld [vmem:[%s6169 + $0x354] sm:$0xf]
        %v6384 = vld [vmem:[%s6169 + $0x358] sm:$0xf]
        %v6385 = vld [vmem:[%s6169 + $0x35c] sm:$0xf]
        %v6386 = vld [vmem:[%s6169 + $0x360] sm:$0xf]
        %v6387 = vld [vmem:[%s6169 + $0x364] sm:$0xf]
        %v6388 = vld [vmem:[%s6169 + $0x368] sm:$0xf]
        %v6389 = vld [vmem:[%s6169 + $0x36c] sm:$0xf]
        %v6390 = vld [vmem:[%s6169 + $0x370] sm:$0xf]
        %v6391 = vld [vmem:[%s6169 + $0x374] sm:$0xf]
        %v6392 = vld [vmem:[%s6169 + $0x378] sm:$0xf]
        %v6393 = vld [vmem:[%s6169 + $0x37c] sm:$0xf]
        %v6394 = vld [vmem:[%s6169 + $0x380] sm:$0xf]
        %v6395 = vld [vmem:[%s6169 + $0x384] sm:$0xf]
        %v6396 = vld [vmem:[%s6169 + $0x388] sm:$0xf]
        %v6397 = vld [vmem:[%s6169 + $0x38c] sm:$0xf]
        %v6398 = vld [vmem:[%s6169 + $0x390] sm:$0xf]
        %v6399 = vld [vmem:[%s6169 + $0x394] sm:$0xf]
        %v6400 = vld [vmem:[%s6169 + $0x398] sm:$0xf]
        %v6401 = vld [vmem:[%s6169 + $0x39c] sm:$0xf]
        %v6402 = vld [vmem:[%s6169 + $0x3a0] sm:$0xf]
        %v6403 = vld [vmem:[%s6169 + $0x3a4] sm:$0xf]
        %v6404 = vld [vmem:[%s6169 + $0x3a8] sm:$0xf]
        %v6405 = vld [vmem:[%s6169 + $0x3ac] sm:$0xf]
        %v6406 = vld [vmem:[%s6169 + $0x3b0] sm:$0xf]
        %v6407 = vld [vmem:[%s6169 + $0x3b4] sm:$0xf]
        %v6408 = vld [vmem:[%s6169 + $0x3b8] sm:$0xf]
        %v6409 = vld [vmem:[%s6169 + $0x3bc] sm:$0xf]
        %v6410 = vld [vmem:[%s6169 + $0x3c0] sm:$0xf]
        %v6411 = vld [vmem:[%s6169 + $0x3c4] sm:$0xf]
        %v6412 = vld [vmem:[%s6169 + $0x3c8] sm:$0xf]
        %v6413 = vld [vmem:[%s6169 + $0x3cc] sm:$0xf]
        %v6414 = vld [vmem:[%s6169 + $0x3d0] sm:$0xf]
        %v6415 = vld [vmem:[%s6169 + $0x3d4] sm:$0xf]
        %v6416 = vld [vmem:[%s6169 + $0x3d8] sm:$0xf]
        %v6417 = vld [vmem:[%s6169 + $0x3dc] sm:$0xf]
        %v6418 = vld [vmem:[%s6169 + $0x3e0] sm:$0xf]
        %v6419 = vld [vmem:[%s6169 + $0x3e4] sm:$0xf]
        %v6420 = vld [vmem:[%s6169 + $0x3e8] sm:$0xf]
        %v6421 = vld [vmem:[%s6169 + $0x3ec] sm:$0xf]
        %v6422 = vld [vmem:[%s6169 + $0x3f0] sm:$0xf]
        %v6423 = vld [vmem:[%s6169 + $0x3f4] sm:$0xf]
        %v6424 = vld [vmem:[%s6169 + $0x3f8] sm:$0xf]
        %v6425 = vld [vmem:[%s6169 + $0x3fc] sm:$0xf]
        %s6426 = scalar_lea.vmem %s13, 1
        %v6427 = vld [vmem:[%s6426] sm:$0x1]
        %v6429 = vlaneseq
        %v6430 = vshrl.u32 %v6429, 7
        %v6431 = vsub.s32 0, %v6430
        %v6432 = vrot.slane %v6427, %v6431
        %v6690 = vunpack.c.l.b16 %v6170
        %v6691 = vunpack.c.l.b16 %v6171
        %v6692 = vunpack.c.l.b16 %v6172
        %v6693 = vunpack.c.l.b16 %v6173
        %v6694 = vunpack.c.l.b16 %v6174
        %v6695 = vunpack.c.l.b16 %v6175
        %v6696 = vunpack.c.l.b16 %v6176
        %v6697 = vunpack.c.l.b16 %v6177
        %v6698 = vunpack.c.l.b16 %v6178
        %v6699 = vunpack.c.l.b16 %v6179
        %v6700 = vunpack.c.l.b16 %v6180
        %v6701 = vunpack.c.l.b16 %v6181
        %v6702 = vunpack.c.l.b16 %v6182
        %v6703 = vunpack.c.l.b16 %v6183
        %v6704 = vunpack.c.l.b16 %v6184
        %v6705 = vunpack.c.l.b16 %v6185
        %v6706 = vunpack.c.l.b16 %v6186
        %v6707 = vunpack.c.l.b16 %v6187
        %v6708 = vunpack.c.l.b16 %v6188
        %v6709 = vunpack.c.l.b16 %v6189
        %v6710 = vunpack.c.l.b16 %v6190
        %v6711 = vunpack.c.l.b16 %v6191
        %v6712 = vunpack.c.l.b16 %v6192
        %v6713 = vunpack.c.l.b16 %v6193
        %v6714 = vunpack.c.l.b16 %v6194
        %v6715 = vunpack.c.l.b16 %v6195
        %v6716 = vunpack.c.l.b16 %v6196
        %v6717 = vunpack.c.l.b16 %v6197
        %v6718 = vunpack.c.l.b16 %v6198
        %v6719 = vunpack.c.l.b16 %v6199
        %v6720 = vunpack.c.l.b16 %v6200
        %v6721 = vunpack.c.l.b16 %v6201
        %v6722 = vunpack.c.l.b16 %v6202
        %v6723 = vunpack.c.l.b16 %v6203
        %v6724 = vunpack.c.l.b16 %v6204
        %v6725 = vunpack.c.l.b16 %v6205
        %v6726 = vunpack.c.l.b16 %v6206
        %v6727 = vunpack.c.l.b16 %v6207
        %v6728 = vunpack.c.l.b16 %v6208
        %v6729 = vunpack.c.l.b16 %v6209
        %v6730 = vunpack.c.l.b16 %v6210
        %v6731 = vunpack.c.l.b16 %v6211
        %v6732 = vunpack.c.l.b16 %v6212
        %v6733 = vunpack.c.l.b16 %v6213
        %v6734 = vunpack.c.l.b16 %v6214
        %v6735 = vunpack.c.l.b16 %v6215
        %v6736 = vunpack.c.l.b16 %v6216
        %v6737 = vunpack.c.l.b16 %v6217
        %v6738 = vunpack.c.l.b16 %v6218
        %v6739 = vunpack.c.l.b16 %v6219
        %v6740 = vunpack.c.l.b16 %v6220
        %v6741 = vunpack.c.l.b16 %v6221
        %v6742 = vunpack.c.l.b16 %v6222
        %v6743 = vunpack.c.l.b16 %v6223
        %v6744 = vunpack.c.l.b16 %v6224
        %v6745 = vunpack.c.l.b16 %v6225
        %v6746 = vunpack.c.l.b16 %v6226
        %v6747 = vunpack.c.l.b16 %v6227
        %v6748 = vunpack.c.l.b16 %v6228
        %v6749 = vunpack.c.l.b16 %v6229
        %v6750 = vunpack.c.l.b16 %v6230
        %v6751 = vunpack.c.l.b16 %v6231
        %v6752 = vunpack.c.l.b16 %v6232
        %v6753 = vunpack.c.l.b16 %v6233
        %v6754 = vunpack.c.l.b16 %v6234
        %v6755 = vunpack.c.l.b16 %v6235
        %v6756 = vunpack.c.l.b16 %v6236
        %v6757 = vunpack.c.l.b16 %v6237
        %v6758 = vunpack.c.l.b16 %v6238
        %v6759 = vunpack.c.l.b16 %v6239
        %v6760 = vunpack.c.l.b16 %v6240
        %v6761 = vunpack.c.l.b16 %v6241
        %v6762 = vunpack.c.l.b16 %v6242
        %v6763 = vunpack.c.l.b16 %v6243
        %v6764 = vunpack.c.l.b16 %v6244
        %v6765 = vunpack.c.l.b16 %v6245
        %v6766 = vunpack.c.l.b16 %v6246
        %v6767 = vunpack.c.l.b16 %v6247
        %v6768 = vunpack.c.l.b16 %v6248
        %v6769 = vunpack.c.l.b16 %v6249
        %v6770 = vunpack.c.l.b16 %v6250
        %v6771 = vunpack.c.l.b16 %v6251
        %v6772 = vunpack.c.l.b16 %v6252
        %v6773 = vunpack.c.l.b16 %v6253
        %v6774 = vunpack.c.l.b16 %v6254
        %v6775 = vunpack.c.l.b16 %v6255
        %v6776 = vunpack.c.l.b16 %v6256
        %v6777 = vunpack.c.l.b16 %v6257
        %v6778 = vunpack.c.l.b16 %v6258
        %v6779 = vunpack.c.l.b16 %v6259
        %v6780 = vunpack.c.l.b16 %v6260
        %v6781 = vunpack.c.l.b16 %v6261
        %v6782 = vunpack.c.l.b16 %v6262
        %v6783 = vunpack.c.l.b16 %v6263
        %v6784 = vunpack.c.l.b16 %v6264
        %v6785 = vunpack.c.l.b16 %v6265
        %v6786 = vunpack.c.l.b16 %v6266
        %v6787 = vunpack.c.l.b16 %v6267
        %v6788 = vunpack.c.l.b16 %v6268
        %v6789 = vunpack.c.l.b16 %v6269
        %v6790 = vunpack.c.l.b16 %v6270
        %v6791 = vunpack.c.l.b16 %v6271
        %v6792 = vunpack.c.l.b16 %v6272
        %v6793 = vunpack.c.l.b16 %v6273
        %v6794 = vunpack.c.l.b16 %v6274
        %v6795 = vunpack.c.l.b16 %v6275
        %v6796 = vunpack.c.l.b16 %v6276
        %v6797 = vunpack.c.l.b16 %v6277
        %v6798 = vunpack.c.l.b16 %v6278
        %v6799 = vunpack.c.l.b16 %v6279
        %v6800 = vunpack.c.l.b16 %v6280
        %v6801 = vunpack.c.l.b16 %v6281
        %v6802 = vunpack.c.l.b16 %v6282
        %v6803 = vunpack.c.l.b16 %v6283
        %v6804 = vunpack.c.l.b16 %v6284
        %v6805 = vunpack.c.l.b16 %v6285
        %v6806 = vunpack.c.l.b16 %v6286
        %v6807 = vunpack.c.l.b16 %v6287
        %v6808 = vunpack.c.l.b16 %v6288
        %v6809 = vunpack.c.l.b16 %v6289
        %v6810 = vunpack.c.l.b16 %v6290
        %v6811 = vunpack.c.l.b16 %v6291
        %v6812 = vunpack.c.l.b16 %v6292
        %v6813 = vunpack.c.l.b16 %v6293
        %v6814 = vunpack.c.l.b16 %v6294
        %v6815 = vunpack.c.l.b16 %v6295
        %v6816 = vunpack.c.l.b16 %v6296
        %v6817 = vunpack.c.l.b16 %v6297
        %v6818 = vunpack.c.l.b16 %v6298
        %v6819 = vunpack.c.l.b16 %v6299
        %v6820 = vunpack.c.l.b16 %v6300
        %v6821 = vunpack.c.l.b16 %v6301
        %v6822 = vunpack.c.l.b16 %v6302
        %v6823 = vunpack.c.l.b16 %v6303
        %v6824 = vunpack.c.l.b16 %v6304
        %v6825 = vunpack.c.l.b16 %v6305
        %v6826 = vunpack.c.l.b16 %v6306
        %v6827 = vunpack.c.l.b16 %v6307
        %v6828 = vunpack.c.l.b16 %v6308
        %v6829 = vunpack.c.l.b16 %v6309
        %v6830 = vunpack.c.l.b16 %v6310
        %v6831 = vunpack.c.l.b16 %v6311
        %v6832 = vunpack.c.l.b16 %v6312
        %v6833 = vunpack.c.l.b16 %v6313
        %v6834 = vunpack.c.l.b16 %v6314
        %v6835 = vunpack.c.l.b16 %v6315
        %v6836 = vunpack.c.l.b16 %v6316
        %v6837 = vunpack.c.l.b16 %v6317
        %v6838 = vunpack.c.l.b16 %v6318
        %v6839 = vunpack.c.l.b16 %v6319
        %v6840 = vunpack.c.l.b16 %v6320
        %v6841 = vunpack.c.l.b16 %v6321
        %v6842 = vunpack.c.l.b16 %v6322
        %v6843 = vunpack.c.l.b16 %v6323
        %v6844 = vunpack.c.l.b16 %v6324
        %v6845 = vunpack.c.l.b16 %v6325
        %v6846 = vunpack.c.l.b16 %v6326
        %v6847 = vunpack.c.l.b16 %v6327
        %v6848 = vunpack.c.l.b16 %v6328
        %v6849 = vunpack.c.l.b16 %v6329
        %v6850 = vunpack.c.l.b16 %v6330
        %v6851 = vunpack.c.l.b16 %v6331
        %v6852 = vunpack.c.l.b16 %v6332
        %v6853 = vunpack.c.l.b16 %v6333
        %v6854 = vunpack.c.l.b16 %v6334
        %v6855 = vunpack.c.l.b16 %v6335
        %v6856 = vunpack.c.l.b16 %v6336
        %v6857 = vunpack.c.l.b16 %v6337
        %v6858 = vunpack.c.l.b16 %v6338
        %v6859 = vunpack.c.l.b16 %v6339
        %v6860 = vunpack.c.l.b16 %v6340
        %v6861 = vunpack.c.l.b16 %v6341
        %v6862 = vunpack.c.l.b16 %v6342
        %v6863 = vunpack.c.l.b16 %v6343
        %v6864 = vunpack.c.l.b16 %v6344
        %v6865 = vunpack.c.l.b16 %v6345
        %v6866 = vunpack.c.l.b16 %v6346
        %v6867 = vunpack.c.l.b16 %v6347
        %v6868 = vunpack.c.l.b16 %v6348
        %v6869 = vunpack.c.l.b16 %v6349
        %v6870 = vunpack.c.l.b16 %v6350
        %v6871 = vunpack.c.l.b16 %v6351
        %v6872 = vunpack.c.l.b16 %v6352
        %v6873 = vunpack.c.l.b16 %v6353
        %v6874 = vunpack.c.l.b16 %v6354
        %v6875 = vunpack.c.l.b16 %v6355
        %v6876 = vunpack.c.l.b16 %v6356
        %v6877 = vunpack.c.l.b16 %v6357
        %v6878 = vunpack.c.l.b16 %v6358
        %v6879 = vunpack.c.l.b16 %v6359
        %v6880 = vunpack.c.l.b16 %v6360
        %v6881 = vunpack.c.l.b16 %v6361
        %v6882 = vunpack.c.l.b16 %v6362
        %v6883 = vunpack.c.l.b16 %v6363
        %v6884 = vunpack.c.l.b16 %v6364
        %v6885 = vunpack.c.l.b16 %v6365
        %v6886 = vunpack.c.l.b16 %v6366
        %v6887 = vunpack.c.l.b16 %v6367
        %v6888 = vunpack.c.l.b16 %v6368
        %v6889 = vunpack.c.l.b16 %v6369
        %v6890 = vunpack.c.l.b16 %v6370
        %v6891 = vunpack.c.l.b16 %v6371
        %v6892 = vunpack.c.l.b16 %v6372
        %v6893 = vunpack.c.l.b16 %v6373
        %v6894 = vunpack.c.l.b16 %v6374
        %v6895 = vunpack.c.l.b16 %v6375
        %v6896 = vunpack.c.l.b16 %v6376
        %v6897 = vunpack.c.l.b16 %v6377
        %v6898 = vunpack.c.l.b16 %v6378
        %v6899 = vunpack.c.l.b16 %v6379
        %v6900 = vunpack.c.l.b16 %v6380
        %v6901 = vunpack.c.l.b16 %v6381
        %v6902 = vunpack.c.l.b16 %v6382
        %v6903 = vunpack.c.l.b16 %v6383
        %v6904 = vunpack.c.l.b16 %v6384
        %v6905 = vunpack.c.l.b16 %v6385
        %v6906 = vunpack.c.l.b16 %v6386
        %v6907 = vunpack.c.l.b16 %v6387
        %v6908 = vunpack.c.l.b16 %v6388
        %v6909 = vunpack.c.l.b16 %v6389
        %v6910 = vunpack.c.l.b16 %v6390
        %v6911 = vunpack.c.l.b16 %v6391
        %v6912 = vunpack.c.l.b16 %v6392
        %v6913 = vunpack.c.l.b16 %v6393
        %v6914 = vunpack.c.l.b16 %v6394
        %v6915 = vunpack.c.l.b16 %v6395
        %v6916 = vunpack.c.l.b16 %v6396
        %v6917 = vunpack.c.l.b16 %v6397
        %v6918 = vunpack.c.l.b16 %v6398
        %v6919 = vunpack.c.l.b16 %v6399
        %v6920 = vunpack.c.l.b16 %v6400
        %v6921 = vunpack.c.l.b16 %v6401
        %v6922 = vunpack.c.l.b16 %v6402
        %v6923 = vunpack.c.l.b16 %v6403
        %v6924 = vunpack.c.l.b16 %v6404
        %v6925 = vunpack.c.l.b16 %v6405
        %v6926 = vunpack.c.l.b16 %v6406
        %v6927 = vunpack.c.l.b16 %v6407
        %v6928 = vunpack.c.l.b16 %v6408
        %v6929 = vunpack.c.l.b16 %v6409
        %v6930 = vunpack.c.l.b16 %v6410
        %v6931 = vunpack.c.l.b16 %v6411
        %v6932 = vunpack.c.l.b16 %v6412
        %v6933 = vunpack.c.l.b16 %v6413
        %v6934 = vunpack.c.l.b16 %v6414
        %v6935 = vunpack.c.l.b16 %v6415
        %v6936 = vunpack.c.l.b16 %v6416
        %v6937 = vunpack.c.l.b16 %v6417
        %v6938 = vunpack.c.l.b16 %v6418
        %v6939 = vunpack.c.l.b16 %v6419
        %v6940 = vunpack.c.l.b16 %v6420
        %v6941 = vunpack.c.l.b16 %v6421
        %v6942 = vunpack.c.l.b16 %v6422
        %v6943 = vunpack.c.l.b16 %v6423
        %v6944 = vunpack.c.l.b16 %v6424
        %v6945 = vunpack.c.l.b16 %v6425
        %v6946 = vpack.c.b16 %v6691, %v6690
        %v6947 = vpack.c.b16 %v6693, %v6692
        %v6948 = vpack.c.b16 %v6695, %v6694
        %v6949 = vpack.c.b16 %v6697, %v6696
        %v6950 = vpack.c.b16 %v6699, %v6698
        %v6951 = vpack.c.b16 %v6701, %v6700
        %v6952 = vpack.c.b16 %v6703, %v6702
        %v6953 = vpack.c.b16 %v6705, %v6704
        %v6954 = vpack.c.b16 %v6707, %v6706
        %v6955 = vpack.c.b16 %v6709, %v6708
        %v6956 = vpack.c.b16 %v6711, %v6710
        %v6957 = vpack.c.b16 %v6713, %v6712
        %v6958 = vpack.c.b16 %v6715, %v6714
        %v6959 = vpack.c.b16 %v6717, %v6716
        %v6960 = vpack.c.b16 %v6719, %v6718
        %v6961 = vpack.c.b16 %v6721, %v6720
        %v6962 = vpack.c.b16 %v6723, %v6722
        %v6963 = vpack.c.b16 %v6725, %v6724
        %v6964 = vpack.c.b16 %v6727, %v6726
        %v6965 = vpack.c.b16 %v6729, %v6728
        %v6966 = vpack.c.b16 %v6731, %v6730
        %v6967 = vpack.c.b16 %v6733, %v6732
        %v6968 = vpack.c.b16 %v6735, %v6734
        %v6969 = vpack.c.b16 %v6737, %v6736
        %v6970 = vpack.c.b16 %v6739, %v6738
        %v6971 = vpack.c.b16 %v6741, %v6740
        %v6972 = vpack.c.b16 %v6743, %v6742
        %v6973 = vpack.c.b16 %v6745, %v6744
        %v6974 = vpack.c.b16 %v6747, %v6746
        %v6975 = vpack.c.b16 %v6749, %v6748
        %v6976 = vpack.c.b16 %v6751, %v6750
        %v6977 = vpack.c.b16 %v6753, %v6752
        %v6978 = vpack.c.b16 %v6755, %v6754
        %v6979 = vpack.c.b16 %v6757, %v6756
        %v6980 = vpack.c.b16 %v6759, %v6758
        %v6981 = vpack.c.b16 %v6761, %v6760
        %v6982 = vpack.c.b16 %v6763, %v6762
        %v6983 = vpack.c.b16 %v6765, %v6764
        %v6984 = vpack.c.b16 %v6767, %v6766
        %v6985 = vpack.c.b16 %v6769, %v6768
        %v6986 = vpack.c.b16 %v6771, %v6770
        %v6987 = vpack.c.b16 %v6773, %v6772
        %v6988 = vpack.c.b16 %v6775, %v6774
        %v6989 = vpack.c.b16 %v6777, %v6776
        %v6990 = vpack.c.b16 %v6779, %v6778
        %v6991 = vpack.c.b16 %v6781, %v6780
        %v6992 = vpack.c.b16 %v6783, %v6782
        %v6993 = vpack.c.b16 %v6785, %v6784
        %v6994 = vpack.c.b16 %v6787, %v6786
        %v6995 = vpack.c.b16 %v6789, %v6788
        %v6996 = vpack.c.b16 %v6791, %v6790
        %v6997 = vpack.c.b16 %v6793, %v6792
        %v6998 = vpack.c.b16 %v6795, %v6794
        %v6999 = vpack.c.b16 %v6797, %v6796
        %v7000 = vpack.c.b16 %v6799, %v6798
        %v7001 = vpack.c.b16 %v6801, %v6800
        %v7002 = vpack.c.b16 %v6803, %v6802
        %v7003 = vpack.c.b16 %v6805, %v6804
        %v7004 = vpack.c.b16 %v6807, %v6806
        %v7005 = vpack.c.b16 %v6809, %v6808
        %v7006 = vpack.c.b16 %v6811, %v6810
        %v7007 = vpack.c.b16 %v6813, %v6812
        %v7008 = vpack.c.b16 %v6815, %v6814
        %v7009 = vpack.c.b16 %v6817, %v6816
        %v7010 = vpack.c.b16 %v6819, %v6818
        %v7011 = vpack.c.b16 %v6821, %v6820
        %v7012 = vpack.c.b16 %v6823, %v6822
        %v7013 = vpack.c.b16 %v6825, %v6824
        %v7014 = vpack.c.b16 %v6827, %v6826
        %v7015 = vpack.c.b16 %v6829, %v6828
        %v7016 = vpack.c.b16 %v6831, %v6830
        %v7017 = vpack.c.b16 %v6833, %v6832
        %v7018 = vpack.c.b16 %v6835, %v6834
        %v7019 = vpack.c.b16 %v6837, %v6836
        %v7020 = vpack.c.b16 %v6839, %v6838
        %v7021 = vpack.c.b16 %v6841, %v6840
        %v7022 = vpack.c.b16 %v6843, %v6842
        %v7023 = vpack.c.b16 %v6845, %v6844
        %v7024 = vpack.c.b16 %v6847, %v6846
        %v7025 = vpack.c.b16 %v6849, %v6848
        %v7026 = vpack.c.b16 %v6851, %v6850
        %v7027 = vpack.c.b16 %v6853, %v6852
        %v7028 = vpack.c.b16 %v6855, %v6854
        %v7029 = vpack.c.b16 %v6857, %v6856
        %v7030 = vpack.c.b16 %v6859, %v6858
        %v7031 = vpack.c.b16 %v6861, %v6860
        %v7032 = vpack.c.b16 %v6863, %v6862
        %v7033 = vpack.c.b16 %v6865, %v6864
        %v7034 = vpack.c.b16 %v6867, %v6866
        %v7035 = vpack.c.b16 %v6869, %v6868
        %v7036 = vpack.c.b16 %v6871, %v6870
        %v7037 = vpack.c.b16 %v6873, %v6872
        %v7038 = vpack.c.b16 %v6875, %v6874
        %v7039 = vpack.c.b16 %v6877, %v6876
        %v7040 = vpack.c.b16 %v6879, %v6878
        %v7041 = vpack.c.b16 %v6881, %v6880
        %v7042 = vpack.c.b16 %v6883, %v6882
        %v7043 = vpack.c.b16 %v6885, %v6884
        %v7044 = vpack.c.b16 %v6887, %v6886
        %v7045 = vpack.c.b16 %v6889, %v6888
        %v7046 = vpack.c.b16 %v6891, %v6890
        %v7047 = vpack.c.b16 %v6893, %v6892
        %v7048 = vpack.c.b16 %v6895, %v6894
        %v7049 = vpack.c.b16 %v6897, %v6896
        %v7050 = vpack.c.b16 %v6899, %v6898
        %v7051 = vpack.c.b16 %v6901, %v6900
        %v7052 = vpack.c.b16 %v6903, %v6902
        %v7053 = vpack.c.b16 %v6905, %v6904
        %v7054 = vpack.c.b16 %v6907, %v6906
        %v7055 = vpack.c.b16 %v6909, %v6908
        %v7056 = vpack.c.b16 %v6911, %v6910
        %v7057 = vpack.c.b16 %v6913, %v6912
        %v7058 = vpack.c.b16 %v6915, %v6914
        %v7059 = vpack.c.b16 %v6917, %v6916
        %v7060 = vpack.c.b16 %v6919, %v6918
        %v7061 = vpack.c.b16 %v6921, %v6920
        %v7062 = vpack.c.b16 %v6923, %v6922
        %v7063 = vpack.c.b16 %v6925, %v6924
        %v7064 = vpack.c.b16 %v6927, %v6926
        %v7065 = vpack.c.b16 %v6929, %v6928
        %v7066 = vpack.c.b16 %v6931, %v6930
        %v7067 = vpack.c.b16 %v6933, %v6932
        %v7068 = vpack.c.b16 %v6935, %v6934
        %v7069 = vpack.c.b16 %v6937, %v6936
        %v7070 = vpack.c.b16 %v6939, %v6938
        %v7071 = vpack.c.b16 %v6941, %v6940
        %v7072 = vpack.c.b16 %v6943, %v6942
        %v7073 = vpack.c.b16 %v6945, %v6944
        %7202 = vmatprep.subr.bf16.mxu0 0
        %7203 = vmatpush1.bf16.msra.mxu0 %v6953
        %7204 = vmatprep.subr.bf16.mxu0 0
        %7205 = vmatpush1.bf16.msra.mxu0 %v6952
        %7206 = vmatprep.subr.bf16.mxu0 0
        %7207 = vmatpush1.bf16.msra.mxu0 %v6951
        %7208 = vmatprep.subr.bf16.mxu0 0
        %7209 = vmatpush1.bf16.msra.mxu0 %v6950
        %7210 = vmatprep.subr.bf16.mxu0 0
        %7211 = vmatpush1.bf16.msra.mxu0 %v6949
        %7212 = vmatprep.subr.bf16.mxu0 0
        %7213 = vmatpush1.bf16.msra.mxu0 %v6948
        %7214 = vmatprep.subr.bf16.mxu0 0
        %7215 = vmatpush1.bf16.msra.mxu0 %v6947
        %7216 = vmatprep.subr.bf16.mxu0 0
        %7217 = vmatpush1.bf16.msra.mxu0 %v6946
        %7218 = vmatprep.subr.bf16.mxu0 0
        %7219 = vmatpush2.bf16.msra.mxu0 %v6961
        %7220 = vmatprep.subr.bf16.mxu0 0
        %7221 = vmatpush2.bf16.msra.mxu0 %v6960
        %7222 = vmatprep.subr.bf16.mxu0 0
        %7223 = vmatpush2.bf16.msra.mxu0 %v6959
        %7224 = vmatprep.subr.bf16.mxu0 0
        %7225 = vmatpush2.bf16.msra.mxu0 %v6958
        %7226 = vmatprep.subr.bf16.mxu0 0
        %7227 = vmatpush2.bf16.msra.mxu0 %v6957
        %7228 = vmatprep.subr.bf16.mxu0 0
        %7229 = vmatpush2.bf16.msra.mxu0 %v6956
        %7230 = vmatprep.subr.bf16.mxu0 0
        %7231 = vmatpush2.bf16.msra.mxu0 %v6955
        %7232 = vmatprep.subr.bf16.mxu0 0
        %7233 = vmatpush2.bf16.msra.mxu0 %v6954
        %7234 = vmatprep.mubr.bf16.mxu0 %v6154
        %7235 = vmatmul.mubr.bf16.gmra.mxu0 %v6153
        %v7236 = vpop.f32.mrf.mxu0
        %v7237 = vadd.f32 %v6432, %v7236
        %v7238 = vpop.f32.mrf.mxu0
        %v7239 = vpop.f32.mrf.mxu0
        %v7240 = vpop.f32.mrf.mxu0
        %7241 = vdwg.mxu0
        %7242 = vmatprep.subr.bf16.mxu0 0
        %7243 = vmatpush1.bf16.msra.mxu0 %v6969
        %7244 = vmatprep.subr.bf16.mxu0 0
        %7245 = vmatpush1.bf16.msra.mxu0 %v6968
        %7246 = vmatprep.subr.bf16.mxu0 0
        %7247 = vmatpush1.bf16.msra.mxu0 %v6967
        %7248 = vmatprep.subr.bf16.mxu0 0
        %7249 = vmatpush1.bf16.msra.mxu0 %v6966
        %7250 = vmatprep.subr.bf16.mxu0 0
        %7251 = vmatpush1.bf16.msra.mxu0 %v6965
        %7252 = vmatprep.subr.bf16.mxu0 0
        %7253 = vmatpush1.bf16.msra.mxu0 %v6964
        %7254 = vmatprep.subr.bf16.mxu0 0
        %7255 = vmatpush1.bf16.msra.mxu0 %v6963
        %7256 = vmatprep.subr.bf16.mxu0 0
        %7257 = vmatpush1.bf16.msra.mxu0 %v6962
        %7258 = vmatprep.subr.bf16.mxu0 0
        %7259 = vmatpush2.bf16.msra.mxu0 %v6977
        %7260 = vmatprep.subr.bf16.mxu0 0
        %7261 = vmatpush2.bf16.msra.mxu0 %v6976
        %7262 = vmatprep.subr.bf16.mxu0 0
        %7263 = vmatpush2.bf16.msra.mxu0 %v6975
        %7264 = vmatprep.subr.bf16.mxu0 0
        %7265 = vmatpush2.bf16.msra.mxu0 %v6974
        %7266 = vmatprep.subr.bf16.mxu0 0
        %7267 = vmatpush2.bf16.msra.mxu0 %v6973
        %7268 = vmatprep.subr.bf16.mxu0 0
        %7269 = vmatpush2.bf16.msra.mxu0 %v6972
        %7270 = vmatprep.subr.bf16.mxu0 0
        %7271 = vmatpush2.bf16.msra.mxu0 %v6971
        %7272 = vmatprep.subr.bf16.mxu0 0
        %7273 = vmatpush2.bf16.msra.mxu0 %v6970
        %7274 = vmatprep.mubr.bf16.mxu0 %v6156
        %7275 = vmatmul.mubr.bf16.gmra.mxu0 %v6155
        %v7276 = vpop.f32.mrf.mxu0
        %v7277 = vadd.f32 %v7237, %v7276
        %v7278 = vpop.f32.mrf.mxu0
        %v7279 = vpop.f32.mrf.mxu0
        %v7280 = vpop.f32.mrf.mxu0
        %7281 = vdwg.mxu0
        %7282 = vmatprep.subr.bf16.mxu0 0
        %7283 = vmatpush1.bf16.msra.mxu0 %v6985
        %7284 = vmatprep.subr.bf16.mxu0 0
        %7285 = vmatpush1.bf16.msra.mxu0 %v6984
        %7286 = vmatprep.subr.bf16.mxu0 0
        %7287 = vmatpush1.bf16.msra.mxu0 %v6983
        %7288 = vmatprep.subr.bf16.mxu0 0
        %7289 = vmatpush1.bf16.msra.mxu0 %v6982
        %7290 = vmatprep.subr.bf16.mxu0 0
        %7291 = vmatpush1.bf16.msra.mxu0 %v6981
        %7292 = vmatprep.subr.bf16.mxu0 0
        %7293 = vmatpush1.bf16.msra.mxu0 %v6980
        %7294 = vmatprep.subr.bf16.mxu0 0
        %7295 = vmatpush1.bf16.msra.mxu0 %v6979
        %7296 = vmatprep.subr.bf16.mxu0 0
        %7297 = vmatpush1.bf16.msra.mxu0 %v6978
        %7298 = vmatprep.subr.bf16.mxu0 0
        %7299 = vmatpush2.bf16.msra.mxu0 %v6993
        %7300 = vmatprep.subr.bf16.mxu0 0
        %7301 = vmatpush2.bf16.msra.mxu0 %v6992
        %7302 = vmatprep.subr.bf16.mxu0 0
        %7303 = vmatpush2.bf16.msra.mxu0 %v6991
        %7304 = vmatprep.subr.bf16.mxu0 0
        %7305 = vmatpush2.bf16.msra.mxu0 %v6990
        %7306 = vmatprep.subr.bf16.mxu0 0
        %7307 = vmatpush2.bf16.msra.mxu0 %v6989
        %7308 = vmatprep.subr.bf16.mxu0 0
        %7309 = vmatpush2.bf16.msra.mxu0 %v6988
        %7310 = vmatprep.subr.bf16.mxu0 0
        %7311 = vmatpush2.bf16.msra.mxu0 %v6987
        %7312 = vmatprep.subr.bf16.mxu0 0
        %7313 = vmatpush2.bf16.msra.mxu0 %v6986
        %7314 = vmatprep.mubr.bf16.mxu0 %v6158
        %7315 = vmatmul.mubr.bf16.gmra.mxu0 %v6157
        %v7316 = vpop.f32.mrf.mxu0
        %v7317 = vadd.f32 %v7277, %v7316
        %v7318 = vpop.f32.mrf.mxu0
        %v7319 = vpop.f32.mrf.mxu0
        %v7320 = vpop.f32.mrf.mxu0
        %7321 = vdwg.mxu0
        %7322 = vmatprep.subr.bf16.mxu0 0
        %7323 = vmatpush1.bf16.msra.mxu0 %v7001
        %7324 = vmatprep.subr.bf16.mxu0 0
        %7325 = vmatpush1.bf16.msra.mxu0 %v7000
        %7326 = vmatprep.subr.bf16.mxu0 0
        %7327 = vmatpush1.bf16.msra.mxu0 %v6999
        %7328 = vmatprep.subr.bf16.mxu0 0
        %7329 = vmatpush1.bf16.msra.mxu0 %v6998
        %7330 = vmatprep.subr.bf16.mxu0 0
        %7331 = vmatpush1.bf16.msra.mxu0 %v6997
        %7332 = vmatprep.subr.bf16.mxu0 0
        %7333 = vmatpush1.bf16.msra.mxu0 %v6996
        %7334 = vmatprep.subr.bf16.mxu0 0
        %7335 = vmatpush1.bf16.msra.mxu0 %v6995
        %7336 = vmatprep.subr.bf16.mxu0 0
        %7337 = vmatpush1.bf16.msra.mxu0 %v6994
        %7338 = vmatprep.subr.bf16.mxu0 0
        %7339 = vmatpush2.bf16.msra.mxu0 %v7009
        %7340 = vmatprep.subr.bf16.mxu0 0
        %7341 = vmatpush2.bf16.msra.mxu0 %v7008
        %7342 = vmatprep.subr.bf16.mxu0 0
        %7343 = vmatpush2.bf16.msra.mxu0 %v7007
        %7344 = vmatprep.subr.bf16.mxu0 0
        %7345 = vmatpush2.bf16.msra.mxu0 %v7006
        %7346 = vmatprep.subr.bf16.mxu0 0
        %7347 = vmatpush2.bf16.msra.mxu0 %v7005
        %7348 = vmatprep.subr.bf16.mxu0 0
        %7349 = vmatpush2.bf16.msra.mxu0 %v7004
        %7350 = vmatprep.subr.bf16.mxu0 0
        %7351 = vmatpush2.bf16.msra.mxu0 %v7003
        %7352 = vmatprep.subr.bf16.mxu0 0
        %7353 = vmatpush2.bf16.msra.mxu0 %v7002
        %7354 = vmatprep.mubr.bf16.mxu0 %v6160
        %7355 = vmatmul.mubr.bf16.gmra.mxu0 %v6159
        %v7356 = vpop.f32.mrf.mxu0
        %v7357 = vadd.f32 %v7317, %v7356
        %v7358 = vpop.f32.mrf.mxu0
        %v7359 = vpop.f32.mrf.mxu0
        %v7360 = vpop.f32.mrf.mxu0
        %7361 = vdwg.mxu0
        %7362 = vmatprep.subr.bf16.mxu0 0
        %7363 = vmatpush1.bf16.msra.mxu0 %v7017
        %7364 = vmatprep.subr.bf16.mxu0 0
        %7365 = vmatpush1.bf16.msra.mxu0 %v7016
        %7366 = vmatprep.subr.bf16.mxu0 0
        %7367 = vmatpush1.bf16.msra.mxu0 %v7015
        %7368 = vmatprep.subr.bf16.mxu0 0
        %7369 = vmatpush1.bf16.msra.mxu0 %v7014
        %7370 = vmatprep.subr.bf16.mxu0 0
        %7371 = vmatpush1.bf16.msra.mxu0 %v7013
        %7372 = vmatprep.subr.bf16.mxu0 0
        %7373 = vmatpush1.bf16.msra.mxu0 %v7012
        %7374 = vmatprep.subr.bf16.mxu0 0
        %7375 = vmatpush1.bf16.msra.mxu0 %v7011
        %7376 = vmatprep.subr.bf16.mxu0 0
        %7377 = vmatpush1.bf16.msra.mxu0 %v7010
        %7378 = vmatprep.subr.bf16.mxu0 0
        %7379 = vmatpush2.bf16.msra.mxu0 %v7025
        %7380 = vmatprep.subr.bf16.mxu0 0
        %7381 = vmatpush2.bf16.msra.mxu0 %v7024
        %7382 = vmatprep.subr.bf16.mxu0 0
        %7383 = vmatpush2.bf16.msra.mxu0 %v7023
        %7384 = vmatprep.subr.bf16.mxu0 0
        %7385 = vmatpush2.bf16.msra.mxu0 %v7022
        %7386 = vmatprep.subr.bf16.mxu0 0
        %7387 = vmatpush2.bf16.msra.mxu0 %v7021
        %7388 = vmatprep.subr.bf16.mxu0 0
        %7389 = vmatpush2.bf16.msra.mxu0 %v7020
        %7390 = vmatprep.subr.bf16.mxu0 0
        %7391 = vmatpush2.bf16.msra.mxu0 %v7019
        %7392 = vmatprep.subr.bf16.mxu0 0
        %7393 = vmatpush2.bf16.msra.mxu0 %v7018
        %7394 = vmatprep.mubr.bf16.mxu0 %v6162
        %7395 = vmatmul.mubr.bf16.gmra.mxu0 %v6161
        %v7396 = vpop.f32.mrf.mxu0
        %v7397 = vadd.f32 %v7357, %v7396
        %v7398 = vpop.f32.mrf.mxu0
        %v7399 = vpop.f32.mrf.mxu0
        %v7400 = vpop.f32.mrf.mxu0
        %7401 = vdwg.mxu0
        %7402 = vmatprep.subr.bf16.mxu0 0
        %7403 = vmatpush1.bf16.msra.mxu0 %v7033
        %7404 = vmatprep.subr.bf16.mxu0 0
        %7405 = vmatpush1.bf16.msra.mxu0 %v7032
        %7406 = vmatprep.subr.bf16.mxu0 0
        %7407 = vmatpush1.bf16.msra.mxu0 %v7031
        %7408 = vmatprep.subr.bf16.mxu0 0
        %7409 = vmatpush1.bf16.msra.mxu0 %v7030
        %7410 = vmatprep.subr.bf16.mxu0 0
        %7411 = vmatpush1.bf16.msra.mxu0 %v7029
        %7412 = vmatprep.subr.bf16.mxu0 0
        %7413 = vmatpush1.bf16.msra.mxu0 %v7028
        %7414 = vmatprep.subr.bf16.mxu0 0
        %7415 = vmatpush1.bf16.msra.mxu0 %v7027
        %7416 = vmatprep.subr.bf16.mxu0 0
        %7417 = vmatpush1.bf16.msra.mxu0 %v7026
        %7418 = vmatprep.subr.bf16.mxu0 0
        %7419 = vmatpush2.bf16.msra.mxu0 %v7041
        %7420 = vmatprep.subr.bf16.mxu0 0
        %7421 = vmatpush2.bf16.msra.mxu0 %v7040
        %7422 = vmatprep.subr.bf16.mxu0 0
        %7423 = vmatpush2.bf16.msra.mxu0 %v7039
        %7424 = vmatprep.subr.bf16.mxu0 0
        %7425 = vmatpush2.bf16.msra.mxu0 %v7038
        %7426 = vmatprep.subr.bf16.mxu0 0
        %7427 = vmatpush2.bf16.msra.mxu0 %v7037
        %7428 = vmatprep.subr.bf16.mxu0 0
        %7429 = vmatpush2.bf16.msra.mxu0 %v7036
        %7430 = vmatprep.subr.bf16.mxu0 0
        %7431 = vmatpush2.bf16.msra.mxu0 %v7035
        %7432 = vmatprep.subr.bf16.mxu0 0
        %7433 = vmatpush2.bf16.msra.mxu0 %v7034
        %7434 = vmatprep.mubr.bf16.mxu0 %v6164
        %7435 = vmatmul.mubr.bf16.gmra.mxu0 %v6163
        %v7436 = vpop.f32.mrf.mxu0
        %v7437 = vadd.f32 %v7397, %v7436
        %v7438 = vpop.f32.mrf.mxu0
        %v7439 = vpop.f32.mrf.mxu0
        %v7440 = vpop.f32.mrf.mxu0
        %7441 = vdwg.mxu0
        %7442 = vmatprep.subr.bf16.mxu0 0
        %7443 = vmatpush1.bf16.msra.mxu0 %v7049
        %7444 = vmatprep.subr.bf16.mxu0 0
        %7445 = vmatpush1.bf16.msra.mxu0 %v7048
        %7446 = vmatprep.subr.bf16.mxu0 0
        %7447 = vmatpush1.bf16.msra.mxu0 %v7047
        %7448 = vmatprep.subr.bf16.mxu0 0
        %7449 = vmatpush1.bf16.msra.mxu0 %v7046
        %7450 = vmatprep.subr.bf16.mxu0 0
        %7451 = vmatpush1.bf16.msra.mxu0 %v7045
        %7452 = vmatprep.subr.bf16.mxu0 0
        %7453 = vmatpush1.bf16.msra.mxu0 %v7044
        %7454 = vmatprep.subr.bf16.mxu0 0
        %7455 = vmatpush1.bf16.msra.mxu0 %v7043
        %7456 = vmatprep.subr.bf16.mxu0 0
        %7457 = vmatpush1.bf16.msra.mxu0 %v7042
        %7458 = vmatprep.subr.bf16.mxu0 0
        %7459 = vmatpush2.bf16.msra.mxu0 %v7057
        %7460 = vmatprep.subr.bf16.mxu0 0
        %7461 = vmatpush2.bf16.msra.mxu0 %v7056
        %7462 = vmatprep.subr.bf16.mxu0 0
        %7463 = vmatpush2.bf16.msra.mxu0 %v7055
        %7464 = vmatprep.subr.bf16.mxu0 0
        %7465 = vmatpush2.bf16.msra.mxu0 %v7054
        %7466 = vmatprep.subr.bf16.mxu0 0
        %7467 = vmatpush2.bf16.msra.mxu0 %v7053
        %7468 = vmatprep.subr.bf16.mxu0 0
        %7469 = vmatpush2.bf16.msra.mxu0 %v7052
        %7470 = vmatprep.subr.bf16.mxu0 0
        %7471 = vmatpush2.bf16.msra.mxu0 %v7051
        %7472 = vmatprep.subr.bf16.mxu0 0
        %7473 = vmatpush2.bf16.msra.mxu0 %v7050
        %7474 = vmatprep.mubr.bf16.mxu0 %v6166
        %7475 = vmatmul.mubr.bf16.gmra.mxu0 %v6165
        %v7476 = vpop.f32.mrf.mxu0
        %v7477 = vadd.f32 %v7437, %v7476
        %v7478 = vpop.f32.mrf.mxu0
        %v7479 = vpop.f32.mrf.mxu0
        %v7480 = vpop.f32.mrf.mxu0
        %7481 = vdwg.mxu0
        %7482 = vmatprep.subr.bf16.mxu0 0
        %7483 = vmatpush1.bf16.msra.mxu0 %v7065
        %7484 = vmatprep.subr.bf16.mxu0 0
        %7485 = vmatpush1.bf16.msra.mxu0 %v7064
        %7486 = vmatprep.subr.bf16.mxu0 0
        %7487 = vmatpush1.bf16.msra.mxu0 %v7063
        %7488 = vmatprep.subr.bf16.mxu0 0
        %7489 = vmatpush1.bf16.msra.mxu0 %v7062
        %7490 = vmatprep.subr.bf16.mxu0 0
        %7491 = vmatpush1.bf16.msra.mxu0 %v7061
        %7492 = vmatprep.subr.bf16.mxu0 0
        %7493 = vmatpush1.bf16.msra.mxu0 %v7060
        %7494 = vmatprep.subr.bf16.mxu0 0
        %7495 = vmatpush1.bf16.msra.mxu0 %v7059
        %7496 = vmatprep.subr.bf16.mxu0 0
        %7497 = vmatpush1.bf16.msra.mxu0 %v7058
        %7498 = vmatprep.subr.bf16.mxu0 0
        %7499 = vmatpush2.bf16.msra.mxu0 %v7073
        %7500 = vmatprep.subr.bf16.mxu0 0
        %7501 = vmatpush2.bf16.msra.mxu0 %v7072
        %7502 = vmatprep.subr.bf16.mxu0 0
        %7503 = vmatpush2.bf16.msra.mxu0 %v7071
        %7504 = vmatprep.subr.bf16.mxu0 0
        %7505 = vmatpush2.bf16.msra.mxu0 %v7070
        %7506 = vmatprep.subr.bf16.mxu0 0
        %7507 = vmatpush2.bf16.msra.mxu0 %v7069
        %7508 = vmatprep.subr.bf16.mxu0 0
        %7509 = vmatpush2.bf16.msra.mxu0 %v7068
        %7510 = vmatprep.subr.bf16.mxu0 0
        %7511 = vmatpush2.bf16.msra.mxu0 %v7067
        %7512 = vmatprep.subr.bf16.mxu0 0
        %7513 = vmatpush2.bf16.msra.mxu0 %v7066
        %7514 = vmatprep.mubr.bf16.mxu0 %v6168
        %7515 = vmatmul.mubr.bf16.gmra.mxu0 %v6167
        %v7516 = vpop.f32.mrf.mxu0
        %v7517 = vadd.f32 %v7477, %v7516
        %v7518 = vpop.f32.mrf.mxu0
        %v7519 = vpop.f32.mrf.mxu0
        %v7520 = vpop.f32.mrf.mxu0
        %7521 = vdwg.mxu0
        %v7522 = vadd.f32 %v4953, %v7517
        %7523 = vadd.xlane.f32.xlu0 %v7522
        %v7524 = vpop.xlane.xlu0 %7523
        %v7525 = vmul.f32 %v7524, %v1473
        %v7526 = vsub.f32 %v7522, %v7525
        %v7527 = vmul.f32 %v7526, %v7526
        %7528 = vadd.xlane.f32.xlu0 %v7527
        %v7529 = vpop.xlane.xlu0 %7528
        %v7530 = vmul.f32 %v7529, %v1473
        %v7531 = vadd.f32 %v7530, 1e-05
        %v7532 = vrsqrt.pop %v7531
        %v7533 = vmul.f32 %v7526, %v7532
        %s7534 = scalar_lea.vmem %s14, 1
        %v7535 = vld [vmem:[%s7534] sm:$0x1]
        %v7537 = vlaneseq
        %v7538 = vshrl.u32 %v7537, 7
        %v7539 = vsub.s32 0, %v7538
        %v7540 = vrot.slane %v7535, %v7539
        %v7542 = vmul.f32 %v7533, %v7540
        %s7543 = scalar_lea.vmem %s15, 1
        %v7544 = vld [vmem:[%s7543] sm:$0x1]
        %v7546 = vlaneseq
        %v7547 = vshrl.u32 %v7546, 7
        %v7548 = vsub.s32 0, %v7547
        %v7549 = vrot.slane %v7544, %v7548
        %v7551 = vadd.f32 %v7542, %v7549
        %v7552 = vpack.c.bf16 %v7551, %v7551
        %v7553 = vld [vmem:[%s16] sm:$0xf]
        %v7554 = vld [vmem:[%s16 + $0x4] sm:$0xf]
        %v7555 = vld [vmem:[%s16 + $0x8] sm:$0xf]
        %v7556 = vld [vmem:[%s16 + $0xc] sm:$0xf]
        %v7557 = vld [vmem:[%s16 + $0x10] sm:$0xf]
        %v7558 = vld [vmem:[%s16 + $0x14] sm:$0xf]
        %v7559 = vld [vmem:[%s16 + $0x18] sm:$0xf]
        %v7560 = vld [vmem:[%s16 + $0x1c] sm:$0xf]
        %v7561 = vld [vmem:[%s16 + $0x20] sm:$0xf]
        %v7562 = vld [vmem:[%s16 + $0x24] sm:$0xf]
        %v7563 = vld [vmem:[%s16 + $0x28] sm:$0xf]
        %v7564 = vld [vmem:[%s16 + $0x2c] sm:$0xf]
        %v7565 = vld [vmem:[%s16 + $0x30] sm:$0xf]
        %v7566 = vld [vmem:[%s16 + $0x34] sm:$0xf]
        %v7567 = vld [vmem:[%s16 + $0x38] sm:$0xf]
        %v7568 = vld [vmem:[%s16 + $0x3c] sm:$0xf]
        %v7569 = vld [vmem:[%s17] sm:$0x1]
        %v7571 = vlaneseq
        %v7572 = vshrl.u32 %v7571, 7
        %v7573 = vsub.s32 0, %v7572
        %v7574 = vrot.slane %v7569, %v7573
        %v7592 = vunpack.c.l.b16 %v7553
        %v7593 = vunpack.c.l.b16 %v7554
        %v7594 = vunpack.c.l.b16 %v7555
        %v7595 = vunpack.c.l.b16 %v7556
        %v7596 = vunpack.c.l.b16 %v7557
        %v7597 = vunpack.c.l.b16 %v7558
        %v7598 = vunpack.c.l.b16 %v7559
        %v7599 = vunpack.c.l.b16 %v7560
        %v7600 = vunpack.c.l.b16 %v7561
        %v7601 = vunpack.c.l.b16 %v7562
        %v7602 = vunpack.c.l.b16 %v7563
        %v7603 = vunpack.c.l.b16 %v7564
        %v7604 = vunpack.c.l.b16 %v7565
        %v7605 = vunpack.c.l.b16 %v7566
        %v7606 = vunpack.c.l.b16 %v7567
        %v7607 = vunpack.c.l.b16 %v7568
        %v7608 = vpack.c.b16 %v7593, %v7592
        %v7609 = vpack.c.b16 %v7595, %v7594
        %v7610 = vpack.c.b16 %v7597, %v7596
        %v7611 = vpack.c.b16 %v7599, %v7598
        %v7612 = vpack.c.b16 %v7601, %v7600
        %v7613 = vpack.c.b16 %v7603, %v7602
        %v7614 = vpack.c.b16 %v7605, %v7604
        %v7615 = vpack.c.b16 %v7607, %v7606
        %7624 = vmatprep.subr.bf16.mxu0 0
        %7625 = vmatpush1.bf16.msra.mxu0 %v7615
        %7626 = vmatprep.subr.bf16.mxu0 0
        %7627 = vmatpush1.bf16.msra.mxu0 %v7614
        %7628 = vmatprep.subr.bf16.mxu0 0
        %7629 = vmatpush1.bf16.msra.mxu0 %v7613
        %7630 = vmatprep.subr.bf16.mxu0 0
        %7631 = vmatpush1.bf16.msra.mxu0 %v7612
        %7632 = vmatprep.subr.bf16.mxu0 0
        %7633 = vmatpush1.bf16.msra.mxu0 %v7611
        %7634 = vmatprep.subr.bf16.mxu0 0
        %7635 = vmatpush1.bf16.msra.mxu0 %v7610
        %7636 = vmatprep.subr.bf16.mxu0 0
        %7637 = vmatpush1.bf16.msra.mxu0 %v7609
        %7638 = vmatprep.subr.bf16.mxu0 0
        %7639 = vmatpush1.bf16.msra.mxu0 %v7608
        %7640 = vmatprep.subr.bf16.mxu0 0
        %7641 = vmatpush2.bf16.msra.mxu0 0
        %7642 = vmatprep.subr.bf16.mxu0 0
        %7643 = vmatpush2.bf16.msra.mxu0 0
        %7644 = vmatprep.subr.bf16.mxu0 0
        %7645 = vmatpush2.bf16.msra.mxu0 0
        %7646 = vmatprep.subr.bf16.mxu0 0
        %7647 = vmatpush2.bf16.msra.mxu0 0
        %7648 = vmatprep.subr.bf16.mxu0 0
        %7649 = vmatpush2.bf16.msra.mxu0 0
        %7650 = vmatprep.subr.bf16.mxu0 0
        %7651 = vmatpush2.bf16.msra.mxu0 0
        %7652 = vmatprep.subr.bf16.mxu0 0
        %7653 = vmatpush2.bf16.msra.mxu0 0
        %7654 = vmatprep.subr.bf16.mxu0 0
        %7655 = vmatpush2.bf16.msra.mxu0 0
        %7656 = vmatprep.mubr.bf16.mxu0 0
        %7657 = vmatmul.mubr.bf16.gmra.mxu0 %v7552
        %v7658 = vpop.f32.mrf.mxu0
        %v7659 = vadd.f32 %v7574, %v7658
        %v7660 = vpop.f32.mrf.mxu0
        %v7661 = vpop.f32.mrf.mxu0
        %v7662 = vpop.f32.mrf.mxu0
        %7663 = vdwg.mxu0
        %7664 = vst [vmem:[%s600] sm:$0xff] %v7659
        %p7665 = scmp.lt.s32.totalorder %s31, 1
        %s7666 = scalar_select %p7665, %s31, 1
        %s7667 = smul.addr %s7666, 8
        %s7668 = scalar_lea.vmem %s18, %s7667
        // Predicated region
        $region101: #{trajectory_transformer_forward.1} parent=91 // pred_check
          %p7669 = pneg %p432
        $region102: #{trajectory_transformer_forward.1} parent=91 // pred_check_branch
          %7671 = sbr.rel (%p7669) target = $region104
        $region103: #{trajectory_transformer_forward.1} parent=91 // pred_region
          _
        $region104: #{trajectory_transformer_forward.1} parent=91 // pred_fallthru
          _
      $region92: #{trajectory_transformer_forward.1} parent=5 // pred_fallthru
        _
      %p7672 = scmp.le.s32.totalorder 2, %s26
      // Predicated region
      $region105: #{trajectory_transformer_forward.1} parent=5 // pred_check
        %p7673 = pneg %p7672
      $region106: #{trajectory_transformer_forward.1} parent=5 // pred_check_branch
        %7675 = sbr.rel (%p7673) target = $region108
      $region107: #{trajectory_transformer_forward.1} parent=5 // pred_region
        %s7676 = ssub.s32 %s26, 2
        // Predicated region
        $region109: #{trajectory_transformer_forward.1} parent=107 // pred_check
          %p7677 = pneg %p438
        $region110: #{trajectory_transformer_forward.1} parent=107 // pred_check_branch
          %7679 = sbr.rel (%p7677) target = $region112
        $region111: #{trajectory_transformer_forward.1} parent=107 // pred_region
          %p7680 = scmp.lt.s32.totalorder %s32, 1
          %s7681 = scalar_select %p7680, %s32, 1
          %s7682 = smul.addr %s7681, 8
          %s7683 = scalar_lea.vmem %s18, %s7682
        $region112: #{trajectory_transformer_forward.1} parent=107 // pred_fallthru
          _
      $region108: #{trajectory_transformer_forward.1} parent=5 // pred_fallthru
        _
    $region6: #{trajectory_transformer_forward.1} parent=1 // loop_footer
      %s30 = sadd.s32 1, %s26
    $region7: #{trajectory_transformer_forward.1} parent=1 // loop_footer_branch
      %25 = sbr.rel target = $region3
    $region8: #{trajectory_transformer_forward.1} parent=1 // loop_exit
      _
    %7684 = vsyncpa [#allocation4], 1
    %s7685 = scalar_lea.sflag [#allocation4], 1
    %7686 = vsyncpa %s7685, 1
    %7687 = vsyncpa [#allocation6], 1

</llo_original>
